<compile_context>
chip_gen: v7x
topology: tpu7x:2x2x1
jax: 0.10.0
libtpu: 0.0.40
codegen_flags: <defaults>
</compile_context>

<pallas_src>
import numpy as np
import jax
import jax.numpy as jnp
from jax import lax
from jax.experimental import pallas as pl
from jax.experimental.pallas import tpu as pltpu


K = 3            # Tnet(k=3)
N_POINTS = 1024  # MaxPool1d(kernel_size=1024) => sequence length must be 1024
KP = 8           # channel dim k=3 zero-padded to 8 sublanes
CHUNK = 256      # points per inner-loop step (lane-aligned multiple of 128)
C1, C2, C3 = 64, 128, 1024
BN_EPS = 1e-5
VMEM_LIMIT = 32 * 1024 * 1024   # modest explicit limit; safe on v5e/v6e/v7x


# ---------------------------------------------------------------------------
# Kernel 1: conv1/conv2/conv3 (+folded BN, ReLU) fused with global max pool.
# ---------------------------------------------------------------------------
def _conv_pool_kernel(x_ref, w1_ref, b1_ref, w2_ref, b2_ref, w3_ref, b3_ref,
                      out_ref):
    # x_ref block: (1, KP, N) bf16 (NCL, channel-padded). out_ref: (1, 1, C3) bf16.
    # Hoist weight/bias loads out of the chunk loop.
    w1 = w1_ref[...]
    w2 = w2_ref[...]
    w3 = w3_ref[...]
    b1 = b1_ref[...]
    b2 = b2_ref[...]
    b3 = b3_ref[...]

    gmax = jnp.full((1, C3), -jnp.inf, dtype=jnp.float32)
    # Static Python loop == fully-unrolled inner loop (N_POINTS // CHUNK == 4):
    # static lane-aligned slices; no (1024, 1024) f32 intermediate ever lives.
    for c in range(N_POINTS // CHUNK):
        xc = x_ref[0, :, c * CHUNK:(c + 1) * CHUNK]               # (KP, CHUNK) bf16
        # conv1: contract the channel axis of the NCL tile -> channels-last.
        h = lax.dot_general(xc, w1, (((0,), (0,)), ((), ())),
                            preferred_element_type=jnp.float32)    # (CHUNK, C1)
        h = jnp.maximum(h + b1, 0.0).astype(jnp.bfloat16)          # conv1+bn1+relu
        h = jnp.dot(h, w2, preferred_element_type=jnp.float32)     # (CHUNK, C2)
        h = jnp.maximum(h + b2, 0.0).astype(jnp.bfloat16)          # conv2+bn2+relu
        z = jnp.dot(h, w3, preferred_element_type=jnp.float32)     # (CHUNK, C3)
        gmax = jnp.maximum(gmax, jnp.max(z, axis=0, keepdims=True))
    # Per-channel bias and monotone ReLU commute with the max over points:
    #   max_n relu(z[n,c] + b[c]) == relu(max_n z[n,c] + b[c]).
    out_ref[0] = jnp.maximum(gmax + b3, 0.0).astype(out_ref.dtype)


# ---------------------------------------------------------------------------
# Kernel 2: fc1/fc2/fc3 head (+folded BN, ReLU, identity in b6), batched over B.
# ---------------------------------------------------------------------------
def _fc_head_kernel(g_ref, w4_ref, b4_ref, w5_ref, b5_ref, w6_ref, b6_ref,
                    out_ref):
    # g_ref: (B, C3) bf16 pooled features. out_ref: (B, k*k) f32.
    h = jnp.dot(g_ref[...], w4_ref[...], preferred_element_type=jnp.float32)
    h = jnp.maximum(h + b4_ref[...], 0.0).astype(jnp.bfloat16)      # fc1+bn4+relu
    h = jnp.dot(h, w5_ref[...], preferred_element_type=jnp.float32)
    h = jnp.maximum(h + b5_ref[...], 0.0).astype(jnp.bfloat16)      # fc2+bn5+relu
    out_ref[...] = (jnp.dot(h, w6_ref[...], preferred_element_type=jnp.float32)
                    + b6_ref[...])                                   # fc3 (+ eye via bias)


# ---------------------------------------------------------------------------
# pallas_call wrappers
# ---------------------------------------------------------------------------
def _const_spec(arr):
    nd = arr.ndim
    return pl.BlockSpec(arr.shape, lambda i, _nd=nd: (0,) * _nd)


def _conv_pool(x_pad, fp):
    B = x_pad.shape[0]
    weights = (fp["w1"], fp["b1"], fp["w2"], fp["b2"], fp["w3"], fp["b3"])
    in_specs = [pl.BlockSpec((1, KP, N_POINTS), lambda b: (b, 0, 0))]
    in_specs += [_const_spec(a) for a in weights]
    out_specs = pl.BlockSpec((1, 1, C3), lambda b: (b, 0, 0))
    pooled = pl.pallas_call(
        _conv_pool_kernel,
        out_shape=jax.ShapeDtypeStruct((B, 1, C3), jnp.bfloat16),
        grid_spec=pltpu.PrefetchScalarGridSpec(
            num_scalar_prefetch=0,
            grid=(B,),
            in_specs=in_specs,
            out_specs=out_specs,
        ),
        compiler_params=pltpu.CompilerParams(
            dimension_semantics=("parallel",),   # B>=2 -> both TCs on v7x
            vmem_limit_bytes=VMEM_LIMIT,
        ),
    )(x_pad, *weights)
    return pooled.reshape(B, C3)


def _fc_head(pooled, fp, k):
    B = pooled.shape[0]
    weights = (fp["w4"], fp["b4"], fp["w5"], fp["b5"], fp["w6"], fp["b6"])
    in_specs = [_const_spec(pooled)] + [_const_spec(a) for a in weights]
    out_specs = pl.BlockSpec((B, k * k), lambda i: (0, 0))
    return pl.pallas_call(
        _fc_head_kernel,
        out_shape=jax.ShapeDtypeStruct((B, k * k), jnp.float32),
        grid_spec=pltpu.PrefetchScalarGridSpec(
            num_scalar_prefetch=0,
            grid=(1,),
            in_specs=in_specs,
            out_specs=out_specs,
        ),
        compiler_params=pltpu.CompilerParams(
            dimension_semantics=("arbitrary",),
            vmem_limit_bytes=VMEM_LIMIT,
        ),
    )(pooled, *weights)


def tnet_forward(x_ncl, fp, k=K):
    """x_ncl: (B, k, N) float32 (PyTorch NCL layout). Returns (B, k, k) float32."""
    B, C, N = x_ncl.shape
    assert C == k and N == N_POINTS
    # Keep NCL layout; zero-pad channels k -> KP on the sublane axis; bf16 operands.
    x_pad = jnp.pad(x_ncl, ((0, 0), (0, KP - k), (0, 0))).astype(jnp.bfloat16)
    pooled = _conv_pool(x_pad, fp)        # (B, 1024) bf16
    out = _fc_head(pooled, fp, k)         # (B, k*k) f32
    return out.reshape(B, k, k)


# ---------------------------------------------------------------------------
# Parameters: raw (PyTorch-layer-shaped) and folded (kernel-ready).
# ---------------------------------------------------------------------------
def make_params(key, k=K):
    def dense(key, fan_in, fan_out):
        k1, k2 = jax.random.split(key)
        bound = 1.0 / np.sqrt(fan_in)
        w = jax.random.uniform(k1, (fan_in, fan_out), jnp.float32, -bound, bound)
        b = jax.random.uniform(k2, (1, fan_out), jnp.float32, -bound, bound)
        return w, b

    def bn(key, c):
        k1, k2 = jax.random.split(key)
        gamma = jax.random.uniform(k1, (1, c), jnp.float32, 0.5, 1.5)
        beta = jax.random.uniform(k2, (1, c), jnp.float32, -0.1, 0.1)
        mean = jnp.zeros((1, c), jnp.float32)
        var = jnp.ones((1, c), jnp.float32)
        scale = gamma / jnp.sqrt(var + BN_EPS)
        shift = beta - mean * scale
        return scale, shift

    keys = jax.random.split(key, 11)
    p = {}
    p["w1"], p["b1"] = dense(keys[0], k, C1)        # conv1: k   -> 64
    p["s1"], p["t1"] = bn(keys[1], C1)
    p["w2"], p["b2"] = dense(keys[2], C1, C2)       # conv2: 64  -> 128
    p["s2"], p["t2"] = bn(keys[3], C2)
    p["w3"], p["b3"] = dense(keys[4], C2, C3)       # conv3: 128 -> 1024
    p["s3"], p["t3"] = bn(keys[5], C3)
    p["w4"], p["b4"] = dense(keys[6], C3, 512)      # fc1
    p["s4"], p["t4"] = bn(keys[7], 512)
    p["w5"], p["b5"] = dense(keys[8], 512, 256)     # fc2
    p["s5"], p["t5"] = bn(keys[9], 256)
    p["w6"], p["b6"] = dense(keys[10], 256, k * k)  # fc3
    return p


def fold_params(p, k=K):
    """Fold inference-mode BatchNorm into weights/bias, fold eye(k) into the fc3
    bias, and cast matmul operands to bf16 (biases stay f32)."""
    def fold(w, b, s, t):
        wf = (w * s).astype(jnp.bfloat16)           # per-output-channel scale
        bf = (b * s + t).astype(jnp.float32)
        return wf, bf

    fp = {}
    w1, fp["b1"] = fold(p["w1"], p["b1"], p["s1"], p["t1"])
    fp["w1"] = jnp.pad(w1, ((0, KP - k), (0, 0)))   # zero rows for padded channels
    fp["w2"], fp["b2"] = fold(p["w2"], p["b2"], p["s2"], p["t2"])
    fp["w3"], fp["b3"] = fold(p["w3"], p["b3"], p["s3"], p["t3"])
    fp["w4"], fp["b4"] = fold(p["w4"], p["b4"], p["s4"], p["t4"])
    fp["w5"], fp["b5"] = fold(p["w5"], p["b5"], p["s5"], p["t5"])
    fp["w6"] = p["w6"].astype(jnp.bfloat16)
    eye_flat = jnp.eye(k, dtype=jnp.float32).reshape(1, k * k)
    fp["b6"] = (p["b6"] + eye_flat).astype(jnp.float32)
    return fp


# ---------------------------------------------------------------------------
# Pure-JAX reference (same folded bf16 params / op order, no Pallas).
# ---------------------------------------------------------------------------
def tnet_reference(x_ncl, fp, k=K):
    B = x_ncl.shape[0]
    x = jnp.transpose(x_ncl, (0, 2, 1)).astype(jnp.bfloat16)       # (B, N, k)
    w1 = fp["w1"][:k]                                              # drop padded rows

    def lin(h, w, b):
        return jnp.dot(h, w, preferred_element_type=jnp.float32) + b

    h = jnp.maximum(lin(x, w1, fp["b1"]), 0.0).astype(jnp.bfloat16)
    h = jnp.maximum(lin(h, fp["w2"], fp["b2"]), 0.0).astype(jnp.bfloat16)
    z = jnp.dot(h, fp["w3"], preferred_element_type=jnp.float32)   # (B, N, 1024)
    g = jnp.max(z, axis=1)                                         # global max pool
    g = jnp.maximum(g + fp["b3"], 0.0).astype(jnp.bfloat16)        # (B, 1024)
    h = jnp.maximum(lin(g, fp["w4"], fp["b4"]), 0.0).astype(jnp.bfloat16)
    h = jnp.maximum(lin(h, fp["w5"], fp["b5"]), 0.0).astype(jnp.bfloat16)
    out = jnp.dot(h, fp["w6"], preferred_element_type=jnp.float32) + fp["b6"]
    return out.reshape(B, k, k)


if __name__ == "__main__":
    key = jax.random.PRNGKey(0)
    pkey, xkey = jax.random.split(key)
    raw = make_params(pkey, K)
    fp = fold_params(raw, K)

    B = 2
    x = jax.random.normal(xkey, (B, K, N_POINTS), jnp.float32)  # PyTorch NCL input

    out = tnet_forward(x, fp, K)
    out = jax.block_until_ready(out)

    ref = tnet_reference(x, fp, K)
    np.testing.assert_allclose(np.asarray(out), np.asarray(ref),
                               rtol=1e-2, atol=1e-2)

    print("KERNEL_OK")
</pallas_src>

<mosaic_0001>
module attributes {stable_mosaic.version = 11 : i64} {
  func.func @_conv_pool_kernel(%arg0: i32, %arg1: memref<1x8x1024xbf16, #tpu.memory_space<vmem>>, %arg2: memref<8x64xbf16, #tpu.memory_space<vmem>>, %arg3: memref<1x64xf32, #tpu.memory_space<vmem>>, %arg4: memref<64x128xbf16, #tpu.memory_space<vmem>>, %arg5: memref<1x128xf32, #tpu.memory_space<vmem>>, %arg6: memref<128x1024xbf16, #tpu.memory_space<vmem>>, %arg7: memref<1x1024xf32, #tpu.memory_space<vmem>>, %arg8: memref<1x1x1024xbf16, #tpu.memory_space<vmem>>) attributes {dimension_semantics = [#tpu.dimension_semantics<parallel>], iteration_bounds = array<i64: 2>, scalar_prefetch = 0 : i64, scratch_operands = 0 : i64, tpu.core_type = #tpu.core_type<tc>, window_params = [{transform_indices = @transform_0, window_bounds = array<i64: 1, 8, 1024>}, {pipeline_mode = #tpu.pipeline_mode<synchronous>, transform_indices = @transform_1, window_bounds = array<i64: 8, 64>}, {pipeline_mode = #tpu.pipeline_mode<synchronous>, transform_indices = @transform_2, window_bounds = array<i64: 1, 64>}, {pipeline_mode = #tpu.pipeline_mode<synchronous>, transform_indices = @transform_3, window_bounds = array<i64: 64, 128>}, {pipeline_mode = #tpu.pipeline_mode<synchronous>, transform_indices = @transform_4, window_bounds = array<i64: 1, 128>}, {pipeline_mode = #tpu.pipeline_mode<synchronous>, transform_indices = @transform_5, window_bounds = array<i64: 128, 1024>}, {pipeline_mode = #tpu.pipeline_mode<synchronous>, transform_indices = @transform_6, window_bounds = array<i64: 1, 1024>}, {transform_indices = @transform_7, window_bounds = array<i64: 1, 1, 1024>}]} {
    %c0 = arith.constant 0 : index
    %c0_0 = arith.constant 0 : index
    %0 = vector.load %arg2[%c0, %c0_0] : memref<8x64xbf16, #tpu.memory_space<vmem>>, vector<8x64xbf16>
    %c0_1 = arith.constant 0 : index
    %c0_2 = arith.constant 0 : index
    %1 = vector.load %arg4[%c0_1, %c0_2] : memref<64x128xbf16, #tpu.memory_space<vmem>>, vector<64x128xbf16>
    %c0_3 = arith.constant 0 : index
    %c0_4 = arith.constant 0 : index
    %2 = vector.load %arg6[%c0_3, %c0_4] : memref<128x1024xbf16, #tpu.memory_space<vmem>>, vector<128x1024xbf16>
    %c0_5 = arith.constant 0 : index
    %c0_6 = arith.constant 0 : index
    %3 = vector.load %arg3[%c0_5, %c0_6] : memref<1x64xf32, #tpu.memory_space<vmem>>, vector<1x64xf32>
    %c0_7 = arith.constant 0 : index
    %c0_8 = arith.constant 0 : index
    %4 = vector.load %arg5[%c0_7, %c0_8] : memref<1x128xf32, #tpu.memory_space<vmem>>, vector<1x128xf32>
    %c0_9 = arith.constant 0 : index
    %c0_10 = arith.constant 0 : index
    %5 = vector.load %arg7[%c0_9, %c0_10] : memref<1x1024xf32, #tpu.memory_space<vmem>>, vector<1x1024xf32>
    %cst = arith.constant 0xFF800000 : f32
    %6 = vector.broadcast %cst : f32 to vector<1x1024xf32>
    %c0_11 = arith.constant 0 : index
    %c0_12 = arith.constant 0 : index
    %c0_13 = arith.constant 0 : index
    %7 = vector.load %arg1[%c0_11, %c0_12, %c0_13] : memref<1x8x1024xbf16, #tpu.memory_space<vmem>>, vector<1x8x256xbf16>
    %8 = vector.shape_cast %7 : vector<1x8x256xbf16> to vector<8x256xbf16>
    %cst_14 = arith.constant dense<0.000000e+00> : vector<256x64xf32>
    %9 = tpu.matmul %8, %0, %cst_14 {dimension_numbers = #tpu.dot_dimension_numbers<[0], [0], [1], [1], [0, 1, 1, 1], [], []>} : vector<8x256xbf16>, vector<8x64xbf16>, vector<256x64xf32> -> vector<256x64xf32>
    %10 = vector.broadcast %3 : vector<1x64xf32> to vector<256x64xf32>
    %11 = arith.addf %9, %10 : vector<256x64xf32>
    %cst_15 = arith.constant 0.000000e+00 : f32
    %12 = vector.broadcast %cst_15 : f32 to vector<256x64xf32>
    %13 = arith.maximumf %11, %12 : vector<256x64xf32>
    %14 = arith.truncf %13 : vector<256x64xf32> to vector<256x64xbf16>
    %cst_16 = arith.constant dense<0.000000e+00> : vector<256x128xf32>
    %15 = tpu.matmul %14, %1, %cst_16 {dimension_numbers = #tpu.dot_dimension_numbers<[1], [0], [0], [1], [0, 0, 1, 1], [], []>} : vector<256x64xbf16>, vector<64x128xbf16>, vector<256x128xf32> -> vector<256x128xf32>
    %16 = vector.broadcast %4 : vector<1x128xf32> to vector<256x128xf32>
    %17 = arith.addf %15, %16 : vector<256x128xf32>
    %cst_17 = arith.constant 0.000000e+00 : f32
    %18 = vector.broadcast %cst_17 : f32 to vector<256x128xf32>
    %19 = arith.maximumf %17, %18 : vector<256x128xf32>
    %20 = arith.truncf %19 : vector<256x128xf32> to vector<256x128xbf16>
    %cst_18 = arith.constant dense<0.000000e+00> : vector<256x1024xf32>
    %21 = tpu.matmul %20, %2, %cst_18 {dimension_numbers = #tpu.dot_dimension_numbers<[1], [0], [0], [1], [0, 0, 1, 1], [], []>} : vector<256x128xbf16>, vector<128x1024xbf16>, vector<256x1024xf32> -> vector<256x1024xf32>
    %cst_19 = arith.constant dense<0xFF800000> : vector<1024xf32>
    %22 = vector.multi_reduction <maximumf>, %21, %cst_19 [0] : vector<256x1024xf32> to vector<1024xf32>
    %23 = vector.shape_cast %22 : vector<1024xf32> to vector<1x1024xf32>
    %24 = arith.maximumf %6, %23 : vector<1x1024xf32>
    %c0_20 = arith.constant 0 : index
    %c0_21 = arith.constant 0 : index
    %c256 = arith.constant 256 : index
    %25 = vector.load %arg1[%c0_20, %c0_21, %c256] : memref<1x8x1024xbf16, #tpu.memory_space<vmem>>, vector<1x8x256xbf16>
    %26 = vector.shape_cast %25 : vector<1x8x256xbf16> to vector<8x256xbf16>
    %cst_22 = arith.constant dense<0.000000e+00> : vector<256x64xf32>
    %27 = tpu.matmul %26, %0, %cst_22 {dimension_numbers = #tpu.dot_dimension_numbers<[0], [0], [1], [1], [0, 1, 1, 1], [], []>} : vector<8x256xbf16>, vector<8x64xbf16>, vector<256x64xf32> -> vector<256x64xf32>
    %28 = vector.broadcast %3 : vector<1x64xf32> to vector<256x64xf32>
    %29 = arith.addf %27, %28 : vector<256x64xf32>
    %cst_23 = arith.constant 0.000000e+00 : f32
    %30 = vector.broadcast %cst_23 : f32 to vector<256x64xf32>
    %31 = arith.maximumf %29, %30 : vector<256x64xf32>
    %32 = arith.truncf %31 : vector<256x64xf32> to vector<256x64xbf16>
    %cst_24 = arith.constant dense<0.000000e+00> : vector<256x128xf32>
    %33 = tpu.matmul %32, %1, %cst_24 {dimension_numbers = #tpu.dot_dimension_numbers<[1], [0], [0], [1], [0, 0, 1, 1], [], []>} : vector<256x64xbf16>, vector<64x128xbf16>, vector<256x128xf32> -> vector<256x128xf32>
    %34 = vector.broadcast %4 : vector<1x128xf32> to vector<256x128xf32>
    %35 = arith.addf %33, %34 : vector<256x128xf32>
    %cst_25 = arith.constant 0.000000e+00 : f32
    %36 = vector.broadcast %cst_25 : f32 to vector<256x128xf32>
    %37 = arith.maximumf %35, %36 : vector<256x128xf32>
    %38 = arith.truncf %37 : vector<256x128xf32> to vector<256x128xbf16>
    %cst_26 = arith.constant dense<0.000000e+00> : vector<256x1024xf32>
    %39 = tpu.matmul %38, %2, %cst_26 {dimension_numbers = #tpu.dot_dimension_numbers<[1], [0], [0], [1], [0, 0, 1, 1], [], []>} : vector<256x128xbf16>, vector<128x1024xbf16>, vector<256x1024xf32> -> vector<256x1024xf32>
    %cst_27 = arith.constant dense<0xFF800000> : vector<1024xf32>
    %40 = vector.multi_reduction <maximumf>, %39, %cst_27 [0] : vector<256x1024xf32> to vector<1024xf32>
    %41 = vector.shape_cast %40 : vector<1024xf32> to vector<1x1024xf32>
    %42 = arith.maximumf %24, %41 : vector<1x1024xf32>
    %c0_28 = arith.constant 0 : index
    %c0_29 = arith.constant 0 : index
    %c512 = arith.constant 512 : index
    %43 = vector.load %arg1[%c0_28, %c0_29, %c512] : memref<1x8x1024xbf16, #tpu.memory_space<vmem>>, vector<1x8x256xbf16>
    %44 = vector.shape_cast %43 : vector<1x8x256xbf16> to vector<8x256xbf16>
    %cst_30 = arith.constant dense<0.000000e+00> : vector<256x64xf32>
    %45 = tpu.matmul %44, %0, %cst_30 {dimension_numbers = #tpu.dot_dimension_numbers<[0], [0], [1], [1], [0, 1, 1, 1], [], []>} : vector<8x256xbf16>, vector<8x64xbf16>, vector<256x64xf32> -> vector<256x64xf32>
    %46 = vector.broadcast %3 : vector<1x64xf32> to vector<256x64xf32>
    %47 = arith.addf %45, %46 : vector<256x64xf32>
    %cst_31 = arith.constant 0.000000e+00 : f32
    %48 = vector.broadcast %cst_31 : f32 to vector<256x64xf32>
    %49 = arith.maximumf %47, %48 : vector<256x64xf32>
    %50 = arith.truncf %49 : vector<256x64xf32> to vector<256x64xbf16>
    %cst_32 = arith.constant dense<0.000000e+00> : vector<256x128xf32>
    %51 = tpu.matmul %50, %1, %cst_32 {dimension_numbers = #tpu.dot_dimension_numbers<[1], [0], [0], [1], [0, 0, 1, 1], [], []>} : vector<256x64xbf16>, vector<64x128xbf16>, vector<256x128xf32> -> vector<256x128xf32>
    %52 = vector.broadcast %4 : vector<1x128xf32> to vector<256x128xf32>
    %53 = arith.addf %51, %52 : vector<256x128xf32>
    %cst_33 = arith.constant 0.000000e+00 : f32
    %54 = vector.broadcast %cst_33 : f32 to vector<256x128xf32>
    %55 = arith.maximumf %53, %54 : vector<256x128xf32>
    %56 = arith.truncf %55 : vector<256x128xf32> to vector<256x128xbf16>
    %cst_34 = arith.constant dense<0.000000e+00> : vector<256x1024xf32>
    %57 = tpu.matmul %56, %2, %cst_34 {dimension_numbers = #tpu.dot_dimension_numbers<[1], [0], [0], [1], [0, 0, 1, 1], [], []>} : vector<256x128xbf16>, vector<128x1024xbf16>, vector<256x1024xf32> -> vector<256x1024xf32>
    %cst_35 = arith.constant dense<0xFF800000> : vector<1024xf32>
    %58 = vector.multi_reduction <maximumf>, %57, %cst_35 [0] : vector<256x1024xf32> to vector<1024xf32>
    %59 = vector.shape_cast %58 : vector<1024xf32> to vector<1x1024xf32>
    %60 = arith.maximumf %42, %59 : vector<1x1024xf32>
    %c0_36 = arith.constant 0 : index
    %c0_37 = arith.constant 0 : index
    %c768 = arith.constant 768 : index
    %61 = vector.load %arg1[%c0_36, %c0_37, %c768] : memref<1x8x1024xbf16, #tpu.memory_space<vmem>>, vector<1x8x256xbf16>
    %62 = vector.shape_cast %61 : vector<1x8x256xbf16> to vector<8x256xbf16>
    %cst_38 = arith.constant dense<0.000000e+00> : vector<256x64xf32>
    %63 = tpu.matmul %62, %0, %cst_38 {dimension_numbers = #tpu.dot_dimension_numbers<[0], [0], [1], [1], [0, 1, 1, 1], [], []>} : vector<8x256xbf16>, vector<8x64xbf16>, vector<256x64xf32> -> vector<256x64xf32>
    %64 = vector.broadcast %3 : vector<1x64xf32> to vector<256x64xf32>
    %65 = arith.addf %63, %64 : vector<256x64xf32>
    %cst_39 = arith.constant 0.000000e+00 : f32
    %66 = vector.broadcast %cst_39 : f32 to vector<256x64xf32>
    %67 = arith.maximumf %65, %66 : vector<256x64xf32>
    %68 = arith.truncf %67 : vector<256x64xf32> to vector<256x64xbf16>
    %cst_40 = arith.constant dense<0.000000e+00> : vector<256x128xf32>
    %69 = tpu.matmul %68, %1, %cst_40 {dimension_numbers = #tpu.dot_dimension_numbers<[1], [0], [0], [1], [0, 0, 1, 1], [], []>} : vector<256x64xbf16>, vector<64x128xbf16>, vector<256x128xf32> -> vector<256x128xf32>
    %70 = vector.broadcast %4 : vector<1x128xf32> to vector<256x128xf32>
    %71 = arith.addf %69, %70 : vector<256x128xf32>
    %cst_41 = arith.constant 0.000000e+00 : f32
    %72 = vector.broadcast %cst_41 : f32 to vector<256x128xf32>
    %73 = arith.maximumf %71, %72 : vector<256x128xf32>
    %74 = arith.truncf %73 : vector<256x128xf32> to vector<256x128xbf16>
    %cst_42 = arith.constant dense<0.000000e+00> : vector<256x1024xf32>
    %75 = tpu.matmul %74, %2, %cst_42 {dimension_numbers = #tpu.dot_dimension_numbers<[1], [0], [0], [1], [0, 0, 1, 1], [], []>} : vector<256x128xbf16>, vector<128x1024xbf16>, vector<256x1024xf32> -> vector<256x1024xf32>
    %cst_43 = arith.constant dense<0xFF800000> : vector<1024xf32>
    %76 = vector.multi_reduction <maximumf>, %75, %cst_43 [0] : vector<256x1024xf32> to vector<1024xf32>
    %77 = vector.shape_cast %76 : vector<1024xf32> to vector<1x1024xf32>
    %78 = arith.maximumf %60, %77 : vector<1x1024xf32>
    %79 = arith.addf %78, %5 : vector<1x1024xf32>
    %cst_44 = arith.constant 0.000000e+00 : f32
    %80 = vector.broadcast %cst_44 : f32 to vector<1x1024xf32>
    %81 = arith.maximumf %79, %80 : vector<1x1024xf32>
    %82 = arith.truncf %81 : vector<1x1024xf32> to vector<1x1024xbf16>
    %c0_45 = arith.constant 0 : index
    %c0_46 = arith.constant 0 : index
    %c0_47 = arith.constant 0 : index
    %83 = vector.load %arg8[%c0_45, %c0_46, %c0_47] : memref<1x1x1024xbf16, #tpu.memory_space<vmem>>, vector<1x1x1024xbf16>
    %84 = vector.shape_cast %83 : vector<1x1x1024xbf16> to vector<1x1024xbf16>
    %85 = vector.shape_cast %82 : vector<1x1024xbf16> to vector<1x1x1024xbf16>
    tpu.vector_store %arg8[%c0_45, %c0_46, %c0_47], %85 {strides = array<i32>} : memref<1x1x1024xbf16, #tpu.memory_space<vmem>>, vector<1x1x1024xbf16>,
    return
  }
  func.func @transform_0(%arg0: i32) -> (i32, i32, i32) {
    %c0_i32 = arith.constant 0 : i32
    %c0_i32_0 = arith.constant 0 : i32
    %c0_i32_1 = arith.constant 0 : i32
    return %arg0, %c0_i32, %c0_i32_0 : i32, i32, i32
  }
  func.func @transform_1(%arg0: i32) -> (i32, i32) {
    %c0_i32 = arith.constant 0 : i32
    %c0_i32_0 = arith.constant 0 : i32
    %c0_i32_1 = arith.constant 0 : i32
    return %c0_i32, %c0_i32_0 : i32, i32
  }
  func.func @transform_2(%arg0: i32) -> (i32, i32) {
    %c0_i32 = arith.constant 0 : i32
    %c0_i32_0 = arith.constant 0 : i32
    %c0_i32_1 = arith.constant 0 : i32
    return %c0_i32, %c0_i32_0 : i32, i32
  }
  func.func @transform_3(%arg0: i32) -> (i32, i32) {
    %c0_i32 = arith.constant 0 : i32
    %c0_i32_0 = arith.constant 0 : i32
    %c0_i32_1 = arith.constant 0 : i32
    return %c0_i32, %c0_i32_0 : i32, i32
  }
  func.func @transform_4(%arg0: i32) -> (i32, i32) {
    %c0_i32 = arith.constant 0 : i32
    %c0_i32_0 = arith.constant 0 : i32
    %c0_i32_1 = arith.constant 0 : i32
    return %c0_i32, %c0_i32_0 : i32, i32
  }
  func.func @transform_5(%arg0: i32) -> (i32, i32) {
    %c0_i32 = arith.constant 0 : i32
    %c0_i32_0 = arith.constant 0 : i32
    %c0_i32_1 = arith.constant 0 : i32
    return %c0_i32, %c0_i32_0 : i32, i32
  }
  func.func @transform_6(%arg0: i32) -> (i32, i32) {
    %c0_i32 = arith.constant 0 : i32
    %c0_i32_0 = arith.constant 0 : i32
    %c0_i32_1 = arith.constant 0 : i32
    return %c0_i32, %c0_i32_0 : i32, i32
  }
  func.func @transform_7(%arg0: i32) -> (i32, i32, i32) {
    %c0_i32 = arith.constant 0 : i32
    %c0_i32_0 = arith.constant 0 : i32
    %c0_i32_1 = arith.constant 0 : i32
    return %arg0, %c0_i32, %c0_i32_0 : i32, i32, i32
  }
}

</mosaic_0001>

<llo_original>
// kernel: tpu_custom_call.1
$region0: #{tpu_custom_call.1}
  #allocation0 [shape = 'u32[]', space=smem, size = 0x4, offset = 0x4, fixed_abs, tag = 'smem constant byte address 0x4 - core index']
  #allocation1 [shape = 'u32[144,128]{1,0:T(1,128)}', space=vmem, size = 0x12000, scoped, tag = 'internal scratch']
  %s0 = inlined_call_operand.hbm [shape: bf16[2,8,1024], index: 0, kind: input, shape index: {}]
  %s1 = inlined_call_operand.hbm [shape: bf16[8,64], index: 1, kind: input, shape index: {}]
  %s2 = inlined_call_operand.vmem [shape: f32[1,64], index: 2, kind: input, shape index: {}]
  %s3 = inlined_call_operand.hbm [shape: bf16[64,128], index: 3, kind: input, shape index: {}]
  %s4 = inlined_call_operand.vmem [shape: f32[1,128], index: 4, kind: input, shape index: {}]
  %s5 = inlined_call_operand.hbm [shape: bf16[128,1024], index: 5, kind: input, shape index: {}]
  %s6 = inlined_call_operand.vmem [shape: f32[1,1024], index: 6, kind: input, shape index: {}]
  %s7 = inlined_call_operand.vmem [shape: bf16[2,1,1024], index: 7, kind: output, shape index: {}]
  %s8 = sld [smem:[#allocation0]]
  $region77: #{tpu_custom_call.1} parent=0
    _
  %s10 = ssub.s32 1, %s8
  %s11 = scalar_select 0, %s10, %s8
  $region1: #{tpu_custom_call.1} parent=0
    #allocation2 [shape = 'u8[32768]{0}', space=vmem, size = 0x8000, scoped, tag = 'input window, operand 0']
    #allocation3 [shape = 's32[2]{0}', space=sflag, size = 0x8, scoped, tag = 'scoped memory for tpu_custom_call.1']
    #allocation4 [shape = 'u8[2048]{0}', space=vmem, size = 0x800, scoped, tag = 'input window, operand 1, single buffered']
    #allocation5 [shape = 's32[1]{0}', space=sflag, size = 0x4, scoped, tag = 'scoped memory for tpu_custom_call.1']
    #allocation6 [shape = 'u8[16384]{0}', space=vmem, size = 0x4000, scoped, tag = 'input window, operand 3, single buffered']
    #allocation7 [shape = 'u8[262144]{0}', space=vmem, size = 0x40000, scoped, tag = 'input window, operand 5, single buffered']
    #allocation8 [shape = 's32[1]{0}', space=sflag, size = 0x4, scoped, tag = 'scoped memory for tpu_custom_call.1']
    %12 = vsyncpa [#allocation3], 0
    %s13 = scalar_lea.sflag [#allocation3], 1
    %14 = vsyncpa %s13, 0
    %15 = vsyncpa [#allocation5], 0
    %16 = vsyncpa [#allocation8], 0
    loop: start=0, step=1, limit=4
    $region2: #{tpu_custom_call.1} parent=1 // loop_pre_header
      _
    $region3: #{tpu_custom_call.1} parent=1 // loop_header
      %s18 = sphi 0, %s22
      %p19 = scmp.ge.s32.totalorder %s18, 4
      %s28 = sphi 0, %s30
      %s31 = sphi 0, %s28
      %s32 = sphi 0, %s31
      %s48 = sphi 0, %s32
      %s52 = sphi 0, %s52
      %s54 = sphi 0, %s52
      %s55 = sphi 0, %s54
      %s69 = sphi 0, %s55
      %s73 = sphi 0, %s73
      %s75 = sphi 0, %s73
      %s76 = sphi 0, %s75
      %s90 = sphi 0, %s76
      %s94 = sphi 0, %s94
      %s96 = sphi 0, %s94
      %s97 = sphi 0, %s96
      %s111 = sphi 0, %s97
      %s115 = sphi 0, %s115
      %s117 = sphi 0, %s115
      %s118 = sphi 0, %s117
      %s132 = sphi 0, %s118
      %s136 = sphi 0, %s136
      %s138 = sphi 0, %s136
      %s139 = sphi 0, %s138
      %s153 = sphi 0, %s139
      %s157 = sphi 0, %s157
      %s159 = sphi 0, %s157
      %s160 = sphi 0, %s159
      %s174 = sphi 0, %s160
      %s180 = sphi 0, %s182
      %s183 = sphi 0, %s180
      %s184 = sphi 0, %s183
      %s200 = sphi 0, %s184
    $region4: #{tpu_custom_call.1} parent=1 // loop_header_branch
      %21 = sbr.rel (%p19) target = $region8
    $region5: #{tpu_custom_call.1} parent=1 // loop_body
      %s23 = ssub.s32 %s18, 1
      %s24 = ssub.s32 %s18, 2
      %s25 = sadd.s32 %s18, 1
      %s26 = ssub.s32 %s18, %s25
      %p27 = scmp.eq.s32.totalorder %s26, 0
      %s29 = sadd.s32 %s28, 1
      %s30 = scalar_select %p27, %s28, %s29
      %p33 = pneg %p27
      %p34 = scmp.eq.s32.totalorder %s18, 1
      %p35 = por %p33, %p34
      %p36 = scmp.ne.s32.totalorder %s28, %s31
      %p37 = scmp.eq.s32.totalorder %s18, 0
      %p38 = por %p36, %p37
      %p39 = scmp.ne.s32.totalorder %s28, %s31
      %p40 = scmp.eq.s32.totalorder %s23, 1
      %p41 = por %p39, %p40
      %p42 = scmp.ne.s32.totalorder %s31, %s32
      %p43 = scmp.eq.s32.totalorder %s23, 0
      %p44 = por %p42, %p43
      %p45 = scmp.ne.s32.totalorder %s31, %s32
      %p46 = scmp.eq.s32.totalorder %s24, 1
      %p47 = por %p45, %p46
      %p49 = scmp.ne.s32.totalorder %s32, %s48
      %p50 = scmp.eq.s32.totalorder %s24, 0
      %p51 = por %p49, %p50
      %s53 = sadd.s32 %s52, 1
      %p56 = scmp.eq.s32.totalorder %s18, 1
      %p57 = scmp.ne.s32.totalorder %s52, %s54
      %p58 = scmp.eq.s32.totalorder %s18, 0
      %p59 = por %p57, %p58
      %p60 = scmp.ne.s32.totalorder %s52, %s54
      %p61 = scmp.eq.s32.totalorder %s23, 1
      %p62 = por %p60, %p61
      %p63 = scmp.ne.s32.totalorder %s54, %s55
      %p64 = scmp.eq.s32.totalorder %s23, 0
      %p65 = por %p63, %p64
      %p66 = scmp.ne.s32.totalorder %s54, %s55
      %p67 = scmp.eq.s32.totalorder %s24, 1
      %p68 = por %p66, %p67
      %p70 = scmp.ne.s32.totalorder %s55, %s69
      %p71 = scmp.eq.s32.totalorder %s24, 0
      %p72 = por %p70, %p71
      %s74 = sadd.s32 %s73, 1
      %p77 = scmp.eq.s32.totalorder %s18, 1
      %p78 = scmp.ne.s32.totalorder %s73, %s75
      %p79 = scmp.eq.s32.totalorder %s18, 0
      %p80 = por %p78, %p79
      %p81 = scmp.ne.s32.totalorder %s73, %s75
      %p82 = scmp.eq.s32.totalorder %s23, 1
      %p83 = por %p81, %p82
      %p84 = scmp.ne.s32.totalorder %s75, %s76
      %p85 = scmp.eq.s32.totalorder %s23, 0
      %p86 = por %p84, %p85
      %p87 = scmp.ne.s32.totalorder %s75, %s76
      %p88 = scmp.eq.s32.totalorder %s24, 1
      %p89 = por %p87, %p88
      %p91 = scmp.ne.s32.totalorder %s76, %s90
      %p92 = scmp.eq.s32.totalorder %s24, 0
      %p93 = por %p91, %p92
      %s95 = sadd.s32 %s94, 1
      %p98 = scmp.eq.s32.totalorder %s18, 1
      %p99 = scmp.ne.s32.totalorder %s94, %s96
      %p100 = scmp.eq.s32.totalorder %s18, 0
      %p101 = por %p99, %p100
      %p102 = scmp.ne.s32.totalorder %s94, %s96
      %p103 = scmp.eq.s32.totalorder %s23, 1
      %p104 = por %p102, %p103
      %p105 = scmp.ne.s32.totalorder %s96, %s97
      %p106 = scmp.eq.s32.totalorder %s23, 0
      %p107 = por %p105, %p106
      %p108 = scmp.ne.s32.totalorder %s96, %s97
      %p109 = scmp.eq.s32.totalorder %s24, 1
      %p110 = por %p108, %p109
      %p112 = scmp.ne.s32.totalorder %s97, %s111
      %p113 = scmp.eq.s32.totalorder %s24, 0
      %p114 = por %p112, %p113
      %s116 = sadd.s32 %s115, 1
      %p119 = scmp.eq.s32.totalorder %s18, 1
      %p120 = scmp.ne.s32.totalorder %s115, %s117
      %p121 = scmp.eq.s32.totalorder %s18, 0
      %p122 = por %p120, %p121
      %p123 = scmp.ne.s32.totalorder %s115, %s117
      %p124 = scmp.eq.s32.totalorder %s23, 1
      %p125 = por %p123, %p124
      %p126 = scmp.ne.s32.totalorder %s117, %s118
      %p127 = scmp.eq.s32.totalorder %s23, 0
      %p128 = por %p126, %p127
      %p129 = scmp.ne.s32.totalorder %s117, %s118
      %p130 = scmp.eq.s32.totalorder %s24, 1
      %p131 = por %p129, %p130
      %p133 = scmp.ne.s32.totalorder %s118, %s132
      %p134 = scmp.eq.s32.totalorder %s24, 0
      %p135 = por %p133, %p134
      %s137 = sadd.s32 %s136, 1
      %p140 = scmp.eq.s32.totalorder %s18, 1
      %p141 = scmp.ne.s32.totalorder %s136, %s138
      %p142 = scmp.eq.s32.totalorder %s18, 0
      %p143 = por %p141, %p142
      %p144 = scmp.ne.s32.totalorder %s136, %s138
      %p145 = scmp.eq.s32.totalorder %s23, 1
      %p146 = por %p144, %p145
      %p147 = scmp.ne.s32.totalorder %s138, %s139
      %p148 = scmp.eq.s32.totalorder %s23, 0
      %p149 = por %p147, %p148
      %p150 = scmp.ne.s32.totalorder %s138, %s139
      %p151 = scmp.eq.s32.totalorder %s24, 1
      %p152 = por %p150, %p151
      %p154 = scmp.ne.s32.totalorder %s139, %s153
      %p155 = scmp.eq.s32.totalorder %s24, 0
      %p156 = por %p154, %p155
      %s158 = sadd.s32 %s157, 1
      %p161 = scmp.eq.s32.totalorder %s18, 1
      %p162 = scmp.ne.s32.totalorder %s157, %s159
      %p163 = scmp.eq.s32.totalorder %s18, 0
      %p164 = por %p162, %p163
      %p165 = scmp.ne.s32.totalorder %s157, %s159
      %p166 = scmp.eq.s32.totalorder %s23, 1
      %p167 = por %p165, %p166
      %p168 = scmp.ne.s32.totalorder %s159, %s160
      %p169 = scmp.eq.s32.totalorder %s23, 0
      %p170 = por %p168, %p169
      %p171 = scmp.ne.s32.totalorder %s159, %s160
      %p172 = scmp.eq.s32.totalorder %s24, 1
      %p173 = por %p171, %p172
      %p175 = scmp.ne.s32.totalorder %s160, %s174
      %p176 = scmp.eq.s32.totalorder %s24, 0
      %p177 = por %p175, %p176
      %s178 = ssub.s32 %s18, %s25
      %p179 = scmp.eq.s32.totalorder %s178, 0
      %s181 = sadd.s32 %s180, 1
      %s182 = scalar_select %p179, %s180, %s181
      %p185 = pneg %p179
      %p186 = scmp.eq.s32.totalorder %s18, 1
      %p187 = por %p185, %p186
      %p188 = scmp.ne.s32.totalorder %s180, %s183
      %p189 = scmp.eq.s32.totalorder %s18, 0
      %p190 = por %p188, %p189
      %p191 = scmp.ne.s32.totalorder %s180, %s183
      %p192 = scmp.eq.s32.totalorder %s23, 1
      %p193 = por %p191, %p192
      %p194 = scmp.ne.s32.totalorder %s183, %s184
      %p195 = scmp.eq.s32.totalorder %s23, 0
      %p196 = por %p194, %p195
      %p197 = scmp.ne.s32.totalorder %s183, %s184
      %p198 = scmp.eq.s32.totalorder %s24, 1
      %p199 = por %p197, %p198
      %p201 = scmp.ne.s32.totalorder %s184, %s200
      %p202 = scmp.eq.s32.totalorder %s24, 0
      %p203 = por %p201, %p202
      %p204 = scmp.le.s32.totalorder 1, %s18
      %p205 = scmp.lt.s32.totalorder %s18, 3
      %p206 = pnand %p204, %p205
      %p207 = pneg %p206
      // Predicated region
      $region9: #{tpu_custom_call.1} parent=5 // pred_check
        _
      $region10: #{tpu_custom_call.1} parent=5 // pred_check_branch
        %209 = sbr.rel (%p206) target = $region12
      $region11: #{tpu_custom_call.1} parent=5 // pred_region
        %s210 = ssub.s32 %s18, 1
        // Predicated region
        $region13: #{tpu_custom_call.1} parent=11 // pred_check
          %p211 = pneg %p65
        $region14: #{tpu_custom_call.1} parent=11 // pred_check_branch
          %213 = sbr.rel (%p211) target = $region16
        $region15: #{tpu_custom_call.1} parent=11 // pred_region
          %s215 = ssub.s32 64, 64
          %216 = vsyncadd [#allocation5], %s215
          %s218 = sshll.u32 [#allocation4], 4
          %s219 = int_to_ptr.vmem [resolvable:$true] %s218
          %221 = dma.hbm_to_vmem [thread:$0]  %s1, 64, %s219, [#allocation5]
        $region16: #{tpu_custom_call.1} parent=11 // pred_fallthru
          _
        // Predicated region
        $region17: #{tpu_custom_call.1} parent=11 // pred_check
          %p222 = pneg %p86
        $region18: #{tpu_custom_call.1} parent=11 // pred_check_branch
          %224 = sbr.rel (%p222) target = $region20
        $region19: #{tpu_custom_call.1} parent=11 // pred_region
          _
        $region20: #{tpu_custom_call.1} parent=11 // pred_fallthru
          _
        // Predicated region
        $region21: #{tpu_custom_call.1} parent=11 // pred_check
          %p225 = pneg %p107
        $region22: #{tpu_custom_call.1} parent=11 // pred_check_branch
          %227 = sbr.rel (%p225) target = $region24
        $region23: #{tpu_custom_call.1} parent=11 // pred_region
          %s229 = ssub.s32 512, 512
          %230 = vsyncadd [#allocation5], %s229
          %s231 = sshll.u32 [#allocation6], 4
          %s232 = int_to_ptr.vmem [resolvable:$true] %s231
          %237 = dma.hbm_to_vmem [thread:$0]  %s3, 512, %s232, [#allocation5], 64, 64, 4
        $region24: #{tpu_custom_call.1} parent=11 // pred_fallthru
          _
        // Predicated region
        $region25: #{tpu_custom_call.1} parent=11 // pred_check
          %p238 = pneg %p128
        $region26: #{tpu_custom_call.1} parent=11 // pred_check_branch
          %240 = sbr.rel (%p238) target = $region28
        $region27: #{tpu_custom_call.1} parent=11 // pred_region
          _
        $region28: #{tpu_custom_call.1} parent=11 // pred_fallthru
          _
        // Predicated region
        $region29: #{tpu_custom_call.1} parent=11 // pred_check
          %p241 = pneg %p149
        $region30: #{tpu_custom_call.1} parent=11 // pred_check_branch
          %243 = sbr.rel (%p241) target = $region32
        $region31: #{tpu_custom_call.1} parent=11 // pred_region
          %s245 = ssub.s32 8192, 8192
          %246 = vsyncadd [#allocation8], %s245
          %s247 = sshll.u32 [#allocation7], 4
          %s248 = int_to_ptr.vmem [resolvable:$true] %s247
          %253 = dma.hbm_to_vmem [thread:$0]  %s5, 8192, %s248, [#allocation8], 512, 512, 32
        $region32: #{tpu_custom_call.1} parent=11 // pred_fallthru
          _
        // Predicated region
        $region33: #{tpu_custom_call.1} parent=11 // pred_check
          %p254 = pneg %p170
        $region34: #{tpu_custom_call.1} parent=11 // pred_check_branch
          %256 = sbr.rel (%p254) target = $region36
        $region35: #{tpu_custom_call.1} parent=11 // pred_region
          _
        $region36: #{tpu_custom_call.1} parent=11 // pred_fallthru
          _
      $region12: #{tpu_custom_call.1} parent=5 // pred_fallthru
        _
      %p257 = scmp.lt.s32.totalorder %s18, 2
      // Predicated region
      $region37: #{tpu_custom_call.1} parent=5 // pred_check
        %p258 = pneg %p257
      $region38: #{tpu_custom_call.1} parent=5 // pred_check_branch
        %260 = sbr.rel (%p258) target = $region40
      $region39: #{tpu_custom_call.1} parent=5 // pred_region
        // Predicated region
        $region41: #{tpu_custom_call.1} parent=39 // pred_check
          %p261 = pneg %p38
        $region42: #{tpu_custom_call.1} parent=39 // pred_check_branch
          %263 = sbr.rel (%p261) target = $region44
        $region43: #{tpu_custom_call.1} parent=39 // pred_region
          %s264 = sand.u32 %s28, 1
          %s265 = scalar_lea.sflag [#allocation3], %s264
          %s266 = sand.u32 %s28, 1
          %s267 = smul.addr %s266, 32
          %s268 = scalar_lea.vmem [#allocation2], %s267
          %s270 = ssub.s32 512, 512
          %271 = vsyncadd %s265, %s270
          %s272 = smul.addr %s18, 8
          %s273 = smul.addr %s272, 64
          %s274 = scalar_lea.hbm %s0, %s273
          %s276 = sshll.u32 %s268, 4
          %s277 = int_to_ptr.vmem [resolvable:$true] %s276
          %279 = dma.hbm_to_vmem [thread:$0]  %s274, 512, %s277, %s265
        $region44: #{tpu_custom_call.1} parent=39 // pred_fallthru
          _
      $region40: #{tpu_custom_call.1} parent=5 // pred_fallthru
        _
      %p280 = scmp.le.s32.totalorder 1, %s18
      %p281 = scmp.lt.s32.totalorder %s18, 3
      %p282 = pnand %p280, %p281
      %p283 = pneg %p282
      // Predicated region
      $region45: #{tpu_custom_call.1} parent=5 // pred_check
        _
      $region46: #{tpu_custom_call.1} parent=5 // pred_check_branch
        %285 = sbr.rel (%p282) target = $region48
      $region47: #{tpu_custom_call.1} parent=5 // pred_region
        %s286 = ssub.s32 %s18, 1
        %s287 = sand.u32 %s31, 1
        %s288 = scalar_lea.sflag [#allocation3], %s287
        %s289 = sand.u32 %s31, 1
        %s290 = smul.addr %s289, 32
        %s291 = scalar_lea.vmem [#allocation2], %s290
        // Predicated region
        $region49: #{tpu_custom_call.1} parent=47 // pred_check
          %p292 = pneg %p44
        $region50: #{tpu_custom_call.1} parent=47 // pred_check_branch
          %294 = sbr.rel (%p292) target = $region52
        $region51: #{tpu_custom_call.1} parent=47 // pred_region
          %295 = dma.done %s288, 512
        $region52: #{tpu_custom_call.1} parent=47 // pred_fallthru
          _
        // Predicated region
        $region53: #{tpu_custom_call.1} parent=47 // pred_check
          %p296 = pneg %p65
        $region54: #{tpu_custom_call.1} parent=47 // pred_check_branch
          %298 = sbr.rel (%p296) target = $region56
        $region55: #{tpu_custom_call.1} parent=47 // pred_region
          %299 = dma.done [#allocation5], 64
        $region56: #{tpu_custom_call.1} parent=47 // pred_fallthru
          _
        // Predicated region
        $region57: #{tpu_custom_call.1} parent=47 // pred_check
          %p300 = pneg %p107
        $region58: #{tpu_custom_call.1} parent=47 // pred_check_branch
          %302 = sbr.rel (%p300) target = $region60
        $region59: #{tpu_custom_call.1} parent=47 // pred_region
          %303 = dma.done [#allocation5], 512
        $region60: #{tpu_custom_call.1} parent=47 // pred_fallthru
          _
        // Predicated region
        $region61: #{tpu_custom_call.1} parent=47 // pred_check
          %p304 = pneg %p149
        $region62: #{tpu_custom_call.1} parent=47 // pred_check_branch
          %306 = sbr.rel (%p304) target = $region64
        $region63: #{tpu_custom_call.1} parent=47 // pred_region
          %307 = dma.done [#allocation8], 8192
        $region64: #{tpu_custom_call.1} parent=47 // pred_fallthru
          _
        %s308 = sand.u32 %s31, 1
        %s309 = scalar_lea.sflag [#allocation3], %s308
        %s310 = sand.u32 %s31, 1
        %s311 = smul.addr %s310, 32
        %s312 = scalar_lea.vmem [#allocation2], %s311
        %p313 = pneg %p44
        %p314 = pneg %p41
        %p315 = pneg %p65
        %p316 = pneg %p62
        %p317 = pneg %p86
        %p318 = pneg %p83
        %p319 = pneg %p107
        %p320 = pneg %p104
        %p321 = pneg %p128
        %p322 = pneg %p125
        %p323 = pneg %p149
        %p324 = pneg %p146
        %p325 = pneg %p170
        %p326 = pneg %p167
        %p327 = pneg %p196
        %p328 = pneg %p193
        %p329 = scmp.lt.s32.totalorder %s23, 1
        %s330 = scalar_select %p329, %s23, 1
        %s331 = smul.addr %s330, 8
        %s332 = scalar_lea.vmem %s7, %s331
        %p333 = scmp.lt.s32.totalorder %s23, 1
        %s334 = scalar_select %p333, %s23, 1
        %s335 = smul.addr %s334, 8
        %s336 = scalar_lea.vmem %s7, %s335
        %v338 = vld [vmem:[#allocation4] sm:$0xf]
        %v339 = vld [vmem:[#allocation6] sm:$0xf]
        %v340 = vld [vmem:[#allocation6 + $0x4] sm:$0xf]
        %v341 = vld [vmem:[#allocation6 + $0x8] sm:$0xf]
        %v342 = vld [vmem:[#allocation6 + $0xc] sm:$0xf]
        %v343 = vld [vmem:[#allocation6 + $0x10] sm:$0xf]
        %v344 = vld [vmem:[#allocation6 + $0x14] sm:$0xf]
        %v345 = vld [vmem:[#allocation6 + $0x18] sm:$0xf]
        %v346 = vld [vmem:[#allocation6 + $0x1c] sm:$0xf]
        %v347 = vld [vmem:[#allocation7] sm:$0xff]
        %v348 = vld [vmem:[#allocation7 + $0x8] sm:$0xff]
        %v349 = vld [vmem:[#allocation7 + $0x10] sm:$0xff]
        %v350 = vld [vmem:[#allocation7 + $0x18] sm:$0xff]
        %v351 = vld [vmem:[#allocation7 + $0x20] sm:$0xff]
        %v352 = vld [vmem:[#allocation7 + $0x28] sm:$0xff]
        %v353 = vld [vmem:[#allocation7 + $0x30] sm:$0xff]
        %v354 = vld [vmem:[#allocation7 + $0x38] sm:$0xff]
        %v355 = vld [vmem:[#allocation7 + $0x40] sm:$0xff]
        %v356 = vld [vmem:[#allocation7 + $0x48] sm:$0xff]
        %v357 = vld [vmem:[#allocation7 + $0x50] sm:$0xff]
        %v358 = vld [vmem:[#allocation7 + $0x58] sm:$0xff]
        %v359 = vld [vmem:[#allocation7 + $0x60] sm:$0xff]
        %v360 = vld [vmem:[#allocation7 + $0x68] sm:$0xff]
        %v361 = vld [vmem:[#allocation7 + $0x70] sm:$0xff]
        %v362 = vld [vmem:[#allocation7 + $0x78] sm:$0xff]
        %v363 = vld [vmem:[#allocation7 + $0x80] sm:$0xff]
        %v364 = vld [vmem:[#allocation7 + $0x88] sm:$0xff]
        %v365 = vld [vmem:[#allocation7 + $0x90] sm:$0xff]
        %v366 = vld [vmem:[#allocation7 + $0x98] sm:$0xff]
        %v367 = vld [vmem:[#allocation7 + $0xa0] sm:$0xff]
        %v368 = vld [vmem:[#allocation7 + $0xa8] sm:$0xff]
        %v369 = vld [vmem:[#allocation7 + $0xb0] sm:$0xff]
        %v370 = vld [vmem:[#allocation7 + $0xb8] sm:$0xff]
        %v371 = vld [vmem:[#allocation7 + $0xc0] sm:$0xff]
        %v372 = vld [vmem:[#allocation7 + $0xc8] sm:$0xff]
        %v373 = vld [vmem:[#allocation7 + $0xd0] sm:$0xff]
        %v374 = vld [vmem:[#allocation7 + $0xd8] sm:$0xff]
        %v375 = vld [vmem:[#allocation7 + $0xe0] sm:$0xff]
        %v376 = vld [vmem:[#allocation7 + $0xe8] sm:$0xff]
        %v377 = vld [vmem:[#allocation7 + $0xf0] sm:$0xff]
        %v378 = vld [vmem:[#allocation7 + $0xf8] sm:$0xff]
        %v379 = vld [vmem:[#allocation7 + $0x100] sm:$0xff]
        %v380 = vld [vmem:[#allocation7 + $0x108] sm:$0xff]
        %v381 = vld [vmem:[#allocation7 + $0x110] sm:$0xff]
        %v382 = vld [vmem:[#allocation7 + $0x118] sm:$0xff]
        %v383 = vld [vmem:[#allocation7 + $0x120] sm:$0xff]
        %v384 = vld [vmem:[#allocation7 + $0x128] sm:$0xff]
        %v385 = vld [vmem:[#allocation7 + $0x130] sm:$0xff]
        %v386 = vld [vmem:[#allocation7 + $0x138] sm:$0xff]
        %v387 = vld [vmem:[#allocation7 + $0x140] sm:$0xff]
        %v388 = vld [vmem:[#allocation7 + $0x148] sm:$0xff]
        %v389 = vld [vmem:[#allocation7 + $0x150] sm:$0xff]
        %v390 = vld [vmem:[#allocation7 + $0x158] sm:$0xff]
        %v391 = vld [vmem:[#allocation7 + $0x160] sm:$0xff]
        %v392 = vld [vmem:[#allocation7 + $0x168] sm:$0xff]
        %v393 = vld [vmem:[#allocation7 + $0x170] sm:$0xff]
        %v394 = vld [vmem:[#allocation7 + $0x178] sm:$0xff]
        %v395 = vld [vmem:[#allocation7 + $0x180] sm:$0xff]
        %v396 = vld [vmem:[#allocation7 + $0x188] sm:$0xff]
        %v397 = vld [vmem:[#allocation7 + $0x190] sm:$0xff]
        %v398 = vld [vmem:[#allocation7 + $0x198] sm:$0xff]
        %v399 = vld [vmem:[#allocation7 + $0x1a0] sm:$0xff]
        %v400 = vld [vmem:[#allocation7 + $0x1a8] sm:$0xff]
        %v401 = vld [vmem:[#allocation7 + $0x1b0] sm:$0xff]
        %v402 = vld [vmem:[#allocation7 + $0x1b8] sm:$0xff]
        %v403 = vld [vmem:[#allocation7 + $0x1c0] sm:$0xff]
        %v404 = vld [vmem:[#allocation7 + $0x1c8] sm:$0xff]
        %v405 = vld [vmem:[#allocation7 + $0x1d0] sm:$0xff]
        %v406 = vld [vmem:[#allocation7 + $0x1d8] sm:$0xff]
        %v407 = vld [vmem:[#allocation7 + $0x1e0] sm:$0xff]
        %v408 = vld [vmem:[#allocation7 + $0x1e8] sm:$0xff]
        %v409 = vld [vmem:[#allocation7 + $0x1f0] sm:$0xff]
        %v410 = vld [vmem:[#allocation7 + $0x1f8] sm:$0xff]
        %v411 = vld [vmem:[%s2] sm:$0x1]
        %v412 = vld [vmem:[%s4] sm:$0x1]
        %v413 = vld [vmem:[%s6] sm:$0xff]
        %v414 = vld [vmem:[%s291] sm:$0xff]
        %v416 = vlaneseq
        %v417 = vshrl.u32 %v416, 7
        %v418 = vsub.s32 0, %v417
        %v419 = vrot.slane %v411, %v418
        %v422 = vunpack.c.l.b16 %v414
        %v423 = vunpack.c.h.b16 %v414
        %v424 = vpack.c.b16 %v422, %v422
        %v425 = vpack.c.b16 %v423, %v423
        %428 = vxpose.xlu0.c.b16.start [1/8] %v424, 128
        %429 = vxpose.xlu0.c.b16.cont [2/8] 0, 128
        %430 = vxpose.xlu0.c.b16.cont [3/8] 0, 128
        %431 = vxpose.xlu0.c.b16.cont [4/8] 0, 128
        %432 = vxpose.xlu0.c.b16.cont [5/8] 0, 128
        %433 = vxpose.xlu0.c.b16.cont [6/8] 0, 128
        %434 = vxpose.xlu0.c.b16.cont [7/8] 0, 128
        %435 = vxpose.xlu0.c.b16.end [8/8] 0, 128
        %v436 = vpop.trf.xlu0
        %v437 = vpop.trf.xlu0
        %v438 = vpop.trf.xlu0
        %v439 = vpop.trf.xlu0
        %v440 = vpop.trf.xlu0
        %v441 = vpop.trf.xlu0
        %v442 = vpop.trf.xlu0
        %v443 = vpop.trf.xlu0
        %444 = vxpose.xlu0.c.b16.start [1/8] %v425, 128
        %445 = vxpose.xlu0.c.b16.cont [2/8] 0, 128
        %446 = vxpose.xlu0.c.b16.cont [3/8] 0, 128
        %447 = vxpose.xlu0.c.b16.cont [4/8] 0, 128
        %448 = vxpose.xlu0.c.b16.cont [5/8] 0, 128
        %449 = vxpose.xlu0.c.b16.cont [6/8] 0, 128
        %450 = vxpose.xlu0.c.b16.cont [7/8] 0, 128
        %451 = vxpose.xlu0.c.b16.end [8/8] 0, 128
        %v452 = vpop.trf.xlu0
        %v453 = vpop.trf.xlu0
        %v454 = vpop.trf.xlu0
        %v455 = vpop.trf.xlu0
        %v456 = vpop.trf.xlu0
        %v457 = vpop.trf.xlu0
        %v458 = vpop.trf.xlu0
        %v459 = vpop.trf.xlu0
        %vm460 = vcmask 64512
        %v462 = vsel %vm460, %v436, 0
        %v465 = vsel %vm460, %v437, 0
        %v468 = vsel %vm460, %v438, 0
        %v471 = vsel %vm460, %v439, 0
        %v474 = vsel %vm460, %v440, 0
        %v477 = vsel %vm460, %v441, 0
        %v480 = vsel %vm460, %v442, 0
        %v483 = vsel %vm460, %v443, 0
        %v486 = vsel %vm460, %v452, 0
        %v489 = vsel %vm460, %v453, 0
        %v492 = vsel %vm460, %v454, 0
        %v495 = vsel %vm460, %v455, 0
        %v498 = vsel %vm460, %v456, 0
        %v501 = vsel %vm460, %v457, 0
        %v504 = vsel %vm460, %v458, 0
        %v507 = vsel %vm460, %v459, 0
        %vm509 = vcmask 1043456
        %v511 = vsel %vm509, %v338, 0
        %513 = vmatprep.subr.bf16.mxu0 0
        %514 = vmatpush1.bf16.msra.mxu0 %v511
        %515 = vmatprep.subr.bf16.mxu0 0
        %516 = vmatpush1.bf16.msra.mxu0 0
        %517 = vmatprep.subr.bf16.mxu0 0
        %518 = vmatpush1.bf16.msra.mxu0 0
        %519 = vmatprep.subr.bf16.mxu0 0
        %520 = vmatpush1.bf16.msra.mxu0 0
        %521 = vmatprep.subr.bf16.mxu0 0
        %522 = vmatpush1.bf16.msra.mxu0 0
        %523 = vmatprep.subr.bf16.mxu0 0
        %524 = vmatpush1.bf16.msra.mxu0 0
        %525 = vmatprep.subr.bf16.mxu0 0
        %526 = vmatpush1.bf16.msra.mxu0 0
        %527 = vmatprep.subr.bf16.mxu0 0
        %528 = vmatpush1.bf16.msra.mxu0 0
        %529 = vmatprep.subr.bf16.mxu0 0
        %530 = vmatpush1.bf16.msra.mxu0 0
        %531 = vmatprep.subr.bf16.mxu0 0
        %532 = vmatpush1.bf16.msra.mxu0 0
        %533 = vmatprep.subr.bf16.mxu0 0
        %534 = vmatpush1.bf16.msra.mxu0 0
        %535 = vmatprep.subr.bf16.mxu0 0
        %536 = vmatpush1.bf16.msra.mxu0 0
        %537 = vmatprep.subr.bf16.mxu0 0
        %538 = vmatpush1.bf16.msra.mxu0 0
        %539 = vmatprep.subr.bf16.mxu0 0
        %540 = vmatpush1.bf16.msra.mxu0 0
        %541 = vmatprep.subr.bf16.mxu0 0
        %542 = vmatpush1.bf16.msra.mxu0 0
        %543 = vmatprep.subr.bf16.mxu0 0
        %544 = vmatpush1.bf16.msra.mxu0 0
        %545 = vmatprep.mubr.bf16.mxu0 0
        %546 = vmatmul.mubr.bf16.gmra.mrb[0].mxu0 %v462
        %v547 = vpop.f32.mrb[0].mxu0
        %v548 = vadd.f32 %v419, %v547
        %v549 = vpop.f32.mrb[0].mxu0
        %v550 = vpop.f32.mrb[0].mxu0
        %v551 = vadd.f32 %v419, %v550
        %v552 = vpop.f32.mrb[0].mxu0
        %553 = vmatprep.mubr.bf16.mxu0 0
        %554 = vmatmul.mubr.bf16.gmra.mrb[0].mxu0 %v465
        %v555 = vpop.f32.mrb[0].mxu0
        %v556 = vadd.f32 %v419, %v555
        %v557 = vpop.f32.mrb[0].mxu0
        %v558 = vpop.f32.mrb[0].mxu0
        %v559 = vadd.f32 %v419, %v558
        %v560 = vpop.f32.mrb[0].mxu0
        %561 = vmatprep.mubr.bf16.mxu0 0
        %562 = vmatmul.mubr.bf16.gmra.mrb[0].mxu0 %v468
        %v563 = vpop.f32.mrb[0].mxu0
        %v564 = vadd.f32 %v419, %v563
        %v565 = vpop.f32.mrb[0].mxu0
        %v566 = vpop.f32.mrb[0].mxu0
        %v567 = vadd.f32 %v419, %v566
        %v568 = vpop.f32.mrb[0].mxu0
        %569 = vmatprep.mubr.bf16.mxu0 0
        %570 = vmatmul.mubr.bf16.gmra.mrb[0].mxu0 %v471
        %v571 = vpop.f32.mrb[0].mxu0
        %v572 = vadd.f32 %v419, %v571
        %v573 = vpop.f32.mrb[0].mxu0
        %v574 = vpop.f32.mrb[0].mxu0
        %v575 = vadd.f32 %v419, %v574
        %v576 = vpop.f32.mrb[0].mxu0
        %577 = vmatprep.mubr.bf16.mxu0 0
        %578 = vmatmul.mubr.bf16.gmra.mrb[0].mxu0 %v474
        %v579 = vpop.f32.mrb[0].mxu0
        %v580 = vadd.f32 %v419, %v579
        %v581 = vpop.f32.mrb[0].mxu0
        %v582 = vpop.f32.mrb[0].mxu0
        %v583 = vadd.f32 %v419, %v582
        %v584 = vpop.f32.mrb[0].mxu0
        %585 = vmatprep.mubr.bf16.mxu0 0
        %586 = vmatmul.mubr.bf16.gmra.mrb[0].mxu0 %v477
        %v587 = vpop.f32.mrb[0].mxu0
        %v588 = vadd.f32 %v419, %v587
        %v589 = vpop.f32.mrb[0].mxu0
        %v590 = vpop.f32.mrb[0].mxu0
        %v591 = vadd.f32 %v419, %v590
        %v592 = vpop.f32.mrb[0].mxu0
        %593 = vmatprep.mubr.bf16.mxu0 0
        %594 = vmatmul.mubr.bf16.gmra.mrb[0].mxu0 %v480
        %v595 = vpop.f32.mrb[0].mxu0
        %v596 = vadd.f32 %v419, %v595
        %v597 = vpop.f32.mrb[0].mxu0
        %v598 = vpop.f32.mrb[0].mxu0
        %v599 = vadd.f32 %v419, %v598
        %v600 = vpop.f32.mrb[0].mxu0
        %601 = vmatprep.mubr.bf16.mxu0 0
        %602 = vmatmul.mubr.bf16.gmra.mrb[0].mxu0 %v483
        %v603 = vpop.f32.mrb[0].mxu0
        %v604 = vadd.f32 %v419, %v603
        %v605 = vpop.f32.mrb[0].mxu0
        %v606 = vpop.f32.mrb[0].mxu0
        %v607 = vadd.f32 %v419, %v606
        %v608 = vpop.f32.mrb[0].mxu0
        %609 = vmatprep.mubr.bf16.mxu0 0
        %610 = vmatmul.mubr.bf16.gmra.mrb[0].mxu0 %v486
        %v611 = vpop.f32.mrb[0].mxu0
        %v612 = vadd.f32 %v419, %v611
        %v613 = vpop.f32.mrb[0].mxu0
        %v614 = vpop.f32.mrb[0].mxu0
        %v615 = vadd.f32 %v419, %v614
        %v616 = vpop.f32.mrb[0].mxu0
        %617 = vmatprep.mubr.bf16.mxu0 0
        %618 = vmatmul.mubr.bf16.gmra.mrb[0].mxu0 %v489
        %v619 = vpop.f32.mrb[0].mxu0
        %v620 = vadd.f32 %v419, %v619
        %v621 = vpop.f32.mrb[0].mxu0
        %v622 = vpop.f32.mrb[0].mxu0
        %v623 = vadd.f32 %v419, %v622
        %v624 = vpop.f32.mrb[0].mxu0
        %625 = vmatprep.mubr.bf16.mxu0 0
        %626 = vmatmul.mubr.bf16.gmra.mrb[0].mxu0 %v492
        %v627 = vpop.f32.mrb[0].mxu0
        %v628 = vadd.f32 %v419, %v627
        %v629 = vpop.f32.mrb[0].mxu0
        %v630 = vpop.f32.mrb[0].mxu0
        %v631 = vadd.f32 %v419, %v630
        %v632 = vpop.f32.mrb[0].mxu0
        %633 = vmatprep.mubr.bf16.mxu0 0
        %634 = vmatmul.mubr.bf16.gmra.mrb[0].mxu0 %v495
        %v635 = vpop.f32.mrb[0].mxu0
        %v636 = vadd.f32 %v419, %v635
        %v637 = vpop.f32.mrb[0].mxu0
        %v638 = vpop.f32.mrb[0].mxu0
        %v639 = vadd.f32 %v419, %v638
        %v640 = vpop.f32.mrb[0].mxu0
        %641 = vmatprep.mubr.bf16.mxu0 0
        %642 = vmatmul.mubr.bf16.gmra.mrb[0].mxu0 %v498
        %v643 = vpop.f32.mrb[0].mxu0
        %v644 = vadd.f32 %v419, %v643
        %v645 = vpop.f32.mrb[0].mxu0
        %v646 = vpop.f32.mrb[0].mxu0
        %v647 = vadd.f32 %v419, %v646
        %v648 = vpop.f32.mrb[0].mxu0
        %649 = vmatprep.mubr.bf16.mxu0 0
        %650 = vmatmul.mubr.bf16.gmra.mrb[0].mxu0 %v501
        %v651 = vpop.f32.mrb[0].mxu0
        %v652 = vadd.f32 %v419, %v651
        %v653 = vpop.f32.mrb[0].mxu0
        %v654 = vpop.f32.mrb[0].mxu0
        %v655 = vadd.f32 %v419, %v654
        %v656 = vpop.f32.mrb[0].mxu0
        %657 = vmatprep.mubr.bf16.mxu0 0
        %658 = vmatmul.mubr.bf16.gmra.mrb[0].mxu0 %v504
        %v659 = vpop.f32.mrb[0].mxu0
        %v660 = vadd.f32 %v419, %v659
        %v661 = vpop.f32.mrb[0].mxu0
        %v662 = vpop.f32.mrb[0].mxu0
        %v663 = vadd.f32 %v419, %v662
        %v664 = vpop.f32.mrb[0].mxu0
        %665 = vmatprep.mubr.bf16.mxu0 0
        %666 = vmatmul.mubr.bf16.gmra.mrb[0].mxu0 %v507
        %v667 = vpop.f32.mrb[0].mxu0
        %v668 = vadd.f32 %v419, %v667
        %v669 = vpop.f32.mrb[0].mxu0
        %v670 = vpop.f32.mrb[0].mxu0
        %v671 = vadd.f32 %v419, %v670
        %v672 = vpop.f32.mrb[0].mxu0
        %673 = vdwg.mxu0
        %v674 = vmax.f32 %v548, 0.0
        %v675 = vmax.f32 %v551, 0.0
        %v676 = vmax.f32 %v556, 0.0
        %v677 = vmax.f32 %v559, 0.0
        %v678 = vmax.f32 %v564, 0.0
        %v679 = vmax.f32 %v567, 0.0
        %v680 = vmax.f32 %v572, 0.0
        %v681 = vmax.f32 %v575, 0.0
        %v682 = vmax.f32 %v580, 0.0
        %v683 = vmax.f32 %v583, 0.0
        %v684 = vmax.f32 %v588, 0.0
        %v685 = vmax.f32 %v591, 0.0
        %v686 = vmax.f32 %v596, 0.0
        %v687 = vmax.f32 %v599, 0.0
        %v688 = vmax.f32 %v604, 0.0
        %v689 = vmax.f32 %v607, 0.0
        %v690 = vmax.f32 %v612, 0.0
        %v691 = vmax.f32 %v615, 0.0
        %v692 = vmax.f32 %v620, 0.0
        %v693 = vmax.f32 %v623, 0.0
        %v694 = vmax.f32 %v628, 0.0
        %v695 = vmax.f32 %v631, 0.0
        %v696 = vmax.f32 %v636, 0.0
        %v697 = vmax.f32 %v639, 0.0
        %v698 = vmax.f32 %v644, 0.0
        %v699 = vmax.f32 %v647, 0.0
        %v700 = vmax.f32 %v652, 0.0
        %v701 = vmax.f32 %v655, 0.0
        %v702 = vmax.f32 %v660, 0.0
        %v703 = vmax.f32 %v663, 0.0
        %v704 = vmax.f32 %v668, 0.0
        %v705 = vmax.f32 %v671, 0.0
        %v706 = vpack.c.bf16 %v675, %v674
        %v707 = vpack.c.bf16 %v677, %v676
        %v708 = vpack.c.bf16 %v679, %v678
        %v709 = vpack.c.bf16 %v681, %v680
        %v710 = vpack.c.bf16 %v683, %v682
        %v711 = vpack.c.bf16 %v685, %v684
        %v712 = vpack.c.bf16 %v687, %v686
        %v713 = vpack.c.bf16 %v689, %v688
        %v714 = vpack.c.bf16 %v691, %v690
        %v715 = vpack.c.bf16 %v693, %v692
        %v716 = vpack.c.bf16 %v695, %v694
        %v717 = vpack.c.bf16 %v697, %v696
        %v718 = vpack.c.bf16 %v699, %v698
        %v719 = vpack.c.bf16 %v701, %v700
        %v720 = vpack.c.bf16 %v703, %v702
        %v721 = vpack.c.bf16 %v705, %v704
        %v723 = vlaneseq
        %v724 = vshrl.u32 %v723, 7
        %v725 = vsub.s32 0, %v724
        %v726 = vrot.slane %v412, %v725
        %v736 = vunpack.c.l.b16 %v339
        %v737 = vunpack.c.l.b16 %v340
        %v738 = vunpack.c.l.b16 %v341
        %v739 = vunpack.c.l.b16 %v342
        %v740 = vunpack.c.l.b16 %v343
        %v741 = vunpack.c.l.b16 %v344
        %v742 = vunpack.c.l.b16 %v345
        %v743 = vunpack.c.l.b16 %v346
        %v744 = vpack.c.b16 %v737, %v736
        %v745 = vpack.c.b16 %v739, %v738
        %v746 = vpack.c.b16 %v741, %v740
        %v747 = vpack.c.b16 %v743, %v742
        %vm752 = vcmask 523264
        %v754 = vsel %vm752, %v706, 0
        %v757 = vsel %vm752, %v707, 0
        %v760 = vsel %vm752, %v708, 0
        %v763 = vsel %vm752, %v709, 0
        %v766 = vsel %vm752, %v710, 0
        %v769 = vsel %vm752, %v711, 0
        %v772 = vsel %vm752, %v712, 0
        %v775 = vsel %vm752, %v713, 0
        %v778 = vsel %vm752, %v714, 0
        %v781 = vsel %vm752, %v715, 0
        %v784 = vsel %vm752, %v716, 0
        %v787 = vsel %vm752, %v717, 0
        %v790 = vsel %vm752, %v718, 0
        %v793 = vsel %vm752, %v719, 0
        %v796 = vsel %vm752, %v720, 0
        %v799 = vsel %vm752, %v721, 0
        %801 = vmatprep.subr.bf16.mxu0 0
        %802 = vmatpush1.bf16.msra.mxu0 %v744
        %803 = vmatprep.subr.bf16.mxu0 0
        %804 = vmatpush1.bf16.msra.mxu0 %v745
        %805 = vmatprep.subr.bf16.mxu0 0
        %806 = vmatpush1.bf16.msra.mxu0 %v746
        %807 = vmatprep.subr.bf16.mxu0 0
        %808 = vmatpush1.bf16.msra.mxu0 %v747
        %809 = vmatprep.subr.bf16.mxu0 0
        %810 = vmatpush1.bf16.msra.mxu0 0
        %811 = vmatprep.subr.bf16.mxu0 0
        %812 = vmatpush1.bf16.msra.mxu0 0
        %813 = vmatprep.subr.bf16.mxu0 0
        %814 = vmatpush1.bf16.msra.mxu0 0
        %815 = vmatprep.subr.bf16.mxu0 0
        %816 = vmatpush1.bf16.msra.mxu0 0
        %817 = vmatprep.subr.bf16.mxu0 0
        %818 = vmatpush1.bf16.msra.mxu0 0
        %819 = vmatprep.subr.bf16.mxu0 0
        %820 = vmatpush1.bf16.msra.mxu0 0
        %821 = vmatprep.subr.bf16.mxu0 0
        %822 = vmatpush1.bf16.msra.mxu0 0
        %823 = vmatprep.subr.bf16.mxu0 0
        %824 = vmatpush1.bf16.msra.mxu0 0
        %825 = vmatprep.subr.bf16.mxu0 0
        %826 = vmatpush1.bf16.msra.mxu0 0
        %827 = vmatprep.subr.bf16.mxu0 0
        %828 = vmatpush1.bf16.msra.mxu0 0
        %829 = vmatprep.subr.bf16.mxu0 0
        %830 = vmatpush1.bf16.msra.mxu0 0
        %831 = vmatprep.subr.bf16.mxu0 0
        %832 = vmatpush1.bf16.msra.mxu0 0
        %833 = vmatprep.mubr.bf16.mxu0 0
        %834 = vmatmul.mubr.bf16.gmra.mrb[0].mxu0 %v754
        %v835 = vpop.f32.mrb[0].mxu0
        %v836 = vadd.f32 %v726, %v835
        %v837 = vpop.f32.mrb[0].mxu0
        %v838 = vpop.f32.mrb[0].mxu0
        %v839 = vadd.f32 %v726, %v838
        %v840 = vpop.f32.mrb[0].mxu0
        %841 = vmatprep.mubr.bf16.mxu0 0
        %842 = vmatmul.mubr.bf16.gmra.mrb[0].mxu0 %v757
        %v843 = vpop.f32.mrb[0].mxu0
        %v844 = vadd.f32 %v726, %v843
        %v845 = vpop.f32.mrb[0].mxu0
        %v846 = vpop.f32.mrb[0].mxu0
        %v847 = vadd.f32 %v726, %v846
        %v848 = vpop.f32.mrb[0].mxu0
        %849 = vmatprep.mubr.bf16.mxu0 0
        %850 = vmatmul.mubr.bf16.gmra.mrb[0].mxu0 %v760
        %v851 = vpop.f32.mrb[0].mxu0
        %v852 = vadd.f32 %v726, %v851
        %v853 = vpop.f32.mrb[0].mxu0
        %v854 = vpop.f32.mrb[0].mxu0
        %v855 = vadd.f32 %v726, %v854
        %v856 = vpop.f32.mrb[0].mxu0
        %857 = vmatprep.mubr.bf16.mxu0 0
        %858 = vmatmul.mubr.bf16.gmra.mrb[0].mxu0 %v763
        %v859 = vpop.f32.mrb[0].mxu0
        %v860 = vadd.f32 %v726, %v859
        %v861 = vpop.f32.mrb[0].mxu0
        %v862 = vpop.f32.mrb[0].mxu0
        %v863 = vadd.f32 %v726, %v862
        %v864 = vpop.f32.mrb[0].mxu0
        %865 = vmatprep.mubr.bf16.mxu0 0
        %866 = vmatmul.mubr.bf16.gmra.mrb[0].mxu0 %v766
        %v867 = vpop.f32.mrb[0].mxu0
        %v868 = vadd.f32 %v726, %v867
        %v869 = vpop.f32.mrb[0].mxu0
        %v870 = vpop.f32.mrb[0].mxu0
        %v871 = vadd.f32 %v726, %v870
        %v872 = vpop.f32.mrb[0].mxu0
        %873 = vmatprep.mubr.bf16.mxu0 0
        %874 = vmatmul.mubr.bf16.gmra.mrb[0].mxu0 %v769
        %v875 = vpop.f32.mrb[0].mxu0
        %v876 = vadd.f32 %v726, %v875
        %v877 = vpop.f32.mrb[0].mxu0
        %v878 = vpop.f32.mrb[0].mxu0
        %v879 = vadd.f32 %v726, %v878
        %v880 = vpop.f32.mrb[0].mxu0
        %881 = vmatprep.mubr.bf16.mxu0 0
        %882 = vmatmul.mubr.bf16.gmra.mrb[0].mxu0 %v772
        %v883 = vpop.f32.mrb[0].mxu0
        %v884 = vadd.f32 %v726, %v883
        %v885 = vpop.f32.mrb[0].mxu0
        %v886 = vpop.f32.mrb[0].mxu0
        %v887 = vadd.f32 %v726, %v886
        %v888 = vpop.f32.mrb[0].mxu0
        %889 = vmatprep.mubr.bf16.mxu0 0
        %890 = vmatmul.mubr.bf16.gmra.mrb[0].mxu0 %v775
        %v891 = vpop.f32.mrb[0].mxu0
        %v892 = vadd.f32 %v726, %v891
        %v893 = vpop.f32.mrb[0].mxu0
        %v894 = vpop.f32.mrb[0].mxu0
        %v895 = vadd.f32 %v726, %v894
        %v896 = vpop.f32.mrb[0].mxu0
        %897 = vmatprep.mubr.bf16.mxu0 0
        %898 = vmatmul.mubr.bf16.gmra.mrb[0].mxu0 %v778
        %v899 = vpop.f32.mrb[0].mxu0
        %v900 = vadd.f32 %v726, %v899
        %v901 = vpop.f32.mrb[0].mxu0
        %v902 = vpop.f32.mrb[0].mxu0
        %v903 = vadd.f32 %v726, %v902
        %v904 = vpop.f32.mrb[0].mxu0
        %905 = vmatprep.mubr.bf16.mxu0 0
        %906 = vmatmul.mubr.bf16.gmra.mrb[0].mxu0 %v781
        %v907 = vpop.f32.mrb[0].mxu0
        %v908 = vadd.f32 %v726, %v907
        %v909 = vpop.f32.mrb[0].mxu0
        %v910 = vpop.f32.mrb[0].mxu0
        %v911 = vadd.f32 %v726, %v910
        %v912 = vpop.f32.mrb[0].mxu0
        %913 = vmatprep.mubr.bf16.mxu0 0
        %914 = vmatmul.mubr.bf16.gmra.mrb[0].mxu0 %v784
        %v915 = vpop.f32.mrb[0].mxu0
        %v916 = vadd.f32 %v726, %v915
        %v917 = vpop.f32.mrb[0].mxu0
        %v918 = vpop.f32.mrb[0].mxu0
        %v919 = vadd.f32 %v726, %v918
        %v920 = vpop.f32.mrb[0].mxu0
        %921 = vmatprep.mubr.bf16.mxu0 0
        %922 = vmatmul.mubr.bf16.gmra.mrb[0].mxu0 %v787
        %v923 = vpop.f32.mrb[0].mxu0
        %v924 = vadd.f32 %v726, %v923
        %v925 = vpop.f32.mrb[0].mxu0
        %v926 = vpop.f32.mrb[0].mxu0
        %v927 = vadd.f32 %v726, %v926
        %v928 = vpop.f32.mrb[0].mxu0
        %929 = vmatprep.mubr.bf16.mxu0 0
        %930 = vmatmul.mubr.bf16.gmra.mrb[0].mxu0 %v790
        %v931 = vpop.f32.mrb[0].mxu0
        %v932 = vadd.f32 %v726, %v931
        %v933 = vpop.f32.mrb[0].mxu0
        %v934 = vpop.f32.mrb[0].mxu0
        %v935 = vadd.f32 %v726, %v934
        %v936 = vpop.f32.mrb[0].mxu0
        %937 = vmatprep.mubr.bf16.mxu0 0
        %938 = vmatmul.mubr.bf16.gmra.mrb[0].mxu0 %v793
        %v939 = vpop.f32.mrb[0].mxu0
        %v940 = vadd.f32 %v726, %v939
        %v941 = vpop.f32.mrb[0].mxu0
        %v942 = vpop.f32.mrb[0].mxu0
        %v943 = vadd.f32 %v726, %v942
        %v944 = vpop.f32.mrb[0].mxu0
        %945 = vmatprep.mubr.bf16.mxu0 0
        %946 = vmatmul.mubr.bf16.gmra.mrb[0].mxu0 %v796
        %v947 = vpop.f32.mrb[0].mxu0
        %v948 = vadd.f32 %v726, %v947
        %v949 = vpop.f32.mrb[0].mxu0
        %v950 = vpop.f32.mrb[0].mxu0
        %v951 = vadd.f32 %v726, %v950
        %v952 = vpop.f32.mrb[0].mxu0
        %953 = vmatprep.mubr.bf16.mxu0 0
        %954 = vmatmul.mubr.bf16.gmra.mrb[0].mxu0 %v799
        %v955 = vpop.f32.mrb[0].mxu0
        %v956 = vadd.f32 %v726, %v955
        %v957 = vpop.f32.mrb[0].mxu0
        %v958 = vpop.f32.mrb[0].mxu0
        %v959 = vadd.f32 %v726, %v958
        %v960 = vpop.f32.mrb[0].mxu0
        %961 = vdwg.mxu0
        %v962 = vmax.f32 %v836, 0.0
        %v963 = vmax.f32 %v839, 0.0
        %v964 = vmax.f32 %v844, 0.0
        %v965 = vmax.f32 %v847, 0.0
        %v966 = vmax.f32 %v852, 0.0
        %v967 = vmax.f32 %v855, 0.0
        %v968 = vmax.f32 %v860, 0.0
        %v969 = vmax.f32 %v863, 0.0
        %v970 = vmax.f32 %v868, 0.0
        %v971 = vmax.f32 %v871, 0.0
        %v972 = vmax.f32 %v876, 0.0
        %v973 = vmax.f32 %v879, 0.0
        %v974 = vmax.f32 %v884, 0.0
        %v975 = vmax.f32 %v887, 0.0
        %v976 = vmax.f32 %v892, 0.0
        %v977 = vmax.f32 %v895, 0.0
        %v978 = vmax.f32 %v900, 0.0
        %v979 = vmax.f32 %v903, 0.0
        %v980 = vmax.f32 %v908, 0.0
        %v981 = vmax.f32 %v911, 0.0
        %v982 = vmax.f32 %v916, 0.0
        %v983 = vmax.f32 %v919, 0.0
        %v984 = vmax.f32 %v924, 0.0
        %v985 = vmax.f32 %v927, 0.0
        %v986 = vmax.f32 %v932, 0.0
        %v987 = vmax.f32 %v935, 0.0
        %v988 = vmax.f32 %v940, 0.0
        %v989 = vmax.f32 %v943, 0.0
        %v990 = vmax.f32 %v948, 0.0
        %v991 = vmax.f32 %v951, 0.0
        %v992 = vmax.f32 %v956, 0.0
        %v993 = vmax.f32 %v959, 0.0
        %v994 = vpack.c.bf16 %v963, %v962
        %v995 = vpack.c.bf16 %v965, %v964
        %v996 = vpack.c.bf16 %v967, %v966
        %v997 = vpack.c.bf16 %v969, %v968
        %v998 = vpack.c.bf16 %v971, %v970
        %v999 = vpack.c.bf16 %v973, %v972
        %v1000 = vpack.c.bf16 %v975, %v974
        %v1001 = vpack.c.bf16 %v977, %v976
        %v1002 = vpack.c.bf16 %v979, %v978
        %v1003 = vpack.c.bf16 %v981, %v980
        %v1004 = vpack.c.bf16 %v983, %v982
        %v1005 = vpack.c.bf16 %v985, %v984
        %v1006 = vpack.c.bf16 %v987, %v986
        %v1007 = vpack.c.bf16 %v989, %v988
        %v1008 = vpack.c.bf16 %v991, %v990
        %v1009 = vpack.c.bf16 %v993, %v992
        %v1074 = vunpack.c.l.b16 %v347
        %v1075 = vunpack.c.h.b16 %v347
        %v1076 = vunpack.c.l.b16 %v348
        %v1077 = vunpack.c.h.b16 %v348
        %v1078 = vunpack.c.l.b16 %v349
        %v1079 = vunpack.c.h.b16 %v349
        %v1080 = vunpack.c.l.b16 %v350
        %v1081 = vunpack.c.h.b16 %v350
        %v1082 = vunpack.c.l.b16 %v351
        %v1083 = vunpack.c.h.b16 %v351
        %v1084 = vunpack.c.l.b16 %v352
        %v1085 = vunpack.c.h.b16 %v352
        %v1086 = vunpack.c.l.b16 %v353
        %v1087 = vunpack.c.h.b16 %v353
        %v1088 = vunpack.c.l.b16 %v354
        %v1089 = vunpack.c.h.b16 %v354
        %v1090 = vunpack.c.l.b16 %v355
        %v1091 = vunpack.c.h.b16 %v355
        %v1092 = vunpack.c.l.b16 %v356
        %v1093 = vunpack.c.h.b16 %v356
        %v1094 = vunpack.c.l.b16 %v357
        %v1095 = vunpack.c.h.b16 %v357
        %v1096 = vunpack.c.l.b16 %v358
        %v1097 = vunpack.c.h.b16 %v358
        %v1098 = vunpack.c.l.b16 %v359
        %v1099 = vunpack.c.h.b16 %v359
        %v1100 = vunpack.c.l.b16 %v360
        %v1101 = vunpack.c.h.b16 %v360
        %v1102 = vunpack.c.l.b16 %v361
        %v1103 = vunpack.c.h.b16 %v361
        %v1104 = vunpack.c.l.b16 %v362
        %v1105 = vunpack.c.h.b16 %v362
        %v1106 = vunpack.c.l.b16 %v363
        %v1107 = vunpack.c.h.b16 %v363
        %v1108 = vunpack.c.l.b16 %v364
        %v1109 = vunpack.c.h.b16 %v364
        %v1110 = vunpack.c.l.b16 %v365
        %v1111 = vunpack.c.h.b16 %v365
        %v1112 = vunpack.c.l.b16 %v366
        %v1113 = vunpack.c.h.b16 %v366
        %v1114 = vunpack.c.l.b16 %v367
        %v1115 = vunpack.c.h.b16 %v367
        %v1116 = vunpack.c.l.b16 %v368
        %v1117 = vunpack.c.h.b16 %v368
        %v1118 = vunpack.c.l.b16 %v369
        %v1119 = vunpack.c.h.b16 %v369
        %v1120 = vunpack.c.l.b16 %v370
        %v1121 = vunpack.c.h.b16 %v370
        %v1122 = vunpack.c.l.b16 %v371
        %v1123 = vunpack.c.h.b16 %v371
        %v1124 = vunpack.c.l.b16 %v372
        %v1125 = vunpack.c.h.b16 %v372
        %v1126 = vunpack.c.l.b16 %v373
        %v1127 = vunpack.c.h.b16 %v373
        %v1128 = vunpack.c.l.b16 %v374
        %v1129 = vunpack.c.h.b16 %v374
        %v1130 = vunpack.c.l.b16 %v375
        %v1131 = vunpack.c.h.b16 %v375
        %v1132 = vunpack.c.l.b16 %v376
        %v1133 = vunpack.c.h.b16 %v376
        %v1134 = vunpack.c.l.b16 %v377
        %v1135 = vunpack.c.h.b16 %v377
        %v1136 = vunpack.c.l.b16 %v378
        %v1137 = vunpack.c.h.b16 %v378
        %v1138 = vunpack.c.l.b16 %v379
        %v1139 = vunpack.c.h.b16 %v379
        %v1140 = vunpack.c.l.b16 %v380
        %v1141 = vunpack.c.h.b16 %v380
        %v1142 = vunpack.c.l.b16 %v381
        %v1143 = vunpack.c.h.b16 %v381
        %v1144 = vunpack.c.l.b16 %v382
        %v1145 = vunpack.c.h.b16 %v382
        %v1146 = vunpack.c.l.b16 %v383
        %v1147 = vunpack.c.h.b16 %v383
        %v1148 = vunpack.c.l.b16 %v384
        %v1149 = vunpack.c.h.b16 %v384
        %v1150 = vunpack.c.l.b16 %v385
        %v1151 = vunpack.c.h.b16 %v385
        %v1152 = vunpack.c.l.b16 %v386
        %v1153 = vunpack.c.h.b16 %v386
        %v1154 = vunpack.c.l.b16 %v387
        %v1155 = vunpack.c.h.b16 %v387
        %v1156 = vunpack.c.l.b16 %v388
        %v1157 = vunpack.c.h.b16 %v388
        %v1158 = vunpack.c.l.b16 %v389
        %v1159 = vunpack.c.h.b16 %v389
        %v1160 = vunpack.c.l.b16 %v390
        %v1161 = vunpack.c.h.b16 %v390
        %v1162 = vunpack.c.l.b16 %v391
        %v1163 = vunpack.c.h.b16 %v391
        %v1164 = vunpack.c.l.b16 %v392
        %v1165 = vunpack.c.h.b16 %v392
        %v1166 = vunpack.c.l.b16 %v393
        %v1167 = vunpack.c.h.b16 %v393
        %v1168 = vunpack.c.l.b16 %v394
        %v1169 = vunpack.c.h.b16 %v394
        %v1170 = vunpack.c.l.b16 %v395
        %v1171 = vunpack.c.h.b16 %v395
        %v1172 = vunpack.c.l.b16 %v396
        %v1173 = vunpack.c.h.b16 %v396
        %v1174 = vunpack.c.l.b16 %v397
        %v1175 = vunpack.c.h.b16 %v397
        %v1176 = vunpack.c.l.b16 %v398
        %v1177 = vunpack.c.h.b16 %v398
        %v1178 = vunpack.c.l.b16 %v399
        %v1179 = vunpack.c.h.b16 %v399
        %v1180 = vunpack.c.l.b16 %v400
        %v1181 = vunpack.c.h.b16 %v400
        %v1182 = vunpack.c.l.b16 %v401
        %v1183 = vunpack.c.h.b16 %v401
        %v1184 = vunpack.c.l.b16 %v402
        %v1185 = vunpack.c.h.b16 %v402
        %v1186 = vunpack.c.l.b16 %v403
        %v1187 = vunpack.c.h.b16 %v403
        %v1188 = vunpack.c.l.b16 %v404
        %v1189 = vunpack.c.h.b16 %v404
        %v1190 = vunpack.c.l.b16 %v405
        %v1191 = vunpack.c.h.b16 %v405
        %v1192 = vunpack.c.l.b16 %v406
        %v1193 = vunpack.c.h.b16 %v406
        %v1194 = vunpack.c.l.b16 %v407
        %v1195 = vunpack.c.h.b16 %v407
        %v1196 = vunpack.c.l.b16 %v408
        %v1197 = vunpack.c.h.b16 %v408
        %v1198 = vunpack.c.l.b16 %v409
        %v1199 = vunpack.c.h.b16 %v409
        %v1200 = vunpack.c.l.b16 %v410
        %v1201 = vunpack.c.h.b16 %v410
        %v1202 = vpack.c.b16 %v1082, %v1074
        %v1203 = vpack.c.b16 %v1083, %v1075
        %v1204 = vpack.c.b16 %v1084, %v1076
        %v1205 = vpack.c.b16 %v1085, %v1077
        %v1206 = vpack.c.b16 %v1086, %v1078
        %v1207 = vpack.c.b16 %v1087, %v1079
        %v1208 = vpack.c.b16 %v1088, %v1080
        %v1209 = vpack.c.b16 %v1089, %v1081
        %v1210 = vpack.c.b16 %v1098, %v1090
        %v1211 = vpack.c.b16 %v1099, %v1091
        %v1212 = vpack.c.b16 %v1100, %v1092
        %v1213 = vpack.c.b16 %v1101, %v1093
        %v1214 = vpack.c.b16 %v1102, %v1094
        %v1215 = vpack.c.b16 %v1103, %v1095
        %v1216 = vpack.c.b16 %v1104, %v1096
        %v1217 = vpack.c.b16 %v1105, %v1097
        %v1218 = vpack.c.b16 %v1114, %v1106
        %v1219 = vpack.c.b16 %v1115, %v1107
        %v1220 = vpack.c.b16 %v1116, %v1108
        %v1221 = vpack.c.b16 %v1117, %v1109
        %v1222 = vpack.c.b16 %v1118, %v1110
        %v1223 = vpack.c.b16 %v1119, %v1111
        %v1224 = vpack.c.b16 %v1120, %v1112
        %v1225 = vpack.c.b16 %v1121, %v1113
        %v1226 = vpack.c.b16 %v1130, %v1122
        %v1227 = vpack.c.b16 %v1131, %v1123
        %v1228 = vpack.c.b16 %v1132, %v1124
        %v1229 = vpack.c.b16 %v1133, %v1125
        %v1230 = vpack.c.b16 %v1134, %v1126
        %v1231 = vpack.c.b16 %v1135, %v1127
        %v1232 = vpack.c.b16 %v1136, %v1128
        %v1233 = vpack.c.b16 %v1137, %v1129
        %v1234 = vpack.c.b16 %v1146, %v1138
        %v1235 = vpack.c.b16 %v1147, %v1139
        %v1236 = vpack.c.b16 %v1148, %v1140
        %v1237 = vpack.c.b16 %v1149, %v1141
        %v1238 = vpack.c.b16 %v1150, %v1142
        %v1239 = vpack.c.b16 %v1151, %v1143
        %v1240 = vpack.c.b16 %v1152, %v1144
        %v1241 = vpack.c.b16 %v1153, %v1145
        %v1242 = vpack.c.b16 %v1162, %v1154
        %v1243 = vpack.c.b16 %v1163, %v1155
        %v1244 = vpack.c.b16 %v1164, %v1156
        %v1245 = vpack.c.b16 %v1165, %v1157
        %v1246 = vpack.c.b16 %v1166, %v1158
        %v1247 = vpack.c.b16 %v1167, %v1159
        %v1248 = vpack.c.b16 %v1168, %v1160
        %v1249 = vpack.c.b16 %v1169, %v1161
        %v1250 = vpack.c.b16 %v1178, %v1170
        %v1251 = vpack.c.b16 %v1179, %v1171
        %v1252 = vpack.c.b16 %v1180, %v1172
        %v1253 = vpack.c.b16 %v1181, %v1173
        %v1254 = vpack.c.b16 %v1182, %v1174
        %v1255 = vpack.c.b16 %v1183, %v1175
        %v1256 = vpack.c.b16 %v1184, %v1176
        %v1257 = vpack.c.b16 %v1185, %v1177
        %v1258 = vpack.c.b16 %v1194, %v1186
        %v1259 = vpack.c.b16 %v1195, %v1187
        %v1260 = vpack.c.b16 %v1196, %v1188
        %v1261 = vpack.c.b16 %v1197, %v1189
        %v1262 = vpack.c.b16 %v1198, %v1190
        %v1263 = vpack.c.b16 %v1199, %v1191
        %v1264 = vpack.c.b16 %v1200, %v1192
        %v1265 = vpack.c.b16 %v1201, %v1193
        %1330 = vmatprep.subr.bf16.mxu0 %v1203
        %1331 = vmatpush1.bf16.msra.mxu0 %v1202
        %1332 = vmatprep.subr.bf16.mxu0 %v1211
        %1333 = vmatpush1.bf16.msra.mxu0 %v1210
        %1334 = vmatprep.subr.bf16.mxu0 %v1219
        %1335 = vmatpush1.bf16.msra.mxu0 %v1218
        %1336 = vmatprep.subr.bf16.mxu0 %v1227
        %1337 = vmatpush1.bf16.msra.mxu0 %v1226
        %1338 = vmatprep.subr.bf16.mxu0 %v1235
        %1339 = vmatpush1.bf16.msra.mxu0 %v1234
        %1340 = vmatprep.subr.bf16.mxu0 %v1243
        %1341 = vmatpush1.bf16.msra.mxu0 %v1242
        %1342 = vmatprep.subr.bf16.mxu0 %v1251
        %1343 = vmatpush1.bf16.msra.mxu0 %v1250
        %1344 = vmatprep.subr.bf16.mxu0 %v1259
        %1345 = vmatpush1.bf16.msra.mxu0 %v1258
        %1346 = vmatprep.subr.bf16.mxu0 0
        %1347 = vmatpush1.bf16.msra.mxu0 0
        %1348 = vmatprep.subr.bf16.mxu0 0
        %1349 = vmatpush1.bf16.msra.mxu0 0
        %1350 = vmatprep.subr.bf16.mxu0 0
        %1351 = vmatpush1.bf16.msra.mxu0 0
        %1352 = vmatprep.subr.bf16.mxu0 0
        %1353 = vmatpush1.bf16.msra.mxu0 0
        %1354 = vmatprep.subr.bf16.mxu0 0
        %1355 = vmatpush1.bf16.msra.mxu0 0
        %1356 = vmatprep.subr.bf16.mxu0 0
        %1357 = vmatpush1.bf16.msra.mxu0 0
        %1358 = vmatprep.subr.bf16.mxu0 0
        %1359 = vmatpush1.bf16.msra.mxu0 0
        %1360 = vmatprep.subr.bf16.mxu0 0
        %1361 = vmatpush1.bf16.msra.mxu0 0
        %1362 = vmatprep.mubr.bf16.mxu0 0
        %1363 = vmatmul.mubr.bf16.gmra.mrb[0].mxu0 %v994
        %v1364 = vpop.f32.mrb[0].mxu0
        %v1365 = vadd.f32 0.0, %v1364
        %v1366 = vpop.f32.mrb[0].mxu0
        %v1367 = vadd.f32 0.0, %v1366
        %v1368 = vpop.f32.mrb[0].mxu0
        %v1369 = vadd.f32 0.0, %v1368
        %v1370 = vpop.f32.mrb[0].mxu0
        %v1371 = vadd.f32 0.0, %v1370
        %1372 = vmatprep.mubr.bf16.mxu0 0
        %1373 = vmatmul.mubr.bf16.gmra.mrb[0].mxu0 %v995
        %v1374 = vpop.f32.mrb[0].mxu0
        %v1375 = vadd.f32 0.0, %v1374
        %v1376 = vpop.f32.mrb[0].mxu0
        %v1377 = vadd.f32 0.0, %v1376
        %v1378 = vpop.f32.mrb[0].mxu0
        %v1379 = vadd.f32 0.0, %v1378
        %v1380 = vpop.f32.mrb[0].mxu0
        %v1381 = vadd.f32 0.0, %v1380
        %1382 = vmatprep.mubr.bf16.mxu0 0
        %1383 = vmatmul.mubr.bf16.gmra.mrb[0].mxu0 %v996
        %v1384 = vpop.f32.mrb[0].mxu0
        %v1385 = vadd.f32 0.0, %v1384
        %v1386 = vpop.f32.mrb[0].mxu0
        %v1387 = vadd.f32 0.0, %v1386
        %v1388 = vpop.f32.mrb[0].mxu0
        %v1389 = vadd.f32 0.0, %v1388
        %v1390 = vpop.f32.mrb[0].mxu0
        %v1391 = vadd.f32 0.0, %v1390
        %1392 = vmatprep.mubr.bf16.mxu0 0
        %1393 = vmatmul.mubr.bf16.gmra.mrb[0].mxu0 %v997
        %v1394 = vpop.f32.mrb[0].mxu0
        %v1395 = vadd.f32 0.0, %v1394
        %v1396 = vpop.f32.mrb[0].mxu0
        %v1397 = vadd.f32 0.0, %v1396
        %v1398 = vpop.f32.mrb[0].mxu0
        %v1399 = vadd.f32 0.0, %v1398
        %v1400 = vpop.f32.mrb[0].mxu0
        %v1401 = vadd.f32 0.0, %v1400
        %1402 = vmatprep.mubr.bf16.mxu0 0
        %1403 = vmatmul.mubr.bf16.gmra.mrb[0].mxu0 %v998
        %v1404 = vpop.f32.mrb[0].mxu0
        %v1405 = vadd.f32 0.0, %v1404
        %v1406 = vpop.f32.mrb[0].mxu0
        %v1407 = vadd.f32 0.0, %v1406
        %v1408 = vpop.f32.mrb[0].mxu0
        %v1409 = vadd.f32 0.0, %v1408
        %v1410 = vpop.f32.mrb[0].mxu0
        %v1411 = vadd.f32 0.0, %v1410
        %1412 = vmatprep.mubr.bf16.mxu0 0
        %1413 = vmatmul.mubr.bf16.gmra.mrb[0].mxu0 %v999
        %v1414 = vpop.f32.mrb[0].mxu0
        %v1415 = vadd.f32 0.0, %v1414
        %v1416 = vpop.f32.mrb[0].mxu0
        %v1417 = vadd.f32 0.0, %v1416
        %v1418 = vpop.f32.mrb[0].mxu0
        %v1419 = vadd.f32 0.0, %v1418
        %v1420 = vpop.f32.mrb[0].mxu0
        %v1421 = vadd.f32 0.0, %v1420
        %1422 = vmatprep.mubr.bf16.mxu0 0
        %1423 = vmatmul.mubr.bf16.gmra.mrb[0].mxu0 %v1000
        %v1424 = vpop.f32.mrb[0].mxu0
        %v1425 = vadd.f32 0.0, %v1424
        %v1426 = vpop.f32.mrb[0].mxu0
        %v1427 = vadd.f32 0.0, %v1426
        %v1428 = vpop.f32.mrb[0].mxu0
        %v1429 = vadd.f32 0.0, %v1428
        %v1430 = vpop.f32.mrb[0].mxu0
        %v1431 = vadd.f32 0.0, %v1430
        %1432 = vmatprep.mubr.bf16.mxu0 0
        %1433 = vmatmul.mubr.bf16.gmra.mrb[0].mxu0 %v1001
        %v1434 = vpop.f32.mrb[0].mxu0
        %v1435 = vadd.f32 0.0, %v1434
        %v1436 = vpop.f32.mrb[0].mxu0
        %v1437 = vadd.f32 0.0, %v1436
        %v1438 = vpop.f32.mrb[0].mxu0
        %v1439 = vadd.f32 0.0, %v1438
        %v1440 = vpop.f32.mrb[0].mxu0
        %v1441 = vadd.f32 0.0, %v1440
        %1442 = vmatprep.mubr.bf16.mxu0 0
        %1443 = vmatmul.mubr.bf16.gmra.mrb[0].mxu0 %v1002
        %v1444 = vpop.f32.mrb[0].mxu0
        %v1445 = vadd.f32 0.0, %v1444
        %v1446 = vpop.f32.mrb[0].mxu0
        %v1447 = vadd.f32 0.0, %v1446
        %v1448 = vpop.f32.mrb[0].mxu0
        %v1449 = vadd.f32 0.0, %v1448
        %v1450 = vpop.f32.mrb[0].mxu0
        %v1451 = vadd.f32 0.0, %v1450
        %1452 = vmatprep.mubr.bf16.mxu0 0
        %1453 = vmatmul.mubr.bf16.gmra.mrb[0].mxu0 %v1003
        %v1454 = vpop.f32.mrb[0].mxu0
        %v1455 = vadd.f32 0.0, %v1454
        %v1456 = vpop.f32.mrb[0].mxu0
        %v1457 = vadd.f32 0.0, %v1456
        %v1458 = vpop.f32.mrb[0].mxu0
        %v1459 = vadd.f32 0.0, %v1458
        %v1460 = vpop.f32.mrb[0].mxu0
        %v1461 = vadd.f32 0.0, %v1460
        %1462 = vmatprep.mubr.bf16.mxu0 0
        %1463 = vmatmul.mubr.bf16.gmra.mrb[0].mxu0 %v1004
        %v1464 = vpop.f32.mrb[0].mxu0
        %v1465 = vadd.f32 0.0, %v1464
        %v1466 = vpop.f32.mrb[0].mxu0
        %v1467 = vadd.f32 0.0, %v1466
        %v1468 = vpop.f32.mrb[0].mxu0
        %v1469 = vadd.f32 0.0, %v1468
        %v1470 = vpop.f32.mrb[0].mxu0
        %v1471 = vadd.f32 0.0, %v1470
        %1472 = vmatprep.mubr.bf16.mxu0 0
        %1473 = vmatmul.mubr.bf16.gmra.mrb[0].mxu0 %v1005
        %v1474 = vpop.f32.mrb[0].mxu0
        %v1475 = vadd.f32 0.0, %v1474
        %v1476 = vpop.f32.mrb[0].mxu0
        %v1477 = vadd.f32 0.0, %v1476
        %v1478 = vpop.f32.mrb[0].mxu0
        %v1479 = vadd.f32 0.0, %v1478
        %v1480 = vpop.f32.mrb[0].mxu0
        %v1481 = vadd.f32 0.0, %v1480
        %1482 = vmatprep.mubr.bf16.mxu0 0
        %1483 = vmatmul.mubr.bf16.gmra.mrb[0].mxu0 %v1006
        %v1484 = vpop.f32.mrb[0].mxu0
        %v1485 = vadd.f32 0.0, %v1484
        %v1486 = vpop.f32.mrb[0].mxu0
        %v1487 = vadd.f32 0.0, %v1486
        %v1488 = vpop.f32.mrb[0].mxu0
        %v1489 = vadd.f32 0.0, %v1488
        %v1490 = vpop.f32.mrb[0].mxu0
        %v1491 = vadd.f32 0.0, %v1490
        %1492 = vmatprep.mubr.bf16.mxu0 0
        %1493 = vmatmul.mubr.bf16.gmra.mrb[0].mxu0 %v1007
        %v1494 = vpop.f32.mrb[0].mxu0
        %v1495 = vadd.f32 0.0, %v1494
        %v1496 = vpop.f32.mrb[0].mxu0
        %v1497 = vadd.f32 0.0, %v1496
        %v1498 = vpop.f32.mrb[0].mxu0
        %v1499 = vadd.f32 0.0, %v1498
        %v1500 = vpop.f32.mrb[0].mxu0
        %v1501 = vadd.f32 0.0, %v1500
        %1502 = vmatprep.mubr.bf16.mxu0 0
        %1503 = vmatmul.mubr.bf16.gmra.mrb[0].mxu0 %v1008
        %v1504 = vpop.f32.mrb[0].mxu0
        %v1505 = vadd.f32 0.0, %v1504
        %v1506 = vpop.f32.mrb[0].mxu0
        %v1507 = vadd.f32 0.0, %v1506
        %v1508 = vpop.f32.mrb[0].mxu0
        %v1509 = vadd.f32 0.0, %v1508
        %v1510 = vpop.f32.mrb[0].mxu0
        %v1511 = vadd.f32 0.0, %v1510
        %1512 = vmatprep.mubr.bf16.mxu0 0
        %1513 = vmatmul.mubr.bf16.gmra.mrb[0].mxu0 %v1009
        %v1514 = vpop.f32.mrb[0].mxu0
        %v1515 = vadd.f32 0.0, %v1514
        %v1516 = vpop.f32.mrb[0].mxu0
        %v1517 = vadd.f32 0.0, %v1516
        %v1518 = vpop.f32.mrb[0].mxu0
        %v1519 = vadd.f32 0.0, %v1518
        %v1520 = vpop.f32.mrb[0].mxu0
        %v1521 = vadd.f32 0.0, %v1520
        %1522 = vdwg.mxu0
        %1523 = vmatprep.subr.bf16.mxu0 %v1205
        %1524 = vmatpush1.bf16.msra.mxu0 %v1204
        %1525 = vmatprep.subr.bf16.mxu0 %v1213
        %1526 = vmatpush1.bf16.msra.mxu0 %v1212
        %1527 = vmatprep.subr.bf16.mxu0 %v1221
        %1528 = vmatpush1.bf16.msra.mxu0 %v1220
        %1529 = vmatprep.subr.bf16.mxu0 %v1229
        %1530 = vmatpush1.bf16.msra.mxu0 %v1228
        %1531 = vmatprep.subr.bf16.mxu0 %v1237
        %1532 = vmatpush1.bf16.msra.mxu0 %v1236
        %1533 = vmatprep.subr.bf16.mxu0 %v1245
        %1534 = vmatpush1.bf16.msra.mxu0 %v1244
        %1535 = vmatprep.subr.bf16.mxu0 %v1253
        %1536 = vmatpush1.bf16.msra.mxu0 %v1252
        %1537 = vmatprep.subr.bf16.mxu0 %v1261
        %1538 = vmatpush1.bf16.msra.mxu0 %v1260
        %1539 = vmatprep.subr.bf16.mxu0 0
        %1540 = vmatpush1.bf16.msra.mxu0 0
        %1541 = vmatprep.subr.bf16.mxu0 0
        %1542 = vmatpush1.bf16.msra.mxu0 0
        %1543 = vmatprep.subr.bf16.mxu0 0
        %1544 = vmatpush1.bf16.msra.mxu0 0
        %1545 = vmatprep.subr.bf16.mxu0 0
        %1546 = vmatpush1.bf16.msra.mxu0 0
        %1547 = vmatprep.subr.bf16.mxu0 0
        %1548 = vmatpush1.bf16.msra.mxu0 0
        %1549 = vmatprep.subr.bf16.mxu0 0
        %1550 = vmatpush1.bf16.msra.mxu0 0
        %1551 = vmatprep.subr.bf16.mxu0 0
        %1552 = vmatpush1.bf16.msra.mxu0 0
        %1553 = vmatprep.subr.bf16.mxu0 0
        %1554 = vmatpush1.bf16.msra.mxu0 0
        %1555 = vmatprep.mubr.bf16.mxu0 0
        %1556 = vmatmul.mubr.bf16.gmra.mrb[0].mxu0 %v994
        %v1557 = vpop.f32.mrb[0].mxu0
        %v1558 = vadd.f32 0.0, %v1557
        %v1559 = vpop.f32.mrb[0].mxu0
        %v1560 = vadd.f32 0.0, %v1559
        %v1561 = vpop.f32.mrb[0].mxu0
        %v1562 = vadd.f32 0.0, %v1561
        %v1563 = vpop.f32.mrb[0].mxu0
        %v1564 = vadd.f32 0.0, %v1563
        %1565 = vmatprep.mubr.bf16.mxu0 0
        %1566 = vmatmul.mubr.bf16.gmra.mrb[0].mxu0 %v995
        %v1567 = vpop.f32.mrb[0].mxu0
        %v1568 = vadd.f32 0.0, %v1567
        %v1569 = vpop.f32.mrb[0].mxu0
        %v1570 = vadd.f32 0.0, %v1569
        %v1571 = vpop.f32.mrb[0].mxu0
        %v1572 = vadd.f32 0.0, %v1571
        %v1573 = vpop.f32.mrb[0].mxu0
        %v1574 = vadd.f32 0.0, %v1573
        %1575 = vmatprep.mubr.bf16.mxu0 0
        %1576 = vmatmul.mubr.bf16.gmra.mrb[0].mxu0 %v996
        %v1577 = vpop.f32.mrb[0].mxu0
        %v1578 = vadd.f32 0.0, %v1577
        %v1579 = vpop.f32.mrb[0].mxu0
        %v1580 = vadd.f32 0.0, %v1579
        %v1581 = vpop.f32.mrb[0].mxu0
        %v1582 = vadd.f32 0.0, %v1581
        %v1583 = vpop.f32.mrb[0].mxu0
        %v1584 = vadd.f32 0.0, %v1583
        %1585 = vmatprep.mubr.bf16.mxu0 0
        %1586 = vmatmul.mubr.bf16.gmra.mrb[0].mxu0 %v997
        %v1587 = vpop.f32.mrb[0].mxu0
        %v1588 = vadd.f32 0.0, %v1587
        %v1589 = vpop.f32.mrb[0].mxu0
        %v1590 = vadd.f32 0.0, %v1589
        %v1591 = vpop.f32.mrb[0].mxu0
        %v1592 = vadd.f32 0.0, %v1591
        %v1593 = vpop.f32.mrb[0].mxu0
        %v1594 = vadd.f32 0.0, %v1593
        %1595 = vmatprep.mubr.bf16.mxu0 0
        %1596 = vmatmul.mubr.bf16.gmra.mrb[0].mxu0 %v998
        %v1597 = vpop.f32.mrb[0].mxu0
        %v1598 = vadd.f32 0.0, %v1597
        %v1599 = vpop.f32.mrb[0].mxu0
        %v1600 = vadd.f32 0.0, %v1599
        %v1601 = vpop.f32.mrb[0].mxu0
        %v1602 = vadd.f32 0.0, %v1601
        %v1603 = vpop.f32.mrb[0].mxu0
        %v1604 = vadd.f32 0.0, %v1603
        %1605 = vmatprep.mubr.bf16.mxu0 0
        %1606 = vmatmul.mubr.bf16.gmra.mrb[0].mxu0 %v999
        %v1607 = vpop.f32.mrb[0].mxu0
        %v1608 = vadd.f32 0.0, %v1607
        %v1609 = vpop.f32.mrb[0].mxu0
        %v1610 = vadd.f32 0.0, %v1609
        %v1611 = vpop.f32.mrb[0].mxu0
        %v1612 = vadd.f32 0.0, %v1611
        %v1613 = vpop.f32.mrb[0].mxu0
        %v1614 = vadd.f32 0.0, %v1613
        %1615 = vmatprep.mubr.bf16.mxu0 0
        %1616 = vmatmul.mubr.bf16.gmra.mrb[0].mxu0 %v1000
        %v1617 = vpop.f32.mrb[0].mxu0
        %v1618 = vadd.f32 0.0, %v1617
        %v1619 = vpop.f32.mrb[0].mxu0
        %v1620 = vadd.f32 0.0, %v1619
        %v1621 = vpop.f32.mrb[0].mxu0
        %v1622 = vadd.f32 0.0, %v1621
        %v1623 = vpop.f32.mrb[0].mxu0
        %v1624 = vadd.f32 0.0, %v1623
        %1625 = vmatprep.mubr.bf16.mxu0 0
        %1626 = vmatmul.mubr.bf16.gmra.mrb[0].mxu0 %v1001
        %v1627 = vpop.f32.mrb[0].mxu0
        %v1628 = vadd.f32 0.0, %v1627
        %v1629 = vpop.f32.mrb[0].mxu0
        %v1630 = vadd.f32 0.0, %v1629
        %v1631 = vpop.f32.mrb[0].mxu0
        %v1632 = vadd.f32 0.0, %v1631
        %v1633 = vpop.f32.mrb[0].mxu0
        %v1634 = vadd.f32 0.0, %v1633
        %1635 = vmatprep.mubr.bf16.mxu0 0
        %1636 = vmatmul.mubr.bf16.gmra.mrb[0].mxu0 %v1002
        %v1637 = vpop.f32.mrb[0].mxu0
        %v1638 = vadd.f32 0.0, %v1637
        %v1639 = vpop.f32.mrb[0].mxu0
        %v1640 = vadd.f32 0.0, %v1639
        %v1641 = vpop.f32.mrb[0].mxu0
        %v1642 = vadd.f32 0.0, %v1641
        %v1643 = vpop.f32.mrb[0].mxu0
        %v1644 = vadd.f32 0.0, %v1643
        %1645 = vmatprep.mubr.bf16.mxu0 0
        %1646 = vmatmul.mubr.bf16.gmra.mrb[0].mxu0 %v1003
        %v1647 = vpop.f32.mrb[0].mxu0
        %v1648 = vadd.f32 0.0, %v1647
        %v1649 = vpop.f32.mrb[0].mxu0
        %v1650 = vadd.f32 0.0, %v1649
        %v1651 = vpop.f32.mrb[0].mxu0
        %v1652 = vadd.f32 0.0, %v1651
        %v1653 = vpop.f32.mrb[0].mxu0
        %v1654 = vadd.f32 0.0, %v1653
        %1655 = vmatprep.mubr.bf16.mxu0 0
        %1656 = vmatmul.mubr.bf16.gmra.mrb[0].mxu0 %v1004
        %v1657 = vpop.f32.mrb[0].mxu0
        %v1658 = vadd.f32 0.0, %v1657
        %v1659 = vpop.f32.mrb[0].mxu0
        %v1660 = vadd.f32 0.0, %v1659
        %v1661 = vpop.f32.mrb[0].mxu0
        %v1662 = vadd.f32 0.0, %v1661
        %v1663 = vpop.f32.mrb[0].mxu0
        %v1664 = vadd.f32 0.0, %v1663
        %1665 = vmatprep.mubr.bf16.mxu0 0
        %1666 = vmatmul.mubr.bf16.gmra.mrb[0].mxu0 %v1005
        %v1667 = vpop.f32.mrb[0].mxu0
        %v1668 = vadd.f32 0.0, %v1667
        %v1669 = vpop.f32.mrb[0].mxu0
        %v1670 = vadd.f32 0.0, %v1669
        %v1671 = vpop.f32.mrb[0].mxu0
        %v1672 = vadd.f32 0.0, %v1671
        %v1673 = vpop.f32.mrb[0].mxu0
        %v1674 = vadd.f32 0.0, %v1673
        %1675 = vmatprep.mubr.bf16.mxu0 0
        %1676 = vmatmul.mubr.bf16.gmra.mrb[0].mxu0 %v1006
        %v1677 = vpop.f32.mrb[0].mxu0
        %v1678 = vadd.f32 0.0, %v1677
        %v1679 = vpop.f32.mrb[0].mxu0
        %v1680 = vadd.f32 0.0, %v1679
        %v1681 = vpop.f32.mrb[0].mxu0
        %v1682 = vadd.f32 0.0, %v1681
        %v1683 = vpop.f32.mrb[0].mxu0
        %v1684 = vadd.f32 0.0, %v1683
        %1685 = vmatprep.mubr.bf16.mxu0 0
        %1686 = vmatmul.mubr.bf16.gmra.mrb[0].mxu0 %v1007
        %v1687 = vpop.f32.mrb[0].mxu0
        %v1688 = vadd.f32 0.0, %v1687
        %v1689 = vpop.f32.mrb[0].mxu0
        %v1690 = vadd.f32 0.0, %v1689
        %v1691 = vpop.f32.mrb[0].mxu0
        %v1692 = vadd.f32 0.0, %v1691
        %v1693 = vpop.f32.mrb[0].mxu0
        %v1694 = vadd.f32 0.0, %v1693
        %1695 = vmatprep.mubr.bf16.mxu0 0
        %1696 = vmatmul.mubr.bf16.gmra.mrb[0].mxu0 %v1008
        %v1697 = vpop.f32.mrb[0].mxu0
        %v1698 = vadd.f32 0.0, %v1697
        %v1699 = vpop.f32.mrb[0].mxu0
        %v1700 = vadd.f32 0.0, %v1699
        %v1701 = vpop.f32.mrb[0].mxu0
        %v1702 = vadd.f32 0.0, %v1701
        %v1703 = vpop.f32.mrb[0].mxu0
        %v1704 = vadd.f32 0.0, %v1703
        %1705 = vmatprep.mubr.bf16.mxu0 0
        %1706 = vmatmul.mubr.bf16.gmra.mrb[0].mxu0 %v1009
        %v1707 = vpop.f32.mrb[0].mxu0
        %v1708 = vadd.f32 0.0, %v1707
        %v1709 = vpop.f32.mrb[0].mxu0
        %v1710 = vadd.f32 0.0, %v1709
        %v1711 = vpop.f32.mrb[0].mxu0
        %v1712 = vadd.f32 0.0, %v1711
        %v1713 = vpop.f32.mrb[0].mxu0
        %v1714 = vadd.f32 0.0, %v1713
        %1715 = vdwg.mxu0
        %1716 = vmatprep.subr.bf16.mxu0 %v1207
        %1717 = vmatpush1.bf16.msra.mxu0 %v1206
        %1718 = vmatprep.subr.bf16.mxu0 %v1215
        %1719 = vmatpush1.bf16.msra.mxu0 %v1214
        %1720 = vmatprep.subr.bf16.mxu0 %v1223
        %1721 = vmatpush1.bf16.msra.mxu0 %v1222
        %1722 = vmatprep.subr.bf16.mxu0 %v1231
        %1723 = vmatpush1.bf16.msra.mxu0 %v1230
        %1724 = vmatprep.subr.bf16.mxu0 %v1239
        %1725 = vmatpush1.bf16.msra.mxu0 %v1238
        %1726 = vmatprep.subr.bf16.mxu0 %v1247
        %1727 = vmatpush1.bf16.msra.mxu0 %v1246
        %1728 = vmatprep.subr.bf16.mxu0 %v1255
        %1729 = vmatpush1.bf16.msra.mxu0 %v1254
        %1730 = vmatprep.subr.bf16.mxu0 %v1263
        %1731 = vmatpush1.bf16.msra.mxu0 %v1262
        %1732 = vmatprep.subr.bf16.mxu0 0
        %1733 = vmatpush1.bf16.msra.mxu0 0
        %1734 = vmatprep.subr.bf16.mxu0 0
        %1735 = vmatpush1.bf16.msra.mxu0 0
        %1736 = vmatprep.subr.bf16.mxu0 0
        %1737 = vmatpush1.bf16.msra.mxu0 0
        %1738 = vmatprep.subr.bf16.mxu0 0
        %1739 = vmatpush1.bf16.msra.mxu0 0
        %1740 = vmatprep.subr.bf16.mxu0 0
        %1741 = vmatpush1.bf16.msra.mxu0 0
        %1742 = vmatprep.subr.bf16.mxu0 0
        %1743 = vmatpush1.bf16.msra.mxu0 0
        %1744 = vmatprep.subr.bf16.mxu0 0
        %1745 = vmatpush1.bf16.msra.mxu0 0
        %1746 = vmatprep.subr.bf16.mxu0 0
        %1747 = vmatpush1.bf16.msra.mxu0 0
        %1748 = vmatprep.mubr.bf16.mxu0 0
        %1749 = vmatmul.mubr.bf16.gmra.mrb[0].mxu0 %v994
        %v1750 = vpop.f32.mrb[0].mxu0
        %v1751 = vadd.f32 0.0, %v1750
        %v1752 = vpop.f32.mrb[0].mxu0
        %v1753 = vadd.f32 0.0, %v1752
        %v1754 = vpop.f32.mrb[0].mxu0
        %v1755 = vadd.f32 0.0, %v1754
        %v1756 = vpop.f32.mrb[0].mxu0
        %v1757 = vadd.f32 0.0, %v1756
        %1758 = vmatprep.mubr.bf16.mxu0 0
        %1759 = vmatmul.mubr.bf16.gmra.mrb[0].mxu0 %v995
        %v1760 = vpop.f32.mrb[0].mxu0
        %v1761 = vadd.f32 0.0, %v1760
        %v1762 = vpop.f32.mrb[0].mxu0
        %v1763 = vadd.f32 0.0, %v1762
        %v1764 = vpop.f32.mrb[0].mxu0
        %v1765 = vadd.f32 0.0, %v1764
        %v1766 = vpop.f32.mrb[0].mxu0
        %v1767 = vadd.f32 0.0, %v1766
        %1768 = vmatprep.mubr.bf16.mxu0 0
        %1769 = vmatmul.mubr.bf16.gmra.mrb[0].mxu0 %v996
        %v1770 = vpop.f32.mrb[0].mxu0
        %v1771 = vadd.f32 0.0, %v1770
        %v1772 = vpop.f32.mrb[0].mxu0
        %v1773 = vadd.f32 0.0, %v1772
        %v1774 = vpop.f32.mrb[0].mxu0
        %v1775 = vadd.f32 0.0, %v1774
        %v1776 = vpop.f32.mrb[0].mxu0
        %v1777 = vadd.f32 0.0, %v1776
        %1778 = vmatprep.mubr.bf16.mxu0 0
        %1779 = vmatmul.mubr.bf16.gmra.mrb[0].mxu0 %v997
        %v1780 = vpop.f32.mrb[0].mxu0
        %v1781 = vadd.f32 0.0, %v1780
        %v1782 = vpop.f32.mrb[0].mxu0
        %v1783 = vadd.f32 0.0, %v1782
        %v1784 = vpop.f32.mrb[0].mxu0
        %v1785 = vadd.f32 0.0, %v1784
        %v1786 = vpop.f32.mrb[0].mxu0
        %v1787 = vadd.f32 0.0, %v1786
        %1788 = vmatprep.mubr.bf16.mxu0 0
        %1789 = vmatmul.mubr.bf16.gmra.mrb[0].mxu0 %v998
        %v1790 = vpop.f32.mrb[0].mxu0
        %v1791 = vadd.f32 0.0, %v1790
        %v1792 = vpop.f32.mrb[0].mxu0
        %v1793 = vadd.f32 0.0, %v1792
        %v1794 = vpop.f32.mrb[0].mxu0
        %v1795 = vadd.f32 0.0, %v1794
        %v1796 = vpop.f32.mrb[0].mxu0
        %v1797 = vadd.f32 0.0, %v1796
        %1798 = vmatprep.mubr.bf16.mxu0 0
        %1799 = vmatmul.mubr.bf16.gmra.mrb[0].mxu0 %v999
        %v1800 = vpop.f32.mrb[0].mxu0
        %v1801 = vadd.f32 0.0, %v1800
        %v1802 = vpop.f32.mrb[0].mxu0
        %v1803 = vadd.f32 0.0, %v1802
        %v1804 = vpop.f32.mrb[0].mxu0
        %v1805 = vadd.f32 0.0, %v1804
        %v1806 = vpop.f32.mrb[0].mxu0
        %v1807 = vadd.f32 0.0, %v1806
        %1808 = vmatprep.mubr.bf16.mxu0 0
        %1809 = vmatmul.mubr.bf16.gmra.mrb[0].mxu0 %v1000
        %v1810 = vpop.f32.mrb[0].mxu0
        %v1811 = vadd.f32 0.0, %v1810
        %v1812 = vpop.f32.mrb[0].mxu0
        %v1813 = vadd.f32 0.0, %v1812
        %v1814 = vpop.f32.mrb[0].mxu0
        %v1815 = vadd.f32 0.0, %v1814
        %v1816 = vpop.f32.mrb[0].mxu0
        %v1817 = vadd.f32 0.0, %v1816
        %1818 = vmatprep.mubr.bf16.mxu0 0
        %1819 = vmatmul.mubr.bf16.gmra.mrb[0].mxu0 %v1001
        %v1820 = vpop.f32.mrb[0].mxu0
        %v1821 = vadd.f32 0.0, %v1820
        %v1822 = vpop.f32.mrb[0].mxu0
        %v1823 = vadd.f32 0.0, %v1822
        %v1824 = vpop.f32.mrb[0].mxu0
        %v1825 = vadd.f32 0.0, %v1824
        %v1826 = vpop.f32.mrb[0].mxu0
        %v1827 = vadd.f32 0.0, %v1826
        %1828 = vmatprep.mubr.bf16.mxu0 0
        %1829 = vmatmul.mubr.bf16.gmra.mrb[0].mxu0 %v1002
        %v1830 = vpop.f32.mrb[0].mxu0
        %v1831 = vadd.f32 0.0, %v1830
        %v1832 = vpop.f32.mrb[0].mxu0
        %v1833 = vadd.f32 0.0, %v1832
        %v1834 = vpop.f32.mrb[0].mxu0
        %v1835 = vadd.f32 0.0, %v1834
        %v1836 = vpop.f32.mrb[0].mxu0
        %v1837 = vadd.f32 0.0, %v1836
        %1838 = vmatprep.mubr.bf16.mxu0 0
        %1839 = vmatmul.mubr.bf16.gmra.mrb[0].mxu0 %v1003
        %v1840 = vpop.f32.mrb[0].mxu0
        %v1841 = vadd.f32 0.0, %v1840
        %v1842 = vpop.f32.mrb[0].mxu0
        %v1843 = vadd.f32 0.0, %v1842
        %v1844 = vpop.f32.mrb[0].mxu0
        %v1845 = vadd.f32 0.0, %v1844
        %v1846 = vpop.f32.mrb[0].mxu0
        %v1847 = vadd.f32 0.0, %v1846
        %1848 = vmatprep.mubr.bf16.mxu0 0
        %1849 = vmatmul.mubr.bf16.gmra.mrb[0].mxu0 %v1004
        %v1850 = vpop.f32.mrb[0].mxu0
        %v1851 = vadd.f32 0.0, %v1850
        %v1852 = vpop.f32.mrb[0].mxu0
        %v1853 = vadd.f32 0.0, %v1852
        %v1854 = vpop.f32.mrb[0].mxu0
        %v1855 = vadd.f32 0.0, %v1854
        %v1856 = vpop.f32.mrb[0].mxu0
        %v1857 = vadd.f32 0.0, %v1856
        %1858 = vmatprep.mubr.bf16.mxu0 0
        %1859 = vmatmul.mubr.bf16.gmra.mrb[0].mxu0 %v1005
        %v1860 = vpop.f32.mrb[0].mxu0
        %v1861 = vadd.f32 0.0, %v1860
        %v1862 = vpop.f32.mrb[0].mxu0
        %v1863 = vadd.f32 0.0, %v1862
        %v1864 = vpop.f32.mrb[0].mxu0
        %v1865 = vadd.f32 0.0, %v1864
        %v1866 = vpop.f32.mrb[0].mxu0
        %v1867 = vadd.f32 0.0, %v1866
        %1868 = vmatprep.mubr.bf16.mxu0 0
        %1869 = vmatmul.mubr.bf16.gmra.mrb[0].mxu0 %v1006
        %v1870 = vpop.f32.mrb[0].mxu0
        %v1871 = vadd.f32 0.0, %v1870
        %v1872 = vpop.f32.mrb[0].mxu0
        %v1873 = vadd.f32 0.0, %v1872
        %v1874 = vpop.f32.mrb[0].mxu0
        %v1875 = vadd.f32 0.0, %v1874
        %v1876 = vpop.f32.mrb[0].mxu0
        %v1877 = vadd.f32 0.0, %v1876
        %1878 = vmatprep.mubr.bf16.mxu0 0
        %1879 = vmatmul.mubr.bf16.gmra.mrb[0].mxu0 %v1007
        %v1880 = vpop.f32.mrb[0].mxu0
        %v1881 = vadd.f32 0.0, %v1880
        %v1882 = vpop.f32.mrb[0].mxu0
        %v1883 = vadd.f32 0.0, %v1882
        %v1884 = vpop.f32.mrb[0].mxu0
        %v1885 = vadd.f32 0.0, %v1884
        %v1886 = vpop.f32.mrb[0].mxu0
        %v1887 = vadd.f32 0.0, %v1886
        %1888 = vmatprep.mubr.bf16.mxu0 0
        %1889 = vmatmul.mubr.bf16.gmra.mrb[0].mxu0 %v1008
        %v1890 = vpop.f32.mrb[0].mxu0
        %v1891 = vadd.f32 0.0, %v1890
        %v1892 = vpop.f32.mrb[0].mxu0
        %v1893 = vadd.f32 0.0, %v1892
        %v1894 = vpop.f32.mrb[0].mxu0
        %v1895 = vadd.f32 0.0, %v1894
        %v1896 = vpop.f32.mrb[0].mxu0
        %v1897 = vadd.f32 0.0, %v1896
        %1898 = vmatprep.mubr.bf16.mxu0 0
        %1899 = vmatmul.mubr.bf16.gmra.mrb[0].mxu0 %v1009
        %v1900 = vpop.f32.mrb[0].mxu0
        %v1901 = vadd.f32 0.0, %v1900
        %v1902 = vpop.f32.mrb[0].mxu0
        %v1903 = vadd.f32 0.0, %v1902
        %v1904 = vpop.f32.mrb[0].mxu0
        %v1905 = vadd.f32 0.0, %v1904
        %v1906 = vpop.f32.mrb[0].mxu0
        %v1907 = vadd.f32 0.0, %v1906
        %1908 = vdwg.mxu0
        %1909 = vmatprep.subr.bf16.mxu0 %v1209
        %1910 = vmatpush1.bf16.msra.mxu0 %v1208
        %1911 = vmatprep.subr.bf16.mxu0 %v1217
        %1912 = vmatpush1.bf16.msra.mxu0 %v1216
        %1913 = vmatprep.subr.bf16.mxu0 %v1225
        %1914 = vmatpush1.bf16.msra.mxu0 %v1224
        %1915 = vmatprep.subr.bf16.mxu0 %v1233
        %1916 = vmatpush1.bf16.msra.mxu0 %v1232
        %1917 = vmatprep.subr.bf16.mxu0 %v1241
        %1918 = vmatpush1.bf16.msra.mxu0 %v1240
        %1919 = vmatprep.subr.bf16.mxu0 %v1249
        %1920 = vmatpush1.bf16.msra.mxu0 %v1248
        %1921 = vmatprep.subr.bf16.mxu0 %v1257
        %1922 = vmatpush1.bf16.msra.mxu0 %v1256
        %1923 = vmatprep.subr.bf16.mxu0 %v1265
        %1924 = vmatpush1.bf16.msra.mxu0 %v1264
        %1925 = vmatprep.subr.bf16.mxu0 0
        %1926 = vmatpush1.bf16.msra.mxu0 0
        %1927 = vmatprep.subr.bf16.mxu0 0
        %1928 = vmatpush1.bf16.msra.mxu0 0
        %1929 = vmatprep.subr.bf16.mxu0 0
        %1930 = vmatpush1.bf16.msra.mxu0 0
        %1931 = vmatprep.subr.bf16.mxu0 0
        %1932 = vmatpush1.bf16.msra.mxu0 0
        %1933 = vmatprep.subr.bf16.mxu0 0
        %1934 = vmatpush1.bf16.msra.mxu0 0
        %1935 = vmatprep.subr.bf16.mxu0 0
        %1936 = vmatpush1.bf16.msra.mxu0 0
        %1937 = vmatprep.subr.bf16.mxu0 0
        %1938 = vmatpush1.bf16.msra.mxu0 0
        %1939 = vmatprep.subr.bf16.mxu0 0
        %1940 = vmatpush1.bf16.msra.mxu0 0
        %1941 = vmatprep.mubr.bf16.mxu0 0
        %1942 = vmatmul.mubr.bf16.gmra.mrb[0].mxu0 %v994
        %v1943 = vpop.f32.mrb[0].mxu0
        %v1944 = vadd.f32 0.0, %v1943
        %v1945 = vpop.f32.mrb[0].mxu0
        %v1946 = vadd.f32 0.0, %v1945
        %v1947 = vpop.f32.mrb[0].mxu0
        %v1948 = vadd.f32 0.0, %v1947
        %v1949 = vpop.f32.mrb[0].mxu0
        %v1950 = vadd.f32 0.0, %v1949
        %1951 = vmatprep.mubr.bf16.mxu0 0
        %1952 = vmatmul.mubr.bf16.gmra.mrb[0].mxu0 %v995
        %v1953 = vpop.f32.mrb[0].mxu0
        %v1954 = vadd.f32 0.0, %v1953
        %v1955 = vpop.f32.mrb[0].mxu0
        %v1956 = vadd.f32 0.0, %v1955
        %v1957 = vpop.f32.mrb[0].mxu0
        %v1958 = vadd.f32 0.0, %v1957
        %v1959 = vpop.f32.mrb[0].mxu0
        %v1960 = vadd.f32 0.0, %v1959
        %1961 = vmatprep.mubr.bf16.mxu0 0
        %1962 = vmatmul.mubr.bf16.gmra.mrb[0].mxu0 %v996
        %v1963 = vpop.f32.mrb[0].mxu0
        %v1964 = vadd.f32 0.0, %v1963
        %v1965 = vpop.f32.mrb[0].mxu0
        %v1966 = vadd.f32 0.0, %v1965
        %v1967 = vpop.f32.mrb[0].mxu0
        %v1968 = vadd.f32 0.0, %v1967
        %v1969 = vpop.f32.mrb[0].mxu0
        %v1970 = vadd.f32 0.0, %v1969
        %1971 = vmatprep.mubr.bf16.mxu0 0
        %1972 = vmatmul.mubr.bf16.gmra.mrb[0].mxu0 %v997
        %v1973 = vpop.f32.mrb[0].mxu0
        %v1974 = vadd.f32 0.0, %v1973
        %v1975 = vpop.f32.mrb[0].mxu0
        %v1976 = vadd.f32 0.0, %v1975
        %v1977 = vpop.f32.mrb[0].mxu0
        %v1978 = vadd.f32 0.0, %v1977
        %v1979 = vpop.f32.mrb[0].mxu0
        %v1980 = vadd.f32 0.0, %v1979
        %1981 = vmatprep.mubr.bf16.mxu0 0
        %1982 = vmatmul.mubr.bf16.gmra.mrb[0].mxu0 %v998
        %v1983 = vpop.f32.mrb[0].mxu0
        %v1984 = vadd.f32 0.0, %v1983
        %v1985 = vpop.f32.mrb[0].mxu0
        %v1986 = vadd.f32 0.0, %v1985
        %v1987 = vpop.f32.mrb[0].mxu0
        %v1988 = vadd.f32 0.0, %v1987
        %v1989 = vpop.f32.mrb[0].mxu0
        %v1990 = vadd.f32 0.0, %v1989
        %1991 = vmatprep.mubr.bf16.mxu0 0
        %1992 = vmatmul.mubr.bf16.gmra.mrb[0].mxu0 %v999
        %v1993 = vpop.f32.mrb[0].mxu0
        %v1994 = vadd.f32 0.0, %v1993
        %v1995 = vpop.f32.mrb[0].mxu0
        %v1996 = vadd.f32 0.0, %v1995
        %v1997 = vpop.f32.mrb[0].mxu0
        %v1998 = vadd.f32 0.0, %v1997
        %v1999 = vpop.f32.mrb[0].mxu0
        %v2000 = vadd.f32 0.0, %v1999
        %2001 = vmatprep.mubr.bf16.mxu0 0
        %2002 = vmatmul.mubr.bf16.gmra.mrb[0].mxu0 %v1000
        %v2003 = vpop.f32.mrb[0].mxu0
        %v2004 = vadd.f32 0.0, %v2003
        %v2005 = vpop.f32.mrb[0].mxu0
        %v2006 = vadd.f32 0.0, %v2005
        %v2007 = vpop.f32.mrb[0].mxu0
        %v2008 = vadd.f32 0.0, %v2007
        %v2009 = vpop.f32.mrb[0].mxu0
        %v2010 = vadd.f32 0.0, %v2009
        %2011 = vmatprep.mubr.bf16.mxu0 0
        %2012 = vmatmul.mubr.bf16.gmra.mrb[0].mxu0 %v1001
        %v2013 = vpop.f32.mrb[0].mxu0
        %v2014 = vadd.f32 0.0, %v2013
        %v2015 = vpop.f32.mrb[0].mxu0
        %v2016 = vadd.f32 0.0, %v2015
        %v2017 = vpop.f32.mrb[0].mxu0
        %v2018 = vadd.f32 0.0, %v2017
        %v2019 = vpop.f32.mrb[0].mxu0
        %v2020 = vadd.f32 0.0, %v2019
        %2021 = vmatprep.mubr.bf16.mxu0 0
        %2022 = vmatmul.mubr.bf16.gmra.mrb[0].mxu0 %v1002
        %v2023 = vpop.f32.mrb[0].mxu0
        %v2024 = vadd.f32 0.0, %v2023
        %v2025 = vpop.f32.mrb[0].mxu0
        %v2026 = vadd.f32 0.0, %v2025
        %v2027 = vpop.f32.mrb[0].mxu0
        %v2028 = vadd.f32 0.0, %v2027
        %v2029 = vpop.f32.mrb[0].mxu0
        %v2030 = vadd.f32 0.0, %v2029
        %2031 = vmatprep.mubr.bf16.mxu0 0
        %2032 = vmatmul.mubr.bf16.gmra.mrb[0].mxu0 %v1003
        %v2033 = vpop.f32.mrb[0].mxu0
        %v2034 = vadd.f32 0.0, %v2033
        %v2035 = vpop.f32.mrb[0].mxu0
        %v2036 = vadd.f32 0.0, %v2035
        %v2037 = vpop.f32.mrb[0].mxu0
        %v2038 = vadd.f32 0.0, %v2037
        %v2039 = vpop.f32.mrb[0].mxu0
        %v2040 = vadd.f32 0.0, %v2039
        %2041 = vmatprep.mubr.bf16.mxu0 0
        %2042 = vmatmul.mubr.bf16.gmra.mrb[0].mxu0 %v1004
        %v2043 = vpop.f32.mrb[0].mxu0
        %v2044 = vadd.f32 0.0, %v2043
        %v2045 = vpop.f32.mrb[0].mxu0
        %v2046 = vadd.f32 0.0, %v2045
        %v2047 = vpop.f32.mrb[0].mxu0
        %v2048 = vadd.f32 0.0, %v2047
        %v2049 = vpop.f32.mrb[0].mxu0
        %v2050 = vadd.f32 0.0, %v2049
        %2051 = vmatprep.mubr.bf16.mxu0 0
        %2052 = vmatmul.mubr.bf16.gmra.mrb[0].mxu0 %v1005
        %v2053 = vpop.f32.mrb[0].mxu0
        %v2054 = vadd.f32 0.0, %v2053
        %v2055 = vpop.f32.mrb[0].mxu0
        %v2056 = vadd.f32 0.0, %v2055
        %v2057 = vpop.f32.mrb[0].mxu0
        %v2058 = vadd.f32 0.0, %v2057
        %v2059 = vpop.f32.mrb[0].mxu0
        %v2060 = vadd.f32 0.0, %v2059
        %2061 = vmatprep.mubr.bf16.mxu0 0
        %2062 = vmatmul.mubr.bf16.gmra.mrb[0].mxu0 %v1006
        %v2063 = vpop.f32.mrb[0].mxu0
        %v2064 = vadd.f32 0.0, %v2063
        %v2065 = vpop.f32.mrb[0].mxu0
        %v2066 = vadd.f32 0.0, %v2065
        %v2067 = vpop.f32.mrb[0].mxu0
        %v2068 = vadd.f32 0.0, %v2067
        %v2069 = vpop.f32.mrb[0].mxu0
        %v2070 = vadd.f32 0.0, %v2069
        %2071 = vmatprep.mubr.bf16.mxu0 0
        %2072 = vmatmul.mubr.bf16.gmra.mrb[0].mxu0 %v1007
        %v2073 = vpop.f32.mrb[0].mxu0
        %v2074 = vadd.f32 0.0, %v2073
        %v2075 = vpop.f32.mrb[0].mxu0
        %v2076 = vadd.f32 0.0, %v2075
        %v2077 = vpop.f32.mrb[0].mxu0
        %v2078 = vadd.f32 0.0, %v2077
        %v2079 = vpop.f32.mrb[0].mxu0
        %v2080 = vadd.f32 0.0, %v2079
        %2081 = vmatprep.mubr.bf16.mxu0 0
        %2082 = vmatmul.mubr.bf16.gmra.mrb[0].mxu0 %v1008
        %v2083 = vpop.f32.mrb[0].mxu0
        %v2084 = vadd.f32 0.0, %v2083
        %v2085 = vpop.f32.mrb[0].mxu0
        %v2086 = vadd.f32 0.0, %v2085
        %v2087 = vpop.f32.mrb[0].mxu0
        %v2088 = vadd.f32 0.0, %v2087
        %v2089 = vpop.f32.mrb[0].mxu0
        %v2090 = vadd.f32 0.0, %v2089
        %2091 = vmatprep.mubr.bf16.mxu0 0
        %2092 = vmatmul.mubr.bf16.gmra.mrb[0].mxu0 %v1009
        %v2093 = vpop.f32.mrb[0].mxu0
        %v2094 = vadd.f32 0.0, %v2093
        %v2095 = vpop.f32.mrb[0].mxu0
        %v2096 = vadd.f32 0.0, %v2095
        %v2097 = vpop.f32.mrb[0].mxu0
        %v2098 = vadd.f32 0.0, %v2097
        %v2099 = vpop.f32.mrb[0].mxu0
        %v2100 = vadd.f32 0.0, %v2099
        %2101 = vdwg.mxu0
        %v2102 = vmax.f32 %v1365, %v1369
        %v2103 = vmax.f32 %v2102, %v1375
        %v2104 = vmax.f32 %v2103, %v1379
        %v2105 = vmax.f32 %v2104, %v1385
        %v2106 = vmax.f32 %v2105, %v1389
        %v2107 = vmax.f32 %v2106, %v1395
        %v2108 = vmax.f32 %v2107, %v1399
        %v2109 = vmax.f32 %v2108, %v1405
        %v2110 = vmax.f32 %v2109, %v1409
        %v2111 = vmax.f32 %v2110, %v1415
        %v2112 = vmax.f32 %v2111, %v1419
        %v2113 = vmax.f32 %v2112, %v1425
        %v2114 = vmax.f32 %v2113, %v1429
        %v2115 = vmax.f32 %v2114, %v1435
        %v2116 = vmax.f32 %v2115, %v1439
        %v2117 = vmax.f32 %v2116, %v1445
        %v2118 = vmax.f32 %v2117, %v1449
        %v2119 = vmax.f32 %v2118, %v1455
        %v2120 = vmax.f32 %v2119, %v1459
        %v2121 = vmax.f32 %v2120, %v1465
        %v2122 = vmax.f32 %v2121, %v1469
        %v2123 = vmax.f32 %v2122, %v1475
        %v2124 = vmax.f32 %v2123, %v1479
        %v2125 = vmax.f32 %v2124, %v1485
        %v2126 = vmax.f32 %v2125, %v1489
        %v2127 = vmax.f32 %v2126, %v1495
        %v2128 = vmax.f32 %v2127, %v1499
        %v2129 = vmax.f32 %v2128, %v1505
        %v2130 = vmax.f32 %v2129, %v1509
        %v2131 = vmax.f32 %v2130, %v1515
        %v2132 = vmax.f32 %v2131, %v1519
        %v2133 = vrot.slane %v2132, 4
        %v2134 = vmax.f32 %v2132, %v2133
        %v2135 = vrot.slane %v2134, 2
        %v2136 = vmax.f32 %v2134, %v2135
        %v2137 = vrot.slane %v2136, 1
        %v2138 = vmax.f32 %v2136, %v2137
        %v2139 = vmax.f32 %v1367, %v1371
        %v2140 = vmax.f32 %v2139, %v1377
        %v2141 = vmax.f32 %v2140, %v1381
        %v2142 = vmax.f32 %v2141, %v1387
        %v2143 = vmax.f32 %v2142, %v1391
        %v2144 = vmax.f32 %v2143, %v1397
        %v2145 = vmax.f32 %v2144, %v1401
        %v2146 = vmax.f32 %v2145, %v1407
        %v2147 = vmax.f32 %v2146, %v1411
        %v2148 = vmax.f32 %v2147, %v1417
        %v2149 = vmax.f32 %v2148, %v1421
        %v2150 = vmax.f32 %v2149, %v1427
        %v2151 = vmax.f32 %v2150, %v1431
        %v2152 = vmax.f32 %v2151, %v1437
        %v2153 = vmax.f32 %v2152, %v1441
        %v2154 = vmax.f32 %v2153, %v1447
        %v2155 = vmax.f32 %v2154, %v1451
        %v2156 = vmax.f32 %v2155, %v1457
        %v2157 = vmax.f32 %v2156, %v1461
        %v2158 = vmax.f32 %v2157, %v1467
        %v2159 = vmax.f32 %v2158, %v1471
        %v2160 = vmax.f32 %v2159, %v1477
        %v2161 = vmax.f32 %v2160, %v1481
        %v2162 = vmax.f32 %v2161, %v1487
        %v2163 = vmax.f32 %v2162, %v1491
        %v2164 = vmax.f32 %v2163, %v1497
        %v2165 = vmax.f32 %v2164, %v1501
        %v2166 = vmax.f32 %v2165, %v1507
        %v2167 = vmax.f32 %v2166, %v1511
        %v2168 = vmax.f32 %v2167, %v1517
        %v2169 = vmax.f32 %v2168, %v1521
        %v2170 = vrot.slane %v2169, 4
        %v2171 = vmax.f32 %v2169, %v2170
        %v2172 = vrot.slane %v2171, 2
        %v2173 = vmax.f32 %v2171, %v2172
        %v2174 = vrot.slane %v2173, 1
        %v2175 = vmax.f32 %v2173, %v2174
        %v2176 = vmax.f32 %v1558, %v1562
        %v2177 = vmax.f32 %v2176, %v1568
        %v2178 = vmax.f32 %v2177, %v1572
        %v2179 = vmax.f32 %v2178, %v1578
        %v2180 = vmax.f32 %v2179, %v1582
        %v2181 = vmax.f32 %v2180, %v1588
        %v2182 = vmax.f32 %v2181, %v1592
        %v2183 = vmax.f32 %v2182, %v1598
        %v2184 = vmax.f32 %v2183, %v1602
        %v2185 = vmax.f32 %v2184, %v1608
        %v2186 = vmax.f32 %v2185, %v1612
        %v2187 = vmax.f32 %v2186, %v1618
        %v2188 = vmax.f32 %v2187, %v1622
        %v2189 = vmax.f32 %v2188, %v1628
        %v2190 = vmax.f32 %v2189, %v1632
        %v2191 = vmax.f32 %v2190, %v1638
        %v2192 = vmax.f32 %v2191, %v1642
        %v2193 = vmax.f32 %v2192, %v1648
        %v2194 = vmax.f32 %v2193, %v1652
        %v2195 = vmax.f32 %v2194, %v1658
        %v2196 = vmax.f32 %v2195, %v1662
        %v2197 = vmax.f32 %v2196, %v1668
        %v2198 = vmax.f32 %v2197, %v1672
        %v2199 = vmax.f32 %v2198, %v1678
        %v2200 = vmax.f32 %v2199, %v1682
        %v2201 = vmax.f32 %v2200, %v1688
        %v2202 = vmax.f32 %v2201, %v1692
        %v2203 = vmax.f32 %v2202, %v1698
        %v2204 = vmax.f32 %v2203, %v1702
        %v2205 = vmax.f32 %v2204, %v1708
        %v2206 = vmax.f32 %v2205, %v1712
        %v2207 = vrot.slane %v2206, 4
        %v2208 = vmax.f32 %v2206, %v2207
        %v2209 = vrot.slane %v2208, 2
        %v2210 = vmax.f32 %v2208, %v2209
        %v2211 = vrot.slane %v2210, 1
        %v2212 = vmax.f32 %v2210, %v2211
        %v2213 = vmax.f32 %v1560, %v1564
        %v2214 = vmax.f32 %v2213, %v1570
        %v2215 = vmax.f32 %v2214, %v1574
        %v2216 = vmax.f32 %v2215, %v1580
        %v2217 = vmax.f32 %v2216, %v1584
        %v2218 = vmax.f32 %v2217, %v1590
        %v2219 = vmax.f32 %v2218, %v1594
        %v2220 = vmax.f32 %v2219, %v1600
        %v2221 = vmax.f32 %v2220, %v1604
        %v2222 = vmax.f32 %v2221, %v1610
        %v2223 = vmax.f32 %v2222, %v1614
        %v2224 = vmax.f32 %v2223, %v1620
        %v2225 = vmax.f32 %v2224, %v1624
        %v2226 = vmax.f32 %v2225, %v1630
        %v2227 = vmax.f32 %v2226, %v1634
        %v2228 = vmax.f32 %v2227, %v1640
        %v2229 = vmax.f32 %v2228, %v1644
        %v2230 = vmax.f32 %v2229, %v1650
        %v2231 = vmax.f32 %v2230, %v1654
        %v2232 = vmax.f32 %v2231, %v1660
        %v2233 = vmax.f32 %v2232, %v1664
        %v2234 = vmax.f32 %v2233, %v1670
        %v2235 = vmax.f32 %v2234, %v1674
        %v2236 = vmax.f32 %v2235, %v1680
        %v2237 = vmax.f32 %v2236, %v1684
        %v2238 = vmax.f32 %v2237, %v1690
        %v2239 = vmax.f32 %v2238, %v1694
        %v2240 = vmax.f32 %v2239, %v1700
        %v2241 = vmax.f32 %v2240, %v1704
        %v2242 = vmax.f32 %v2241, %v1710
        %v2243 = vmax.f32 %v2242, %v1714
        %v2244 = vrot.slane %v2243, 4
        %v2245 = vmax.f32 %v2243, %v2244
        %v2246 = vrot.slane %v2245, 2
        %v2247 = vmax.f32 %v2245, %v2246
        %v2248 = vrot.slane %v2247, 1
        %v2249 = vmax.f32 %v2247, %v2248
        %v2250 = vmax.f32 %v1751, %v1755
        %v2251 = vmax.f32 %v2250, %v1761
        %v2252 = vmax.f32 %v2251, %v1765
        %v2253 = vmax.f32 %v2252, %v1771
        %v2254 = vmax.f32 %v2253, %v1775
        %v2255 = vmax.f32 %v2254, %v1781
        %v2256 = vmax.f32 %v2255, %v1785
        %v2257 = vmax.f32 %v2256, %v1791
        %v2258 = vmax.f32 %v2257, %v1795
        %v2259 = vmax.f32 %v2258, %v1801
        %v2260 = vmax.f32 %v2259, %v1805
        %v2261 = vmax.f32 %v2260, %v1811
        %v2262 = vmax.f32 %v2261, %v1815
        %v2263 = vmax.f32 %v2262, %v1821
        %v2264 = vmax.f32 %v2263, %v1825
        %v2265 = vmax.f32 %v2264, %v1831
        %v2266 = vmax.f32 %v2265, %v1835
        %v2267 = vmax.f32 %v2266, %v1841
        %v2268 = vmax.f32 %v2267, %v1845
        %v2269 = vmax.f32 %v2268, %v1851
        %v2270 = vmax.f32 %v2269, %v1855
        %v2271 = vmax.f32 %v2270, %v1861
        %v2272 = vmax.f32 %v2271, %v1865
        %v2273 = vmax.f32 %v2272, %v1871
        %v2274 = vmax.f32 %v2273, %v1875
        %v2275 = vmax.f32 %v2274, %v1881
        %v2276 = vmax.f32 %v2275, %v1885
        %v2277 = vmax.f32 %v2276, %v1891
        %v2278 = vmax.f32 %v2277, %v1895
        %v2279 = vmax.f32 %v2278, %v1901
        %v2280 = vmax.f32 %v2279, %v1905
        %v2281 = vrot.slane %v2280, 4
        %v2282 = vmax.f32 %v2280, %v2281
        %v2283 = vrot.slane %v2282, 2
        %v2284 = vmax.f32 %v2282, %v2283
        %v2285 = vrot.slane %v2284, 1
        %v2286 = vmax.f32 %v2284, %v2285
        %v2287 = vmax.f32 %v1753, %v1757
        %v2288 = vmax.f32 %v2287, %v1763
        %v2289 = vmax.f32 %v2288, %v1767
        %v2290 = vmax.f32 %v2289, %v1773
        %v2291 = vmax.f32 %v2290, %v1777
        %v2292 = vmax.f32 %v2291, %v1783
        %v2293 = vmax.f32 %v2292, %v1787
        %v2294 = vmax.f32 %v2293, %v1793
        %v2295 = vmax.f32 %v2294, %v1797
        %v2296 = vmax.f32 %v2295, %v1803
        %v2297 = vmax.f32 %v2296, %v1807
        %v2298 = vmax.f32 %v2297, %v1813
        %v2299 = vmax.f32 %v2298, %v1817
        %v2300 = vmax.f32 %v2299, %v1823
        %v2301 = vmax.f32 %v2300, %v1827
        %v2302 = vmax.f32 %v2301, %v1833
        %v2303 = vmax.f32 %v2302, %v1837
        %v2304 = vmax.f32 %v2303, %v1843
        %v2305 = vmax.f32 %v2304, %v1847
        %v2306 = vmax.f32 %v2305, %v1853
        %v2307 = vmax.f32 %v2306, %v1857
        %v2308 = vmax.f32 %v2307, %v1863
        %v2309 = vmax.f32 %v2308, %v1867
        %v2310 = vmax.f32 %v2309, %v1873
        %v2311 = vmax.f32 %v2310, %v1877
        %v2312 = vmax.f32 %v2311, %v1883
        %v2313 = vmax.f32 %v2312, %v1887
        %v2314 = vmax.f32 %v2313, %v1893
        %v2315 = vmax.f32 %v2314, %v1897
        %v2316 = vmax.f32 %v2315, %v1903
        %v2317 = vmax.f32 %v2316, %v1907
        %v2318 = vrot.slane %v2317, 4
        %v2319 = vmax.f32 %v2317, %v2318
        %v2320 = vrot.slane %v2319, 2
        %v2321 = vmax.f32 %v2319, %v2320
        %v2322 = vrot.slane %v2321, 1
        %v2323 = vmax.f32 %v2321, %v2322
        %v2324 = vmax.f32 %v1944, %v1948
        %v2325 = vmax.f32 %v2324, %v1954
        %v2326 = vmax.f32 %v2325, %v1958
        %v2327 = vmax.f32 %v2326, %v1964
        %v2328 = vmax.f32 %v2327, %v1968
        %v2329 = vmax.f32 %v2328, %v1974
        %v2330 = vmax.f32 %v2329, %v1978
        %v2331 = vmax.f32 %v2330, %v1984
        %v2332 = vmax.f32 %v2331, %v1988
        %v2333 = vmax.f32 %v2332, %v1994
        %v2334 = vmax.f32 %v2333, %v1998
        %v2335 = vmax.f32 %v2334, %v2004
        %v2336 = vmax.f32 %v2335, %v2008
        %v2337 = vmax.f32 %v2336, %v2014
        %v2338 = vmax.f32 %v2337, %v2018
        %v2339 = vmax.f32 %v2338, %v2024
        %v2340 = vmax.f32 %v2339, %v2028
        %v2341 = vmax.f32 %v2340, %v2034
        %v2342 = vmax.f32 %v2341, %v2038
        %v2343 = vmax.f32 %v2342, %v2044
        %v2344 = vmax.f32 %v2343, %v2048
        %v2345 = vmax.f32 %v2344, %v2054
        %v2346 = vmax.f32 %v2345, %v2058
        %v2347 = vmax.f32 %v2346, %v2064
        %v2348 = vmax.f32 %v2347, %v2068
        %v2349 = vmax.f32 %v2348, %v2074
        %v2350 = vmax.f32 %v2349, %v2078
        %v2351 = vmax.f32 %v2350, %v2084
        %v2352 = vmax.f32 %v2351, %v2088
        %v2353 = vmax.f32 %v2352, %v2094
        %v2354 = vmax.f32 %v2353, %v2098
        %v2355 = vrot.slane %v2354, 4
        %v2356 = vmax.f32 %v2354, %v2355
        %v2357 = vrot.slane %v2356, 2
        %v2358 = vmax.f32 %v2356, %v2357
        %v2359 = vrot.slane %v2358, 1
        %v2360 = vmax.f32 %v2358, %v2359
        %v2361 = vmax.f32 %v1946, %v1950
        %v2362 = vmax.f32 %v2361, %v1956
        %v2363 = vmax.f32 %v2362, %v1960
        %v2364 = vmax.f32 %v2363, %v1966
        %v2365 = vmax.f32 %v2364, %v1970
        %v2366 = vmax.f32 %v2365, %v1976
        %v2367 = vmax.f32 %v2366, %v1980
        %v2368 = vmax.f32 %v2367, %v1986
        %v2369 = vmax.f32 %v2368, %v1990
        %v2370 = vmax.f32 %v2369, %v1996
        %v2371 = vmax.f32 %v2370, %v2000
        %v2372 = vmax.f32 %v2371, %v2006
        %v2373 = vmax.f32 %v2372, %v2010
        %v2374 = vmax.f32 %v2373, %v2016
        %v2375 = vmax.f32 %v2374, %v2020
        %v2376 = vmax.f32 %v2375, %v2026
        %v2377 = vmax.f32 %v2376, %v2030
        %v2378 = vmax.f32 %v2377, %v2036
        %v2379 = vmax.f32 %v2378, %v2040
        %v2380 = vmax.f32 %v2379, %v2046
        %v2381 = vmax.f32 %v2380, %v2050
        %v2382 = vmax.f32 %v2381, %v2056
        %v2383 = vmax.f32 %v2382, %v2060
        %v2384 = vmax.f32 %v2383, %v2066
        %v2385 = vmax.f32 %v2384, %v2070
        %v2386 = vmax.f32 %v2385, %v2076
        %v2387 = vmax.f32 %v2386, %v2080
        %v2388 = vmax.f32 %v2387, %v2086
        %v2389 = vmax.f32 %v2388, %v2090
        %v2390 = vmax.f32 %v2389, %v2096
        %v2391 = vmax.f32 %v2390, %v2100
        %v2392 = vrot.slane %v2391, 4
        %v2393 = vmax.f32 %v2391, %v2392
        %v2394 = vrot.slane %v2393, 2
        %v2395 = vmax.f32 %v2393, %v2394
        %v2396 = vrot.slane %v2395, 1
        %v2397 = vmax.f32 %v2395, %v2396
        %v2398 = vld [vmem:[%s291 + $0x8] sm:$0xff]
        %v2400 = vunpack.c.l.b16 %v2398
        %v2401 = vunpack.c.h.b16 %v2398
        %v2402 = vpack.c.b16 %v2400, %v2400
        %v2403 = vpack.c.b16 %v2401, %v2401
        %2406 = vxpose.xlu0.c.b16.start [1/8] %v2402, 128
        %2407 = vxpose.xlu0.c.b16.cont [2/8] 0, 128
        %2408 = vxpose.xlu0.c.b16.cont [3/8] 0, 128
        %2409 = vxpose.xlu0.c.b16.cont [4/8] 0, 128
        %2410 = vxpose.xlu0.c.b16.cont [5/8] 0, 128
        %2411 = vxpose.xlu0.c.b16.cont [6/8] 0, 128
        %2412 = vxpose.xlu0.c.b16.cont [7/8] 0, 128
        %2413 = vxpose.xlu0.c.b16.end [8/8] 0, 128
        %v2414 = vpop.trf.xlu0
        %v2415 = vpop.trf.xlu0
        %v2416 = vpop.trf.xlu0
        %v2417 = vpop.trf.xlu0
        %v2418 = vpop.trf.xlu0
        %v2419 = vpop.trf.xlu0
        %v2420 = vpop.trf.xlu0
        %v2421 = vpop.trf.xlu0
        %2422 = vxpose.xlu0.c.b16.start [1/8] %v2403, 128
        %2423 = vxpose.xlu0.c.b16.cont [2/8] 0, 128
        %2424 = vxpose.xlu0.c.b16.cont [3/8] 0, 128
        %2425 = vxpose.xlu0.c.b16.cont [4/8] 0, 128
        %2426 = vxpose.xlu0.c.b16.cont [5/8] 0, 128
        %2427 = vxpose.xlu0.c.b16.cont [6/8] 0, 128
        %2428 = vxpose.xlu0.c.b16.cont [7/8] 0, 128
        %2429 = vxpose.xlu0.c.b16.end [8/8] 0, 128
        %v2430 = vpop.trf.xlu0
        %v2431 = vpop.trf.xlu0
        %v2432 = vpop.trf.xlu0
        %v2433 = vpop.trf.xlu0
        %v2434 = vpop.trf.xlu0
        %v2435 = vpop.trf.xlu0
        %v2436 = vpop.trf.xlu0
        %v2437 = vpop.trf.xlu0
        %v2439 = vsel %vm460, %v2414, 0
        %v2442 = vsel %vm460, %v2415, 0
        %v2445 = vsel %vm460, %v2416, 0
        %v2448 = vsel %vm460, %v2417, 0
        %v2451 = vsel %vm460, %v2418, 0
        %v2454 = vsel %vm460, %v2419, 0
        %v2457 = vsel %vm460, %v2420, 0
        %v2460 = vsel %vm460, %v2421, 0
        %v2463 = vsel %vm460, %v2430, 0
        %v2466 = vsel %vm460, %v2431, 0
        %v2469 = vsel %vm460, %v2432, 0
        %v2472 = vsel %vm460, %v2433, 0
        %v2475 = vsel %vm460, %v2434, 0
        %v2478 = vsel %vm460, %v2435, 0
        %v2481 = vsel %vm460, %v2436, 0
        %v2484 = vsel %vm460, %v2437, 0
        %2486 = vmatprep.subr.bf16.mxu0 0
        %2487 = vmatpush1.bf16.msra.mxu0 %v511
        %2488 = vmatprep.subr.bf16.mxu0 0
        %2489 = vmatpush1.bf16.msra.mxu0 0
        %2490 = vmatprep.subr.bf16.mxu0 0
        %2491 = vmatpush1.bf16.msra.mxu0 0
        %2492 = vmatprep.subr.bf16.mxu0 0
        %2493 = vmatpush1.bf16.msra.mxu0 0
        %2494 = vmatprep.subr.bf16.mxu0 0
        %2495 = vmatpush1.bf16.msra.mxu0 0
        %2496 = vmatprep.subr.bf16.mxu0 0
        %2497 = vmatpush1.bf16.msra.mxu0 0
        %2498 = vmatprep.subr.bf16.mxu0 0
        %2499 = vmatpush1.bf16.msra.mxu0 0
        %2500 = vmatprep.subr.bf16.mxu0 0
        %2501 = vmatpush1.bf16.msra.mxu0 0
        %2502 = vmatprep.subr.bf16.mxu0 0
        %2503 = vmatpush1.bf16.msra.mxu0 0
        %2504 = vmatprep.subr.bf16.mxu0 0
        %2505 = vmatpush1.bf16.msra.mxu0 0
        %2506 = vmatprep.subr.bf16.mxu0 0
        %2507 = vmatpush1.bf16.msra.mxu0 0
        %2508 = vmatprep.subr.bf16.mxu0 0
        %2509 = vmatpush1.bf16.msra.mxu0 0
        %2510 = vmatprep.subr.bf16.mxu0 0
        %2511 = vmatpush1.bf16.msra.mxu0 0
        %2512 = vmatprep.subr.bf16.mxu0 0
        %2513 = vmatpush1.bf16.msra.mxu0 0
        %2514 = vmatprep.subr.bf16.mxu0 0
        %2515 = vmatpush1.bf16.msra.mxu0 0
        %2516 = vmatprep.subr.bf16.mxu0 0
        %2517 = vmatpush1.bf16.msra.mxu0 0
        %2518 = vmatprep.mubr.bf16.mxu0 0
        %2519 = vmatmul.mubr.bf16.gmra.mrb[0].mxu0 %v2439
        %v2520 = vpop.f32.mrb[0].mxu0
        %v2521 = vadd.f32 %v419, %v2520
        %v2522 = vpop.f32.mrb[0].mxu0
        %v2523 = vpop.f32.mrb[0].mxu0
        %v2524 = vadd.f32 %v419, %v2523
        %v2525 = vpop.f32.mrb[0].mxu0
        %2526 = vmatprep.mubr.bf16.mxu0 0
        %2527 = vmatmul.mubr.bf16.gmra.mrb[0].mxu0 %v2442
        %v2528 = vpop.f32.mrb[0].mxu0
        %v2529 = vadd.f32 %v419, %v2528
        %v2530 = vpop.f32.mrb[0].mxu0
        %v2531 = vpop.f32.mrb[0].mxu0
        %v2532 = vadd.f32 %v419, %v2531
        %v2533 = vpop.f32.mrb[0].mxu0
        %2534 = vmatprep.mubr.bf16.mxu0 0
        %2535 = vmatmul.mubr.bf16.gmra.mrb[0].mxu0 %v2445
        %v2536 = vpop.f32.mrb[0].mxu0
        %v2537 = vadd.f32 %v419, %v2536
        %v2538 = vpop.f32.mrb[0].mxu0
        %v2539 = vpop.f32.mrb[0].mxu0
        %v2540 = vadd.f32 %v419, %v2539
        %v2541 = vpop.f32.mrb[0].mxu0
        %2542 = vmatprep.mubr.bf16.mxu0 0
        %2543 = vmatmul.mubr.bf16.gmra.mrb[0].mxu0 %v2448
        %v2544 = vpop.f32.mrb[0].mxu0
        %v2545 = vadd.f32 %v419, %v2544
        %v2546 = vpop.f32.mrb[0].mxu0
        %v2547 = vpop.f32.mrb[0].mxu0
        %v2548 = vadd.f32 %v419, %v2547
        %v2549 = vpop.f32.mrb[0].mxu0
        %2550 = vmatprep.mubr.bf16.mxu0 0
        %2551 = vmatmul.mubr.bf16.gmra.mrb[0].mxu0 %v2451
        %v2552 = vpop.f32.mrb[0].mxu0
        %v2553 = vadd.f32 %v419, %v2552
        %v2554 = vpop.f32.mrb[0].mxu0
        %v2555 = vpop.f32.mrb[0].mxu0
        %v2556 = vadd.f32 %v419, %v2555
        %v2557 = vpop.f32.mrb[0].mxu0
        %2558 = vmatprep.mubr.bf16.mxu0 0
        %2559 = vmatmul.mubr.bf16.gmra.mrb[0].mxu0 %v2454
        %v2560 = vpop.f32.mrb[0].mxu0
        %v2561 = vadd.f32 %v419, %v2560
        %v2562 = vpop.f32.mrb[0].mxu0
        %v2563 = vpop.f32.mrb[0].mxu0
        %v2564 = vadd.f32 %v419, %v2563
        %v2565 = vpop.f32.mrb[0].mxu0
        %2566 = vmatprep.mubr.bf16.mxu0 0
        %2567 = vmatmul.mubr.bf16.gmra.mrb[0].mxu0 %v2457
        %v2568 = vpop.f32.mrb[0].mxu0
        %v2569 = vadd.f32 %v419, %v2568
        %v2570 = vpop.f32.mrb[0].mxu0
        %v2571 = vpop.f32.mrb[0].mxu0
        %v2572 = vadd.f32 %v419, %v2571
        %v2573 = vpop.f32.mrb[0].mxu0
        %2574 = vmatprep.mubr.bf16.mxu0 0
        %2575 = vmatmul.mubr.bf16.gmra.mrb[0].mxu0 %v2460
        %v2576 = vpop.f32.mrb[0].mxu0
        %v2577 = vadd.f32 %v419, %v2576
        %v2578 = vpop.f32.mrb[0].mxu0
        %v2579 = vpop.f32.mrb[0].mxu0
        %v2580 = vadd.f32 %v419, %v2579
        %v2581 = vpop.f32.mrb[0].mxu0
        %2582 = vmatprep.mubr.bf16.mxu0 0
        %2583 = vmatmul.mubr.bf16.gmra.mrb[0].mxu0 %v2463
        %v2584 = vpop.f32.mrb[0].mxu0
        %v2585 = vadd.f32 %v419, %v2584
        %v2586 = vpop.f32.mrb[0].mxu0
        %v2587 = vpop.f32.mrb[0].mxu0
        %v2588 = vadd.f32 %v419, %v2587
        %v2589 = vpop.f32.mrb[0].mxu0
        %2590 = vmatprep.mubr.bf16.mxu0 0
        %2591 = vmatmul.mubr.bf16.gmra.mrb[0].mxu0 %v2466
        %v2592 = vpop.f32.mrb[0].mxu0
        %v2593 = vadd.f32 %v419, %v2592
        %v2594 = vpop.f32.mrb[0].mxu0
        %v2595 = vpop.f32.mrb[0].mxu0
        %v2596 = vadd.f32 %v419, %v2595
        %v2597 = vpop.f32.mrb[0].mxu0
        %2598 = vmatprep.mubr.bf16.mxu0 0
        %2599 = vmatmul.mubr.bf16.gmra.mrb[0].mxu0 %v2469
        %v2600 = vpop.f32.mrb[0].mxu0
        %v2601 = vadd.f32 %v419, %v2600
        %v2602 = vpop.f32.mrb[0].mxu0
        %v2603 = vpop.f32.mrb[0].mxu0
        %v2604 = vadd.f32 %v419, %v2603
        %v2605 = vpop.f32.mrb[0].mxu0
        %2606 = vmatprep.mubr.bf16.mxu0 0
        %2607 = vmatmul.mubr.bf16.gmra.mrb[0].mxu0 %v2472
        %v2608 = vpop.f32.mrb[0].mxu0
        %v2609 = vadd.f32 %v419, %v2608
        %v2610 = vpop.f32.mrb[0].mxu0
        %v2611 = vpop.f32.mrb[0].mxu0
        %v2612 = vadd.f32 %v419, %v2611
        %v2613 = vpop.f32.mrb[0].mxu0
        %2614 = vmatprep.mubr.bf16.mxu0 0
        %2615 = vmatmul.mubr.bf16.gmra.mrb[0].mxu0 %v2475
        %v2616 = vpop.f32.mrb[0].mxu0
        %v2617 = vadd.f32 %v419, %v2616
        %v2618 = vpop.f32.mrb[0].mxu0
        %v2619 = vpop.f32.mrb[0].mxu0
        %v2620 = vadd.f32 %v419, %v2619
        %v2621 = vpop.f32.mrb[0].mxu0
        %2622 = vmatprep.mubr.bf16.mxu0 0
        %2623 = vmatmul.mubr.bf16.gmra.mrb[0].mxu0 %v2478
        %v2624 = vpop.f32.mrb[0].mxu0
        %v2625 = vadd.f32 %v419, %v2624
        %v2626 = vpop.f32.mrb[0].mxu0
        %v2627 = vpop.f32.mrb[0].mxu0
        %v2628 = vadd.f32 %v419, %v2627
        %v2629 = vpop.f32.mrb[0].mxu0
        %2630 = vmatprep.mubr.bf16.mxu0 0
        %2631 = vmatmul.mubr.bf16.gmra.mrb[0].mxu0 %v2481
        %v2632 = vpop.f32.mrb[0].mxu0
        %v2633 = vadd.f32 %v419, %v2632
        %v2634 = vpop.f32.mrb[0].mxu0
        %v2635 = vpop.f32.mrb[0].mxu0
        %v2636 = vadd.f32 %v419, %v2635
        %v2637 = vpop.f32.mrb[0].mxu0
        %2638 = vmatprep.mubr.bf16.mxu0 0
        %2639 = vmatmul.mubr.bf16.gmra.mrb[0].mxu0 %v2484
        %v2640 = vpop.f32.mrb[0].mxu0
        %v2641 = vadd.f32 %v419, %v2640
        %v2642 = vpop.f32.mrb[0].mxu0
        %v2643 = vpop.f32.mrb[0].mxu0
        %v2644 = vadd.f32 %v419, %v2643
        %v2645 = vpop.f32.mrb[0].mxu0
        %2646 = vdwg.mxu0
        %v2647 = vmax.f32 %v2521, 0.0
        %v2648 = vmax.f32 %v2524, 0.0
        %v2649 = vmax.f32 %v2529, 0.0
        %v2650 = vmax.f32 %v2532, 0.0
        %v2651 = vmax.f32 %v2537, 0.0
        %v2652 = vmax.f32 %v2540, 0.0
        %v2653 = vmax.f32 %v2545, 0.0
        %v2654 = vmax.f32 %v2548, 0.0
        %v2655 = vmax.f32 %v2553, 0.0
        %v2656 = vmax.f32 %v2556, 0.0
        %v2657 = vmax.f32 %v2561, 0.0
        %v2658 = vmax.f32 %v2564, 0.0
        %v2659 = vmax.f32 %v2569, 0.0
        %v2660 = vmax.f32 %v2572, 0.0
        %v2661 = vmax.f32 %v2577, 0.0
        %v2662 = vmax.f32 %v2580, 0.0
        %v2663 = vmax.f32 %v2585, 0.0
        %v2664 = vmax.f32 %v2588, 0.0
        %v2665 = vmax.f32 %v2593, 0.0
        %v2666 = vmax.f32 %v2596, 0.0
        %v2667 = vmax.f32 %v2601, 0.0
        %v2668 = vmax.f32 %v2604, 0.0
        %v2669 = vmax.f32 %v2609, 0.0
        %v2670 = vmax.f32 %v2612, 0.0
        %v2671 = vmax.f32 %v2617, 0.0
        %v2672 = vmax.f32 %v2620, 0.0
        %v2673 = vmax.f32 %v2625, 0.0
        %v2674 = vmax.f32 %v2628, 0.0
        %v2675 = vmax.f32 %v2633, 0.0
        %v2676 = vmax.f32 %v2636, 0.0
        %v2677 = vmax.f32 %v2641, 0.0
        %v2678 = vmax.f32 %v2644, 0.0
        %v2679 = vpack.c.bf16 %v2648, %v2647
        %v2680 = vpack.c.bf16 %v2650, %v2649
        %v2681 = vpack.c.bf16 %v2652, %v2651
        %v2682 = vpack.c.bf16 %v2654, %v2653
        %v2683 = vpack.c.bf16 %v2656, %v2655
        %v2684 = vpack.c.bf16 %v2658, %v2657
        %v2685 = vpack.c.bf16 %v2660, %v2659
        %v2686 = vpack.c.bf16 %v2662, %v2661
        %v2687 = vpack.c.bf16 %v2664, %v2663
        %v2688 = vpack.c.bf16 %v2666, %v2665
        %v2689 = vpack.c.bf16 %v2668, %v2667
        %v2690 = vpack.c.bf16 %v2670, %v2669
        %v2691 = vpack.c.bf16 %v2672, %v2671
        %v2692 = vpack.c.bf16 %v2674, %v2673
        %v2693 = vpack.c.bf16 %v2676, %v2675
        %v2694 = vpack.c.bf16 %v2678, %v2677
        %v2696 = vsel %vm752, %v2679, 0
        %v2699 = vsel %vm752, %v2680, 0
        %v2702 = vsel %vm752, %v2681, 0
        %v2705 = vsel %vm752, %v2682, 0
        %v2708 = vsel %vm752, %v2683, 0
        %v2711 = vsel %vm752, %v2684, 0
        %v2714 = vsel %vm752, %v2685, 0
        %v2717 = vsel %vm752, %v2686, 0
        %v2720 = vsel %vm752, %v2687, 0
        %v2723 = vsel %vm752, %v2688, 0
        %v2726 = vsel %vm752, %v2689, 0
        %v2729 = vsel %vm752, %v2690, 0
        %v2732 = vsel %vm752, %v2691, 0
        %v2735 = vsel %vm752, %v2692, 0
        %v2738 = vsel %vm752, %v2693, 0
        %v2741 = vsel %vm752, %v2694, 0
        %2743 = vmatprep.subr.bf16.mxu0 0
        %2744 = vmatpush1.bf16.msra.mxu0 %v744
        %2745 = vmatprep.subr.bf16.mxu0 0
        %2746 = vmatpush1.bf16.msra.mxu0 %v745
        %2747 = vmatprep.subr.bf16.mxu0 0
        %2748 = vmatpush1.bf16.msra.mxu0 %v746
        %2749 = vmatprep.subr.bf16.mxu0 0
        %2750 = vmatpush1.bf16.msra.mxu0 %v747
        %2751 = vmatprep.subr.bf16.mxu0 0
        %2752 = vmatpush1.bf16.msra.mxu0 0
        %2753 = vmatprep.subr.bf16.mxu0 0
        %2754 = vmatpush1.bf16.msra.mxu0 0
        %2755 = vmatprep.subr.bf16.mxu0 0
        %2756 = vmatpush1.bf16.msra.mxu0 0
        %2757 = vmatprep.subr.bf16.mxu0 0
        %2758 = vmatpush1.bf16.msra.mxu0 0
        %2759 = vmatprep.subr.bf16.mxu0 0
        %2760 = vmatpush1.bf16.msra.mxu0 0
        %2761 = vmatprep.subr.bf16.mxu0 0
        %2762 = vmatpush1.bf16.msra.mxu0 0
        %2763 = vmatprep.subr.bf16.mxu0 0
        %2764 = vmatpush1.bf16.msra.mxu0 0
        %2765 = vmatprep.subr.bf16.mxu0 0
        %2766 = vmatpush1.bf16.msra.mxu0 0
        %2767 = vmatprep.subr.bf16.mxu0 0
        %2768 = vmatpush1.bf16.msra.mxu0 0
        %2769 = vmatprep.subr.bf16.mxu0 0
        %2770 = vmatpush1.bf16.msra.mxu0 0
        %2771 = vmatprep.subr.bf16.mxu0 0
        %2772 = vmatpush1.bf16.msra.mxu0 0
        %2773 = vmatprep.subr.bf16.mxu0 0
        %2774 = vmatpush1.bf16.msra.mxu0 0
        %2775 = vmatprep.mubr.bf16.mxu0 0
        %2776 = vmatmul.mubr.bf16.gmra.mrb[0].mxu0 %v2696
        %v2777 = vpop.f32.mrb[0].mxu0
        %v2778 = vadd.f32 %v726, %v2777
        %v2779 = vpop.f32.mrb[0].mxu0
        %v2780 = vpop.f32.mrb[0].mxu0
        %v2781 = vadd.f32 %v726, %v2780
        %v2782 = vpop.f32.mrb[0].mxu0
        %2783 = vmatprep.mubr.bf16.mxu0 0
        %2784 = vmatmul.mubr.bf16.gmra.mrb[0].mxu0 %v2699
        %v2785 = vpop.f32.mrb[0].mxu0
        %v2786 = vadd.f32 %v726, %v2785
        %v2787 = vpop.f32.mrb[0].mxu0
        %v2788 = vpop.f32.mrb[0].mxu0
        %v2789 = vadd.f32 %v726, %v2788
        %v2790 = vpop.f32.mrb[0].mxu0
        %2791 = vmatprep.mubr.bf16.mxu0 0
        %2792 = vmatmul.mubr.bf16.gmra.mrb[0].mxu0 %v2702
        %v2793 = vpop.f32.mrb[0].mxu0
        %v2794 = vadd.f32 %v726, %v2793
        %v2795 = vpop.f32.mrb[0].mxu0
        %v2796 = vpop.f32.mrb[0].mxu0
        %v2797 = vadd.f32 %v726, %v2796
        %v2798 = vpop.f32.mrb[0].mxu0
        %2799 = vmatprep.mubr.bf16.mxu0 0
        %2800 = vmatmul.mubr.bf16.gmra.mrb[0].mxu0 %v2705
        %v2801 = vpop.f32.mrb[0].mxu0
        %v2802 = vadd.f32 %v726, %v2801
        %v2803 = vpop.f32.mrb[0].mxu0
        %v2804 = vpop.f32.mrb[0].mxu0
        %v2805 = vadd.f32 %v726, %v2804
        %v2806 = vpop.f32.mrb[0].mxu0
        %2807 = vmatprep.mubr.bf16.mxu0 0
        %2808 = vmatmul.mubr.bf16.gmra.mrb[0].mxu0 %v2708
        %v2809 = vpop.f32.mrb[0].mxu0
        %v2810 = vadd.f32 %v726, %v2809
        %v2811 = vpop.f32.mrb[0].mxu0
        %v2812 = vpop.f32.mrb[0].mxu0
        %v2813 = vadd.f32 %v726, %v2812
        %v2814 = vpop.f32.mrb[0].mxu0
        %2815 = vmatprep.mubr.bf16.mxu0 0
        %2816 = vmatmul.mubr.bf16.gmra.mrb[0].mxu0 %v2711
        %v2817 = vpop.f32.mrb[0].mxu0
        %v2818 = vadd.f32 %v726, %v2817
        %v2819 = vpop.f32.mrb[0].mxu0
        %v2820 = vpop.f32.mrb[0].mxu0
        %v2821 = vadd.f32 %v726, %v2820
        %v2822 = vpop.f32.mrb[0].mxu0
        %2823 = vmatprep.mubr.bf16.mxu0 0
        %2824 = vmatmul.mubr.bf16.gmra.mrb[0].mxu0 %v2714
        %v2825 = vpop.f32.mrb[0].mxu0
        %v2826 = vadd.f32 %v726, %v2825
        %v2827 = vpop.f32.mrb[0].mxu0
        %v2828 = vpop.f32.mrb[0].mxu0
        %v2829 = vadd.f32 %v726, %v2828
        %v2830 = vpop.f32.mrb[0].mxu0
        %2831 = vmatprep.mubr.bf16.mxu0 0
        %2832 = vmatmul.mubr.bf16.gmra.mrb[0].mxu0 %v2717
        %v2833 = vpop.f32.mrb[0].mxu0
        %v2834 = vadd.f32 %v726, %v2833
        %v2835 = vpop.f32.mrb[0].mxu0
        %v2836 = vpop.f32.mrb[0].mxu0
        %v2837 = vadd.f32 %v726, %v2836
        %v2838 = vpop.f32.mrb[0].mxu0
        %2839 = vmatprep.mubr.bf16.mxu0 0
        %2840 = vmatmul.mubr.bf16.gmra.mrb[0].mxu0 %v2720
        %v2841 = vpop.f32.mrb[0].mxu0
        %v2842 = vadd.f32 %v726, %v2841
        %v2843 = vpop.f32.mrb[0].mxu0
        %v2844 = vpop.f32.mrb[0].mxu0
        %v2845 = vadd.f32 %v726, %v2844
        %v2846 = vpop.f32.mrb[0].mxu0
        %2847 = vmatprep.mubr.bf16.mxu0 0
        %2848 = vmatmul.mubr.bf16.gmra.mrb[0].mxu0 %v2723
        %v2849 = vpop.f32.mrb[0].mxu0
        %v2850 = vadd.f32 %v726, %v2849
        %v2851 = vpop.f32.mrb[0].mxu0
        %v2852 = vpop.f32.mrb[0].mxu0
        %v2853 = vadd.f32 %v726, %v2852
        %v2854 = vpop.f32.mrb[0].mxu0
        %2855 = vmatprep.mubr.bf16.mxu0 0
        %2856 = vmatmul.mubr.bf16.gmra.mrb[0].mxu0 %v2726
        %v2857 = vpop.f32.mrb[0].mxu0
        %v2858 = vadd.f32 %v726, %v2857
        %v2859 = vpop.f32.mrb[0].mxu0
        %v2860 = vpop.f32.mrb[0].mxu0
        %v2861 = vadd.f32 %v726, %v2860
        %v2862 = vpop.f32.mrb[0].mxu0
        %2863 = vmatprep.mubr.bf16.mxu0 0
        %2864 = vmatmul.mubr.bf16.gmra.mrb[0].mxu0 %v2729
        %v2865 = vpop.f32.mrb[0].mxu0
        %v2866 = vadd.f32 %v726, %v2865
        %v2867 = vpop.f32.mrb[0].mxu0
        %v2868 = vpop.f32.mrb[0].mxu0
        %v2869 = vadd.f32 %v726, %v2868
        %v2870 = vpop.f32.mrb[0].mxu0
        %2871 = vmatprep.mubr.bf16.mxu0 0
        %2872 = vmatmul.mubr.bf16.gmra.mrb[0].mxu0 %v2732
        %v2873 = vpop.f32.mrb[0].mxu0
        %v2874 = vadd.f32 %v726, %v2873
        %v2875 = vpop.f32.mrb[0].mxu0
        %v2876 = vpop.f32.mrb[0].mxu0
        %v2877 = vadd.f32 %v726, %v2876
        %v2878 = vpop.f32.mrb[0].mxu0
        %2879 = vmatprep.mubr.bf16.mxu0 0
        %2880 = vmatmul.mubr.bf16.gmra.mrb[0].mxu0 %v2735
        %v2881 = vpop.f32.mrb[0].mxu0
        %v2882 = vadd.f32 %v726, %v2881
        %v2883 = vpop.f32.mrb[0].mxu0
        %v2884 = vpop.f32.mrb[0].mxu0
        %v2885 = vadd.f32 %v726, %v2884
        %v2886 = vpop.f32.mrb[0].mxu0
        %2887 = vmatprep.mubr.bf16.mxu0 0
        %2888 = vmatmul.mubr.bf16.gmra.mrb[0].mxu0 %v2738
        %v2889 = vpop.f32.mrb[0].mxu0
        %v2890 = vadd.f32 %v726, %v2889
        %v2891 = vpop.f32.mrb[0].mxu0
        %v2892 = vpop.f32.mrb[0].mxu0
        %v2893 = vadd.f32 %v726, %v2892
        %v2894 = vpop.f32.mrb[0].mxu0
        %2895 = vmatprep.mubr.bf16.mxu0 0
        %2896 = vmatmul.mubr.bf16.gmra.mrb[0].mxu0 %v2741
        %v2897 = vpop.f32.mrb[0].mxu0
        %v2898 = vadd.f32 %v726, %v2897
        %v2899 = vpop.f32.mrb[0].mxu0
        %v2900 = vpop.f32.mrb[0].mxu0
        %v2901 = vadd.f32 %v726, %v2900
        %v2902 = vpop.f32.mrb[0].mxu0
        %2903 = vdwg.mxu0
        %v2904 = vmax.f32 %v2778, 0.0
        %v2905 = vmax.f32 %v2781, 0.0
        %v2906 = vmax.f32 %v2786, 0.0
        %v2907 = vmax.f32 %v2789, 0.0
        %v2908 = vmax.f32 %v2794, 0.0
        %v2909 = vmax.f32 %v2797, 0.0
        %v2910 = vmax.f32 %v2802, 0.0
        %v2911 = vmax.f32 %v2805, 0.0
        %v2912 = vmax.f32 %v2810, 0.0
        %v2913 = vmax.f32 %v2813, 0.0
        %v2914 = vmax.f32 %v2818, 0.0
        %v2915 = vmax.f32 %v2821, 0.0
        %v2916 = vmax.f32 %v2826, 0.0
        %v2917 = vmax.f32 %v2829, 0.0
        %v2918 = vmax.f32 %v2834, 0.0
        %v2919 = vmax.f32 %v2837, 0.0
        %v2920 = vmax.f32 %v2842, 0.0
        %v2921 = vmax.f32 %v2845, 0.0
        %v2922 = vmax.f32 %v2850, 0.0
        %v2923 = vmax.f32 %v2853, 0.0
        %v2924 = vmax.f32 %v2858, 0.0
        %v2925 = vmax.f32 %v2861, 0.0
        %v2926 = vmax.f32 %v2866, 0.0
        %v2927 = vmax.f32 %v2869, 0.0
        %v2928 = vmax.f32 %v2874, 0.0
        %v2929 = vmax.f32 %v2877, 0.0
        %v2930 = vmax.f32 %v2882, 0.0
        %v2931 = vmax.f32 %v2885, 0.0
        %v2932 = vmax.f32 %v2890, 0.0
        %v2933 = vmax.f32 %v2893, 0.0
        %v2934 = vmax.f32 %v2898, 0.0
        %v2935 = vmax.f32 %v2901, 0.0
        %v2936 = vpack.c.bf16 %v2905, %v2904
        %v2937 = vpack.c.bf16 %v2907, %v2906
        %v2938 = vpack.c.bf16 %v2909, %v2908
        %v2939 = vpack.c.bf16 %v2911, %v2910
        %v2940 = vpack.c.bf16 %v2913, %v2912
        %v2941 = vpack.c.bf16 %v2915, %v2914
        %v2942 = vpack.c.bf16 %v2917, %v2916
        %v2943 = vpack.c.bf16 %v2919, %v2918
        %v2944 = vpack.c.bf16 %v2921, %v2920
        %v2945 = vpack.c.bf16 %v2923, %v2922
        %v2946 = vpack.c.bf16 %v2925, %v2924
        %v2947 = vpack.c.bf16 %v2927, %v2926
        %v2948 = vpack.c.bf16 %v2929, %v2928
        %v2949 = vpack.c.bf16 %v2931, %v2930
        %v2950 = vpack.c.bf16 %v2933, %v2932
        %v2951 = vpack.c.bf16 %v2935, %v2934
        %2952 = vmatprep.subr.bf16.mxu0 %v1203
        %2953 = vmatpush1.bf16.msra.mxu0 %v1202
        %2954 = vmatprep.subr.bf16.mxu0 %v1211
        %2955 = vmatpush1.bf16.msra.mxu0 %v1210
        %2956 = vmatprep.subr.bf16.mxu0 %v1219
        %2957 = vmatpush1.bf16.msra.mxu0 %v1218
        %2958 = vmatprep.subr.bf16.mxu0 %v1227
        %2959 = vmatpush1.bf16.msra.mxu0 %v1226
        %2960 = vmatprep.subr.bf16.mxu0 %v1235
        %2961 = vmatpush1.bf16.msra.mxu0 %v1234
        %2962 = vmatprep.subr.bf16.mxu0 %v1243
        %2963 = vmatpush1.bf16.msra.mxu0 %v1242
        %2964 = vmatprep.subr.bf16.mxu0 %v1251
        %2965 = vmatpush1.bf16.msra.mxu0 %v1250
        %2966 = vmatprep.subr.bf16.mxu0 %v1259
        %2967 = vmatpush1.bf16.msra.mxu0 %v1258
        %2968 = vmatprep.subr.bf16.mxu0 0
        %2969 = vmatpush1.bf16.msra.mxu0 0
        %2970 = vmatprep.subr.bf16.mxu0 0
        %2971 = vmatpush1.bf16.msra.mxu0 0
        %2972 = vmatprep.subr.bf16.mxu0 0
        %2973 = vmatpush1.bf16.msra.mxu0 0
        %2974 = vmatprep.subr.bf16.mxu0 0
        %2975 = vmatpush1.bf16.msra.mxu0 0
        %2976 = vmatprep.subr.bf16.mxu0 0
        %2977 = vmatpush1.bf16.msra.mxu0 0
        %2978 = vmatprep.subr.bf16.mxu0 0
        %2979 = vmatpush1.bf16.msra.mxu0 0
        %2980 = vmatprep.subr.bf16.mxu0 0
        %2981 = vmatpush1.bf16.msra.mxu0 0
        %2982 = vmatprep.subr.bf16.mxu0 0
        %2983 = vmatpush1.bf16.msra.mxu0 0
        %2984 = vmatprep.mubr.bf16.mxu0 0
        %2985 = vmatmul.mubr.bf16.gmra.mrb[0].mxu0 %v2936
        %v2986 = vpop.f32.mrb[0].mxu0
        %v2987 = vadd.f32 0.0, %v2986
        %v2988 = vpop.f32.mrb[0].mxu0
        %v2989 = vadd.f32 0.0, %v2988
        %v2990 = vpop.f32.mrb[0].mxu0
        %v2991 = vadd.f32 0.0, %v2990
        %v2992 = vpop.f32.mrb[0].mxu0
        %v2993 = vadd.f32 0.0, %v2992
        %2994 = vmatprep.mubr.bf16.mxu0 0
        %2995 = vmatmul.mubr.bf16.gmra.mrb[0].mxu0 %v2937
        %v2996 = vpop.f32.mrb[0].mxu0
        %v2997 = vadd.f32 0.0, %v2996
        %v2998 = vpop.f32.mrb[0].mxu0
        %v2999 = vadd.f32 0.0, %v2998
        %v3000 = vpop.f32.mrb[0].mxu0
        %v3001 = vadd.f32 0.0, %v3000
        %v3002 = vpop.f32.mrb[0].mxu0
        %v3003 = vadd.f32 0.0, %v3002
        %3004 = vmatprep.mubr.bf16.mxu0 0
        %3005 = vmatmul.mubr.bf16.gmra.mrb[0].mxu0 %v2938
        %v3006 = vpop.f32.mrb[0].mxu0
        %v3007 = vadd.f32 0.0, %v3006
        %v3008 = vpop.f32.mrb[0].mxu0
        %v3009 = vadd.f32 0.0, %v3008
        %v3010 = vpop.f32.mrb[0].mxu0
        %v3011 = vadd.f32 0.0, %v3010
        %v3012 = vpop.f32.mrb[0].mxu0
        %v3013 = vadd.f32 0.0, %v3012
        %3014 = vmatprep.mubr.bf16.mxu0 0
        %3015 = vmatmul.mubr.bf16.gmra.mrb[0].mxu0 %v2939
        %v3016 = vpop.f32.mrb[0].mxu0
        %v3017 = vadd.f32 0.0, %v3016
        %v3018 = vpop.f32.mrb[0].mxu0
        %v3019 = vadd.f32 0.0, %v3018
        %v3020 = vpop.f32.mrb[0].mxu0
        %v3021 = vadd.f32 0.0, %v3020
        %v3022 = vpop.f32.mrb[0].mxu0
        %v3023 = vadd.f32 0.0, %v3022
        %3024 = vmatprep.mubr.bf16.mxu0 0
        %3025 = vmatmul.mubr.bf16.gmra.mrb[0].mxu0 %v2940
        %v3026 = vpop.f32.mrb[0].mxu0
        %v3027 = vadd.f32 0.0, %v3026
        %v3028 = vpop.f32.mrb[0].mxu0
        %v3029 = vadd.f32 0.0, %v3028
        %v3030 = vpop.f32.mrb[0].mxu0
        %v3031 = vadd.f32 0.0, %v3030
        %v3032 = vpop.f32.mrb[0].mxu0
        %v3033 = vadd.f32 0.0, %v3032
        %3034 = vmatprep.mubr.bf16.mxu0 0
        %3035 = vmatmul.mubr.bf16.gmra.mrb[0].mxu0 %v2941
        %v3036 = vpop.f32.mrb[0].mxu0
        %v3037 = vadd.f32 0.0, %v3036
        %v3038 = vpop.f32.mrb[0].mxu0
        %v3039 = vadd.f32 0.0, %v3038
        %v3040 = vpop.f32.mrb[0].mxu0
        %v3041 = vadd.f32 0.0, %v3040
        %v3042 = vpop.f32.mrb[0].mxu0
        %v3043 = vadd.f32 0.0, %v3042
        %3044 = vmatprep.mubr.bf16.mxu0 0
        %3045 = vmatmul.mubr.bf16.gmra.mrb[0].mxu0 %v2942
        %v3046 = vpop.f32.mrb[0].mxu0
        %v3047 = vadd.f32 0.0, %v3046
        %v3048 = vpop.f32.mrb[0].mxu0
        %v3049 = vadd.f32 0.0, %v3048
        %v3050 = vpop.f32.mrb[0].mxu0
        %v3051 = vadd.f32 0.0, %v3050
        %v3052 = vpop.f32.mrb[0].mxu0
        %v3053 = vadd.f32 0.0, %v3052
        %3054 = vmatprep.mubr.bf16.mxu0 0
        %3055 = vmatmul.mubr.bf16.gmra.mrb[0].mxu0 %v2943
        %v3056 = vpop.f32.mrb[0].mxu0
        %v3057 = vadd.f32 0.0, %v3056
        %v3058 = vpop.f32.mrb[0].mxu0
        %v3059 = vadd.f32 0.0, %v3058
        %v3060 = vpop.f32.mrb[0].mxu0
        %v3061 = vadd.f32 0.0, %v3060
        %v3062 = vpop.f32.mrb[0].mxu0
        %v3063 = vadd.f32 0.0, %v3062
        %3064 = vmatprep.mubr.bf16.mxu0 0
        %3065 = vmatmul.mubr.bf16.gmra.mrb[0].mxu0 %v2944
        %v3066 = vpop.f32.mrb[0].mxu0
        %v3067 = vadd.f32 0.0, %v3066
        %v3068 = vpop.f32.mrb[0].mxu0
        %v3069 = vadd.f32 0.0, %v3068
        %v3070 = vpop.f32.mrb[0].mxu0
        %v3071 = vadd.f32 0.0, %v3070
        %v3072 = vpop.f32.mrb[0].mxu0
        %v3073 = vadd.f32 0.0, %v3072
        %3074 = vmatprep.mubr.bf16.mxu0 0
        %3075 = vmatmul.mubr.bf16.gmra.mrb[0].mxu0 %v2945
        %v3076 = vpop.f32.mrb[0].mxu0
        %v3077 = vadd.f32 0.0, %v3076
        %v3078 = vpop.f32.mrb[0].mxu0
        %v3079 = vadd.f32 0.0, %v3078
        %v3080 = vpop.f32.mrb[0].mxu0
        %v3081 = vadd.f32 0.0, %v3080
        %v3082 = vpop.f32.mrb[0].mxu0
        %v3083 = vadd.f32 0.0, %v3082
        %3084 = vmatprep.mubr.bf16.mxu0 0
        %3085 = vmatmul.mubr.bf16.gmra.mrb[0].mxu0 %v2946
        %v3086 = vpop.f32.mrb[0].mxu0
        %v3087 = vadd.f32 0.0, %v3086
        %v3088 = vpop.f32.mrb[0].mxu0
        %v3089 = vadd.f32 0.0, %v3088
        %v3090 = vpop.f32.mrb[0].mxu0
        %v3091 = vadd.f32 0.0, %v3090
        %v3092 = vpop.f32.mrb[0].mxu0
        %v3093 = vadd.f32 0.0, %v3092
        %3094 = vmatprep.mubr.bf16.mxu0 0
        %3095 = vmatmul.mubr.bf16.gmra.mrb[0].mxu0 %v2947
        %v3096 = vpop.f32.mrb[0].mxu0
        %v3097 = vadd.f32 0.0, %v3096
        %v3098 = vpop.f32.mrb[0].mxu0
        %v3099 = vadd.f32 0.0, %v3098
        %v3100 = vpop.f32.mrb[0].mxu0
        %v3101 = vadd.f32 0.0, %v3100
        %v3102 = vpop.f32.mrb[0].mxu0
        %v3103 = vadd.f32 0.0, %v3102
        %3104 = vmatprep.mubr.bf16.mxu0 0
        %3105 = vmatmul.mubr.bf16.gmra.mrb[0].mxu0 %v2948
        %v3106 = vpop.f32.mrb[0].mxu0
        %v3107 = vadd.f32 0.0, %v3106
        %v3108 = vpop.f32.mrb[0].mxu0
        %v3109 = vadd.f32 0.0, %v3108
        %v3110 = vpop.f32.mrb[0].mxu0
        %v3111 = vadd.f32 0.0, %v3110
        %v3112 = vpop.f32.mrb[0].mxu0
        %v3113 = vadd.f32 0.0, %v3112
        %3114 = vmatprep.mubr.bf16.mxu0 0
        %3115 = vmatmul.mubr.bf16.gmra.mrb[0].mxu0 %v2949
        %v3116 = vpop.f32.mrb[0].mxu0
        %v3117 = vadd.f32 0.0, %v3116
        %v3118 = vpop.f32.mrb[0].mxu0
        %v3119 = vadd.f32 0.0, %v3118
        %v3120 = vpop.f32.mrb[0].mxu0
        %v3121 = vadd.f32 0.0, %v3120
        %v3122 = vpop.f32.mrb[0].mxu0
        %v3123 = vadd.f32 0.0, %v3122
        %3124 = vmatprep.mubr.bf16.mxu0 0
        %3125 = vmatmul.mubr.bf16.gmra.mrb[0].mxu0 %v2950
        %v3126 = vpop.f32.mrb[0].mxu0
        %v3127 = vadd.f32 0.0, %v3126
        %v3128 = vpop.f32.mrb[0].mxu0
        %v3129 = vadd.f32 0.0, %v3128
        %v3130 = vpop.f32.mrb[0].mxu0
        %v3131 = vadd.f32 0.0, %v3130
        %v3132 = vpop.f32.mrb[0].mxu0
        %v3133 = vadd.f32 0.0, %v3132
        %3134 = vmatprep.mubr.bf16.mxu0 0
        %3135 = vmatmul.mubr.bf16.gmra.mrb[0].mxu0 %v2951
        %v3136 = vpop.f32.mrb[0].mxu0
        %v3137 = vadd.f32 0.0, %v3136
        %v3138 = vpop.f32.mrb[0].mxu0
        %v3139 = vadd.f32 0.0, %v3138
        %v3140 = vpop.f32.mrb[0].mxu0
        %v3141 = vadd.f32 0.0, %v3140
        %v3142 = vpop.f32.mrb[0].mxu0
        %v3143 = vadd.f32 0.0, %v3142
        %3144 = vdwg.mxu0
        %3145 = vmatprep.subr.bf16.mxu0 %v1205
        %3146 = vmatpush1.bf16.msra.mxu0 %v1204
        %3147 = vmatprep.subr.bf16.mxu0 %v1213
        %3148 = vmatpush1.bf16.msra.mxu0 %v1212
        %3149 = vmatprep.subr.bf16.mxu0 %v1221
        %3150 = vmatpush1.bf16.msra.mxu0 %v1220
        %3151 = vmatprep.subr.bf16.mxu0 %v1229
        %3152 = vmatpush1.bf16.msra.mxu0 %v1228
        %3153 = vmatprep.subr.bf16.mxu0 %v1237
        %3154 = vmatpush1.bf16.msra.mxu0 %v1236
        %3155 = vmatprep.subr.bf16.mxu0 %v1245
        %3156 = vmatpush1.bf16.msra.mxu0 %v1244
        %3157 = vmatprep.subr.bf16.mxu0 %v1253
        %3158 = vmatpush1.bf16.msra.mxu0 %v1252
        %3159 = vmatprep.subr.bf16.mxu0 %v1261
        %3160 = vmatpush1.bf16.msra.mxu0 %v1260
        %3161 = vmatprep.subr.bf16.mxu0 0
        %3162 = vmatpush1.bf16.msra.mxu0 0
        %3163 = vmatprep.subr.bf16.mxu0 0
        %3164 = vmatpush1.bf16.msra.mxu0 0
        %3165 = vmatprep.subr.bf16.mxu0 0
        %3166 = vmatpush1.bf16.msra.mxu0 0
        %3167 = vmatprep.subr.bf16.mxu0 0
        %3168 = vmatpush1.bf16.msra.mxu0 0
        %3169 = vmatprep.subr.bf16.mxu0 0
        %3170 = vmatpush1.bf16.msra.mxu0 0
        %3171 = vmatprep.subr.bf16.mxu0 0
        %3172 = vmatpush1.bf16.msra.mxu0 0
        %3173 = vmatprep.subr.bf16.mxu0 0
        %3174 = vmatpush1.bf16.msra.mxu0 0
        %3175 = vmatprep.subr.bf16.mxu0 0
        %3176 = vmatpush1.bf16.msra.mxu0 0
        %3177 = vmatprep.mubr.bf16.mxu0 0
        %3178 = vmatmul.mubr.bf16.gmra.mrb[0].mxu0 %v2936
        %v3179 = vpop.f32.mrb[0].mxu0
        %v3180 = vadd.f32 0.0, %v3179
        %v3181 = vpop.f32.mrb[0].mxu0
        %v3182 = vadd.f32 0.0, %v3181
        %v3183 = vpop.f32.mrb[0].mxu0
        %v3184 = vadd.f32 0.0, %v3183
        %v3185 = vpop.f32.mrb[0].mxu0
        %v3186 = vadd.f32 0.0, %v3185
        %3187 = vmatprep.mubr.bf16.mxu0 0
        %3188 = vmatmul.mubr.bf16.gmra.mrb[0].mxu0 %v2937
        %v3189 = vpop.f32.mrb[0].mxu0
        %v3190 = vadd.f32 0.0, %v3189
        %v3191 = vpop.f32.mrb[0].mxu0
        %v3192 = vadd.f32 0.0, %v3191
        %v3193 = vpop.f32.mrb[0].mxu0
        %v3194 = vadd.f32 0.0, %v3193
        %v3195 = vpop.f32.mrb[0].mxu0
        %v3196 = vadd.f32 0.0, %v3195
        %3197 = vmatprep.mubr.bf16.mxu0 0
        %3198 = vmatmul.mubr.bf16.gmra.mrb[0].mxu0 %v2938
        %v3199 = vpop.f32.mrb[0].mxu0
        %v3200 = vadd.f32 0.0, %v3199
        %v3201 = vpop.f32.mrb[0].mxu0
        %v3202 = vadd.f32 0.0, %v3201
        %v3203 = vpop.f32.mrb[0].mxu0
        %v3204 = vadd.f32 0.0, %v3203
        %v3205 = vpop.f32.mrb[0].mxu0
        %v3206 = vadd.f32 0.0, %v3205
        %3207 = vmatprep.mubr.bf16.mxu0 0
        %3208 = vmatmul.mubr.bf16.gmra.mrb[0].mxu0 %v2939
        %v3209 = vpop.f32.mrb[0].mxu0
        %v3210 = vadd.f32 0.0, %v3209
        %v3211 = vpop.f32.mrb[0].mxu0
        %v3212 = vadd.f32 0.0, %v3211
        %v3213 = vpop.f32.mrb[0].mxu0
        %v3214 = vadd.f32 0.0, %v3213
        %v3215 = vpop.f32.mrb[0].mxu0
        %v3216 = vadd.f32 0.0, %v3215
        %3217 = vmatprep.mubr.bf16.mxu0 0
        %3218 = vmatmul.mubr.bf16.gmra.mrb[0].mxu0 %v2940
        %v3219 = vpop.f32.mrb[0].mxu0
        %v3220 = vadd.f32 0.0, %v3219
        %v3221 = vpop.f32.mrb[0].mxu0
        %v3222 = vadd.f32 0.0, %v3221
        %v3223 = vpop.f32.mrb[0].mxu0
        %v3224 = vadd.f32 0.0, %v3223
        %v3225 = vpop.f32.mrb[0].mxu0
        %v3226 = vadd.f32 0.0, %v3225
        %3227 = vmatprep.mubr.bf16.mxu0 0
        %3228 = vmatmul.mubr.bf16.gmra.mrb[0].mxu0 %v2941
        %v3229 = vpop.f32.mrb[0].mxu0
        %v3230 = vadd.f32 0.0, %v3229
        %v3231 = vpop.f32.mrb[0].mxu0
        %v3232 = vadd.f32 0.0, %v3231
        %v3233 = vpop.f32.mrb[0].mxu0
        %v3234 = vadd.f32 0.0, %v3233
        %v3235 = vpop.f32.mrb[0].mxu0
        %v3236 = vadd.f32 0.0, %v3235
        %3237 = vmatprep.mubr.bf16.mxu0 0
        %3238 = vmatmul.mubr.bf16.gmra.mrb[0].mxu0 %v2942
        %v3239 = vpop.f32.mrb[0].mxu0
        %v3240 = vadd.f32 0.0, %v3239
        %v3241 = vpop.f32.mrb[0].mxu0
        %v3242 = vadd.f32 0.0, %v3241
        %v3243 = vpop.f32.mrb[0].mxu0
        %v3244 = vadd.f32 0.0, %v3243
        %v3245 = vpop.f32.mrb[0].mxu0
        %v3246 = vadd.f32 0.0, %v3245
        %3247 = vmatprep.mubr.bf16.mxu0 0
        %3248 = vmatmul.mubr.bf16.gmra.mrb[0].mxu0 %v2943
        %v3249 = vpop.f32.mrb[0].mxu0
        %v3250 = vadd.f32 0.0, %v3249
        %v3251 = vpop.f32.mrb[0].mxu0
        %v3252 = vadd.f32 0.0, %v3251
        %v3253 = vpop.f32.mrb[0].mxu0
        %v3254 = vadd.f32 0.0, %v3253
        %v3255 = vpop.f32.mrb[0].mxu0
        %v3256 = vadd.f32 0.0, %v3255
        %3257 = vmatprep.mubr.bf16.mxu0 0
        %3258 = vmatmul.mubr.bf16.gmra.mrb[0].mxu0 %v2944
        %v3259 = vpop.f32.mrb[0].mxu0
        %v3260 = vadd.f32 0.0, %v3259
        %v3261 = vpop.f32.mrb[0].mxu0
        %v3262 = vadd.f32 0.0, %v3261
        %v3263 = vpop.f32.mrb[0].mxu0
        %v3264 = vadd.f32 0.0, %v3263
        %v3265 = vpop.f32.mrb[0].mxu0
        %v3266 = vadd.f32 0.0, %v3265
        %3267 = vmatprep.mubr.bf16.mxu0 0
        %3268 = vmatmul.mubr.bf16.gmra.mrb[0].mxu0 %v2945
        %v3269 = vpop.f32.mrb[0].mxu0
        %v3270 = vadd.f32 0.0, %v3269
        %v3271 = vpop.f32.mrb[0].mxu0
        %v3272 = vadd.f32 0.0, %v3271
        %v3273 = vpop.f32.mrb[0].mxu0
        %v3274 = vadd.f32 0.0, %v3273
        %v3275 = vpop.f32.mrb[0].mxu0
        %v3276 = vadd.f32 0.0, %v3275
        %3277 = vmatprep.mubr.bf16.mxu0 0
        %3278 = vmatmul.mubr.bf16.gmra.mrb[0].mxu0 %v2946
        %v3279 = vpop.f32.mrb[0].mxu0
        %v3280 = vadd.f32 0.0, %v3279
        %v3281 = vpop.f32.mrb[0].mxu0
        %v3282 = vadd.f32 0.0, %v3281
        %v3283 = vpop.f32.mrb[0].mxu0
        %v3284 = vadd.f32 0.0, %v3283
        %v3285 = vpop.f32.mrb[0].mxu0
        %v3286 = vadd.f32 0.0, %v3285
        %3287 = vmatprep.mubr.bf16.mxu0 0
        %3288 = vmatmul.mubr.bf16.gmra.mrb[0].mxu0 %v2947
        %v3289 = vpop.f32.mrb[0].mxu0
        %v3290 = vadd.f32 0.0, %v3289
        %v3291 = vpop.f32.mrb[0].mxu0
        %v3292 = vadd.f32 0.0, %v3291
        %v3293 = vpop.f32.mrb[0].mxu0
        %v3294 = vadd.f32 0.0, %v3293
        %v3295 = vpop.f32.mrb[0].mxu0
        %v3296 = vadd.f32 0.0, %v3295
        %3297 = vmatprep.mubr.bf16.mxu0 0
        %3298 = vmatmul.mubr.bf16.gmra.mrb[0].mxu0 %v2948
        %v3299 = vpop.f32.mrb[0].mxu0
        %v3300 = vadd.f32 0.0, %v3299
        %v3301 = vpop.f32.mrb[0].mxu0
        %v3302 = vadd.f32 0.0, %v3301
        %v3303 = vpop.f32.mrb[0].mxu0
        %v3304 = vadd.f32 0.0, %v3303
        %v3305 = vpop.f32.mrb[0].mxu0
        %v3306 = vadd.f32 0.0, %v3305
        %3307 = vmatprep.mubr.bf16.mxu0 0
        %3308 = vmatmul.mubr.bf16.gmra.mrb[0].mxu0 %v2949
        %v3309 = vpop.f32.mrb[0].mxu0
        %v3310 = vadd.f32 0.0, %v3309
        %v3311 = vpop.f32.mrb[0].mxu0
        %v3312 = vadd.f32 0.0, %v3311
        %v3313 = vpop.f32.mrb[0].mxu0
        %v3314 = vadd.f32 0.0, %v3313
        %v3315 = vpop.f32.mrb[0].mxu0
        %v3316 = vadd.f32 0.0, %v3315
        %3317 = vmatprep.mubr.bf16.mxu0 0
        %3318 = vmatmul.mubr.bf16.gmra.mrb[0].mxu0 %v2950
        %v3319 = vpop.f32.mrb[0].mxu0
        %v3320 = vadd.f32 0.0, %v3319
        %v3321 = vpop.f32.mrb[0].mxu0
        %v3322 = vadd.f32 0.0, %v3321
        %v3323 = vpop.f32.mrb[0].mxu0
        %v3324 = vadd.f32 0.0, %v3323
        %v3325 = vpop.f32.mrb[0].mxu0
        %v3326 = vadd.f32 0.0, %v3325
        %3327 = vmatprep.mubr.bf16.mxu0 0
        %3328 = vmatmul.mubr.bf16.gmra.mrb[0].mxu0 %v2951
        %v3329 = vpop.f32.mrb[0].mxu0
        %v3330 = vadd.f32 0.0, %v3329
        %v3331 = vpop.f32.mrb[0].mxu0
        %v3332 = vadd.f32 0.0, %v3331
        %v3333 = vpop.f32.mrb[0].mxu0
        %v3334 = vadd.f32 0.0, %v3333
        %v3335 = vpop.f32.mrb[0].mxu0
        %v3336 = vadd.f32 0.0, %v3335
        %3337 = vdwg.mxu0
        %3338 = vmatprep.subr.bf16.mxu0 %v1207
        %3339 = vmatpush1.bf16.msra.mxu0 %v1206
        %3340 = vmatprep.subr.bf16.mxu0 %v1215
        %3341 = vmatpush1.bf16.msra.mxu0 %v1214
        %3342 = vmatprep.subr.bf16.mxu0 %v1223
        %3343 = vmatpush1.bf16.msra.mxu0 %v1222
        %3344 = vmatprep.subr.bf16.mxu0 %v1231
        %3345 = vmatpush1.bf16.msra.mxu0 %v1230
        %3346 = vmatprep.subr.bf16.mxu0 %v1239
        %3347 = vmatpush1.bf16.msra.mxu0 %v1238
        %3348 = vmatprep.subr.bf16.mxu0 %v1247
        %3349 = vmatpush1.bf16.msra.mxu0 %v1246
        %3350 = vmatprep.subr.bf16.mxu0 %v1255
        %3351 = vmatpush1.bf16.msra.mxu0 %v1254
        %3352 = vmatprep.subr.bf16.mxu0 %v1263
        %3353 = vmatpush1.bf16.msra.mxu0 %v1262
        %3354 = vmatprep.subr.bf16.mxu0 0
        %3355 = vmatpush1.bf16.msra.mxu0 0
        %3356 = vmatprep.subr.bf16.mxu0 0
        %3357 = vmatpush1.bf16.msra.mxu0 0
        %3358 = vmatprep.subr.bf16.mxu0 0
        %3359 = vmatpush1.bf16.msra.mxu0 0
        %3360 = vmatprep.subr.bf16.mxu0 0
        %3361 = vmatpush1.bf16.msra.mxu0 0
        %3362 = vmatprep.subr.bf16.mxu0 0
        %3363 = vmatpush1.bf16.msra.mxu0 0
        %3364 = vmatprep.subr.bf16.mxu0 0
        %3365 = vmatpush1.bf16.msra.mxu0 0
        %3366 = vmatprep.subr.bf16.mxu0 0
        %3367 = vmatpush1.bf16.msra.mxu0 0
        %3368 = vmatprep.subr.bf16.mxu0 0
        %3369 = vmatpush1.bf16.msra.mxu0 0
        %3370 = vmatprep.mubr.bf16.mxu0 0
        %3371 = vmatmul.mubr.bf16.gmra.mrb[0].mxu0 %v2936
        %v3372 = vpop.f32.mrb[0].mxu0
        %v3373 = vadd.f32 0.0, %v3372
        %v3374 = vpop.f32.mrb[0].mxu0
        %v3375 = vadd.f32 0.0, %v3374
        %v3376 = vpop.f32.mrb[0].mxu0
        %v3377 = vadd.f32 0.0, %v3376
        %v3378 = vpop.f32.mrb[0].mxu0
        %v3379 = vadd.f32 0.0, %v3378
        %3380 = vmatprep.mubr.bf16.mxu0 0
        %3381 = vmatmul.mubr.bf16.gmra.mrb[0].mxu0 %v2937
        %v3382 = vpop.f32.mrb[0].mxu0
        %v3383 = vadd.f32 0.0, %v3382
        %v3384 = vpop.f32.mrb[0].mxu0
        %v3385 = vadd.f32 0.0, %v3384
        %v3386 = vpop.f32.mrb[0].mxu0
        %v3387 = vadd.f32 0.0, %v3386
        %v3388 = vpop.f32.mrb[0].mxu0
        %v3389 = vadd.f32 0.0, %v3388
        %3390 = vmatprep.mubr.bf16.mxu0 0
        %3391 = vmatmul.mubr.bf16.gmra.mrb[0].mxu0 %v2938
        %v3392 = vpop.f32.mrb[0].mxu0
        %v3393 = vadd.f32 0.0, %v3392
        %v3394 = vpop.f32.mrb[0].mxu0
        %v3395 = vadd.f32 0.0, %v3394
        %v3396 = vpop.f32.mrb[0].mxu0
        %v3397 = vadd.f32 0.0, %v3396
        %v3398 = vpop.f32.mrb[0].mxu0
        %v3399 = vadd.f32 0.0, %v3398
        %3400 = vmatprep.mubr.bf16.mxu0 0
        %3401 = vmatmul.mubr.bf16.gmra.mrb[0].mxu0 %v2939
        %v3402 = vpop.f32.mrb[0].mxu0
        %v3403 = vadd.f32 0.0, %v3402
        %v3404 = vpop.f32.mrb[0].mxu0
        %v3405 = vadd.f32 0.0, %v3404
        %v3406 = vpop.f32.mrb[0].mxu0
        %v3407 = vadd.f32 0.0, %v3406
        %v3408 = vpop.f32.mrb[0].mxu0
        %v3409 = vadd.f32 0.0, %v3408
        %3410 = vmatprep.mubr.bf16.mxu0 0
        %3411 = vmatmul.mubr.bf16.gmra.mrb[0].mxu0 %v2940
        %v3412 = vpop.f32.mrb[0].mxu0
        %v3413 = vadd.f32 0.0, %v3412
        %v3414 = vpop.f32.mrb[0].mxu0
        %v3415 = vadd.f32 0.0, %v3414
        %v3416 = vpop.f32.mrb[0].mxu0
        %v3417 = vadd.f32 0.0, %v3416
        %v3418 = vpop.f32.mrb[0].mxu0
        %v3419 = vadd.f32 0.0, %v3418
        %3420 = vmatprep.mubr.bf16.mxu0 0
        %3421 = vmatmul.mubr.bf16.gmra.mrb[0].mxu0 %v2941
        %v3422 = vpop.f32.mrb[0].mxu0
        %v3423 = vadd.f32 0.0, %v3422
        %v3424 = vpop.f32.mrb[0].mxu0
        %v3425 = vadd.f32 0.0, %v3424
        %v3426 = vpop.f32.mrb[0].mxu0
        %v3427 = vadd.f32 0.0, %v3426
        %v3428 = vpop.f32.mrb[0].mxu0
        %v3429 = vadd.f32 0.0, %v3428
        %3430 = vmatprep.mubr.bf16.mxu0 0
        %3431 = vmatmul.mubr.bf16.gmra.mrb[0].mxu0 %v2942
        %v3432 = vpop.f32.mrb[0].mxu0
        %v3433 = vadd.f32 0.0, %v3432
        %v3434 = vpop.f32.mrb[0].mxu0
        %v3435 = vadd.f32 0.0, %v3434
        %v3436 = vpop.f32.mrb[0].mxu0
        %v3437 = vadd.f32 0.0, %v3436
        %v3438 = vpop.f32.mrb[0].mxu0
        %v3439 = vadd.f32 0.0, %v3438
        %3440 = vmatprep.mubr.bf16.mxu0 0
        %3441 = vmatmul.mubr.bf16.gmra.mrb[0].mxu0 %v2943
        %v3442 = vpop.f32.mrb[0].mxu0
        %v3443 = vadd.f32 0.0, %v3442
        %v3444 = vpop.f32.mrb[0].mxu0
        %v3445 = vadd.f32 0.0, %v3444
        %v3446 = vpop.f32.mrb[0].mxu0
        %v3447 = vadd.f32 0.0, %v3446
        %v3448 = vpop.f32.mrb[0].mxu0
        %v3449 = vadd.f32 0.0, %v3448
        %3450 = vmatprep.mubr.bf16.mxu0 0
        %3451 = vmatmul.mubr.bf16.gmra.mrb[0].mxu0 %v2944
        %v3452 = vpop.f32.mrb[0].mxu0
        %v3453 = vadd.f32 0.0, %v3452
        %v3454 = vpop.f32.mrb[0].mxu0
        %v3455 = vadd.f32 0.0, %v3454
        %v3456 = vpop.f32.mrb[0].mxu0
        %v3457 = vadd.f32 0.0, %v3456
        %v3458 = vpop.f32.mrb[0].mxu0
        %v3459 = vadd.f32 0.0, %v3458
        %3460 = vmatprep.mubr.bf16.mxu0 0
        %3461 = vmatmul.mubr.bf16.gmra.mrb[0].mxu0 %v2945
        %v3462 = vpop.f32.mrb[0].mxu0
        %v3463 = vadd.f32 0.0, %v3462
        %v3464 = vpop.f32.mrb[0].mxu0
        %v3465 = vadd.f32 0.0, %v3464
        %v3466 = vpop.f32.mrb[0].mxu0
        %v3467 = vadd.f32 0.0, %v3466
        %v3468 = vpop.f32.mrb[0].mxu0
        %v3469 = vadd.f32 0.0, %v3468
        %3470 = vmatprep.mubr.bf16.mxu0 0
        %3471 = vmatmul.mubr.bf16.gmra.mrb[0].mxu0 %v2946
        %v3472 = vpop.f32.mrb[0].mxu0
        %v3473 = vadd.f32 0.0, %v3472
        %v3474 = vpop.f32.mrb[0].mxu0
        %v3475 = vadd.f32 0.0, %v3474
        %v3476 = vpop.f32.mrb[0].mxu0
        %v3477 = vadd.f32 0.0, %v3476
        %v3478 = vpop.f32.mrb[0].mxu0
        %v3479 = vadd.f32 0.0, %v3478
        %3480 = vmatprep.mubr.bf16.mxu0 0
        %3481 = vmatmul.mubr.bf16.gmra.mrb[0].mxu0 %v2947
        %v3482 = vpop.f32.mrb[0].mxu0
        %v3483 = vadd.f32 0.0, %v3482
        %v3484 = vpop.f32.mrb[0].mxu0
        %v3485 = vadd.f32 0.0, %v3484
        %v3486 = vpop.f32.mrb[0].mxu0
        %v3487 = vadd.f32 0.0, %v3486
        %v3488 = vpop.f32.mrb[0].mxu0
        %v3489 = vadd.f32 0.0, %v3488
        %3490 = vmatprep.mubr.bf16.mxu0 0
        %3491 = vmatmul.mubr.bf16.gmra.mrb[0].mxu0 %v2948
        %v3492 = vpop.f32.mrb[0].mxu0
        %v3493 = vadd.f32 0.0, %v3492
        %v3494 = vpop.f32.mrb[0].mxu0
        %v3495 = vadd.f32 0.0, %v3494
        %v3496 = vpop.f32.mrb[0].mxu0
        %v3497 = vadd.f32 0.0, %v3496
        %v3498 = vpop.f32.mrb[0].mxu0
        %v3499 = vadd.f32 0.0, %v3498
        %3500 = vmatprep.mubr.bf16.mxu0 0
        %3501 = vmatmul.mubr.bf16.gmra.mrb[0].mxu0 %v2949
        %v3502 = vpop.f32.mrb[0].mxu0
        %v3503 = vadd.f32 0.0, %v3502
        %v3504 = vpop.f32.mrb[0].mxu0
        %v3505 = vadd.f32 0.0, %v3504
        %v3506 = vpop.f32.mrb[0].mxu0
        %v3507 = vadd.f32 0.0, %v3506
        %v3508 = vpop.f32.mrb[0].mxu0
        %v3509 = vadd.f32 0.0, %v3508
        %3510 = vmatprep.mubr.bf16.mxu0 0
        %3511 = vmatmul.mubr.bf16.gmra.mrb[0].mxu0 %v2950
        %v3512 = vpop.f32.mrb[0].mxu0
        %v3513 = vadd.f32 0.0, %v3512
        %v3514 = vpop.f32.mrb[0].mxu0
        %v3515 = vadd.f32 0.0, %v3514
        %v3516 = vpop.f32.mrb[0].mxu0
        %v3517 = vadd.f32 0.0, %v3516
        %v3518 = vpop.f32.mrb[0].mxu0
        %v3519 = vadd.f32 0.0, %v3518
        %3520 = vmatprep.mubr.bf16.mxu0 0
        %3521 = vmatmul.mubr.bf16.gmra.mrb[0].mxu0 %v2951
        %v3522 = vpop.f32.mrb[0].mxu0
        %v3523 = vadd.f32 0.0, %v3522
        %v3524 = vpop.f32.mrb[0].mxu0
        %v3525 = vadd.f32 0.0, %v3524
        %v3526 = vpop.f32.mrb[0].mxu0
        %v3527 = vadd.f32 0.0, %v3526
        %v3528 = vpop.f32.mrb[0].mxu0
        %v3529 = vadd.f32 0.0, %v3528
        %3530 = vdwg.mxu0
        %3531 = vmatprep.subr.bf16.mxu0 %v1209
        %3532 = vmatpush1.bf16.msra.mxu0 %v1208
        %3533 = vmatprep.subr.bf16.mxu0 %v1217
        %3534 = vmatpush1.bf16.msra.mxu0 %v1216
        %3535 = vmatprep.subr.bf16.mxu0 %v1225
        %3536 = vmatpush1.bf16.msra.mxu0 %v1224
        %3537 = vmatprep.subr.bf16.mxu0 %v1233
        %3538 = vmatpush1.bf16.msra.mxu0 %v1232
        %3539 = vmatprep.subr.bf16.mxu0 %v1241
        %3540 = vmatpush1.bf16.msra.mxu0 %v1240
        %3541 = vmatprep.subr.bf16.mxu0 %v1249
        %3542 = vmatpush1.bf16.msra.mxu0 %v1248
        %3543 = vmatprep.subr.bf16.mxu0 %v1257
        %3544 = vmatpush1.bf16.msra.mxu0 %v1256
        %3545 = vmatprep.subr.bf16.mxu0 %v1265
        %3546 = vmatpush1.bf16.msra.mxu0 %v1264
        %3547 = vmatprep.subr.bf16.mxu0 0
        %3548 = vmatpush1.bf16.msra.mxu0 0
        %3549 = vmatprep.subr.bf16.mxu0 0
        %3550 = vmatpush1.bf16.msra.mxu0 0
        %3551 = vmatprep.subr.bf16.mxu0 0
        %3552 = vmatpush1.bf16.msra.mxu0 0
        %3553 = vmatprep.subr.bf16.mxu0 0
        %3554 = vmatpush1.bf16.msra.mxu0 0
        %3555 = vmatprep.subr.bf16.mxu0 0
        %3556 = vmatpush1.bf16.msra.mxu0 0
        %3557 = vmatprep.subr.bf16.mxu0 0
        %3558 = vmatpush1.bf16.msra.mxu0 0
        %3559 = vmatprep.subr.bf16.mxu0 0
        %3560 = vmatpush1.bf16.msra.mxu0 0
        %3561 = vmatprep.subr.bf16.mxu0 0
        %3562 = vmatpush1.bf16.msra.mxu0 0
        %3563 = vmatprep.mubr.bf16.mxu0 0
        %3564 = vmatmul.mubr.bf16.gmra.mrb[0].mxu0 %v2936
        %v3565 = vpop.f32.mrb[0].mxu0
        %v3566 = vadd.f32 0.0, %v3565
        %v3567 = vpop.f32.mrb[0].mxu0
        %v3568 = vadd.f32 0.0, %v3567
        %v3569 = vpop.f32.mrb[0].mxu0
        %v3570 = vadd.f32 0.0, %v3569
        %v3571 = vpop.f32.mrb[0].mxu0
        %v3572 = vadd.f32 0.0, %v3571
        %3573 = vmatprep.mubr.bf16.mxu0 0
        %3574 = vmatmul.mubr.bf16.gmra.mrb[0].mxu0 %v2937
        %v3575 = vpop.f32.mrb[0].mxu0
        %v3576 = vadd.f32 0.0, %v3575
        %v3577 = vpop.f32.mrb[0].mxu0
        %v3578 = vadd.f32 0.0, %v3577
        %v3579 = vpop.f32.mrb[0].mxu0
        %v3580 = vadd.f32 0.0, %v3579
        %v3581 = vpop.f32.mrb[0].mxu0
        %v3582 = vadd.f32 0.0, %v3581
        %3583 = vmatprep.mubr.bf16.mxu0 0
        %3584 = vmatmul.mubr.bf16.gmra.mrb[0].mxu0 %v2938
        %v3585 = vpop.f32.mrb[0].mxu0
        %v3586 = vadd.f32 0.0, %v3585
        %v3587 = vpop.f32.mrb[0].mxu0
        %v3588 = vadd.f32 0.0, %v3587
        %v3589 = vpop.f32.mrb[0].mxu0
        %v3590 = vadd.f32 0.0, %v3589
        %v3591 = vpop.f32.mrb[0].mxu0
        %v3592 = vadd.f32 0.0, %v3591
        %3593 = vmatprep.mubr.bf16.mxu0 0
        %3594 = vmatmul.mubr.bf16.gmra.mrb[0].mxu0 %v2939
        %v3595 = vpop.f32.mrb[0].mxu0
        %v3596 = vadd.f32 0.0, %v3595
        %v3597 = vpop.f32.mrb[0].mxu0
        %v3598 = vadd.f32 0.0, %v3597
        %v3599 = vpop.f32.mrb[0].mxu0
        %v3600 = vadd.f32 0.0, %v3599
        %v3601 = vpop.f32.mrb[0].mxu0
        %v3602 = vadd.f32 0.0, %v3601
        %3603 = vmatprep.mubr.bf16.mxu0 0
        %3604 = vmatmul.mubr.bf16.gmra.mrb[0].mxu0 %v2940
        %v3605 = vpop.f32.mrb[0].mxu0
        %v3606 = vadd.f32 0.0, %v3605
        %v3607 = vpop.f32.mrb[0].mxu0
        %v3608 = vadd.f32 0.0, %v3607
        %v3609 = vpop.f32.mrb[0].mxu0
        %v3610 = vadd.f32 0.0, %v3609
        %v3611 = vpop.f32.mrb[0].mxu0
        %v3612 = vadd.f32 0.0, %v3611
        %3613 = vmatprep.mubr.bf16.mxu0 0
        %3614 = vmatmul.mubr.bf16.gmra.mrb[0].mxu0 %v2941
        %v3615 = vpop.f32.mrb[0].mxu0
        %v3616 = vadd.f32 0.0, %v3615
        %v3617 = vpop.f32.mrb[0].mxu0
        %v3618 = vadd.f32 0.0, %v3617
        %v3619 = vpop.f32.mrb[0].mxu0
        %v3620 = vadd.f32 0.0, %v3619
        %v3621 = vpop.f32.mrb[0].mxu0
        %v3622 = vadd.f32 0.0, %v3621
        %3623 = vmatprep.mubr.bf16.mxu0 0
        %3624 = vmatmul.mubr.bf16.gmra.mrb[0].mxu0 %v2942
        %v3625 = vpop.f32.mrb[0].mxu0
        %v3626 = vadd.f32 0.0, %v3625
        %v3627 = vpop.f32.mrb[0].mxu0
        %v3628 = vadd.f32 0.0, %v3627
        %v3629 = vpop.f32.mrb[0].mxu0
        %v3630 = vadd.f32 0.0, %v3629
        %v3631 = vpop.f32.mrb[0].mxu0
        %v3632 = vadd.f32 0.0, %v3631
        %3633 = vmatprep.mubr.bf16.mxu0 0
        %3634 = vmatmul.mubr.bf16.gmra.mrb[0].mxu0 %v2943
        %v3635 = vpop.f32.mrb[0].mxu0
        %v3636 = vadd.f32 0.0, %v3635
        %v3637 = vpop.f32.mrb[0].mxu0
        %v3638 = vadd.f32 0.0, %v3637
        %v3639 = vpop.f32.mrb[0].mxu0
        %v3640 = vadd.f32 0.0, %v3639
        %v3641 = vpop.f32.mrb[0].mxu0
        %v3642 = vadd.f32 0.0, %v3641
        %3643 = vmatprep.mubr.bf16.mxu0 0
        %3644 = vmatmul.mubr.bf16.gmra.mrb[0].mxu0 %v2944
        %v3645 = vpop.f32.mrb[0].mxu0
        %v3646 = vadd.f32 0.0, %v3645
        %v3647 = vpop.f32.mrb[0].mxu0
        %v3648 = vadd.f32 0.0, %v3647
        %v3649 = vpop.f32.mrb[0].mxu0
        %v3650 = vadd.f32 0.0, %v3649
        %v3651 = vpop.f32.mrb[0].mxu0
        %v3652 = vadd.f32 0.0, %v3651
        %3653 = vmatprep.mubr.bf16.mxu0 0
        %3654 = vmatmul.mubr.bf16.gmra.mrb[0].mxu0 %v2945
        %v3655 = vpop.f32.mrb[0].mxu0
        %v3656 = vadd.f32 0.0, %v3655
        %v3657 = vpop.f32.mrb[0].mxu0
        %v3658 = vadd.f32 0.0, %v3657
        %v3659 = vpop.f32.mrb[0].mxu0
        %v3660 = vadd.f32 0.0, %v3659
        %v3661 = vpop.f32.mrb[0].mxu0
        %v3662 = vadd.f32 0.0, %v3661
        %3663 = vmatprep.mubr.bf16.mxu0 0
        %3664 = vmatmul.mubr.bf16.gmra.mrb[0].mxu0 %v2946
        %v3665 = vpop.f32.mrb[0].mxu0
        %v3666 = vadd.f32 0.0, %v3665
        %v3667 = vpop.f32.mrb[0].mxu0
        %v3668 = vadd.f32 0.0, %v3667
        %v3669 = vpop.f32.mrb[0].mxu0
        %v3670 = vadd.f32 0.0, %v3669
        %v3671 = vpop.f32.mrb[0].mxu0
        %v3672 = vadd.f32 0.0, %v3671
        %3673 = vmatprep.mubr.bf16.mxu0 0
        %3674 = vmatmul.mubr.bf16.gmra.mrb[0].mxu0 %v2947
        %v3675 = vpop.f32.mrb[0].mxu0
        %v3676 = vadd.f32 0.0, %v3675
        %v3677 = vpop.f32.mrb[0].mxu0
        %v3678 = vadd.f32 0.0, %v3677
        %v3679 = vpop.f32.mrb[0].mxu0
        %v3680 = vadd.f32 0.0, %v3679
        %v3681 = vpop.f32.mrb[0].mxu0
        %v3682 = vadd.f32 0.0, %v3681
        %3683 = vmatprep.mubr.bf16.mxu0 0
        %3684 = vmatmul.mubr.bf16.gmra.mrb[0].mxu0 %v2948
        %v3685 = vpop.f32.mrb[0].mxu0
        %v3686 = vadd.f32 0.0, %v3685
        %v3687 = vpop.f32.mrb[0].mxu0
        %v3688 = vadd.f32 0.0, %v3687
        %v3689 = vpop.f32.mrb[0].mxu0
        %v3690 = vadd.f32 0.0, %v3689
        %v3691 = vpop.f32.mrb[0].mxu0
        %v3692 = vadd.f32 0.0, %v3691
        %3693 = vmatprep.mubr.bf16.mxu0 0
        %3694 = vmatmul.mubr.bf16.gmra.mrb[0].mxu0 %v2949
        %v3695 = vpop.f32.mrb[0].mxu0
        %v3696 = vadd.f32 0.0, %v3695
        %v3697 = vpop.f32.mrb[0].mxu0
        %v3698 = vadd.f32 0.0, %v3697
        %v3699 = vpop.f32.mrb[0].mxu0
        %v3700 = vadd.f32 0.0, %v3699
        %v3701 = vpop.f32.mrb[0].mxu0
        %v3702 = vadd.f32 0.0, %v3701
        %3703 = vmatprep.mubr.bf16.mxu0 0
        %3704 = vmatmul.mubr.bf16.gmra.mrb[0].mxu0 %v2950
        %v3705 = vpop.f32.mrb[0].mxu0
        %v3706 = vadd.f32 0.0, %v3705
        %v3707 = vpop.f32.mrb[0].mxu0
        %v3708 = vadd.f32 0.0, %v3707
        %v3709 = vpop.f32.mrb[0].mxu0
        %v3710 = vadd.f32 0.0, %v3709
        %v3711 = vpop.f32.mrb[0].mxu0
        %v3712 = vadd.f32 0.0, %v3711
        %3713 = vmatprep.mubr.bf16.mxu0 0
        %3714 = vmatmul.mubr.bf16.gmra.mrb[0].mxu0 %v2951
        %v3715 = vpop.f32.mrb[0].mxu0
        %v3716 = vadd.f32 0.0, %v3715
        %v3717 = vpop.f32.mrb[0].mxu0
        %v3718 = vadd.f32 0.0, %v3717
        %v3719 = vpop.f32.mrb[0].mxu0
        %v3720 = vadd.f32 0.0, %v3719
        %v3721 = vpop.f32.mrb[0].mxu0
        %v3722 = vadd.f32 0.0, %v3721
        %3723 = vdwg.mxu0
        %v3724 = vmax.f32 %v2987, %v2991
        %v3725 = vmax.f32 %v3724, %v2997
        %v3726 = vmax.f32 %v3725, %v3001
        %v3727 = vmax.f32 %v3726, %v3007
        %v3728 = vmax.f32 %v3727, %v3011
        %v3729 = vmax.f32 %v3728, %v3017
        %v3730 = vmax.f32 %v3729, %v3021
        %v3731 = vmax.f32 %v3730, %v3027
        %v3732 = vmax.f32 %v3731, %v3031
        %v3733 = vmax.f32 %v3732, %v3037
        %v3734 = vmax.f32 %v3733, %v3041
        %v3735 = vmax.f32 %v3734, %v3047
        %v3736 = vmax.f32 %v3735, %v3051
        %v3737 = vmax.f32 %v3736, %v3057
        %v3738 = vmax.f32 %v3737, %v3061
        %v3739 = vmax.f32 %v3738, %v3067
        %v3740 = vmax.f32 %v3739, %v3071
        %v3741 = vmax.f32 %v3740, %v3077
        %v3742 = vmax.f32 %v3741, %v3081
        %v3743 = vmax.f32 %v3742, %v3087
        %v3744 = vmax.f32 %v3743, %v3091
        %v3745 = vmax.f32 %v3744, %v3097
        %v3746 = vmax.f32 %v3745, %v3101
        %v3747 = vmax.f32 %v3746, %v3107
        %v3748 = vmax.f32 %v3747, %v3111
        %v3749 = vmax.f32 %v3748, %v3117
        %v3750 = vmax.f32 %v3749, %v3121
        %v3751 = vmax.f32 %v3750, %v3127
        %v3752 = vmax.f32 %v3751, %v3131
        %v3753 = vmax.f32 %v3752, %v3137
        %v3754 = vmax.f32 %v3753, %v3141
        %v3755 = vrot.slane %v3754, 4
        %v3756 = vmax.f32 %v3754, %v3755
        %v3757 = vrot.slane %v3756, 2
        %v3758 = vmax.f32 %v3756, %v3757
        %v3759 = vrot.slane %v3758, 1
        %v3760 = vmax.f32 %v3758, %v3759
        %v3761 = vmax.f32 %v2989, %v2993
        %v3762 = vmax.f32 %v3761, %v2999
        %v3763 = vmax.f32 %v3762, %v3003
        %v3764 = vmax.f32 %v3763, %v3009
        %v3765 = vmax.f32 %v3764, %v3013
        %v3766 = vmax.f32 %v3765, %v3019
        %v3767 = vmax.f32 %v3766, %v3023
        %v3768 = vmax.f32 %v3767, %v3029
        %v3769 = vmax.f32 %v3768, %v3033
        %v3770 = vmax.f32 %v3769, %v3039
        %v3771 = vmax.f32 %v3770, %v3043
        %v3772 = vmax.f32 %v3771, %v3049
        %v3773 = vmax.f32 %v3772, %v3053
        %v3774 = vmax.f32 %v3773, %v3059
        %v3775 = vmax.f32 %v3774, %v3063
        %v3776 = vmax.f32 %v3775, %v3069
        %v3777 = vmax.f32 %v3776, %v3073
        %v3778 = vmax.f32 %v3777, %v3079
        %v3779 = vmax.f32 %v3778, %v3083
        %v3780 = vmax.f32 %v3779, %v3089
        %v3781 = vmax.f32 %v3780, %v3093
        %v3782 = vmax.f32 %v3781, %v3099
        %v3783 = vmax.f32 %v3782, %v3103
        %v3784 = vmax.f32 %v3783, %v3109
        %v3785 = vmax.f32 %v3784, %v3113
        %v3786 = vmax.f32 %v3785, %v3119
        %v3787 = vmax.f32 %v3786, %v3123
        %v3788 = vmax.f32 %v3787, %v3129
        %v3789 = vmax.f32 %v3788, %v3133
        %v3790 = vmax.f32 %v3789, %v3139
        %v3791 = vmax.f32 %v3790, %v3143
        %v3792 = vrot.slane %v3791, 4
        %v3793 = vmax.f32 %v3791, %v3792
        %v3794 = vrot.slane %v3793, 2
        %v3795 = vmax.f32 %v3793, %v3794
        %v3796 = vrot.slane %v3795, 1
        %v3797 = vmax.f32 %v3795, %v3796
        %v3798 = vmax.f32 %v3180, %v3184
        %v3799 = vmax.f32 %v3798, %v3190
        %v3800 = vmax.f32 %v3799, %v3194
        %v3801 = vmax.f32 %v3800, %v3200
        %v3802 = vmax.f32 %v3801, %v3204
        %v3803 = vmax.f32 %v3802, %v3210
        %v3804 = vmax.f32 %v3803, %v3214
        %v3805 = vmax.f32 %v3804, %v3220
        %v3806 = vmax.f32 %v3805, %v3224
        %v3807 = vmax.f32 %v3806, %v3230
        %v3808 = vmax.f32 %v3807, %v3234
        %v3809 = vmax.f32 %v3808, %v3240
        %v3810 = vmax.f32 %v3809, %v3244
        %v3811 = vmax.f32 %v3810, %v3250
        %v3812 = vmax.f32 %v3811, %v3254
        %v3813 = vmax.f32 %v3812, %v3260
        %v3814 = vmax.f32 %v3813, %v3264
        %v3815 = vmax.f32 %v3814, %v3270
        %v3816 = vmax.f32 %v3815, %v3274
        %v3817 = vmax.f32 %v3816, %v3280
        %v3818 = vmax.f32 %v3817, %v3284
        %v3819 = vmax.f32 %v3818, %v3290
        %v3820 = vmax.f32 %v3819, %v3294
        %v3821 = vmax.f32 %v3820, %v3300
        %v3822 = vmax.f32 %v3821, %v3304
        %v3823 = vmax.f32 %v3822, %v3310
        %v3824 = vmax.f32 %v3823, %v3314
        %v3825 = vmax.f32 %v3824, %v3320
        %v3826 = vmax.f32 %v3825, %v3324
        %v3827 = vmax.f32 %v3826, %v3330
        %v3828 = vmax.f32 %v3827, %v3334
        %v3829 = vrot.slane %v3828, 4
        %v3830 = vmax.f32 %v3828, %v3829
        %v3831 = vrot.slane %v3830, 2
        %v3832 = vmax.f32 %v3830, %v3831
        %v3833 = vrot.slane %v3832, 1
        %v3834 = vmax.f32 %v3832, %v3833
        %v3835 = vmax.f32 %v3182, %v3186
        %v3836 = vmax.f32 %v3835, %v3192
        %v3837 = vmax.f32 %v3836, %v3196
        %v3838 = vmax.f32 %v3837, %v3202
        %v3839 = vmax.f32 %v3838, %v3206
        %v3840 = vmax.f32 %v3839, %v3212
        %v3841 = vmax.f32 %v3840, %v3216
        %v3842 = vmax.f32 %v3841, %v3222
        %v3843 = vmax.f32 %v3842, %v3226
        %v3844 = vmax.f32 %v3843, %v3232
        %v3845 = vmax.f32 %v3844, %v3236
        %v3846 = vmax.f32 %v3845, %v3242
        %v3847 = vmax.f32 %v3846, %v3246
        %v3848 = vmax.f32 %v3847, %v3252
        %v3849 = vmax.f32 %v3848, %v3256
        %v3850 = vmax.f32 %v3849, %v3262
        %v3851 = vmax.f32 %v3850, %v3266
        %v3852 = vmax.f32 %v3851, %v3272
        %v3853 = vmax.f32 %v3852, %v3276
        %v3854 = vmax.f32 %v3853, %v3282
        %v3855 = vmax.f32 %v3854, %v3286
        %v3856 = vmax.f32 %v3855, %v3292
        %v3857 = vmax.f32 %v3856, %v3296
        %v3858 = vmax.f32 %v3857, %v3302
        %v3859 = vmax.f32 %v3858, %v3306
        %v3860 = vmax.f32 %v3859, %v3312
        %v3861 = vmax.f32 %v3860, %v3316
        %v3862 = vmax.f32 %v3861, %v3322
        %v3863 = vmax.f32 %v3862, %v3326
        %v3864 = vmax.f32 %v3863, %v3332
        %v3865 = vmax.f32 %v3864, %v3336
        %v3866 = vrot.slane %v3865, 4
        %v3867 = vmax.f32 %v3865, %v3866
        %v3868 = vrot.slane %v3867, 2
        %v3869 = vmax.f32 %v3867, %v3868
        %v3870 = vrot.slane %v3869, 1
        %v3871 = vmax.f32 %v3869, %v3870
        %v3872 = vmax.f32 %v3373, %v3377
        %v3873 = vmax.f32 %v3872, %v3383
        %v3874 = vmax.f32 %v3873, %v3387
        %v3875 = vmax.f32 %v3874, %v3393
        %v3876 = vmax.f32 %v3875, %v3397
        %v3877 = vmax.f32 %v3876, %v3403
        %v3878 = vmax.f32 %v3877, %v3407
        %v3879 = vmax.f32 %v3878, %v3413
        %v3880 = vmax.f32 %v3879, %v3417
        %v3881 = vmax.f32 %v3880, %v3423
        %v3882 = vmax.f32 %v3881, %v3427
        %v3883 = vmax.f32 %v3882, %v3433
        %v3884 = vmax.f32 %v3883, %v3437
        %v3885 = vmax.f32 %v3884, %v3443
        %v3886 = vmax.f32 %v3885, %v3447
        %v3887 = vmax.f32 %v3886, %v3453
        %v3888 = vmax.f32 %v3887, %v3457
        %v3889 = vmax.f32 %v3888, %v3463
        %v3890 = vmax.f32 %v3889, %v3467
        %v3891 = vmax.f32 %v3890, %v3473
        %v3892 = vmax.f32 %v3891, %v3477
        %v3893 = vmax.f32 %v3892, %v3483
        %v3894 = vmax.f32 %v3893, %v3487
        %v3895 = vmax.f32 %v3894, %v3493
        %v3896 = vmax.f32 %v3895, %v3497
        %v3897 = vmax.f32 %v3896, %v3503
        %v3898 = vmax.f32 %v3897, %v3507
        %v3899 = vmax.f32 %v3898, %v3513
        %v3900 = vmax.f32 %v3899, %v3517
        %v3901 = vmax.f32 %v3900, %v3523
        %v3902 = vmax.f32 %v3901, %v3527
        %v3903 = vrot.slane %v3902, 4
        %v3904 = vmax.f32 %v3902, %v3903
        %v3905 = vrot.slane %v3904, 2
        %v3906 = vmax.f32 %v3904, %v3905
        %v3907 = vrot.slane %v3906, 1
        %v3908 = vmax.f32 %v3906, %v3907
        %v3909 = vmax.f32 %v3375, %v3379
        %v3910 = vmax.f32 %v3909, %v3385
        %v3911 = vmax.f32 %v3910, %v3389
        %v3912 = vmax.f32 %v3911, %v3395
        %v3913 = vmax.f32 %v3912, %v3399
        %v3914 = vmax.f32 %v3913, %v3405
        %v3915 = vmax.f32 %v3914, %v3409
        %v3916 = vmax.f32 %v3915, %v3415
        %v3917 = vmax.f32 %v3916, %v3419
        %v3918 = vmax.f32 %v3917, %v3425
        %v3919 = vmax.f32 %v3918, %v3429
        %v3920 = vmax.f32 %v3919, %v3435
        %v3921 = vmax.f32 %v3920, %v3439
        %v3922 = vmax.f32 %v3921, %v3445
        %v3923 = vmax.f32 %v3922, %v3449
        %v3924 = vmax.f32 %v3923, %v3455
        %v3925 = vmax.f32 %v3924, %v3459
        %v3926 = vmax.f32 %v3925, %v3465
        %v3927 = vmax.f32 %v3926, %v3469
        %v3928 = vmax.f32 %v3927, %v3475
        %v3929 = vmax.f32 %v3928, %v3479
        %v3930 = vmax.f32 %v3929, %v3485
        %v3931 = vmax.f32 %v3930, %v3489
        %v3932 = vmax.f32 %v3931, %v3495
        %v3933 = vmax.f32 %v3932, %v3499
        %v3934 = vmax.f32 %v3933, %v3505
        %v3935 = vmax.f32 %v3934, %v3509
        %v3936 = vmax.f32 %v3935, %v3515
        %v3937 = vmax.f32 %v3936, %v3519
        %v3938 = vmax.f32 %v3937, %v3525
        %v3939 = vmax.f32 %v3938, %v3529
        %v3940 = vrot.slane %v3939, 4
        %v3941 = vmax.f32 %v3939, %v3940
        %v3942 = vrot.slane %v3941, 2
        %v3943 = vmax.f32 %v3941, %v3942
        %v3944 = vrot.slane %v3943, 1
        %v3945 = vmax.f32 %v3943, %v3944
        %v3946 = vmax.f32 %v3566, %v3570
        %v3947 = vmax.f32 %v3946, %v3576
        %v3948 = vmax.f32 %v3947, %v3580
        %v3949 = vmax.f32 %v3948, %v3586
        %v3950 = vmax.f32 %v3949, %v3590
        %v3951 = vmax.f32 %v3950, %v3596
        %v3952 = vmax.f32 %v3951, %v3600
        %v3953 = vmax.f32 %v3952, %v3606
        %v3954 = vmax.f32 %v3953, %v3610
        %v3955 = vmax.f32 %v3954, %v3616
        %v3956 = vmax.f32 %v3955, %v3620
        %v3957 = vmax.f32 %v3956, %v3626
        %v3958 = vmax.f32 %v3957, %v3630
        %v3959 = vmax.f32 %v3958, %v3636
        %v3960 = vmax.f32 %v3959, %v3640
        %v3961 = vmax.f32 %v3960, %v3646
        %v3962 = vmax.f32 %v3961, %v3650
        %v3963 = vmax.f32 %v3962, %v3656
        %v3964 = vmax.f32 %v3963, %v3660
        %v3965 = vmax.f32 %v3964, %v3666
        %v3966 = vmax.f32 %v3965, %v3670
        %v3967 = vmax.f32 %v3966, %v3676
        %v3968 = vmax.f32 %v3967, %v3680
        %v3969 = vmax.f32 %v3968, %v3686
        %v3970 = vmax.f32 %v3969, %v3690
        %v3971 = vmax.f32 %v3970, %v3696
        %v3972 = vmax.f32 %v3971, %v3700
        %v3973 = vmax.f32 %v3972, %v3706
        %v3974 = vmax.f32 %v3973, %v3710
        %v3975 = vmax.f32 %v3974, %v3716
        %v3976 = vmax.f32 %v3975, %v3720
        %v3977 = vrot.slane %v3976, 4
        %v3978 = vmax.f32 %v3976, %v3977
        %v3979 = vrot.slane %v3978, 2
        %v3980 = vmax.f32 %v3978, %v3979
        %v3981 = vrot.slane %v3980, 1
        %v3982 = vmax.f32 %v3980, %v3981
        %v3983 = vmax.f32 %v3568, %v3572
        %v3984 = vmax.f32 %v3983, %v3578
        %v3985 = vmax.f32 %v3984, %v3582
        %v3986 = vmax.f32 %v3985, %v3588
        %v3987 = vmax.f32 %v3986, %v3592
        %v3988 = vmax.f32 %v3987, %v3598
        %v3989 = vmax.f32 %v3988, %v3602
        %v3990 = vmax.f32 %v3989, %v3608
        %v3991 = vmax.f32 %v3990, %v3612
        %v3992 = vmax.f32 %v3991, %v3618
        %v3993 = vmax.f32 %v3992, %v3622
        %v3994 = vmax.f32 %v3993, %v3628
        %v3995 = vmax.f32 %v3994, %v3632
        %v3996 = vmax.f32 %v3995, %v3638
        %v3997 = vmax.f32 %v3996, %v3642
        %v3998 = vmax.f32 %v3997, %v3648
        %v3999 = vmax.f32 %v3998, %v3652
        %v4000 = vmax.f32 %v3999, %v3658
        %v4001 = vmax.f32 %v4000, %v3662
        %v4002 = vmax.f32 %v4001, %v3668
        %v4003 = vmax.f32 %v4002, %v3672
        %v4004 = vmax.f32 %v4003, %v3678
        %v4005 = vmax.f32 %v4004, %v3682
        %v4006 = vmax.f32 %v4005, %v3688
        %v4007 = vmax.f32 %v4006, %v3692
        %v4008 = vmax.f32 %v4007, %v3698
        %v4009 = vmax.f32 %v4008, %v3702
        %v4010 = vmax.f32 %v4009, %v3708
        %v4011 = vmax.f32 %v4010, %v3712
        %v4012 = vmax.f32 %v4011, %v3718
        %v4013 = vmax.f32 %v4012, %v3722
        %v4014 = vrot.slane %v4013, 4
        %v4015 = vmax.f32 %v4013, %v4014
        %v4016 = vrot.slane %v4015, 2
        %v4017 = vmax.f32 %v4015, %v4016
        %v4018 = vrot.slane %v4017, 1
        %v4019 = vmax.f32 %v4017, %v4018
        %v4020 = vmax.f32 %v2138, %v3760
        %v4021 = vmax.f32 %v2175, %v3797
        %v4022 = vmax.f32 %v2212, %v3834
        %v4023 = vmax.f32 %v2249, %v3871
        %v4024 = vmax.f32 %v2286, %v3908
        %v4025 = vmax.f32 %v2323, %v3945
        %v4026 = vmax.f32 %v2360, %v3982
        %v4027 = vmax.f32 %v2397, %v4019
        %v4028 = vld [vmem:[%s291 + $0x10] sm:$0xff]
        %v4030 = vunpack.c.l.b16 %v4028
        %v4031 = vunpack.c.h.b16 %v4028
        %v4032 = vpack.c.b16 %v4030, %v4030
        %v4033 = vpack.c.b16 %v4031, %v4031
        %4036 = vxpose.xlu0.c.b16.start [1/8] %v4032, 128
        %4037 = vxpose.xlu0.c.b16.cont [2/8] 0, 128
        %4038 = vxpose.xlu0.c.b16.cont [3/8] 0, 128
        %4039 = vxpose.xlu0.c.b16.cont [4/8] 0, 128
        %4040 = vxpose.xlu0.c.b16.cont [5/8] 0, 128
        %4041 = vxpose.xlu0.c.b16.cont [6/8] 0, 128
        %4042 = vxpose.xlu0.c.b16.cont [7/8] 0, 128
        %4043 = vxpose.xlu0.c.b16.end [8/8] 0, 128
        %v4044 = vpop.trf.xlu0
        %v4045 = vpop.trf.xlu0
        %v4046 = vpop.trf.xlu0
        %v4047 = vpop.trf.xlu0
        %v4048 = vpop.trf.xlu0
        %v4049 = vpop.trf.xlu0
        %v4050 = vpop.trf.xlu0
        %v4051 = vpop.trf.xlu0
        %4052 = vxpose.xlu0.c.b16.start [1/8] %v4033, 128
        %4053 = vxpose.xlu0.c.b16.cont [2/8] 0, 128
        %4054 = vxpose.xlu0.c.b16.cont [3/8] 0, 128
        %4055 = vxpose.xlu0.c.b16.cont [4/8] 0, 128
        %4056 = vxpose.xlu0.c.b16.cont [5/8] 0, 128
        %4057 = vxpose.xlu0.c.b16.cont [6/8] 0, 128
        %4058 = vxpose.xlu0.c.b16.cont [7/8] 0, 128
        %4059 = vxpose.xlu0.c.b16.end [8/8] 0, 128
        %v4060 = vpop.trf.xlu0
        %v4061 = vpop.trf.xlu0
        %v4062 = vpop.trf.xlu0
        %v4063 = vpop.trf.xlu0
        %v4064 = vpop.trf.xlu0
        %v4065 = vpop.trf.xlu0
        %v4066 = vpop.trf.xlu0
        %v4067 = vpop.trf.xlu0
        %v4069 = vsel %vm460, %v4044, 0
        %v4072 = vsel %vm460, %v4045, 0
        %v4075 = vsel %vm460, %v4046, 0
        %v4078 = vsel %vm460, %v4047, 0
        %v4081 = vsel %vm460, %v4048, 0
        %v4084 = vsel %vm460, %v4049, 0
        %v4087 = vsel %vm460, %v4050, 0
        %v4090 = vsel %vm460, %v4051, 0
        %v4093 = vsel %vm460, %v4060, 0
        %v4096 = vsel %vm460, %v4061, 0
        %v4099 = vsel %vm460, %v4062, 0
        %v4102 = vsel %vm460, %v4063, 0
        %v4105 = vsel %vm460, %v4064, 0
        %v4108 = vsel %vm460, %v4065, 0
        %v4111 = vsel %vm460, %v4066, 0
        %v4114 = vsel %vm460, %v4067, 0
        %4116 = vmatprep.subr.bf16.mxu0 0
        %4117 = vmatpush1.bf16.msra.mxu0 %v511
        %4118 = vmatprep.subr.bf16.mxu0 0
        %4119 = vmatpush1.bf16.msra.mxu0 0
        %4120 = vmatprep.subr.bf16.mxu0 0
        %4121 = vmatpush1.bf16.msra.mxu0 0
        %4122 = vmatprep.subr.bf16.mxu0 0
        %4123 = vmatpush1.bf16.msra.mxu0 0
        %4124 = vmatprep.subr.bf16.mxu0 0
        %4125 = vmatpush1.bf16.msra.mxu0 0
        %4126 = vmatprep.subr.bf16.mxu0 0
        %4127 = vmatpush1.bf16.msra.mxu0 0
        %4128 = vmatprep.subr.bf16.mxu0 0
        %4129 = vmatpush1.bf16.msra.mxu0 0
        %4130 = vmatprep.subr.bf16.mxu0 0
        %4131 = vmatpush1.bf16.msra.mxu0 0
        %4132 = vmatprep.subr.bf16.mxu0 0
        %4133 = vmatpush1.bf16.msra.mxu0 0
        %4134 = vmatprep.subr.bf16.mxu0 0
        %4135 = vmatpush1.bf16.msra.mxu0 0
        %4136 = vmatprep.subr.bf16.mxu0 0
        %4137 = vmatpush1.bf16.msra.mxu0 0
        %4138 = vmatprep.subr.bf16.mxu0 0
        %4139 = vmatpush1.bf16.msra.mxu0 0
        %4140 = vmatprep.subr.bf16.mxu0 0
        %4141 = vmatpush1.bf16.msra.mxu0 0
        %4142 = vmatprep.subr.bf16.mxu0 0
        %4143 = vmatpush1.bf16.msra.mxu0 0
        %4144 = vmatprep.subr.bf16.mxu0 0
        %4145 = vmatpush1.bf16.msra.mxu0 0
        %4146 = vmatprep.subr.bf16.mxu0 0
        %4147 = vmatpush1.bf16.msra.mxu0 0
        %4148 = vmatprep.mubr.bf16.mxu0 0
        %4149 = vmatmul.mubr.bf16.gmra.mrb[0].mxu0 %v4069
        %v4150 = vpop.f32.mrb[0].mxu0
        %v4151 = vadd.f32 %v419, %v4150
        %v4152 = vpop.f32.mrb[0].mxu0
        %v4153 = vpop.f32.mrb[0].mxu0
        %v4154 = vadd.f32 %v419, %v4153
        %v4155 = vpop.f32.mrb[0].mxu0
        %4156 = vmatprep.mubr.bf16.mxu0 0
        %4157 = vmatmul.mubr.bf16.gmra.mrb[0].mxu0 %v4072
        %v4158 = vpop.f32.mrb[0].mxu0
        %v4159 = vadd.f32 %v419, %v4158
        %v4160 = vpop.f32.mrb[0].mxu0
        %v4161 = vpop.f32.mrb[0].mxu0
        %v4162 = vadd.f32 %v419, %v4161
        %v4163 = vpop.f32.mrb[0].mxu0
        %4164 = vmatprep.mubr.bf16.mxu0 0
        %4165 = vmatmul.mubr.bf16.gmra.mrb[0].mxu0 %v4075
        %v4166 = vpop.f32.mrb[0].mxu0
        %v4167 = vadd.f32 %v419, %v4166
        %v4168 = vpop.f32.mrb[0].mxu0
        %v4169 = vpop.f32.mrb[0].mxu0
        %v4170 = vadd.f32 %v419, %v4169
        %v4171 = vpop.f32.mrb[0].mxu0
        %4172 = vmatprep.mubr.bf16.mxu0 0
        %4173 = vmatmul.mubr.bf16.gmra.mrb[0].mxu0 %v4078
        %v4174 = vpop.f32.mrb[0].mxu0
        %v4175 = vadd.f32 %v419, %v4174
        %v4176 = vpop.f32.mrb[0].mxu0
        %v4177 = vpop.f32.mrb[0].mxu0
        %v4178 = vadd.f32 %v419, %v4177
        %v4179 = vpop.f32.mrb[0].mxu0
        %4180 = vmatprep.mubr.bf16.mxu0 0
        %4181 = vmatmul.mubr.bf16.gmra.mrb[0].mxu0 %v4081
        %v4182 = vpop.f32.mrb[0].mxu0
        %v4183 = vadd.f32 %v419, %v4182
        %v4184 = vpop.f32.mrb[0].mxu0
        %v4185 = vpop.f32.mrb[0].mxu0
        %v4186 = vadd.f32 %v419, %v4185
        %v4187 = vpop.f32.mrb[0].mxu0
        %4188 = vmatprep.mubr.bf16.mxu0 0
        %4189 = vmatmul.mubr.bf16.gmra.mrb[0].mxu0 %v4084
        %v4190 = vpop.f32.mrb[0].mxu0
        %v4191 = vadd.f32 %v419, %v4190
        %v4192 = vpop.f32.mrb[0].mxu0
        %v4193 = vpop.f32.mrb[0].mxu0
        %v4194 = vadd.f32 %v419, %v4193
        %v4195 = vpop.f32.mrb[0].mxu0
        %4196 = vmatprep.mubr.bf16.mxu0 0
        %4197 = vmatmul.mubr.bf16.gmra.mrb[0].mxu0 %v4087
        %v4198 = vpop.f32.mrb[0].mxu0
        %v4199 = vadd.f32 %v419, %v4198
        %v4200 = vpop.f32.mrb[0].mxu0
        %v4201 = vpop.f32.mrb[0].mxu0
        %v4202 = vadd.f32 %v419, %v4201
        %v4203 = vpop.f32.mrb[0].mxu0
        %4204 = vmatprep.mubr.bf16.mxu0 0
        %4205 = vmatmul.mubr.bf16.gmra.mrb[0].mxu0 %v4090
        %v4206 = vpop.f32.mrb[0].mxu0
        %v4207 = vadd.f32 %v419, %v4206
        %v4208 = vpop.f32.mrb[0].mxu0
        %v4209 = vpop.f32.mrb[0].mxu0
        %v4210 = vadd.f32 %v419, %v4209
        %v4211 = vpop.f32.mrb[0].mxu0
        %4212 = vmatprep.mubr.bf16.mxu0 0
        %4213 = vmatmul.mubr.bf16.gmra.mrb[0].mxu0 %v4093
        %v4214 = vpop.f32.mrb[0].mxu0
        %v4215 = vadd.f32 %v419, %v4214
        %v4216 = vpop.f32.mrb[0].mxu0
        %v4217 = vpop.f32.mrb[0].mxu0
        %v4218 = vadd.f32 %v419, %v4217
        %v4219 = vpop.f32.mrb[0].mxu0
        %4220 = vmatprep.mubr.bf16.mxu0 0
        %4221 = vmatmul.mubr.bf16.gmra.mrb[0].mxu0 %v4096
        %v4222 = vpop.f32.mrb[0].mxu0
        %v4223 = vadd.f32 %v419, %v4222
        %v4224 = vpop.f32.mrb[0].mxu0
        %v4225 = vpop.f32.mrb[0].mxu0
        %v4226 = vadd.f32 %v419, %v4225
        %v4227 = vpop.f32.mrb[0].mxu0
        %4228 = vmatprep.mubr.bf16.mxu0 0
        %4229 = vmatmul.mubr.bf16.gmra.mrb[0].mxu0 %v4099
        %v4230 = vpop.f32.mrb[0].mxu0
        %v4231 = vadd.f32 %v419, %v4230
        %v4232 = vpop.f32.mrb[0].mxu0
        %v4233 = vpop.f32.mrb[0].mxu0
        %v4234 = vadd.f32 %v419, %v4233
        %v4235 = vpop.f32.mrb[0].mxu0
        %4236 = vmatprep.mubr.bf16.mxu0 0
        %4237 = vmatmul.mubr.bf16.gmra.mrb[0].mxu0 %v4102
        %v4238 = vpop.f32.mrb[0].mxu0
        %v4239 = vadd.f32 %v419, %v4238
        %v4240 = vpop.f32.mrb[0].mxu0
        %v4241 = vpop.f32.mrb[0].mxu0
        %v4242 = vadd.f32 %v419, %v4241
        %v4243 = vpop.f32.mrb[0].mxu0
        %4244 = vmatprep.mubr.bf16.mxu0 0
        %4245 = vmatmul.mubr.bf16.gmra.mrb[0].mxu0 %v4105
        %v4246 = vpop.f32.mrb[0].mxu0
        %v4247 = vadd.f32 %v419, %v4246
        %v4248 = vpop.f32.mrb[0].mxu0
        %v4249 = vpop.f32.mrb[0].mxu0
        %v4250 = vadd.f32 %v419, %v4249
        %v4251 = vpop.f32.mrb[0].mxu0
        %4252 = vmatprep.mubr.bf16.mxu0 0
        %4253 = vmatmul.mubr.bf16.gmra.mrb[0].mxu0 %v4108
        %v4254 = vpop.f32.mrb[0].mxu0
        %v4255 = vadd.f32 %v419, %v4254
        %v4256 = vpop.f32.mrb[0].mxu0
        %v4257 = vpop.f32.mrb[0].mxu0
        %v4258 = vadd.f32 %v419, %v4257
        %v4259 = vpop.f32.mrb[0].mxu0
        %4260 = vmatprep.mubr.bf16.mxu0 0
        %4261 = vmatmul.mubr.bf16.gmra.mrb[0].mxu0 %v4111
        %v4262 = vpop.f32.mrb[0].mxu0
        %v4263 = vadd.f32 %v419, %v4262
        %v4264 = vpop.f32.mrb[0].mxu0
        %v4265 = vpop.f32.mrb[0].mxu0
        %v4266 = vadd.f32 %v419, %v4265
        %v4267 = vpop.f32.mrb[0].mxu0
        %4268 = vmatprep.mubr.bf16.mxu0 0
        %4269 = vmatmul.mubr.bf16.gmra.mrb[0].mxu0 %v4114
        %v4270 = vpop.f32.mrb[0].mxu0
        %v4271 = vadd.f32 %v419, %v4270
        %v4272 = vpop.f32.mrb[0].mxu0
        %v4273 = vpop.f32.mrb[0].mxu0
        %v4274 = vadd.f32 %v419, %v4273
        %v4275 = vpop.f32.mrb[0].mxu0
        %4276 = vdwg.mxu0
        %v4277 = vmax.f32 %v4151, 0.0
        %v4278 = vmax.f32 %v4154, 0.0
        %v4279 = vmax.f32 %v4159, 0.0
        %v4280 = vmax.f32 %v4162, 0.0
        %v4281 = vmax.f32 %v4167, 0.0
        %v4282 = vmax.f32 %v4170, 0.0
        %v4283 = vmax.f32 %v4175, 0.0
        %v4284 = vmax.f32 %v4178, 0.0
        %v4285 = vmax.f32 %v4183, 0.0
        %v4286 = vmax.f32 %v4186, 0.0
        %v4287 = vmax.f32 %v4191, 0.0
        %v4288 = vmax.f32 %v4194, 0.0
        %v4289 = vmax.f32 %v4199, 0.0
        %v4290 = vmax.f32 %v4202, 0.0
        %v4291 = vmax.f32 %v4207, 0.0
        %v4292 = vmax.f32 %v4210, 0.0
        %v4293 = vmax.f32 %v4215, 0.0
        %v4294 = vmax.f32 %v4218, 0.0
        %v4295 = vmax.f32 %v4223, 0.0
        %v4296 = vmax.f32 %v4226, 0.0
        %v4297 = vmax.f32 %v4231, 0.0
        %v4298 = vmax.f32 %v4234, 0.0
        %v4299 = vmax.f32 %v4239, 0.0
        %v4300 = vmax.f32 %v4242, 0.0
        %v4301 = vmax.f32 %v4247, 0.0
        %v4302 = vmax.f32 %v4250, 0.0
        %v4303 = vmax.f32 %v4255, 0.0
        %v4304 = vmax.f32 %v4258, 0.0
        %v4305 = vmax.f32 %v4263, 0.0
        %v4306 = vmax.f32 %v4266, 0.0
        %v4307 = vmax.f32 %v4271, 0.0
        %v4308 = vmax.f32 %v4274, 0.0
        %v4309 = vpack.c.bf16 %v4278, %v4277
        %v4310 = vpack.c.bf16 %v4280, %v4279
        %v4311 = vpack.c.bf16 %v4282, %v4281
        %v4312 = vpack.c.bf16 %v4284, %v4283
        %v4313 = vpack.c.bf16 %v4286, %v4285
        %v4314 = vpack.c.bf16 %v4288, %v4287
        %v4315 = vpack.c.bf16 %v4290, %v4289
        %v4316 = vpack.c.bf16 %v4292, %v4291
        %v4317 = vpack.c.bf16 %v4294, %v4293
        %v4318 = vpack.c.bf16 %v4296, %v4295
        %v4319 = vpack.c.bf16 %v4298, %v4297
        %v4320 = vpack.c.bf16 %v4300, %v4299
        %v4321 = vpack.c.bf16 %v4302, %v4301
        %v4322 = vpack.c.bf16 %v4304, %v4303
        %v4323 = vpack.c.bf16 %v4306, %v4305
        %v4324 = vpack.c.bf16 %v4308, %v4307
        %v4326 = vsel %vm752, %v4309, 0
        %v4329 = vsel %vm752, %v4310, 0
        %v4332 = vsel %vm752, %v4311, 0
        %v4335 = vsel %vm752, %v4312, 0
        %v4338 = vsel %vm752, %v4313, 0
        %v4341 = vsel %vm752, %v4314, 0
        %v4344 = vsel %vm752, %v4315, 0
        %v4347 = vsel %vm752, %v4316, 0
        %v4350 = vsel %vm752, %v4317, 0
        %v4353 = vsel %vm752, %v4318, 0
        %v4356 = vsel %vm752, %v4319, 0
        %v4359 = vsel %vm752, %v4320, 0
        %v4362 = vsel %vm752, %v4321, 0
        %v4365 = vsel %vm752, %v4322, 0
        %v4368 = vsel %vm752, %v4323, 0
        %v4371 = vsel %vm752, %v4324, 0
        %4373 = vmatprep.subr.bf16.mxu0 0
        %4374 = vmatpush1.bf16.msra.mxu0 %v744
        %4375 = vmatprep.subr.bf16.mxu0 0
        %4376 = vmatpush1.bf16.msra.mxu0 %v745
        %4377 = vmatprep.subr.bf16.mxu0 0
        %4378 = vmatpush1.bf16.msra.mxu0 %v746
        %4379 = vmatprep.subr.bf16.mxu0 0
        %4380 = vmatpush1.bf16.msra.mxu0 %v747
        %4381 = vmatprep.subr.bf16.mxu0 0
        %4382 = vmatpush1.bf16.msra.mxu0 0
        %4383 = vmatprep.subr.bf16.mxu0 0
        %4384 = vmatpush1.bf16.msra.mxu0 0
        %4385 = vmatprep.subr.bf16.mxu0 0
        %4386 = vmatpush1.bf16.msra.mxu0 0
        %4387 = vmatprep.subr.bf16.mxu0 0
        %4388 = vmatpush1.bf16.msra.mxu0 0
        %4389 = vmatprep.subr.bf16.mxu0 0
        %4390 = vmatpush1.bf16.msra.mxu0 0
        %4391 = vmatprep.subr.bf16.mxu0 0
        %4392 = vmatpush1.bf16.msra.mxu0 0
        %4393 = vmatprep.subr.bf16.mxu0 0
        %4394 = vmatpush1.bf16.msra.mxu0 0
        %4395 = vmatprep.subr.bf16.mxu0 0
        %4396 = vmatpush1.bf16.msra.mxu0 0
        %4397 = vmatprep.subr.bf16.mxu0 0
        %4398 = vmatpush1.bf16.msra.mxu0 0
        %4399 = vmatprep.subr.bf16.mxu0 0
        %4400 = vmatpush1.bf16.msra.mxu0 0
        %4401 = vmatprep.subr.bf16.mxu0 0
        %4402 = vmatpush1.bf16.msra.mxu0 0
        %4403 = vmatprep.subr.bf16.mxu0 0
        %4404 = vmatpush1.bf16.msra.mxu0 0
        %4405 = vmatprep.mubr.bf16.mxu0 0
        %4406 = vmatmul.mubr.bf16.gmra.mrb[0].mxu0 %v4326
        %v4407 = vpop.f32.mrb[0].mxu0
        %v4408 = vadd.f32 %v726, %v4407
        %v4409 = vpop.f32.mrb[0].mxu0
        %v4410 = vpop.f32.mrb[0].mxu0
        %v4411 = vadd.f32 %v726, %v4410
        %v4412 = vpop.f32.mrb[0].mxu0
        %4413 = vmatprep.mubr.bf16.mxu0 0
        %4414 = vmatmul.mubr.bf16.gmra.mrb[0].mxu0 %v4329
        %v4415 = vpop.f32.mrb[0].mxu0
        %v4416 = vadd.f32 %v726, %v4415
        %v4417 = vpop.f32.mrb[0].mxu0
        %v4418 = vpop.f32.mrb[0].mxu0
        %v4419 = vadd.f32 %v726, %v4418
        %v4420 = vpop.f32.mrb[0].mxu0
        %4421 = vmatprep.mubr.bf16.mxu0 0
        %4422 = vmatmul.mubr.bf16.gmra.mrb[0].mxu0 %v4332
        %v4423 = vpop.f32.mrb[0].mxu0
        %v4424 = vadd.f32 %v726, %v4423
        %v4425 = vpop.f32.mrb[0].mxu0
        %v4426 = vpop.f32.mrb[0].mxu0
        %v4427 = vadd.f32 %v726, %v4426
        %v4428 = vpop.f32.mrb[0].mxu0
        %4429 = vmatprep.mubr.bf16.mxu0 0
        %4430 = vmatmul.mubr.bf16.gmra.mrb[0].mxu0 %v4335
        %v4431 = vpop.f32.mrb[0].mxu0
        %v4432 = vadd.f32 %v726, %v4431
        %v4433 = vpop.f32.mrb[0].mxu0
        %v4434 = vpop.f32.mrb[0].mxu0
        %v4435 = vadd.f32 %v726, %v4434
        %v4436 = vpop.f32.mrb[0].mxu0
        %4437 = vmatprep.mubr.bf16.mxu0 0
        %4438 = vmatmul.mubr.bf16.gmra.mrb[0].mxu0 %v4338
        %v4439 = vpop.f32.mrb[0].mxu0
        %v4440 = vadd.f32 %v726, %v4439
        %v4441 = vpop.f32.mrb[0].mxu0
        %v4442 = vpop.f32.mrb[0].mxu0
        %v4443 = vadd.f32 %v726, %v4442
        %v4444 = vpop.f32.mrb[0].mxu0
        %4445 = vmatprep.mubr.bf16.mxu0 0
        %4446 = vmatmul.mubr.bf16.gmra.mrb[0].mxu0 %v4341
        %v4447 = vpop.f32.mrb[0].mxu0
        %v4448 = vadd.f32 %v726, %v4447
        %v4449 = vpop.f32.mrb[0].mxu0
        %v4450 = vpop.f32.mrb[0].mxu0
        %v4451 = vadd.f32 %v726, %v4450
        %v4452 = vpop.f32.mrb[0].mxu0
        %4453 = vmatprep.mubr.bf16.mxu0 0
        %4454 = vmatmul.mubr.bf16.gmra.mrb[0].mxu0 %v4344
        %v4455 = vpop.f32.mrb[0].mxu0
        %v4456 = vadd.f32 %v726, %v4455
        %v4457 = vpop.f32.mrb[0].mxu0
        %v4458 = vpop.f32.mrb[0].mxu0
        %v4459 = vadd.f32 %v726, %v4458
        %v4460 = vpop.f32.mrb[0].mxu0
        %4461 = vmatprep.mubr.bf16.mxu0 0
        %4462 = vmatmul.mubr.bf16.gmra.mrb[0].mxu0 %v4347
        %v4463 = vpop.f32.mrb[0].mxu0
        %v4464 = vadd.f32 %v726, %v4463
        %v4465 = vpop.f32.mrb[0].mxu0
        %v4466 = vpop.f32.mrb[0].mxu0
        %v4467 = vadd.f32 %v726, %v4466
        %v4468 = vpop.f32.mrb[0].mxu0
        %4469 = vmatprep.mubr.bf16.mxu0 0
        %4470 = vmatmul.mubr.bf16.gmra.mrb[0].mxu0 %v4350
        %v4471 = vpop.f32.mrb[0].mxu0
        %v4472 = vadd.f32 %v726, %v4471
        %v4473 = vpop.f32.mrb[0].mxu0
        %v4474 = vpop.f32.mrb[0].mxu0
        %v4475 = vadd.f32 %v726, %v4474
        %v4476 = vpop.f32.mrb[0].mxu0
        %4477 = vmatprep.mubr.bf16.mxu0 0
        %4478 = vmatmul.mubr.bf16.gmra.mrb[0].mxu0 %v4353
        %v4479 = vpop.f32.mrb[0].mxu0
        %v4480 = vadd.f32 %v726, %v4479
        %v4481 = vpop.f32.mrb[0].mxu0
        %v4482 = vpop.f32.mrb[0].mxu0
        %v4483 = vadd.f32 %v726, %v4482
        %v4484 = vpop.f32.mrb[0].mxu0
        %4485 = vmatprep.mubr.bf16.mxu0 0
        %4486 = vmatmul.mubr.bf16.gmra.mrb[0].mxu0 %v4356
        %v4487 = vpop.f32.mrb[0].mxu0
        %v4488 = vadd.f32 %v726, %v4487
        %v4489 = vpop.f32.mrb[0].mxu0
        %v4490 = vpop.f32.mrb[0].mxu0
        %v4491 = vadd.f32 %v726, %v4490
        %v4492 = vpop.f32.mrb[0].mxu0
        %4493 = vmatprep.mubr.bf16.mxu0 0
        %4494 = vmatmul.mubr.bf16.gmra.mrb[0].mxu0 %v4359
        %v4495 = vpop.f32.mrb[0].mxu0
        %v4496 = vadd.f32 %v726, %v4495
        %v4497 = vpop.f32.mrb[0].mxu0
        %v4498 = vpop.f32.mrb[0].mxu0
        %v4499 = vadd.f32 %v726, %v4498
        %v4500 = vpop.f32.mrb[0].mxu0
        %4501 = vmatprep.mubr.bf16.mxu0 0
        %4502 = vmatmul.mubr.bf16.gmra.mrb[0].mxu0 %v4362
        %v4503 = vpop.f32.mrb[0].mxu0
        %v4504 = vadd.f32 %v726, %v4503
        %v4505 = vpop.f32.mrb[0].mxu0
        %v4506 = vpop.f32.mrb[0].mxu0
        %v4507 = vadd.f32 %v726, %v4506
        %v4508 = vpop.f32.mrb[0].mxu0
        %4509 = vmatprep.mubr.bf16.mxu0 0
        %4510 = vmatmul.mubr.bf16.gmra.mrb[0].mxu0 %v4365
        %v4511 = vpop.f32.mrb[0].mxu0
        %v4512 = vadd.f32 %v726, %v4511
        %v4513 = vpop.f32.mrb[0].mxu0
        %v4514 = vpop.f32.mrb[0].mxu0
        %v4515 = vadd.f32 %v726, %v4514
        %v4516 = vpop.f32.mrb[0].mxu0
        %4517 = vmatprep.mubr.bf16.mxu0 0
        %4518 = vmatmul.mubr.bf16.gmra.mrb[0].mxu0 %v4368
        %v4519 = vpop.f32.mrb[0].mxu0
        %v4520 = vadd.f32 %v726, %v4519
        %v4521 = vpop.f32.mrb[0].mxu0
        %v4522 = vpop.f32.mrb[0].mxu0
        %v4523 = vadd.f32 %v726, %v4522
        %v4524 = vpop.f32.mrb[0].mxu0
        %4525 = vmatprep.mubr.bf16.mxu0 0
        %4526 = vmatmul.mubr.bf16.gmra.mrb[0].mxu0 %v4371
        %v4527 = vpop.f32.mrb[0].mxu0
        %v4528 = vadd.f32 %v726, %v4527
        %v4529 = vpop.f32.mrb[0].mxu0
        %v4530 = vpop.f32.mrb[0].mxu0
        %v4531 = vadd.f32 %v726, %v4530
        %v4532 = vpop.f32.mrb[0].mxu0
        %4533 = vdwg.mxu0
        %v4534 = vmax.f32 %v4408, 0.0
        %v4535 = vmax.f32 %v4411, 0.0
        %v4536 = vmax.f32 %v4416, 0.0
        %v4537 = vmax.f32 %v4419, 0.0
        %v4538 = vmax.f32 %v4424, 0.0
        %v4539 = vmax.f32 %v4427, 0.0
        %v4540 = vmax.f32 %v4432, 0.0
        %v4541 = vmax.f32 %v4435, 0.0
        %v4542 = vmax.f32 %v4440, 0.0
        %v4543 = vmax.f32 %v4443, 0.0
        %v4544 = vmax.f32 %v4448, 0.0
        %v4545 = vmax.f32 %v4451, 0.0
        %v4546 = vmax.f32 %v4456, 0.0
        %v4547 = vmax.f32 %v4459, 0.0
        %v4548 = vmax.f32 %v4464, 0.0
        %v4549 = vmax.f32 %v4467, 0.0
        %v4550 = vmax.f32 %v4472, 0.0
        %v4551 = vmax.f32 %v4475, 0.0
        %v4552 = vmax.f32 %v4480, 0.0
        %v4553 = vmax.f32 %v4483, 0.0
        %v4554 = vmax.f32 %v4488, 0.0
        %v4555 = vmax.f32 %v4491, 0.0
        %v4556 = vmax.f32 %v4496, 0.0
        %v4557 = vmax.f32 %v4499, 0.0
        %v4558 = vmax.f32 %v4504, 0.0
        %v4559 = vmax.f32 %v4507, 0.0
        %v4560 = vmax.f32 %v4512, 0.0
        %v4561 = vmax.f32 %v4515, 0.0
        %v4562 = vmax.f32 %v4520, 0.0
        %v4563 = vmax.f32 %v4523, 0.0
        %v4564 = vmax.f32 %v4528, 0.0
        %v4565 = vmax.f32 %v4531, 0.0
        %v4566 = vpack.c.bf16 %v4535, %v4534
        %v4567 = vpack.c.bf16 %v4537, %v4536
        %v4568 = vpack.c.bf16 %v4539, %v4538
        %v4569 = vpack.c.bf16 %v4541, %v4540
        %v4570 = vpack.c.bf16 %v4543, %v4542
        %v4571 = vpack.c.bf16 %v4545, %v4544
        %v4572 = vpack.c.bf16 %v4547, %v4546
        %v4573 = vpack.c.bf16 %v4549, %v4548
        %v4574 = vpack.c.bf16 %v4551, %v4550
        %v4575 = vpack.c.bf16 %v4553, %v4552
        %v4576 = vpack.c.bf16 %v4555, %v4554
        %v4577 = vpack.c.bf16 %v4557, %v4556
        %v4578 = vpack.c.bf16 %v4559, %v4558
        %v4579 = vpack.c.bf16 %v4561, %v4560
        %v4580 = vpack.c.bf16 %v4563, %v4562
        %v4581 = vpack.c.bf16 %v4565, %v4564
        %4582 = vmatprep.subr.bf16.mxu0 %v1203
        %4583 = vmatpush1.bf16.msra.mxu0 %v1202
        %4584 = vmatprep.subr.bf16.mxu0 %v1211
        %4585 = vmatpush1.bf16.msra.mxu0 %v1210
        %4586 = vmatprep.subr.bf16.mxu0 %v1219
        %4587 = vmatpush1.bf16.msra.mxu0 %v1218
        %4588 = vmatprep.subr.bf16.mxu0 %v1227
        %4589 = vmatpush1.bf16.msra.mxu0 %v1226
        %4590 = vmatprep.subr.bf16.mxu0 %v1235
        %4591 = vmatpush1.bf16.msra.mxu0 %v1234
        %4592 = vmatprep.subr.bf16.mxu0 %v1243
        %4593 = vmatpush1.bf16.msra.mxu0 %v1242
        %4594 = vmatprep.subr.bf16.mxu0 %v1251
        %4595 = vmatpush1.bf16.msra.mxu0 %v1250
        %4596 = vmatprep.subr.bf16.mxu0 %v1259
        %4597 = vmatpush1.bf16.msra.mxu0 %v1258
        %4598 = vmatprep.subr.bf16.mxu0 0
        %4599 = vmatpush1.bf16.msra.mxu0 0
        %4600 = vmatprep.subr.bf16.mxu0 0
        %4601 = vmatpush1.bf16.msra.mxu0 0
        %4602 = vmatprep.subr.bf16.mxu0 0
        %4603 = vmatpush1.bf16.msra.mxu0 0
        %4604 = vmatprep.subr.bf16.mxu0 0
        %4605 = vmatpush1.bf16.msra.mxu0 0
        %4606 = vmatprep.subr.bf16.mxu0 0
        %4607 = vmatpush1.bf16.msra.mxu0 0
        %4608 = vmatprep.subr.bf16.mxu0 0
        %4609 = vmatpush1.bf16.msra.mxu0 0
        %4610 = vmatprep.subr.bf16.mxu0 0
        %4611 = vmatpush1.bf16.msra.mxu0 0
        %4612 = vmatprep.subr.bf16.mxu0 0
        %4613 = vmatpush1.bf16.msra.mxu0 0
        %4614 = vmatprep.mubr.bf16.mxu0 0
        %4615 = vmatmul.mubr.bf16.gmra.mrb[0].mxu0 %v4566
        %v4616 = vpop.f32.mrb[0].mxu0
        %v4617 = vadd.f32 0.0, %v4616
        %v4618 = vpop.f32.mrb[0].mxu0
        %v4619 = vadd.f32 0.0, %v4618
        %v4620 = vpop.f32.mrb[0].mxu0
        %v4621 = vadd.f32 0.0, %v4620
        %v4622 = vpop.f32.mrb[0].mxu0
        %v4623 = vadd.f32 0.0, %v4622
        %4624 = vmatprep.mubr.bf16.mxu0 0
        %4625 = vmatmul.mubr.bf16.gmra.mrb[0].mxu0 %v4567
        %v4626 = vpop.f32.mrb[0].mxu0
        %v4627 = vadd.f32 0.0, %v4626
        %v4628 = vpop.f32.mrb[0].mxu0
        %v4629 = vadd.f32 0.0, %v4628
        %v4630 = vpop.f32.mrb[0].mxu0
        %v4631 = vadd.f32 0.0, %v4630
        %v4632 = vpop.f32.mrb[0].mxu0
        %v4633 = vadd.f32 0.0, %v4632
        %4634 = vmatprep.mubr.bf16.mxu0 0
        %4635 = vmatmul.mubr.bf16.gmra.mrb[0].mxu0 %v4568
        %v4636 = vpop.f32.mrb[0].mxu0
        %v4637 = vadd.f32 0.0, %v4636
        %v4638 = vpop.f32.mrb[0].mxu0
        %v4639 = vadd.f32 0.0, %v4638
        %v4640 = vpop.f32.mrb[0].mxu0
        %v4641 = vadd.f32 0.0, %v4640
        %v4642 = vpop.f32.mrb[0].mxu0
        %v4643 = vadd.f32 0.0, %v4642
        %4644 = vmatprep.mubr.bf16.mxu0 0
        %4645 = vmatmul.mubr.bf16.gmra.mrb[0].mxu0 %v4569
        %v4646 = vpop.f32.mrb[0].mxu0
        %v4647 = vadd.f32 0.0, %v4646
        %v4648 = vpop.f32.mrb[0].mxu0
        %v4649 = vadd.f32 0.0, %v4648
        %v4650 = vpop.f32.mrb[0].mxu0
        %v4651 = vadd.f32 0.0, %v4650
        %v4652 = vpop.f32.mrb[0].mxu0
        %v4653 = vadd.f32 0.0, %v4652
        %4654 = vmatprep.mubr.bf16.mxu0 0
        %4655 = vmatmul.mubr.bf16.gmra.mrb[0].mxu0 %v4570
        %v4656 = vpop.f32.mrb[0].mxu0
        %v4657 = vadd.f32 0.0, %v4656
        %v4658 = vpop.f32.mrb[0].mxu0
        %v4659 = vadd.f32 0.0, %v4658
        %v4660 = vpop.f32.mrb[0].mxu0
        %v4661 = vadd.f32 0.0, %v4660
        %v4662 = vpop.f32.mrb[0].mxu0
        %v4663 = vadd.f32 0.0, %v4662
        %4664 = vmatprep.mubr.bf16.mxu0 0
        %4665 = vmatmul.mubr.bf16.gmra.mrb[0].mxu0 %v4571
        %v4666 = vpop.f32.mrb[0].mxu0
        %v4667 = vadd.f32 0.0, %v4666
        %v4668 = vpop.f32.mrb[0].mxu0
        %v4669 = vadd.f32 0.0, %v4668
        %v4670 = vpop.f32.mrb[0].mxu0
        %v4671 = vadd.f32 0.0, %v4670
        %v4672 = vpop.f32.mrb[0].mxu0
        %v4673 = vadd.f32 0.0, %v4672
        %4674 = vmatprep.mubr.bf16.mxu0 0
        %4675 = vmatmul.mubr.bf16.gmra.mrb[0].mxu0 %v4572
        %v4676 = vpop.f32.mrb[0].mxu0
        %v4677 = vadd.f32 0.0, %v4676
        %v4678 = vpop.f32.mrb[0].mxu0
        %v4679 = vadd.f32 0.0, %v4678
        %v4680 = vpop.f32.mrb[0].mxu0
        %v4681 = vadd.f32 0.0, %v4680
        %v4682 = vpop.f32.mrb[0].mxu0
        %v4683 = vadd.f32 0.0, %v4682
        %4684 = vmatprep.mubr.bf16.mxu0 0
        %4685 = vmatmul.mubr.bf16.gmra.mrb[0].mxu0 %v4573
        %v4686 = vpop.f32.mrb[0].mxu0
        %v4687 = vadd.f32 0.0, %v4686
        %v4688 = vpop.f32.mrb[0].mxu0
        %v4689 = vadd.f32 0.0, %v4688
        %v4690 = vpop.f32.mrb[0].mxu0
        %v4691 = vadd.f32 0.0, %v4690
        %v4692 = vpop.f32.mrb[0].mxu0
        %v4693 = vadd.f32 0.0, %v4692
        %4694 = vmatprep.mubr.bf16.mxu0 0
        %4695 = vmatmul.mubr.bf16.gmra.mrb[0].mxu0 %v4574
        %v4696 = vpop.f32.mrb[0].mxu0
        %v4697 = vadd.f32 0.0, %v4696
        %v4698 = vpop.f32.mrb[0].mxu0
        %v4699 = vadd.f32 0.0, %v4698
        %v4700 = vpop.f32.mrb[0].mxu0
        %v4701 = vadd.f32 0.0, %v4700
        %v4702 = vpop.f32.mrb[0].mxu0
        %v4703 = vadd.f32 0.0, %v4702
        %4704 = vmatprep.mubr.bf16.mxu0 0
        %4705 = vmatmul.mubr.bf16.gmra.mrb[0].mxu0 %v4575
        %v4706 = vpop.f32.mrb[0].mxu0
        %v4707 = vadd.f32 0.0, %v4706
        %v4708 = vpop.f32.mrb[0].mxu0
        %v4709 = vadd.f32 0.0, %v4708
        %v4710 = vpop.f32.mrb[0].mxu0
        %v4711 = vadd.f32 0.0, %v4710
        %v4712 = vpop.f32.mrb[0].mxu0
        %v4713 = vadd.f32 0.0, %v4712
        %4714 = vmatprep.mubr.bf16.mxu0 0
        %4715 = vmatmul.mubr.bf16.gmra.mrb[0].mxu0 %v4576
        %v4716 = vpop.f32.mrb[0].mxu0
        %v4717 = vadd.f32 0.0, %v4716
        %v4718 = vpop.f32.mrb[0].mxu0
        %v4719 = vadd.f32 0.0, %v4718
        %v4720 = vpop.f32.mrb[0].mxu0
        %v4721 = vadd.f32 0.0, %v4720
        %v4722 = vpop.f32.mrb[0].mxu0
        %v4723 = vadd.f32 0.0, %v4722
        %4724 = vmatprep.mubr.bf16.mxu0 0
        %4725 = vmatmul.mubr.bf16.gmra.mrb[0].mxu0 %v4577
        %v4726 = vpop.f32.mrb[0].mxu0
        %v4727 = vadd.f32 0.0, %v4726
        %v4728 = vpop.f32.mrb[0].mxu0
        %v4729 = vadd.f32 0.0, %v4728
        %v4730 = vpop.f32.mrb[0].mxu0
        %v4731 = vadd.f32 0.0, %v4730
        %v4732 = vpop.f32.mrb[0].mxu0
        %v4733 = vadd.f32 0.0, %v4732
        %4734 = vmatprep.mubr.bf16.mxu0 0
        %4735 = vmatmul.mubr.bf16.gmra.mrb[0].mxu0 %v4578
        %v4736 = vpop.f32.mrb[0].mxu0
        %v4737 = vadd.f32 0.0, %v4736
        %v4738 = vpop.f32.mrb[0].mxu0
        %v4739 = vadd.f32 0.0, %v4738
        %v4740 = vpop.f32.mrb[0].mxu0
        %v4741 = vadd.f32 0.0, %v4740
        %v4742 = vpop.f32.mrb[0].mxu0
        %v4743 = vadd.f32 0.0, %v4742
        %4744 = vmatprep.mubr.bf16.mxu0 0
        %4745 = vmatmul.mubr.bf16.gmra.mrb[0].mxu0 %v4579
        %v4746 = vpop.f32.mrb[0].mxu0
        %v4747 = vadd.f32 0.0, %v4746
        %v4748 = vpop.f32.mrb[0].mxu0
        %v4749 = vadd.f32 0.0, %v4748
        %v4750 = vpop.f32.mrb[0].mxu0
        %v4751 = vadd.f32 0.0, %v4750
        %v4752 = vpop.f32.mrb[0].mxu0
        %v4753 = vadd.f32 0.0, %v4752
        %4754 = vmatprep.mubr.bf16.mxu0 0
        %4755 = vmatmul.mubr.bf16.gmra.mrb[0].mxu0 %v4580
        %v4756 = vpop.f32.mrb[0].mxu0
        %v4757 = vadd.f32 0.0, %v4756
        %v4758 = vpop.f32.mrb[0].mxu0
        %v4759 = vadd.f32 0.0, %v4758
        %v4760 = vpop.f32.mrb[0].mxu0
        %v4761 = vadd.f32 0.0, %v4760
        %v4762 = vpop.f32.mrb[0].mxu0
        %v4763 = vadd.f32 0.0, %v4762
        %4764 = vmatprep.mubr.bf16.mxu0 0
        %4765 = vmatmul.mubr.bf16.gmra.mrb[0].mxu0 %v4581
        %v4766 = vpop.f32.mrb[0].mxu0
        %v4767 = vadd.f32 0.0, %v4766
        %v4768 = vpop.f32.mrb[0].mxu0
        %v4769 = vadd.f32 0.0, %v4768
        %v4770 = vpop.f32.mrb[0].mxu0
        %v4771 = vadd.f32 0.0, %v4770
        %v4772 = vpop.f32.mrb[0].mxu0
        %v4773 = vadd.f32 0.0, %v4772
        %4774 = vdwg.mxu0
        %4775 = vmatprep.subr.bf16.mxu0 %v1205
        %4776 = vmatpush1.bf16.msra.mxu0 %v1204
        %4777 = vmatprep.subr.bf16.mxu0 %v1213
        %4778 = vmatpush1.bf16.msra.mxu0 %v1212
        %4779 = vmatprep.subr.bf16.mxu0 %v1221
        %4780 = vmatpush1.bf16.msra.mxu0 %v1220
        %4781 = vmatprep.subr.bf16.mxu0 %v1229
        %4782 = vmatpush1.bf16.msra.mxu0 %v1228
        %4783 = vmatprep.subr.bf16.mxu0 %v1237
        %4784 = vmatpush1.bf16.msra.mxu0 %v1236
        %4785 = vmatprep.subr.bf16.mxu0 %v1245
        %4786 = vmatpush1.bf16.msra.mxu0 %v1244
        %4787 = vmatprep.subr.bf16.mxu0 %v1253
        %4788 = vmatpush1.bf16.msra.mxu0 %v1252
        %4789 = vmatprep.subr.bf16.mxu0 %v1261
        %4790 = vmatpush1.bf16.msra.mxu0 %v1260
        %4791 = vmatprep.subr.bf16.mxu0 0
        %4792 = vmatpush1.bf16.msra.mxu0 0
        %4793 = vmatprep.subr.bf16.mxu0 0
        %4794 = vmatpush1.bf16.msra.mxu0 0
        %4795 = vmatprep.subr.bf16.mxu0 0
        %4796 = vmatpush1.bf16.msra.mxu0 0
        %4797 = vmatprep.subr.bf16.mxu0 0
        %4798 = vmatpush1.bf16.msra.mxu0 0
        %4799 = vmatprep.subr.bf16.mxu0 0
        %4800 = vmatpush1.bf16.msra.mxu0 0
        %4801 = vmatprep.subr.bf16.mxu0 0
        %4802 = vmatpush1.bf16.msra.mxu0 0
        %4803 = vmatprep.subr.bf16.mxu0 0
        %4804 = vmatpush1.bf16.msra.mxu0 0
        %4805 = vmatprep.subr.bf16.mxu0 0
        %4806 = vmatpush1.bf16.msra.mxu0 0
        %4807 = vmatprep.mubr.bf16.mxu0 0
        %4808 = vmatmul.mubr.bf16.gmra.mrb[0].mxu0 %v4566
        %v4809 = vpop.f32.mrb[0].mxu0
        %v4810 = vadd.f32 0.0, %v4809
        %v4811 = vpop.f32.mrb[0].mxu0
        %v4812 = vadd.f32 0.0, %v4811
        %v4813 = vpop.f32.mrb[0].mxu0
        %v4814 = vadd.f32 0.0, %v4813
        %v4815 = vpop.f32.mrb[0].mxu0
        %v4816 = vadd.f32 0.0, %v4815
        %4817 = vmatprep.mubr.bf16.mxu0 0
        %4818 = vmatmul.mubr.bf16.gmra.mrb[0].mxu0 %v4567
        %v4819 = vpop.f32.mrb[0].mxu0
        %v4820 = vadd.f32 0.0, %v4819
        %v4821 = vpop.f32.mrb[0].mxu0
        %v4822 = vadd.f32 0.0, %v4821
        %v4823 = vpop.f32.mrb[0].mxu0
        %v4824 = vadd.f32 0.0, %v4823
        %v4825 = vpop.f32.mrb[0].mxu0
        %v4826 = vadd.f32 0.0, %v4825
        %4827 = vmatprep.mubr.bf16.mxu0 0
        %4828 = vmatmul.mubr.bf16.gmra.mrb[0].mxu0 %v4568
        %v4829 = vpop.f32.mrb[0].mxu0
        %v4830 = vadd.f32 0.0, %v4829
        %v4831 = vpop.f32.mrb[0].mxu0
        %v4832 = vadd.f32 0.0, %v4831
        %v4833 = vpop.f32.mrb[0].mxu0
        %v4834 = vadd.f32 0.0, %v4833
        %v4835 = vpop.f32.mrb[0].mxu0
        %v4836 = vadd.f32 0.0, %v4835
        %4837 = vmatprep.mubr.bf16.mxu0 0
        %4838 = vmatmul.mubr.bf16.gmra.mrb[0].mxu0 %v4569
        %v4839 = vpop.f32.mrb[0].mxu0
        %v4840 = vadd.f32 0.0, %v4839
        %v4841 = vpop.f32.mrb[0].mxu0
        %v4842 = vadd.f32 0.0, %v4841
        %v4843 = vpop.f32.mrb[0].mxu0
        %v4844 = vadd.f32 0.0, %v4843
        %v4845 = vpop.f32.mrb[0].mxu0
        %v4846 = vadd.f32 0.0, %v4845
        %4847 = vmatprep.mubr.bf16.mxu0 0
        %4848 = vmatmul.mubr.bf16.gmra.mrb[0].mxu0 %v4570
        %v4849 = vpop.f32.mrb[0].mxu0
        %v4850 = vadd.f32 0.0, %v4849
        %v4851 = vpop.f32.mrb[0].mxu0
        %v4852 = vadd.f32 0.0, %v4851
        %v4853 = vpop.f32.mrb[0].mxu0
        %v4854 = vadd.f32 0.0, %v4853
        %v4855 = vpop.f32.mrb[0].mxu0
        %v4856 = vadd.f32 0.0, %v4855
        %4857 = vmatprep.mubr.bf16.mxu0 0
        %4858 = vmatmul.mubr.bf16.gmra.mrb[0].mxu0 %v4571
        %v4859 = vpop.f32.mrb[0].mxu0
        %v4860 = vadd.f32 0.0, %v4859
        %v4861 = vpop.f32.mrb[0].mxu0
        %v4862 = vadd.f32 0.0, %v4861
        %v4863 = vpop.f32.mrb[0].mxu0
        %v4864 = vadd.f32 0.0, %v4863
        %v4865 = vpop.f32.mrb[0].mxu0
        %v4866 = vadd.f32 0.0, %v4865
        %4867 = vmatprep.mubr.bf16.mxu0 0
        %4868 = vmatmul.mubr.bf16.gmra.mrb[0].mxu0 %v4572
        %v4869 = vpop.f32.mrb[0].mxu0
        %v4870 = vadd.f32 0.0, %v4869
        %v4871 = vpop.f32.mrb[0].mxu0
        %v4872 = vadd.f32 0.0, %v4871
        %v4873 = vpop.f32.mrb[0].mxu0
        %v4874 = vadd.f32 0.0, %v4873
        %v4875 = vpop.f32.mrb[0].mxu0
        %v4876 = vadd.f32 0.0, %v4875
        %4877 = vmatprep.mubr.bf16.mxu0 0
        %4878 = vmatmul.mubr.bf16.gmra.mrb[0].mxu0 %v4573
        %v4879 = vpop.f32.mrb[0].mxu0
        %v4880 = vadd.f32 0.0, %v4879
        %v4881 = vpop.f32.mrb[0].mxu0
        %v4882 = vadd.f32 0.0, %v4881
        %v4883 = vpop.f32.mrb[0].mxu0
        %v4884 = vadd.f32 0.0, %v4883
        %v4885 = vpop.f32.mrb[0].mxu0
        %v4886 = vadd.f32 0.0, %v4885
        %4887 = vmatprep.mubr.bf16.mxu0 0
        %4888 = vmatmul.mubr.bf16.gmra.mrb[0].mxu0 %v4574
        %v4889 = vpop.f32.mrb[0].mxu0
        %v4890 = vadd.f32 0.0, %v4889
        %v4891 = vpop.f32.mrb[0].mxu0
        %v4892 = vadd.f32 0.0, %v4891
        %v4893 = vpop.f32.mrb[0].mxu0
        %v4894 = vadd.f32 0.0, %v4893
        %v4895 = vpop.f32.mrb[0].mxu0
        %v4896 = vadd.f32 0.0, %v4895
        %4897 = vmatprep.mubr.bf16.mxu0 0
        %4898 = vmatmul.mubr.bf16.gmra.mrb[0].mxu0 %v4575
        %v4899 = vpop.f32.mrb[0].mxu0
        %v4900 = vadd.f32 0.0, %v4899
        %v4901 = vpop.f32.mrb[0].mxu0
        %v4902 = vadd.f32 0.0, %v4901
        %v4903 = vpop.f32.mrb[0].mxu0
        %v4904 = vadd.f32 0.0, %v4903
        %v4905 = vpop.f32.mrb[0].mxu0
        %v4906 = vadd.f32 0.0, %v4905
        %4907 = vmatprep.mubr.bf16.mxu0 0
        %4908 = vmatmul.mubr.bf16.gmra.mrb[0].mxu0 %v4576
        %v4909 = vpop.f32.mrb[0].mxu0
        %v4910 = vadd.f32 0.0, %v4909
        %v4911 = vpop.f32.mrb[0].mxu0
        %v4912 = vadd.f32 0.0, %v4911
        %v4913 = vpop.f32.mrb[0].mxu0
        %v4914 = vadd.f32 0.0, %v4913
        %v4915 = vpop.f32.mrb[0].mxu0
        %v4916 = vadd.f32 0.0, %v4915
        %4917 = vmatprep.mubr.bf16.mxu0 0
        %4918 = vmatmul.mubr.bf16.gmra.mrb[0].mxu0 %v4577
        %v4919 = vpop.f32.mrb[0].mxu0
        %v4920 = vadd.f32 0.0, %v4919
        %v4921 = vpop.f32.mrb[0].mxu0
        %v4922 = vadd.f32 0.0, %v4921
        %v4923 = vpop.f32.mrb[0].mxu0
        %v4924 = vadd.f32 0.0, %v4923
        %v4925 = vpop.f32.mrb[0].mxu0
        %v4926 = vadd.f32 0.0, %v4925
        %4927 = vmatprep.mubr.bf16.mxu0 0
        %4928 = vmatmul.mubr.bf16.gmra.mrb[0].mxu0 %v4578
        %v4929 = vpop.f32.mrb[0].mxu0
        %v4930 = vadd.f32 0.0, %v4929
        %v4931 = vpop.f32.mrb[0].mxu0
        %v4932 = vadd.f32 0.0, %v4931
        %v4933 = vpop.f32.mrb[0].mxu0
        %v4934 = vadd.f32 0.0, %v4933
        %v4935 = vpop.f32.mrb[0].mxu0
        %v4936 = vadd.f32 0.0, %v4935
        %4937 = vmatprep.mubr.bf16.mxu0 0
        %4938 = vmatmul.mubr.bf16.gmra.mrb[0].mxu0 %v4579
        %v4939 = vpop.f32.mrb[0].mxu0
        %v4940 = vadd.f32 0.0, %v4939
        %v4941 = vpop.f32.mrb[0].mxu0
        %v4942 = vadd.f32 0.0, %v4941
        %v4943 = vpop.f32.mrb[0].mxu0
        %v4944 = vadd.f32 0.0, %v4943
        %v4945 = vpop.f32.mrb[0].mxu0
        %v4946 = vadd.f32 0.0, %v4945
        %4947 = vmatprep.mubr.bf16.mxu0 0
        %4948 = vmatmul.mubr.bf16.gmra.mrb[0].mxu0 %v4580
        %v4949 = vpop.f32.mrb[0].mxu0
        %v4950 = vadd.f32 0.0, %v4949
        %v4951 = vpop.f32.mrb[0].mxu0
        %v4952 = vadd.f32 0.0, %v4951
        %v4953 = vpop.f32.mrb[0].mxu0
        %v4954 = vadd.f32 0.0, %v4953
        %v4955 = vpop.f32.mrb[0].mxu0
        %v4956 = vadd.f32 0.0, %v4955
        %4957 = vmatprep.mubr.bf16.mxu0 0
        %4958 = vmatmul.mubr.bf16.gmra.mrb[0].mxu0 %v4581
        %v4959 = vpop.f32.mrb[0].mxu0
        %v4960 = vadd.f32 0.0, %v4959
        %v4961 = vpop.f32.mrb[0].mxu0
        %v4962 = vadd.f32 0.0, %v4961
        %v4963 = vpop.f32.mrb[0].mxu0
        %v4964 = vadd.f32 0.0, %v4963
        %v4965 = vpop.f32.mrb[0].mxu0
        %v4966 = vadd.f32 0.0, %v4965
        %4967 = vdwg.mxu0
        %4968 = vmatprep.subr.bf16.mxu0 %v1207
        %4969 = vmatpush1.bf16.msra.mxu0 %v1206
        %4970 = vmatprep.subr.bf16.mxu0 %v1215
        %4971 = vmatpush1.bf16.msra.mxu0 %v1214
        %4972 = vmatprep.subr.bf16.mxu0 %v1223
        %4973 = vmatpush1.bf16.msra.mxu0 %v1222
        %4974 = vmatprep.subr.bf16.mxu0 %v1231
        %4975 = vmatpush1.bf16.msra.mxu0 %v1230
        %4976 = vmatprep.subr.bf16.mxu0 %v1239
        %4977 = vmatpush1.bf16.msra.mxu0 %v1238
        %4978 = vmatprep.subr.bf16.mxu0 %v1247
        %4979 = vmatpush1.bf16.msra.mxu0 %v1246
        %4980 = vmatprep.subr.bf16.mxu0 %v1255
        %4981 = vmatpush1.bf16.msra.mxu0 %v1254
        %4982 = vmatprep.subr.bf16.mxu0 %v1263
        %4983 = vmatpush1.bf16.msra.mxu0 %v1262
        %4984 = vmatprep.subr.bf16.mxu0 0
        %4985 = vmatpush1.bf16.msra.mxu0 0
        %4986 = vmatprep.subr.bf16.mxu0 0
        %4987 = vmatpush1.bf16.msra.mxu0 0
        %4988 = vmatprep.subr.bf16.mxu0 0
        %4989 = vmatpush1.bf16.msra.mxu0 0
        %4990 = vmatprep.subr.bf16.mxu0 0
        %4991 = vmatpush1.bf16.msra.mxu0 0
        %4992 = vmatprep.subr.bf16.mxu0 0
        %4993 = vmatpush1.bf16.msra.mxu0 0
        %4994 = vmatprep.subr.bf16.mxu0 0
        %4995 = vmatpush1.bf16.msra.mxu0 0
        %4996 = vmatprep.subr.bf16.mxu0 0
        %4997 = vmatpush1.bf16.msra.mxu0 0
        %4998 = vmatprep.subr.bf16.mxu0 0
        %4999 = vmatpush1.bf16.msra.mxu0 0
        %5000 = vmatprep.mubr.bf16.mxu0 0
        %5001 = vmatmul.mubr.bf16.gmra.mrb[0].mxu0 %v4566
        %v5002 = vpop.f32.mrb[0].mxu0
        %v5003 = vadd.f32 0.0, %v5002
        %v5004 = vpop.f32.mrb[0].mxu0
        %v5005 = vadd.f32 0.0, %v5004
        %v5006 = vpop.f32.mrb[0].mxu0
        %v5007 = vadd.f32 0.0, %v5006
        %v5008 = vpop.f32.mrb[0].mxu0
        %v5009 = vadd.f32 0.0, %v5008
        %5010 = vmatprep.mubr.bf16.mxu0 0
        %5011 = vmatmul.mubr.bf16.gmra.mrb[0].mxu0 %v4567
        %v5012 = vpop.f32.mrb[0].mxu0
        %v5013 = vadd.f32 0.0, %v5012
        %v5014 = vpop.f32.mrb[0].mxu0
        %v5015 = vadd.f32 0.0, %v5014
        %v5016 = vpop.f32.mrb[0].mxu0
        %v5017 = vadd.f32 0.0, %v5016
        %v5018 = vpop.f32.mrb[0].mxu0
        %v5019 = vadd.f32 0.0, %v5018
        %5020 = vmatprep.mubr.bf16.mxu0 0
        %5021 = vmatmul.mubr.bf16.gmra.mrb[0].mxu0 %v4568
        %v5022 = vpop.f32.mrb[0].mxu0
        %v5023 = vadd.f32 0.0, %v5022
        %v5024 = vpop.f32.mrb[0].mxu0
        %v5025 = vadd.f32 0.0, %v5024
        %v5026 = vpop.f32.mrb[0].mxu0
        %v5027 = vadd.f32 0.0, %v5026
        %v5028 = vpop.f32.mrb[0].mxu0
        %v5029 = vadd.f32 0.0, %v5028
        %5030 = vmatprep.mubr.bf16.mxu0 0
        %5031 = vmatmul.mubr.bf16.gmra.mrb[0].mxu0 %v4569
        %v5032 = vpop.f32.mrb[0].mxu0
        %v5033 = vadd.f32 0.0, %v5032
        %v5034 = vpop.f32.mrb[0].mxu0
        %v5035 = vadd.f32 0.0, %v5034
        %v5036 = vpop.f32.mrb[0].mxu0
        %v5037 = vadd.f32 0.0, %v5036
        %v5038 = vpop.f32.mrb[0].mxu0
        %v5039 = vadd.f32 0.0, %v5038
        %5040 = vmatprep.mubr.bf16.mxu0 0
        %5041 = vmatmul.mubr.bf16.gmra.mrb[0].mxu0 %v4570
        %v5042 = vpop.f32.mrb[0].mxu0
        %v5043 = vadd.f32 0.0, %v5042
        %v5044 = vpop.f32.mrb[0].mxu0
        %v5045 = vadd.f32 0.0, %v5044
        %v5046 = vpop.f32.mrb[0].mxu0
        %v5047 = vadd.f32 0.0, %v5046
        %v5048 = vpop.f32.mrb[0].mxu0
        %v5049 = vadd.f32 0.0, %v5048
        %5050 = vmatprep.mubr.bf16.mxu0 0
        %5051 = vmatmul.mubr.bf16.gmra.mrb[0].mxu0 %v4571
        %v5052 = vpop.f32.mrb[0].mxu0
        %v5053 = vadd.f32 0.0, %v5052
        %v5054 = vpop.f32.mrb[0].mxu0
        %v5055 = vadd.f32 0.0, %v5054
        %v5056 = vpop.f32.mrb[0].mxu0
        %v5057 = vadd.f32 0.0, %v5056
        %v5058 = vpop.f32.mrb[0].mxu0
        %v5059 = vadd.f32 0.0, %v5058
        %5060 = vmatprep.mubr.bf16.mxu0 0
        %5061 = vmatmul.mubr.bf16.gmra.mrb[0].mxu0 %v4572
        %v5062 = vpop.f32.mrb[0].mxu0
        %v5063 = vadd.f32 0.0, %v5062
        %v5064 = vpop.f32.mrb[0].mxu0
        %v5065 = vadd.f32 0.0, %v5064
        %v5066 = vpop.f32.mrb[0].mxu0
        %v5067 = vadd.f32 0.0, %v5066
        %v5068 = vpop.f32.mrb[0].mxu0
        %v5069 = vadd.f32 0.0, %v5068
        %5070 = vmatprep.mubr.bf16.mxu0 0
        %5071 = vmatmul.mubr.bf16.gmra.mrb[0].mxu0 %v4573
        %v5072 = vpop.f32.mrb[0].mxu0
        %v5073 = vadd.f32 0.0, %v5072
        %v5074 = vpop.f32.mrb[0].mxu0
        %v5075 = vadd.f32 0.0, %v5074
        %v5076 = vpop.f32.mrb[0].mxu0
        %v5077 = vadd.f32 0.0, %v5076
        %v5078 = vpop.f32.mrb[0].mxu0
        %v5079 = vadd.f32 0.0, %v5078
        %5080 = vmatprep.mubr.bf16.mxu0 0
        %5081 = vmatmul.mubr.bf16.gmra.mrb[0].mxu0 %v4574
        %v5082 = vpop.f32.mrb[0].mxu0
        %v5083 = vadd.f32 0.0, %v5082
        %v5084 = vpop.f32.mrb[0].mxu0
        %v5085 = vadd.f32 0.0, %v5084
        %v5086 = vpop.f32.mrb[0].mxu0
        %v5087 = vadd.f32 0.0, %v5086
        %v5088 = vpop.f32.mrb[0].mxu0
        %v5089 = vadd.f32 0.0, %v5088
        %5090 = vmatprep.mubr.bf16.mxu0 0
        %5091 = vmatmul.mubr.bf16.gmra.mrb[0].mxu0 %v4575
        %v5092 = vpop.f32.mrb[0].mxu0
        %v5093 = vadd.f32 0.0, %v5092
        %v5094 = vpop.f32.mrb[0].mxu0
        %v5095 = vadd.f32 0.0, %v5094
        %v5096 = vpop.f32.mrb[0].mxu0
        %v5097 = vadd.f32 0.0, %v5096
        %v5098 = vpop.f32.mrb[0].mxu0
        %v5099 = vadd.f32 0.0, %v5098
        %5100 = vmatprep.mubr.bf16.mxu0 0
        %5101 = vmatmul.mubr.bf16.gmra.mrb[0].mxu0 %v4576
        %v5102 = vpop.f32.mrb[0].mxu0
        %v5103 = vadd.f32 0.0, %v5102
        %v5104 = vpop.f32.mrb[0].mxu0
        %v5105 = vadd.f32 0.0, %v5104
        %v5106 = vpop.f32.mrb[0].mxu0
        %v5107 = vadd.f32 0.0, %v5106
        %v5108 = vpop.f32.mrb[0].mxu0
        %v5109 = vadd.f32 0.0, %v5108
        %5110 = vmatprep.mubr.bf16.mxu0 0
        %5111 = vmatmul.mubr.bf16.gmra.mrb[0].mxu0 %v4577
        %v5112 = vpop.f32.mrb[0].mxu0
        %v5113 = vadd.f32 0.0, %v5112
        %v5114 = vpop.f32.mrb[0].mxu0
        %v5115 = vadd.f32 0.0, %v5114
        %v5116 = vpop.f32.mrb[0].mxu0
        %v5117 = vadd.f32 0.0, %v5116
        %v5118 = vpop.f32.mrb[0].mxu0
        %v5119 = vadd.f32 0.0, %v5118
        %5120 = vmatprep.mubr.bf16.mxu0 0
        %5121 = vmatmul.mubr.bf16.gmra.mrb[0].mxu0 %v4578
        %v5122 = vpop.f32.mrb[0].mxu0
        %v5123 = vadd.f32 0.0, %v5122
        %v5124 = vpop.f32.mrb[0].mxu0
        %v5125 = vadd.f32 0.0, %v5124
        %v5126 = vpop.f32.mrb[0].mxu0
        %v5127 = vadd.f32 0.0, %v5126
        %v5128 = vpop.f32.mrb[0].mxu0
        %v5129 = vadd.f32 0.0, %v5128
        %5130 = vmatprep.mubr.bf16.mxu0 0
        %5131 = vmatmul.mubr.bf16.gmra.mrb[0].mxu0 %v4579
        %v5132 = vpop.f32.mrb[0].mxu0
        %v5133 = vadd.f32 0.0, %v5132
        %v5134 = vpop.f32.mrb[0].mxu0
        %v5135 = vadd.f32 0.0, %v5134
        %v5136 = vpop.f32.mrb[0].mxu0
        %v5137 = vadd.f32 0.0, %v5136
        %v5138 = vpop.f32.mrb[0].mxu0
        %v5139 = vadd.f32 0.0, %v5138
        %5140 = vmatprep.mubr.bf16.mxu0 0
        %5141 = vmatmul.mubr.bf16.gmra.mrb[0].mxu0 %v4580
        %v5142 = vpop.f32.mrb[0].mxu0
        %v5143 = vadd.f32 0.0, %v5142
        %v5144 = vpop.f32.mrb[0].mxu0
        %v5145 = vadd.f32 0.0, %v5144
        %v5146 = vpop.f32.mrb[0].mxu0
        %v5147 = vadd.f32 0.0, %v5146
        %v5148 = vpop.f32.mrb[0].mxu0
        %v5149 = vadd.f32 0.0, %v5148
        %5150 = vmatprep.mubr.bf16.mxu0 0
        %5151 = vmatmul.mubr.bf16.gmra.mrb[0].mxu0 %v4581
        %v5152 = vpop.f32.mrb[0].mxu0
        %v5153 = vadd.f32 0.0, %v5152
        %v5154 = vpop.f32.mrb[0].mxu0
        %v5155 = vadd.f32 0.0, %v5154
        %v5156 = vpop.f32.mrb[0].mxu0
        %v5157 = vadd.f32 0.0, %v5156
        %v5158 = vpop.f32.mrb[0].mxu0
        %v5159 = vadd.f32 0.0, %v5158
        %5160 = vdwg.mxu0
        %5161 = vmatprep.subr.bf16.mxu0 %v1209
        %5162 = vmatpush1.bf16.msra.mxu0 %v1208
        %5163 = vmatprep.subr.bf16.mxu0 %v1217
        %5164 = vmatpush1.bf16.msra.mxu0 %v1216
        %5165 = vmatprep.subr.bf16.mxu0 %v1225
        %5166 = vmatpush1.bf16.msra.mxu0 %v1224
        %5167 = vmatprep.subr.bf16.mxu0 %v1233
        %5168 = vmatpush1.bf16.msra.mxu0 %v1232
        %5169 = vmatprep.subr.bf16.mxu0 %v1241
        %5170 = vmatpush1.bf16.msra.mxu0 %v1240
        %5171 = vmatprep.subr.bf16.mxu0 %v1249
        %5172 = vmatpush1.bf16.msra.mxu0 %v1248
        %5173 = vmatprep.subr.bf16.mxu0 %v1257
        %5174 = vmatpush1.bf16.msra.mxu0 %v1256
        %5175 = vmatprep.subr.bf16.mxu0 %v1265
        %5176 = vmatpush1.bf16.msra.mxu0 %v1264
        %5177 = vmatprep.subr.bf16.mxu0 0
        %5178 = vmatpush1.bf16.msra.mxu0 0
        %5179 = vmatprep.subr.bf16.mxu0 0
        %5180 = vmatpush1.bf16.msra.mxu0 0
        %5181 = vmatprep.subr.bf16.mxu0 0
        %5182 = vmatpush1.bf16.msra.mxu0 0
        %5183 = vmatprep.subr.bf16.mxu0 0
        %5184 = vmatpush1.bf16.msra.mxu0 0
        %5185 = vmatprep.subr.bf16.mxu0 0
        %5186 = vmatpush1.bf16.msra.mxu0 0
        %5187 = vmatprep.subr.bf16.mxu0 0
        %5188 = vmatpush1.bf16.msra.mxu0 0
        %5189 = vmatprep.subr.bf16.mxu0 0
        %5190 = vmatpush1.bf16.msra.mxu0 0
        %5191 = vmatprep.subr.bf16.mxu0 0
        %5192 = vmatpush1.bf16.msra.mxu0 0
        %5193 = vmatprep.mubr.bf16.mxu0 0
        %5194 = vmatmul.mubr.bf16.gmra.mrb[0].mxu0 %v4566
        %v5195 = vpop.f32.mrb[0].mxu0
        %v5196 = vadd.f32 0.0, %v5195
        %v5197 = vpop.f32.mrb[0].mxu0
        %v5198 = vadd.f32 0.0, %v5197
        %v5199 = vpop.f32.mrb[0].mxu0
        %v5200 = vadd.f32 0.0, %v5199
        %v5201 = vpop.f32.mrb[0].mxu0
        %v5202 = vadd.f32 0.0, %v5201
        %5203 = vmatprep.mubr.bf16.mxu0 0
        %5204 = vmatmul.mubr.bf16.gmra.mrb[0].mxu0 %v4567
        %v5205 = vpop.f32.mrb[0].mxu0
        %v5206 = vadd.f32 0.0, %v5205
        %v5207 = vpop.f32.mrb[0].mxu0
        %v5208 = vadd.f32 0.0, %v5207
        %v5209 = vpop.f32.mrb[0].mxu0
        %v5210 = vadd.f32 0.0, %v5209
        %v5211 = vpop.f32.mrb[0].mxu0
        %v5212 = vadd.f32 0.0, %v5211
        %5213 = vmatprep.mubr.bf16.mxu0 0
        %5214 = vmatmul.mubr.bf16.gmra.mrb[0].mxu0 %v4568
        %v5215 = vpop.f32.mrb[0].mxu0
        %v5216 = vadd.f32 0.0, %v5215
        %v5217 = vpop.f32.mrb[0].mxu0
        %v5218 = vadd.f32 0.0, %v5217
        %v5219 = vpop.f32.mrb[0].mxu0
        %v5220 = vadd.f32 0.0, %v5219
        %v5221 = vpop.f32.mrb[0].mxu0
        %v5222 = vadd.f32 0.0, %v5221
        %5223 = vmatprep.mubr.bf16.mxu0 0
        %5224 = vmatmul.mubr.bf16.gmra.mrb[0].mxu0 %v4569
        %v5225 = vpop.f32.mrb[0].mxu0
        %v5226 = vadd.f32 0.0, %v5225
        %v5227 = vpop.f32.mrb[0].mxu0
        %v5228 = vadd.f32 0.0, %v5227
        %v5229 = vpop.f32.mrb[0].mxu0
        %v5230 = vadd.f32 0.0, %v5229
        %v5231 = vpop.f32.mrb[0].mxu0
        %v5232 = vadd.f32 0.0, %v5231
        %5233 = vmatprep.mubr.bf16.mxu0 0
        %5234 = vmatmul.mubr.bf16.gmra.mrb[0].mxu0 %v4570
        %v5235 = vpop.f32.mrb[0].mxu0
        %v5236 = vadd.f32 0.0, %v5235
        %v5237 = vpop.f32.mrb[0].mxu0
        %v5238 = vadd.f32 0.0, %v5237
        %v5239 = vpop.f32.mrb[0].mxu0
        %v5240 = vadd.f32 0.0, %v5239
        %v5241 = vpop.f32.mrb[0].mxu0
        %v5242 = vadd.f32 0.0, %v5241
        %5243 = vmatprep.mubr.bf16.mxu0 0
        %5244 = vmatmul.mubr.bf16.gmra.mrb[0].mxu0 %v4571
        %v5245 = vpop.f32.mrb[0].mxu0
        %v5246 = vadd.f32 0.0, %v5245
        %v5247 = vpop.f32.mrb[0].mxu0
        %v5248 = vadd.f32 0.0, %v5247
        %v5249 = vpop.f32.mrb[0].mxu0
        %v5250 = vadd.f32 0.0, %v5249
        %v5251 = vpop.f32.mrb[0].mxu0
        %v5252 = vadd.f32 0.0, %v5251
        %5253 = vmatprep.mubr.bf16.mxu0 0
        %5254 = vmatmul.mubr.bf16.gmra.mrb[0].mxu0 %v4572
        %v5255 = vpop.f32.mrb[0].mxu0
        %v5256 = vadd.f32 0.0, %v5255
        %v5257 = vpop.f32.mrb[0].mxu0
        %v5258 = vadd.f32 0.0, %v5257
        %v5259 = vpop.f32.mrb[0].mxu0
        %v5260 = vadd.f32 0.0, %v5259
        %v5261 = vpop.f32.mrb[0].mxu0
        %v5262 = vadd.f32 0.0, %v5261
        %5263 = vmatprep.mubr.bf16.mxu0 0
        %5264 = vmatmul.mubr.bf16.gmra.mrb[0].mxu0 %v4573
        %v5265 = vpop.f32.mrb[0].mxu0
        %v5266 = vadd.f32 0.0, %v5265
        %v5267 = vpop.f32.mrb[0].mxu0
        %v5268 = vadd.f32 0.0, %v5267
        %v5269 = vpop.f32.mrb[0].mxu0
        %v5270 = vadd.f32 0.0, %v5269
        %v5271 = vpop.f32.mrb[0].mxu0
        %v5272 = vadd.f32 0.0, %v5271
        %5273 = vmatprep.mubr.bf16.mxu0 0
        %5274 = vmatmul.mubr.bf16.gmra.mrb[0].mxu0 %v4574
        %v5275 = vpop.f32.mrb[0].mxu0
        %v5276 = vadd.f32 0.0, %v5275
        %v5277 = vpop.f32.mrb[0].mxu0
        %v5278 = vadd.f32 0.0, %v5277
        %v5279 = vpop.f32.mrb[0].mxu0
        %v5280 = vadd.f32 0.0, %v5279
        %v5281 = vpop.f32.mrb[0].mxu0
        %v5282 = vadd.f32 0.0, %v5281
        %5283 = vmatprep.mubr.bf16.mxu0 0
        %5284 = vmatmul.mubr.bf16.gmra.mrb[0].mxu0 %v4575
        %v5285 = vpop.f32.mrb[0].mxu0
        %v5286 = vadd.f32 0.0, %v5285
        %v5287 = vpop.f32.mrb[0].mxu0
        %v5288 = vadd.f32 0.0, %v5287
        %v5289 = vpop.f32.mrb[0].mxu0
        %v5290 = vadd.f32 0.0, %v5289
        %v5291 = vpop.f32.mrb[0].mxu0
        %v5292 = vadd.f32 0.0, %v5291
        %5293 = vmatprep.mubr.bf16.mxu0 0
        %5294 = vmatmul.mubr.bf16.gmra.mrb[0].mxu0 %v4576
        %v5295 = vpop.f32.mrb[0].mxu0
        %v5296 = vadd.f32 0.0, %v5295
        %v5297 = vpop.f32.mrb[0].mxu0
        %v5298 = vadd.f32 0.0, %v5297
        %v5299 = vpop.f32.mrb[0].mxu0
        %v5300 = vadd.f32 0.0, %v5299
        %v5301 = vpop.f32.mrb[0].mxu0
        %v5302 = vadd.f32 0.0, %v5301
        %5303 = vmatprep.mubr.bf16.mxu0 0
        %5304 = vmatmul.mubr.bf16.gmra.mrb[0].mxu0 %v4577
        %v5305 = vpop.f32.mrb[0].mxu0
        %v5306 = vadd.f32 0.0, %v5305
        %v5307 = vpop.f32.mrb[0].mxu0
        %v5308 = vadd.f32 0.0, %v5307
        %v5309 = vpop.f32.mrb[0].mxu0
        %v5310 = vadd.f32 0.0, %v5309
        %v5311 = vpop.f32.mrb[0].mxu0
        %v5312 = vadd.f32 0.0, %v5311
        %5313 = vmatprep.mubr.bf16.mxu0 0
        %5314 = vmatmul.mubr.bf16.gmra.mrb[0].mxu0 %v4578
        %v5315 = vpop.f32.mrb[0].mxu0
        %v5316 = vadd.f32 0.0, %v5315
        %v5317 = vpop.f32.mrb[0].mxu0
        %v5318 = vadd.f32 0.0, %v5317
        %v5319 = vpop.f32.mrb[0].mxu0
        %v5320 = vadd.f32 0.0, %v5319
        %v5321 = vpop.f32.mrb[0].mxu0
        %v5322 = vadd.f32 0.0, %v5321
        %5323 = vmatprep.mubr.bf16.mxu0 0
        %5324 = vmatmul.mubr.bf16.gmra.mrb[0].mxu0 %v4579
        %v5325 = vpop.f32.mrb[0].mxu0
        %v5326 = vadd.f32 0.0, %v5325
        %v5327 = vpop.f32.mrb[0].mxu0
        %v5328 = vadd.f32 0.0, %v5327
        %v5329 = vpop.f32.mrb[0].mxu0
        %v5330 = vadd.f32 0.0, %v5329
        %v5331 = vpop.f32.mrb[0].mxu0
        %v5332 = vadd.f32 0.0, %v5331
        %5333 = vmatprep.mubr.bf16.mxu0 0
        %5334 = vmatmul.mubr.bf16.gmra.mrb[0].mxu0 %v4580
        %v5335 = vpop.f32.mrb[0].mxu0
        %v5336 = vadd.f32 0.0, %v5335
        %v5337 = vpop.f32.mrb[0].mxu0
        %v5338 = vadd.f32 0.0, %v5337
        %v5339 = vpop.f32.mrb[0].mxu0
        %v5340 = vadd.f32 0.0, %v5339
        %v5341 = vpop.f32.mrb[0].mxu0
        %v5342 = vadd.f32 0.0, %v5341
        %5343 = vmatprep.mubr.bf16.mxu0 0
        %5344 = vmatmul.mubr.bf16.gmra.mrb[0].mxu0 %v4581
        %v5345 = vpop.f32.mrb[0].mxu0
        %v5346 = vadd.f32 0.0, %v5345
        %v5347 = vpop.f32.mrb[0].mxu0
        %v5348 = vadd.f32 0.0, %v5347
        %v5349 = vpop.f32.mrb[0].mxu0
        %v5350 = vadd.f32 0.0, %v5349
        %v5351 = vpop.f32.mrb[0].mxu0
        %v5352 = vadd.f32 0.0, %v5351
        %5353 = vdwg.mxu0
        %v5354 = vmax.f32 %v4617, %v4621
        %v5355 = vmax.f32 %v5354, %v4627
        %v5356 = vmax.f32 %v5355, %v4631
        %v5357 = vmax.f32 %v5356, %v4637
        %v5358 = vmax.f32 %v5357, %v4641
        %v5359 = vmax.f32 %v5358, %v4647
        %v5360 = vmax.f32 %v5359, %v4651
        %v5361 = vmax.f32 %v5360, %v4657
        %v5362 = vmax.f32 %v5361, %v4661
        %v5363 = vmax.f32 %v5362, %v4667
        %v5364 = vmax.f32 %v5363, %v4671
        %v5365 = vmax.f32 %v5364, %v4677
        %v5366 = vmax.f32 %v5365, %v4681
        %v5367 = vmax.f32 %v5366, %v4687
        %v5368 = vmax.f32 %v5367, %v4691
        %v5369 = vmax.f32 %v5368, %v4697
        %v5370 = vmax.f32 %v5369, %v4701
        %v5371 = vmax.f32 %v5370, %v4707
        %v5372 = vmax.f32 %v5371, %v4711
        %v5373 = vmax.f32 %v5372, %v4717
        %v5374 = vmax.f32 %v5373, %v4721
        %v5375 = vmax.f32 %v5374, %v4727
        %v5376 = vmax.f32 %v5375, %v4731
        %v5377 = vmax.f32 %v5376, %v4737
        %v5378 = vmax.f32 %v5377, %v4741
        %v5379 = vmax.f32 %v5378, %v4747
        %v5380 = vmax.f32 %v5379, %v4751
        %v5381 = vmax.f32 %v5380, %v4757
        %v5382 = vmax.f32 %v5381, %v4761
        %v5383 = vmax.f32 %v5382, %v4767
        %v5384 = vmax.f32 %v5383, %v4771
        %v5385 = vrot.slane %v5384, 4
        %v5386 = vmax.f32 %v5384, %v5385
        %v5387 = vrot.slane %v5386, 2
        %v5388 = vmax.f32 %v5386, %v5387
        %v5389 = vrot.slane %v5388, 1
        %v5390 = vmax.f32 %v5388, %v5389
        %v5391 = vmax.f32 %v4619, %v4623
        %v5392 = vmax.f32 %v5391, %v4629
        %v5393 = vmax.f32 %v5392, %v4633
        %v5394 = vmax.f32 %v5393, %v4639
        %v5395 = vmax.f32 %v5394, %v4643
        %v5396 = vmax.f32 %v5395, %v4649
        %v5397 = vmax.f32 %v5396, %v4653
        %v5398 = vmax.f32 %v5397, %v4659
        %v5399 = vmax.f32 %v5398, %v4663
        %v5400 = vmax.f32 %v5399, %v4669
        %v5401 = vmax.f32 %v5400, %v4673
        %v5402 = vmax.f32 %v5401, %v4679
        %v5403 = vmax.f32 %v5402, %v4683
        %v5404 = vmax.f32 %v5403, %v4689
        %v5405 = vmax.f32 %v5404, %v4693
        %v5406 = vmax.f32 %v5405, %v4699
        %v5407 = vmax.f32 %v5406, %v4703
        %v5408 = vmax.f32 %v5407, %v4709
        %v5409 = vmax.f32 %v5408, %v4713
        %v5410 = vmax.f32 %v5409, %v4719
        %v5411 = vmax.f32 %v5410, %v4723
        %v5412 = vmax.f32 %v5411, %v4729
        %v5413 = vmax.f32 %v5412, %v4733
        %v5414 = vmax.f32 %v5413, %v4739
        %v5415 = vmax.f32 %v5414, %v4743
        %v5416 = vmax.f32 %v5415, %v4749
        %v5417 = vmax.f32 %v5416, %v4753
        %v5418 = vmax.f32 %v5417, %v4759
        %v5419 = vmax.f32 %v5418, %v4763
        %v5420 = vmax.f32 %v5419, %v4769
        %v5421 = vmax.f32 %v5420, %v4773
        %v5422 = vrot.slane %v5421, 4
        %v5423 = vmax.f32 %v5421, %v5422
        %v5424 = vrot.slane %v5423, 2
        %v5425 = vmax.f32 %v5423, %v5424
        %v5426 = vrot.slane %v5425, 1
        %v5427 = vmax.f32 %v5425, %v5426
        %v5428 = vmax.f32 %v4810, %v4814
        %v5429 = vmax.f32 %v5428, %v4820
        %v5430 = vmax.f32 %v5429, %v4824
        %v5431 = vmax.f32 %v5430, %v4830
        %v5432 = vmax.f32 %v5431, %v4834
        %v5433 = vmax.f32 %v5432, %v4840
        %v5434 = vmax.f32 %v5433, %v4844
        %v5435 = vmax.f32 %v5434, %v4850
        %v5436 = vmax.f32 %v5435, %v4854
        %v5437 = vmax.f32 %v5436, %v4860
        %v5438 = vmax.f32 %v5437, %v4864
        %v5439 = vmax.f32 %v5438, %v4870
        %v5440 = vmax.f32 %v5439, %v4874
        %v5441 = vmax.f32 %v5440, %v4880
        %v5442 = vmax.f32 %v5441, %v4884
        %v5443 = vmax.f32 %v5442, %v4890
        %v5444 = vmax.f32 %v5443, %v4894
        %v5445 = vmax.f32 %v5444, %v4900
        %v5446 = vmax.f32 %v5445, %v4904
        %v5447 = vmax.f32 %v5446, %v4910
        %v5448 = vmax.f32 %v5447, %v4914
        %v5449 = vmax.f32 %v5448, %v4920
        %v5450 = vmax.f32 %v5449, %v4924
        %v5451 = vmax.f32 %v5450, %v4930
        %v5452 = vmax.f32 %v5451, %v4934
        %v5453 = vmax.f32 %v5452, %v4940
        %v5454 = vmax.f32 %v5453, %v4944
        %v5455 = vmax.f32 %v5454, %v4950
        %v5456 = vmax.f32 %v5455, %v4954
        %v5457 = vmax.f32 %v5456, %v4960
        %v5458 = vmax.f32 %v5457, %v4964
        %v5459 = vrot.slane %v5458, 4
        %v5460 = vmax.f32 %v5458, %v5459
        %v5461 = vrot.slane %v5460, 2
        %v5462 = vmax.f32 %v5460, %v5461
        %v5463 = vrot.slane %v5462, 1
        %v5464 = vmax.f32 %v5462, %v5463
        %v5465 = vmax.f32 %v4812, %v4816
        %v5466 = vmax.f32 %v5465, %v4822
        %v5467 = vmax.f32 %v5466, %v4826
        %v5468 = vmax.f32 %v5467, %v4832
        %v5469 = vmax.f32 %v5468, %v4836
        %v5470 = vmax.f32 %v5469, %v4842
        %v5471 = vmax.f32 %v5470, %v4846
        %v5472 = vmax.f32 %v5471, %v4852
        %v5473 = vmax.f32 %v5472, %v4856
        %v5474 = vmax.f32 %v5473, %v4862
        %v5475 = vmax.f32 %v5474, %v4866
        %v5476 = vmax.f32 %v5475, %v4872
        %v5477 = vmax.f32 %v5476, %v4876
        %v5478 = vmax.f32 %v5477, %v4882
        %v5479 = vmax.f32 %v5478, %v4886
        %v5480 = vmax.f32 %v5479, %v4892
        %v5481 = vmax.f32 %v5480, %v4896
        %v5482 = vmax.f32 %v5481, %v4902
        %v5483 = vmax.f32 %v5482, %v4906
        %v5484 = vmax.f32 %v5483, %v4912
        %v5485 = vmax.f32 %v5484, %v4916
        %v5486 = vmax.f32 %v5485, %v4922
        %v5487 = vmax.f32 %v5486, %v4926
        %v5488 = vmax.f32 %v5487, %v4932
        %v5489 = vmax.f32 %v5488, %v4936
        %v5490 = vmax.f32 %v5489, %v4942
        %v5491 = vmax.f32 %v5490, %v4946
        %v5492 = vmax.f32 %v5491, %v4952
        %v5493 = vmax.f32 %v5492, %v4956
        %v5494 = vmax.f32 %v5493, %v4962
        %v5495 = vmax.f32 %v5494, %v4966
        %v5496 = vrot.slane %v5495, 4
        %v5497 = vmax.f32 %v5495, %v5496
        %v5498 = vrot.slane %v5497, 2
        %v5499 = vmax.f32 %v5497, %v5498
        %v5500 = vrot.slane %v5499, 1
        %v5501 = vmax.f32 %v5499, %v5500
        %v5502 = vmax.f32 %v5003, %v5007
        %v5503 = vmax.f32 %v5502, %v5013
        %v5504 = vmax.f32 %v5503, %v5017
        %v5505 = vmax.f32 %v5504, %v5023
        %v5506 = vmax.f32 %v5505, %v5027
        %v5507 = vmax.f32 %v5506, %v5033
        %v5508 = vmax.f32 %v5507, %v5037
        %v5509 = vmax.f32 %v5508, %v5043
        %v5510 = vmax.f32 %v5509, %v5047
        %v5511 = vmax.f32 %v5510, %v5053
        %v5512 = vmax.f32 %v5511, %v5057
        %v5513 = vmax.f32 %v5512, %v5063
        %v5514 = vmax.f32 %v5513, %v5067
        %v5515 = vmax.f32 %v5514, %v5073
        %v5516 = vmax.f32 %v5515, %v5077
        %v5517 = vmax.f32 %v5516, %v5083
        %v5518 = vmax.f32 %v5517, %v5087
        %v5519 = vmax.f32 %v5518, %v5093
        %v5520 = vmax.f32 %v5519, %v5097
        %v5521 = vmax.f32 %v5520, %v5103
        %v5522 = vmax.f32 %v5521, %v5107
        %v5523 = vmax.f32 %v5522, %v5113
        %v5524 = vmax.f32 %v5523, %v5117
        %v5525 = vmax.f32 %v5524, %v5123
        %v5526 = vmax.f32 %v5525, %v5127
        %v5527 = vmax.f32 %v5526, %v5133
        %v5528 = vmax.f32 %v5527, %v5137
        %v5529 = vmax.f32 %v5528, %v5143
        %v5530 = vmax.f32 %v5529, %v5147
        %v5531 = vmax.f32 %v5530, %v5153
        %v5532 = vmax.f32 %v5531, %v5157
        %v5533 = vrot.slane %v5532, 4
        %v5534 = vmax.f32 %v5532, %v5533
        %v5535 = vrot.slane %v5534, 2
        %v5536 = vmax.f32 %v5534, %v5535
        %v5537 = vrot.slane %v5536, 1
        %v5538 = vmax.f32 %v5536, %v5537
        %v5539 = vmax.f32 %v5005, %v5009
        %v5540 = vmax.f32 %v5539, %v5015
        %v5541 = vmax.f32 %v5540, %v5019
        %v5542 = vmax.f32 %v5541, %v5025
        %v5543 = vmax.f32 %v5542, %v5029
        %v5544 = vmax.f32 %v5543, %v5035
        %v5545 = vmax.f32 %v5544, %v5039
        %v5546 = vmax.f32 %v5545, %v5045
        %v5547 = vmax.f32 %v5546, %v5049
        %v5548 = vmax.f32 %v5547, %v5055
        %v5549 = vmax.f32 %v5548, %v5059
        %v5550 = vmax.f32 %v5549, %v5065
        %v5551 = vmax.f32 %v5550, %v5069
        %v5552 = vmax.f32 %v5551, %v5075
        %v5553 = vmax.f32 %v5552, %v5079
        %v5554 = vmax.f32 %v5553, %v5085
        %v5555 = vmax.f32 %v5554, %v5089
        %v5556 = vmax.f32 %v5555, %v5095
        %v5557 = vmax.f32 %v5556, %v5099
        %v5558 = vmax.f32 %v5557, %v5105
        %v5559 = vmax.f32 %v5558, %v5109
        %v5560 = vmax.f32 %v5559, %v5115
        %v5561 = vmax.f32 %v5560, %v5119
        %v5562 = vmax.f32 %v5561, %v5125
        %v5563 = vmax.f32 %v5562, %v5129
        %v5564 = vmax.f32 %v5563, %v5135
        %v5565 = vmax.f32 %v5564, %v5139
        %v5566 = vmax.f32 %v5565, %v5145
        %v5567 = vmax.f32 %v5566, %v5149
        %v5568 = vmax.f32 %v5567, %v5155
        %v5569 = vmax.f32 %v5568, %v5159
        %v5570 = vrot.slane %v5569, 4
        %v5571 = vmax.f32 %v5569, %v5570
        %v5572 = vrot.slane %v5571, 2
        %v5573 = vmax.f32 %v5571, %v5572
        %v5574 = vrot.slane %v5573, 1
        %v5575 = vmax.f32 %v5573, %v5574
        %v5576 = vmax.f32 %v5196, %v5200
        %v5577 = vmax.f32 %v5576, %v5206
        %v5578 = vmax.f32 %v5577, %v5210
        %v5579 = vmax.f32 %v5578, %v5216
        %v5580 = vmax.f32 %v5579, %v5220
        %v5581 = vmax.f32 %v5580, %v5226
        %v5582 = vmax.f32 %v5581, %v5230
        %v5583 = vmax.f32 %v5582, %v5236
        %v5584 = vmax.f32 %v5583, %v5240
        %v5585 = vmax.f32 %v5584, %v5246
        %v5586 = vmax.f32 %v5585, %v5250
        %v5587 = vmax.f32 %v5586, %v5256
        %v5588 = vmax.f32 %v5587, %v5260
        %v5589 = vmax.f32 %v5588, %v5266
        %v5590 = vmax.f32 %v5589, %v5270
        %v5591 = vmax.f32 %v5590, %v5276
        %v5592 = vmax.f32 %v5591, %v5280
        %v5593 = vmax.f32 %v5592, %v5286
        %v5594 = vmax.f32 %v5593, %v5290
        %v5595 = vmax.f32 %v5594, %v5296
        %v5596 = vmax.f32 %v5595, %v5300
        %v5597 = vmax.f32 %v5596, %v5306
        %v5598 = vmax.f32 %v5597, %v5310
        %v5599 = vmax.f32 %v5598, %v5316
        %v5600 = vmax.f32 %v5599, %v5320
        %v5601 = vmax.f32 %v5600, %v5326
        %v5602 = vmax.f32 %v5601, %v5330
        %v5603 = vmax.f32 %v5602, %v5336
        %v5604 = vmax.f32 %v5603, %v5340
        %v5605 = vmax.f32 %v5604, %v5346
        %v5606 = vmax.f32 %v5605, %v5350
        %v5607 = vrot.slane %v5606, 4
        %v5608 = vmax.f32 %v5606, %v5607
        %v5609 = vrot.slane %v5608, 2
        %v5610 = vmax.f32 %v5608, %v5609
        %v5611 = vrot.slane %v5610, 1
        %v5612 = vmax.f32 %v5610, %v5611
        %v5613 = vmax.f32 %v5198, %v5202
        %v5614 = vmax.f32 %v5613, %v5208
        %v5615 = vmax.f32 %v5614, %v5212
        %v5616 = vmax.f32 %v5615, %v5218
        %v5617 = vmax.f32 %v5616, %v5222
        %v5618 = vmax.f32 %v5617, %v5228
        %v5619 = vmax.f32 %v5618, %v5232
        %v5620 = vmax.f32 %v5619, %v5238
        %v5621 = vmax.f32 %v5620, %v5242
        %v5622 = vmax.f32 %v5621, %v5248
        %v5623 = vmax.f32 %v5622, %v5252
        %v5624 = vmax.f32 %v5623, %v5258
        %v5625 = vmax.f32 %v5624, %v5262
        %v5626 = vmax.f32 %v5625, %v5268
        %v5627 = vmax.f32 %v5626, %v5272
        %v5628 = vmax.f32 %v5627, %v5278
        %v5629 = vmax.f32 %v5628, %v5282
        %v5630 = vmax.f32 %v5629, %v5288
        %v5631 = vmax.f32 %v5630, %v5292
        %v5632 = vmax.f32 %v5631, %v5298
        %v5633 = vmax.f32 %v5632, %v5302
        %v5634 = vmax.f32 %v5633, %v5308
        %v5635 = vmax.f32 %v5634, %v5312
        %v5636 = vmax.f32 %v5635, %v5318
        %v5637 = vmax.f32 %v5636, %v5322
        %v5638 = vmax.f32 %v5637, %v5328
        %v5639 = vmax.f32 %v5638, %v5332
        %v5640 = vmax.f32 %v5639, %v5338
        %v5641 = vmax.f32 %v5640, %v5342
        %v5642 = vmax.f32 %v5641, %v5348
        %v5643 = vmax.f32 %v5642, %v5352
        %v5644 = vrot.slane %v5643, 4
        %v5645 = vmax.f32 %v5643, %v5644
        %v5646 = vrot.slane %v5645, 2
        %v5647 = vmax.f32 %v5645, %v5646
        %v5648 = vrot.slane %v5647, 1
        %v5649 = vmax.f32 %v5647, %v5648
        %v5650 = vmax.f32 %v4020, %v5390
        %v5651 = vmax.f32 %v4021, %v5427
        %v5652 = vmax.f32 %v4022, %v5464
        %v5653 = vmax.f32 %v4023, %v5501
        %v5654 = vmax.f32 %v4024, %v5538
        %v5655 = vmax.f32 %v4025, %v5575
        %v5656 = vmax.f32 %v4026, %v5612
        %v5657 = vmax.f32 %v4027, %v5649
        %v5658 = vld [vmem:[%s291 + $0x18] sm:$0xff]
        %v5660 = vunpack.c.l.b16 %v5658
        %v5661 = vunpack.c.h.b16 %v5658
        %v5662 = vpack.c.b16 %v5660, %v5660
        %v5663 = vpack.c.b16 %v5661, %v5661
        %5666 = vxpose.xlu0.c.b16.start [1/8] %v5662, 128
        %5667 = vxpose.xlu0.c.b16.cont [2/8] 0, 128
        %5668 = vxpose.xlu0.c.b16.cont [3/8] 0, 128
        %5669 = vxpose.xlu0.c.b16.cont [4/8] 0, 128
        %5670 = vxpose.xlu0.c.b16.cont [5/8] 0, 128
        %5671 = vxpose.xlu0.c.b16.cont [6/8] 0, 128
        %5672 = vxpose.xlu0.c.b16.cont [7/8] 0, 128
        %5673 = vxpose.xlu0.c.b16.end [8/8] 0, 128
        %v5674 = vpop.trf.xlu0
        %v5675 = vpop.trf.xlu0
        %v5676 = vpop.trf.xlu0
        %v5677 = vpop.trf.xlu0
        %v5678 = vpop.trf.xlu0
        %v5679 = vpop.trf.xlu0
        %v5680 = vpop.trf.xlu0
        %v5681 = vpop.trf.xlu0
        %5682 = vxpose.xlu0.c.b16.start [1/8] %v5663, 128
        %5683 = vxpose.xlu0.c.b16.cont [2/8] 0, 128
        %5684 = vxpose.xlu0.c.b16.cont [3/8] 0, 128
        %5685 = vxpose.xlu0.c.b16.cont [4/8] 0, 128
        %5686 = vxpose.xlu0.c.b16.cont [5/8] 0, 128
        %5687 = vxpose.xlu0.c.b16.cont [6/8] 0, 128
        %5688 = vxpose.xlu0.c.b16.cont [7/8] 0, 128
        %5689 = vxpose.xlu0.c.b16.end [8/8] 0, 128
        %v5690 = vpop.trf.xlu0
        %v5691 = vpop.trf.xlu0
        %v5692 = vpop.trf.xlu0
        %v5693 = vpop.trf.xlu0
        %v5694 = vpop.trf.xlu0
        %v5695 = vpop.trf.xlu0
        %v5696 = vpop.trf.xlu0
        %v5697 = vpop.trf.xlu0
        %v5699 = vsel %vm460, %v5674, 0
        %v5702 = vsel %vm460, %v5675, 0
        %v5705 = vsel %vm460, %v5676, 0
        %v5708 = vsel %vm460, %v5677, 0
        %v5711 = vsel %vm460, %v5678, 0
        %v5714 = vsel %vm460, %v5679, 0
        %v5717 = vsel %vm460, %v5680, 0
        %v5720 = vsel %vm460, %v5681, 0
        %v5723 = vsel %vm460, %v5690, 0
        %v5726 = vsel %vm460, %v5691, 0
        %v5729 = vsel %vm460, %v5692, 0
        %v5732 = vsel %vm460, %v5693, 0
        %v5735 = vsel %vm460, %v5694, 0
        %v5738 = vsel %vm460, %v5695, 0
        %v5741 = vsel %vm460, %v5696, 0
        %v5744 = vsel %vm460, %v5697, 0
        %5746 = vmatprep.subr.bf16.mxu0 0
        %5747 = vmatpush1.bf16.msra.mxu0 %v511
        %5748 = vmatprep.subr.bf16.mxu0 0
        %5749 = vmatpush1.bf16.msra.mxu0 0
        %5750 = vmatprep.subr.bf16.mxu0 0
        %5751 = vmatpush1.bf16.msra.mxu0 0
        %5752 = vmatprep.subr.bf16.mxu0 0
        %5753 = vmatpush1.bf16.msra.mxu0 0
        %5754 = vmatprep.subr.bf16.mxu0 0
        %5755 = vmatpush1.bf16.msra.mxu0 0
        %5756 = vmatprep.subr.bf16.mxu0 0
        %5757 = vmatpush1.bf16.msra.mxu0 0
        %5758 = vmatprep.subr.bf16.mxu0 0
        %5759 = vmatpush1.bf16.msra.mxu0 0
        %5760 = vmatprep.subr.bf16.mxu0 0
        %5761 = vmatpush1.bf16.msra.mxu0 0
        %5762 = vmatprep.subr.bf16.mxu0 0
        %5763 = vmatpush1.bf16.msra.mxu0 0
        %5764 = vmatprep.subr.bf16.mxu0 0
        %5765 = vmatpush1.bf16.msra.mxu0 0
        %5766 = vmatprep.subr.bf16.mxu0 0
        %5767 = vmatpush1.bf16.msra.mxu0 0
        %5768 = vmatprep.subr.bf16.mxu0 0
        %5769 = vmatpush1.bf16.msra.mxu0 0
        %5770 = vmatprep.subr.bf16.mxu0 0
        %5771 = vmatpush1.bf16.msra.mxu0 0
        %5772 = vmatprep.subr.bf16.mxu0 0
        %5773 = vmatpush1.bf16.msra.mxu0 0
        %5774 = vmatprep.subr.bf16.mxu0 0
        %5775 = vmatpush1.bf16.msra.mxu0 0
        %5776 = vmatprep.subr.bf16.mxu0 0
        %5777 = vmatpush1.bf16.msra.mxu0 0
        %5778 = vmatprep.mubr.bf16.mxu0 0
        %5779 = vmatmul.mubr.bf16.gmra.mrb[0].mxu0 %v5699
        %v5780 = vpop.f32.mrb[0].mxu0
        %v5781 = vadd.f32 %v419, %v5780
        %v5782 = vpop.f32.mrb[0].mxu0
        %v5783 = vpop.f32.mrb[0].mxu0
        %v5784 = vadd.f32 %v419, %v5783
        %v5785 = vpop.f32.mrb[0].mxu0
        %5786 = vmatprep.mubr.bf16.mxu0 0
        %5787 = vmatmul.mubr.bf16.gmra.mrb[0].mxu0 %v5702
        %v5788 = vpop.f32.mrb[0].mxu0
        %v5789 = vadd.f32 %v419, %v5788
        %v5790 = vpop.f32.mrb[0].mxu0
        %v5791 = vpop.f32.mrb[0].mxu0
        %v5792 = vadd.f32 %v419, %v5791
        %v5793 = vpop.f32.mrb[0].mxu0
        %5794 = vmatprep.mubr.bf16.mxu0 0
        %5795 = vmatmul.mubr.bf16.gmra.mrb[0].mxu0 %v5705
        %v5796 = vpop.f32.mrb[0].mxu0
        %v5797 = vadd.f32 %v419, %v5796
        %v5798 = vpop.f32.mrb[0].mxu0
        %v5799 = vpop.f32.mrb[0].mxu0
        %v5800 = vadd.f32 %v419, %v5799
        %v5801 = vpop.f32.mrb[0].mxu0
        %5802 = vmatprep.mubr.bf16.mxu0 0
        %5803 = vmatmul.mubr.bf16.gmra.mrb[0].mxu0 %v5708
        %v5804 = vpop.f32.mrb[0].mxu0
        %v5805 = vadd.f32 %v419, %v5804
        %v5806 = vpop.f32.mrb[0].mxu0
        %v5807 = vpop.f32.mrb[0].mxu0
        %v5808 = vadd.f32 %v419, %v5807
        %v5809 = vpop.f32.mrb[0].mxu0
        %5810 = vmatprep.mubr.bf16.mxu0 0
        %5811 = vmatmul.mubr.bf16.gmra.mrb[0].mxu0 %v5711
        %v5812 = vpop.f32.mrb[0].mxu0
        %v5813 = vadd.f32 %v419, %v5812
        %v5814 = vpop.f32.mrb[0].mxu0
        %v5815 = vpop.f32.mrb[0].mxu0
        %v5816 = vadd.f32 %v419, %v5815
        %v5817 = vpop.f32.mrb[0].mxu0
        %5818 = vmatprep.mubr.bf16.mxu0 0
        %5819 = vmatmul.mubr.bf16.gmra.mrb[0].mxu0 %v5714
        %v5820 = vpop.f32.mrb[0].mxu0
        %v5821 = vadd.f32 %v419, %v5820
        %v5822 = vpop.f32.mrb[0].mxu0
        %v5823 = vpop.f32.mrb[0].mxu0
        %v5824 = vadd.f32 %v419, %v5823
        %v5825 = vpop.f32.mrb[0].mxu0
        %5826 = vmatprep.mubr.bf16.mxu0 0
        %5827 = vmatmul.mubr.bf16.gmra.mrb[0].mxu0 %v5717
        %v5828 = vpop.f32.mrb[0].mxu0
        %v5829 = vadd.f32 %v419, %v5828
        %v5830 = vpop.f32.mrb[0].mxu0
        %v5831 = vpop.f32.mrb[0].mxu0
        %v5832 = vadd.f32 %v419, %v5831
        %v5833 = vpop.f32.mrb[0].mxu0
        %5834 = vmatprep.mubr.bf16.mxu0 0
        %5835 = vmatmul.mubr.bf16.gmra.mrb[0].mxu0 %v5720
        %v5836 = vpop.f32.mrb[0].mxu0
        %v5837 = vadd.f32 %v419, %v5836
        %v5838 = vpop.f32.mrb[0].mxu0
        %v5839 = vpop.f32.mrb[0].mxu0
        %v5840 = vadd.f32 %v419, %v5839
        %v5841 = vpop.f32.mrb[0].mxu0
        %5842 = vmatprep.mubr.bf16.mxu0 0
        %5843 = vmatmul.mubr.bf16.gmra.mrb[0].mxu0 %v5723
        %v5844 = vpop.f32.mrb[0].mxu0
        %v5845 = vadd.f32 %v419, %v5844
        %v5846 = vpop.f32.mrb[0].mxu0
        %v5847 = vpop.f32.mrb[0].mxu0
        %v5848 = vadd.f32 %v419, %v5847
        %v5849 = vpop.f32.mrb[0].mxu0
        %5850 = vmatprep.mubr.bf16.mxu0 0
        %5851 = vmatmul.mubr.bf16.gmra.mrb[0].mxu0 %v5726
        %v5852 = vpop.f32.mrb[0].mxu0
        %v5853 = vadd.f32 %v419, %v5852
        %v5854 = vpop.f32.mrb[0].mxu0
        %v5855 = vpop.f32.mrb[0].mxu0
        %v5856 = vadd.f32 %v419, %v5855
        %v5857 = vpop.f32.mrb[0].mxu0
        %5858 = vmatprep.mubr.bf16.mxu0 0
        %5859 = vmatmul.mubr.bf16.gmra.mrb[0].mxu0 %v5729
        %v5860 = vpop.f32.mrb[0].mxu0
        %v5861 = vadd.f32 %v419, %v5860
        %v5862 = vpop.f32.mrb[0].mxu0
        %v5863 = vpop.f32.mrb[0].mxu0
        %v5864 = vadd.f32 %v419, %v5863
        %v5865 = vpop.f32.mrb[0].mxu0
        %5866 = vmatprep.mubr.bf16.mxu0 0
        %5867 = vmatmul.mubr.bf16.gmra.mrb[0].mxu0 %v5732
        %v5868 = vpop.f32.mrb[0].mxu0
        %v5869 = vadd.f32 %v419, %v5868
        %v5870 = vpop.f32.mrb[0].mxu0
        %v5871 = vpop.f32.mrb[0].mxu0
        %v5872 = vadd.f32 %v419, %v5871
        %v5873 = vpop.f32.mrb[0].mxu0
        %5874 = vmatprep.mubr.bf16.mxu0 0
        %5875 = vmatmul.mubr.bf16.gmra.mrb[0].mxu0 %v5735
        %v5876 = vpop.f32.mrb[0].mxu0
        %v5877 = vadd.f32 %v419, %v5876
        %v5878 = vpop.f32.mrb[0].mxu0
        %v5879 = vpop.f32.mrb[0].mxu0
        %v5880 = vadd.f32 %v419, %v5879
        %v5881 = vpop.f32.mrb[0].mxu0
        %5882 = vmatprep.mubr.bf16.mxu0 0
        %5883 = vmatmul.mubr.bf16.gmra.mrb[0].mxu0 %v5738
        %v5884 = vpop.f32.mrb[0].mxu0
        %v5885 = vadd.f32 %v419, %v5884
        %v5886 = vpop.f32.mrb[0].mxu0
        %v5887 = vpop.f32.mrb[0].mxu0
        %v5888 = vadd.f32 %v419, %v5887
        %v5889 = vpop.f32.mrb[0].mxu0
        %5890 = vmatprep.mubr.bf16.mxu0 0
        %5891 = vmatmul.mubr.bf16.gmra.mrb[0].mxu0 %v5741
        %v5892 = vpop.f32.mrb[0].mxu0
        %v5893 = vadd.f32 %v419, %v5892
        %v5894 = vpop.f32.mrb[0].mxu0
        %v5895 = vpop.f32.mrb[0].mxu0
        %v5896 = vadd.f32 %v419, %v5895
        %v5897 = vpop.f32.mrb[0].mxu0
        %5898 = vmatprep.mubr.bf16.mxu0 0
        %5899 = vmatmul.mubr.bf16.gmra.mrb[0].mxu0 %v5744
        %v5900 = vpop.f32.mrb[0].mxu0
        %v5901 = vadd.f32 %v419, %v5900
        %v5902 = vpop.f32.mrb[0].mxu0
        %v5903 = vpop.f32.mrb[0].mxu0
        %v5904 = vadd.f32 %v419, %v5903
        %v5905 = vpop.f32.mrb[0].mxu0
        %5906 = vdwg.mxu0
        %v5907 = vmax.f32 %v5781, 0.0
        %v5908 = vmax.f32 %v5784, 0.0
        %v5909 = vmax.f32 %v5789, 0.0
        %v5910 = vmax.f32 %v5792, 0.0
        %v5911 = vmax.f32 %v5797, 0.0
        %v5912 = vmax.f32 %v5800, 0.0
        %v5913 = vmax.f32 %v5805, 0.0
        %v5914 = vmax.f32 %v5808, 0.0
        %v5915 = vmax.f32 %v5813, 0.0
        %v5916 = vmax.f32 %v5816, 0.0
        %v5917 = vmax.f32 %v5821, 0.0
        %v5918 = vmax.f32 %v5824, 0.0
        %v5919 = vmax.f32 %v5829, 0.0
        %v5920 = vmax.f32 %v5832, 0.0
        %v5921 = vmax.f32 %v5837, 0.0
        %v5922 = vmax.f32 %v5840, 0.0
        %v5923 = vmax.f32 %v5845, 0.0
        %v5924 = vmax.f32 %v5848, 0.0
        %v5925 = vmax.f32 %v5853, 0.0
        %v5926 = vmax.f32 %v5856, 0.0
        %v5927 = vmax.f32 %v5861, 0.0
        %v5928 = vmax.f32 %v5864, 0.0
        %v5929 = vmax.f32 %v5869, 0.0
        %v5930 = vmax.f32 %v5872, 0.0
        %v5931 = vmax.f32 %v5877, 0.0
        %v5932 = vmax.f32 %v5880, 0.0
        %v5933 = vmax.f32 %v5885, 0.0
        %v5934 = vmax.f32 %v5888, 0.0
        %v5935 = vmax.f32 %v5893, 0.0
        %v5936 = vmax.f32 %v5896, 0.0
        %v5937 = vmax.f32 %v5901, 0.0
        %v5938 = vmax.f32 %v5904, 0.0
        %v5939 = vpack.c.bf16 %v5908, %v5907
        %v5940 = vpack.c.bf16 %v5910, %v5909
        %v5941 = vpack.c.bf16 %v5912, %v5911
        %v5942 = vpack.c.bf16 %v5914, %v5913
        %v5943 = vpack.c.bf16 %v5916, %v5915
        %v5944 = vpack.c.bf16 %v5918, %v5917
        %v5945 = vpack.c.bf16 %v5920, %v5919
        %v5946 = vpack.c.bf16 %v5922, %v5921
        %v5947 = vpack.c.bf16 %v5924, %v5923
        %v5948 = vpack.c.bf16 %v5926, %v5925
        %v5949 = vpack.c.bf16 %v5928, %v5927
        %v5950 = vpack.c.bf16 %v5930, %v5929
        %v5951 = vpack.c.bf16 %v5932, %v5931
        %v5952 = vpack.c.bf16 %v5934, %v5933
        %v5953 = vpack.c.bf16 %v5936, %v5935
        %v5954 = vpack.c.bf16 %v5938, %v5937
        %v5956 = vsel %vm752, %v5939, 0
        %v5959 = vsel %vm752, %v5940, 0
        %v5962 = vsel %vm752, %v5941, 0
        %v5965 = vsel %vm752, %v5942, 0
        %v5968 = vsel %vm752, %v5943, 0
        %v5971 = vsel %vm752, %v5944, 0
        %v5974 = vsel %vm752, %v5945, 0
        %v5977 = vsel %vm752, %v5946, 0
        %v5980 = vsel %vm752, %v5947, 0
        %v5983 = vsel %vm752, %v5948, 0
        %v5986 = vsel %vm752, %v5949, 0
        %v5989 = vsel %vm752, %v5950, 0
        %v5992 = vsel %vm752, %v5951, 0
        %v5995 = vsel %vm752, %v5952, 0
        %v5998 = vsel %vm752, %v5953, 0
        %v6001 = vsel %vm752, %v5954, 0
        %6003 = vmatprep.subr.bf16.mxu0 0
        %6004 = vmatpush1.bf16.msra.mxu0 %v744
        %6005 = vmatprep.subr.bf16.mxu0 0
        %6006 = vmatpush1.bf16.msra.mxu0 %v745
        %6007 = vmatprep.subr.bf16.mxu0 0
        %6008 = vmatpush1.bf16.msra.mxu0 %v746
        %6009 = vmatprep.subr.bf16.mxu0 0
        %6010 = vmatpush1.bf16.msra.mxu0 %v747
        %6011 = vmatprep.subr.bf16.mxu0 0
        %6012 = vmatpush1.bf16.msra.mxu0 0
        %6013 = vmatprep.subr.bf16.mxu0 0
        %6014 = vmatpush1.bf16.msra.mxu0 0
        %6015 = vmatprep.subr.bf16.mxu0 0
        %6016 = vmatpush1.bf16.msra.mxu0 0
        %6017 = vmatprep.subr.bf16.mxu0 0
        %6018 = vmatpush1.bf16.msra.mxu0 0
        %6019 = vmatprep.subr.bf16.mxu0 0
        %6020 = vmatpush1.bf16.msra.mxu0 0
        %6021 = vmatprep.subr.bf16.mxu0 0
        %6022 = vmatpush1.bf16.msra.mxu0 0
        %6023 = vmatprep.subr.bf16.mxu0 0
        %6024 = vmatpush1.bf16.msra.mxu0 0
        %6025 = vmatprep.subr.bf16.mxu0 0
        %6026 = vmatpush1.bf16.msra.mxu0 0
        %6027 = vmatprep.subr.bf16.mxu0 0
        %6028 = vmatpush1.bf16.msra.mxu0 0
        %6029 = vmatprep.subr.bf16.mxu0 0
        %6030 = vmatpush1.bf16.msra.mxu0 0
        %6031 = vmatprep.subr.bf16.mxu0 0
        %6032 = vmatpush1.bf16.msra.mxu0 0
        %6033 = vmatprep.subr.bf16.mxu0 0
        %6034 = vmatpush1.bf16.msra.mxu0 0
        %6035 = vmatprep.mubr.bf16.mxu0 0
        %6036 = vmatmul.mubr.bf16.gmra.mrb[0].mxu0 %v5956
        %v6037 = vpop.f32.mrb[0].mxu0
        %v6038 = vadd.f32 %v726, %v6037
        %v6039 = vpop.f32.mrb[0].mxu0
        %v6040 = vpop.f32.mrb[0].mxu0
        %v6041 = vadd.f32 %v726, %v6040
        %v6042 = vpop.f32.mrb[0].mxu0
        %6043 = vmatprep.mubr.bf16.mxu0 0
        %6044 = vmatmul.mubr.bf16.gmra.mrb[0].mxu0 %v5959
        %v6045 = vpop.f32.mrb[0].mxu0
        %v6046 = vadd.f32 %v726, %v6045
        %v6047 = vpop.f32.mrb[0].mxu0
        %v6048 = vpop.f32.mrb[0].mxu0
        %v6049 = vadd.f32 %v726, %v6048
        %v6050 = vpop.f32.mrb[0].mxu0
        %6051 = vmatprep.mubr.bf16.mxu0 0
        %6052 = vmatmul.mubr.bf16.gmra.mrb[0].mxu0 %v5962
        %v6053 = vpop.f32.mrb[0].mxu0
        %v6054 = vadd.f32 %v726, %v6053
        %v6055 = vpop.f32.mrb[0].mxu0
        %v6056 = vpop.f32.mrb[0].mxu0
        %v6057 = vadd.f32 %v726, %v6056
        %v6058 = vpop.f32.mrb[0].mxu0
        %6059 = vmatprep.mubr.bf16.mxu0 0
        %6060 = vmatmul.mubr.bf16.gmra.mrb[0].mxu0 %v5965
        %v6061 = vpop.f32.mrb[0].mxu0
        %v6062 = vadd.f32 %v726, %v6061
        %v6063 = vpop.f32.mrb[0].mxu0
        %v6064 = vpop.f32.mrb[0].mxu0
        %v6065 = vadd.f32 %v726, %v6064
        %v6066 = vpop.f32.mrb[0].mxu0
        %6067 = vmatprep.mubr.bf16.mxu0 0
        %6068 = vmatmul.mubr.bf16.gmra.mrb[0].mxu0 %v5968
        %v6069 = vpop.f32.mrb[0].mxu0
        %v6070 = vadd.f32 %v726, %v6069
        %v6071 = vpop.f32.mrb[0].mxu0
        %v6072 = vpop.f32.mrb[0].mxu0
        %v6073 = vadd.f32 %v726, %v6072
        %v6074 = vpop.f32.mrb[0].mxu0
        %6075 = vmatprep.mubr.bf16.mxu0 0
        %6076 = vmatmul.mubr.bf16.gmra.mrb[0].mxu0 %v5971
        %v6077 = vpop.f32.mrb[0].mxu0
        %v6078 = vadd.f32 %v726, %v6077
        %v6079 = vpop.f32.mrb[0].mxu0
        %v6080 = vpop.f32.mrb[0].mxu0
        %v6081 = vadd.f32 %v726, %v6080
        %v6082 = vpop.f32.mrb[0].mxu0
        %6083 = vmatprep.mubr.bf16.mxu0 0
        %6084 = vmatmul.mubr.bf16.gmra.mrb[0].mxu0 %v5974
        %v6085 = vpop.f32.mrb[0].mxu0
        %v6086 = vadd.f32 %v726, %v6085
        %v6087 = vpop.f32.mrb[0].mxu0
        %v6088 = vpop.f32.mrb[0].mxu0
        %v6089 = vadd.f32 %v726, %v6088
        %v6090 = vpop.f32.mrb[0].mxu0
        %6091 = vmatprep.mubr.bf16.mxu0 0
        %6092 = vmatmul.mubr.bf16.gmra.mrb[0].mxu0 %v5977
        %v6093 = vpop.f32.mrb[0].mxu0
        %v6094 = vadd.f32 %v726, %v6093
        %v6095 = vpop.f32.mrb[0].mxu0
        %v6096 = vpop.f32.mrb[0].mxu0
        %v6097 = vadd.f32 %v726, %v6096
        %v6098 = vpop.f32.mrb[0].mxu0
        %6099 = vmatprep.mubr.bf16.mxu0 0
        %6100 = vmatmul.mubr.bf16.gmra.mrb[0].mxu0 %v5980
        %v6101 = vpop.f32.mrb[0].mxu0
        %v6102 = vadd.f32 %v726, %v6101
        %v6103 = vpop.f32.mrb[0].mxu0
        %v6104 = vpop.f32.mrb[0].mxu0
        %v6105 = vadd.f32 %v726, %v6104
        %v6106 = vpop.f32.mrb[0].mxu0
        %6107 = vmatprep.mubr.bf16.mxu0 0
        %6108 = vmatmul.mubr.bf16.gmra.mrb[0].mxu0 %v5983
        %v6109 = vpop.f32.mrb[0].mxu0
        %v6110 = vadd.f32 %v726, %v6109
        %v6111 = vpop.f32.mrb[0].mxu0
        %v6112 = vpop.f32.mrb[0].mxu0
        %v6113 = vadd.f32 %v726, %v6112
        %v6114 = vpop.f32.mrb[0].mxu0
        %6115 = vmatprep.mubr.bf16.mxu0 0
        %6116 = vmatmul.mubr.bf16.gmra.mrb[0].mxu0 %v5986
        %v6117 = vpop.f32.mrb[0].mxu0
        %v6118 = vadd.f32 %v726, %v6117
        %v6119 = vpop.f32.mrb[0].mxu0
        %v6120 = vpop.f32.mrb[0].mxu0
        %v6121 = vadd.f32 %v726, %v6120
        %v6122 = vpop.f32.mrb[0].mxu0
        %6123 = vmatprep.mubr.bf16.mxu0 0
        %6124 = vmatmul.mubr.bf16.gmra.mrb[0].mxu0 %v5989
        %v6125 = vpop.f32.mrb[0].mxu0
        %v6126 = vadd.f32 %v726, %v6125
        %v6127 = vpop.f32.mrb[0].mxu0
        %v6128 = vpop.f32.mrb[0].mxu0
        %v6129 = vadd.f32 %v726, %v6128
        %v6130 = vpop.f32.mrb[0].mxu0
        %6131 = vmatprep.mubr.bf16.mxu0 0
        %6132 = vmatmul.mubr.bf16.gmra.mrb[0].mxu0 %v5992
        %v6133 = vpop.f32.mrb[0].mxu0
        %v6134 = vadd.f32 %v726, %v6133
        %v6135 = vpop.f32.mrb[0].mxu0
        %v6136 = vpop.f32.mrb[0].mxu0
        %v6137 = vadd.f32 %v726, %v6136
        %v6138 = vpop.f32.mrb[0].mxu0
        %6139 = vmatprep.mubr.bf16.mxu0 0
        %6140 = vmatmul.mubr.bf16.gmra.mrb[0].mxu0 %v5995
        %v6141 = vpop.f32.mrb[0].mxu0
        %v6142 = vadd.f32 %v726, %v6141
        %v6143 = vpop.f32.mrb[0].mxu0
        %v6144 = vpop.f32.mrb[0].mxu0
        %v6145 = vadd.f32 %v726, %v6144
        %v6146 = vpop.f32.mrb[0].mxu0
        %6147 = vmatprep.mubr.bf16.mxu0 0
        %6148 = vmatmul.mubr.bf16.gmra.mrb[0].mxu0 %v5998
        %v6149 = vpop.f32.mrb[0].mxu0
        %v6150 = vadd.f32 %v726, %v6149
        %v6151 = vpop.f32.mrb[0].mxu0
        %v6152 = vpop.f32.mrb[0].mxu0
        %v6153 = vadd.f32 %v726, %v6152
        %v6154 = vpop.f32.mrb[0].mxu0
        %6155 = vmatprep.mubr.bf16.mxu0 0
        %6156 = vmatmul.mubr.bf16.gmra.mrb[0].mxu0 %v6001
        %v6157 = vpop.f32.mrb[0].mxu0
        %v6158 = vadd.f32 %v726, %v6157
        %v6159 = vpop.f32.mrb[0].mxu0
        %v6160 = vpop.f32.mrb[0].mxu0
        %v6161 = vadd.f32 %v726, %v6160
        %v6162 = vpop.f32.mrb[0].mxu0
        %6163 = vdwg.mxu0
        %v6164 = vmax.f32 %v6038, 0.0
        %v6165 = vmax.f32 %v6041, 0.0
        %v6166 = vmax.f32 %v6046, 0.0
        %v6167 = vmax.f32 %v6049, 0.0
        %v6168 = vmax.f32 %v6054, 0.0
        %v6169 = vmax.f32 %v6057, 0.0
        %v6170 = vmax.f32 %v6062, 0.0
        %v6171 = vmax.f32 %v6065, 0.0
        %v6172 = vmax.f32 %v6070, 0.0
        %v6173 = vmax.f32 %v6073, 0.0
        %v6174 = vmax.f32 %v6078, 0.0
        %v6175 = vmax.f32 %v6081, 0.0
        %v6176 = vmax.f32 %v6086, 0.0
        %v6177 = vmax.f32 %v6089, 0.0
        %v6178 = vmax.f32 %v6094, 0.0
        %v6179 = vmax.f32 %v6097, 0.0
        %v6180 = vmax.f32 %v6102, 0.0
        %v6181 = vmax.f32 %v6105, 0.0
        %v6182 = vmax.f32 %v6110, 0.0
        %v6183 = vmax.f32 %v6113, 0.0
        %v6184 = vmax.f32 %v6118, 0.0
        %v6185 = vmax.f32 %v6121, 0.0
        %v6186 = vmax.f32 %v6126, 0.0
        %v6187 = vmax.f32 %v6129, 0.0
        %v6188 = vmax.f32 %v6134, 0.0
        %v6189 = vmax.f32 %v6137, 0.0
        %v6190 = vmax.f32 %v6142, 0.0
        %v6191 = vmax.f32 %v6145, 0.0
        %v6192 = vmax.f32 %v6150, 0.0
        %v6193 = vmax.f32 %v6153, 0.0
        %v6194 = vmax.f32 %v6158, 0.0
        %v6195 = vmax.f32 %v6161, 0.0
        %v6196 = vpack.c.bf16 %v6165, %v6164
        %v6197 = vpack.c.bf16 %v6167, %v6166
        %v6198 = vpack.c.bf16 %v6169, %v6168
        %v6199 = vpack.c.bf16 %v6171, %v6170
        %v6200 = vpack.c.bf16 %v6173, %v6172
        %v6201 = vpack.c.bf16 %v6175, %v6174
        %v6202 = vpack.c.bf16 %v6177, %v6176
        %v6203 = vpack.c.bf16 %v6179, %v6178
        %v6204 = vpack.c.bf16 %v6181, %v6180
        %v6205 = vpack.c.bf16 %v6183, %v6182
        %v6206 = vpack.c.bf16 %v6185, %v6184
        %v6207 = vpack.c.bf16 %v6187, %v6186
        %v6208 = vpack.c.bf16 %v6189, %v6188
        %v6209 = vpack.c.bf16 %v6191, %v6190
        %v6210 = vpack.c.bf16 %v6193, %v6192
        %v6211 = vpack.c.bf16 %v6195, %v6194
        %6212 = vmatprep.subr.bf16.mxu0 %v1203
        %6213 = vmatpush1.bf16.msra.mxu0 %v1202
        %6214 = vmatprep.subr.bf16.mxu0 %v1211
        %6215 = vmatpush1.bf16.msra.mxu0 %v1210
        %6216 = vmatprep.subr.bf16.mxu0 %v1219
        %6217 = vmatpush1.bf16.msra.mxu0 %v1218
        %6218 = vmatprep.subr.bf16.mxu0 %v1227
        %6219 = vmatpush1.bf16.msra.mxu0 %v1226
        %6220 = vmatprep.subr.bf16.mxu0 %v1235
        %6221 = vmatpush1.bf16.msra.mxu0 %v1234
        %6222 = vmatprep.subr.bf16.mxu0 %v1243
        %6223 = vmatpush1.bf16.msra.mxu0 %v1242
        %6224 = vmatprep.subr.bf16.mxu0 %v1251
        %6225 = vmatpush1.bf16.msra.mxu0 %v1250
        %6226 = vmatprep.subr.bf16.mxu0 %v1259
        %6227 = vmatpush1.bf16.msra.mxu0 %v1258
        %6228 = vmatprep.subr.bf16.mxu0 0
        %6229 = vmatpush1.bf16.msra.mxu0 0
        %6230 = vmatprep.subr.bf16.mxu0 0
        %6231 = vmatpush1.bf16.msra.mxu0 0
        %6232 = vmatprep.subr.bf16.mxu0 0
        %6233 = vmatpush1.bf16.msra.mxu0 0
        %6234 = vmatprep.subr.bf16.mxu0 0
        %6235 = vmatpush1.bf16.msra.mxu0 0
        %6236 = vmatprep.subr.bf16.mxu0 0
        %6237 = vmatpush1.bf16.msra.mxu0 0
        %6238 = vmatprep.subr.bf16.mxu0 0
        %6239 = vmatpush1.bf16.msra.mxu0 0
        %6240 = vmatprep.subr.bf16.mxu0 0
        %6241 = vmatpush1.bf16.msra.mxu0 0
        %6242 = vmatprep.subr.bf16.mxu0 0
        %6243 = vmatpush1.bf16.msra.mxu0 0
        %6244 = vmatprep.mubr.bf16.mxu0 0
        %6245 = vmatmul.mubr.bf16.gmra.mrb[0].mxu0 %v6196
        %v6246 = vpop.f32.mrb[0].mxu0
        %v6247 = vadd.f32 0.0, %v6246
        %v6248 = vpop.f32.mrb[0].mxu0
        %v6249 = vadd.f32 0.0, %v6248
        %v6250 = vpop.f32.mrb[0].mxu0
        %v6251 = vadd.f32 0.0, %v6250
        %v6252 = vpop.f32.mrb[0].mxu0
        %v6253 = vadd.f32 0.0, %v6252
        %6254 = vmatprep.mubr.bf16.mxu0 0
        %6255 = vmatmul.mubr.bf16.gmra.mrb[0].mxu0 %v6197
        %v6256 = vpop.f32.mrb[0].mxu0
        %v6257 = vadd.f32 0.0, %v6256
        %v6258 = vpop.f32.mrb[0].mxu0
        %v6259 = vadd.f32 0.0, %v6258
        %v6260 = vpop.f32.mrb[0].mxu0
        %v6261 = vadd.f32 0.0, %v6260
        %v6262 = vpop.f32.mrb[0].mxu0
        %v6263 = vadd.f32 0.0, %v6262
        %6264 = vmatprep.mubr.bf16.mxu0 0
        %6265 = vmatmul.mubr.bf16.gmra.mrb[0].mxu0 %v6198
        %v6266 = vpop.f32.mrb[0].mxu0
        %v6267 = vadd.f32 0.0, %v6266
        %v6268 = vpop.f32.mrb[0].mxu0
        %v6269 = vadd.f32 0.0, %v6268
        %v6270 = vpop.f32.mrb[0].mxu0
        %v6271 = vadd.f32 0.0, %v6270
        %v6272 = vpop.f32.mrb[0].mxu0
        %v6273 = vadd.f32 0.0, %v6272
        %6274 = vmatprep.mubr.bf16.mxu0 0
        %6275 = vmatmul.mubr.bf16.gmra.mrb[0].mxu0 %v6199
        %v6276 = vpop.f32.mrb[0].mxu0
        %v6277 = vadd.f32 0.0, %v6276
        %v6278 = vpop.f32.mrb[0].mxu0
        %v6279 = vadd.f32 0.0, %v6278
        %v6280 = vpop.f32.mrb[0].mxu0
        %v6281 = vadd.f32 0.0, %v6280
        %v6282 = vpop.f32.mrb[0].mxu0
        %v6283 = vadd.f32 0.0, %v6282
        %6284 = vmatprep.mubr.bf16.mxu0 0
        %6285 = vmatmul.mubr.bf16.gmra.mrb[0].mxu0 %v6200
        %v6286 = vpop.f32.mrb[0].mxu0
        %v6287 = vadd.f32 0.0, %v6286
        %v6288 = vpop.f32.mrb[0].mxu0
        %v6289 = vadd.f32 0.0, %v6288
        %v6290 = vpop.f32.mrb[0].mxu0
        %v6291 = vadd.f32 0.0, %v6290
        %v6292 = vpop.f32.mrb[0].mxu0
        %v6293 = vadd.f32 0.0, %v6292
        %6294 = vmatprep.mubr.bf16.mxu0 0
        %6295 = vmatmul.mubr.bf16.gmra.mrb[0].mxu0 %v6201
        %v6296 = vpop.f32.mrb[0].mxu0
        %v6297 = vadd.f32 0.0, %v6296
        %v6298 = vpop.f32.mrb[0].mxu0
        %v6299 = vadd.f32 0.0, %v6298
        %v6300 = vpop.f32.mrb[0].mxu0
        %v6301 = vadd.f32 0.0, %v6300
        %v6302 = vpop.f32.mrb[0].mxu0
        %v6303 = vadd.f32 0.0, %v6302
        %6304 = vmatprep.mubr.bf16.mxu0 0
        %6305 = vmatmul.mubr.bf16.gmra.mrb[0].mxu0 %v6202
        %v6306 = vpop.f32.mrb[0].mxu0
        %v6307 = vadd.f32 0.0, %v6306
        %v6308 = vpop.f32.mrb[0].mxu0
        %v6309 = vadd.f32 0.0, %v6308
        %v6310 = vpop.f32.mrb[0].mxu0
        %v6311 = vadd.f32 0.0, %v6310
        %v6312 = vpop.f32.mrb[0].mxu0
        %v6313 = vadd.f32 0.0, %v6312
        %6314 = vmatprep.mubr.bf16.mxu0 0
        %6315 = vmatmul.mubr.bf16.gmra.mrb[0].mxu0 %v6203
        %v6316 = vpop.f32.mrb[0].mxu0
        %v6317 = vadd.f32 0.0, %v6316
        %v6318 = vpop.f32.mrb[0].mxu0
        %v6319 = vadd.f32 0.0, %v6318
        %v6320 = vpop.f32.mrb[0].mxu0
        %v6321 = vadd.f32 0.0, %v6320
        %v6322 = vpop.f32.mrb[0].mxu0
        %v6323 = vadd.f32 0.0, %v6322
        %6324 = vmatprep.mubr.bf16.mxu0 0
        %6325 = vmatmul.mubr.bf16.gmra.mrb[0].mxu0 %v6204
        %v6326 = vpop.f32.mrb[0].mxu0
        %v6327 = vadd.f32 0.0, %v6326
        %v6328 = vpop.f32.mrb[0].mxu0
        %v6329 = vadd.f32 0.0, %v6328
        %v6330 = vpop.f32.mrb[0].mxu0
        %v6331 = vadd.f32 0.0, %v6330
        %v6332 = vpop.f32.mrb[0].mxu0
        %v6333 = vadd.f32 0.0, %v6332
        %6334 = vmatprep.mubr.bf16.mxu0 0
        %6335 = vmatmul.mubr.bf16.gmra.mrb[0].mxu0 %v6205
        %v6336 = vpop.f32.mrb[0].mxu0
        %v6337 = vadd.f32 0.0, %v6336
        %v6338 = vpop.f32.mrb[0].mxu0
        %v6339 = vadd.f32 0.0, %v6338
        %v6340 = vpop.f32.mrb[0].mxu0
        %v6341 = vadd.f32 0.0, %v6340
        %v6342 = vpop.f32.mrb[0].mxu0
        %v6343 = vadd.f32 0.0, %v6342
        %6344 = vmatprep.mubr.bf16.mxu0 0
        %6345 = vmatmul.mubr.bf16.gmra.mrb[0].mxu0 %v6206
        %v6346 = vpop.f32.mrb[0].mxu0
        %v6347 = vadd.f32 0.0, %v6346
        %v6348 = vpop.f32.mrb[0].mxu0
        %v6349 = vadd.f32 0.0, %v6348
        %v6350 = vpop.f32.mrb[0].mxu0
        %v6351 = vadd.f32 0.0, %v6350
        %v6352 = vpop.f32.mrb[0].mxu0
        %v6353 = vadd.f32 0.0, %v6352
        %6354 = vmatprep.mubr.bf16.mxu0 0
        %6355 = vmatmul.mubr.bf16.gmra.mrb[0].mxu0 %v6207
        %v6356 = vpop.f32.mrb[0].mxu0
        %v6357 = vadd.f32 0.0, %v6356
        %v6358 = vpop.f32.mrb[0].mxu0
        %v6359 = vadd.f32 0.0, %v6358
        %v6360 = vpop.f32.mrb[0].mxu0
        %v6361 = vadd.f32 0.0, %v6360
        %v6362 = vpop.f32.mrb[0].mxu0
        %v6363 = vadd.f32 0.0, %v6362
        %6364 = vmatprep.mubr.bf16.mxu0 0
        %6365 = vmatmul.mubr.bf16.gmra.mrb[0].mxu0 %v6208
        %v6366 = vpop.f32.mrb[0].mxu0
        %v6367 = vadd.f32 0.0, %v6366
        %v6368 = vpop.f32.mrb[0].mxu0
        %v6369 = vadd.f32 0.0, %v6368
        %v6370 = vpop.f32.mrb[0].mxu0
        %v6371 = vadd.f32 0.0, %v6370
        %v6372 = vpop.f32.mrb[0].mxu0
        %v6373 = vadd.f32 0.0, %v6372
        %6374 = vmatprep.mubr.bf16.mxu0 0
        %6375 = vmatmul.mubr.bf16.gmra.mrb[0].mxu0 %v6209
        %v6376 = vpop.f32.mrb[0].mxu0
        %v6377 = vadd.f32 0.0, %v6376
        %v6378 = vpop.f32.mrb[0].mxu0
        %v6379 = vadd.f32 0.0, %v6378
        %v6380 = vpop.f32.mrb[0].mxu0
        %v6381 = vadd.f32 0.0, %v6380
        %v6382 = vpop.f32.mrb[0].mxu0
        %v6383 = vadd.f32 0.0, %v6382
        %6384 = vmatprep.mubr.bf16.mxu0 0
        %6385 = vmatmul.mubr.bf16.gmra.mrb[0].mxu0 %v6210
        %v6386 = vpop.f32.mrb[0].mxu0
        %v6387 = vadd.f32 0.0, %v6386
        %v6388 = vpop.f32.mrb[0].mxu0
        %v6389 = vadd.f32 0.0, %v6388
        %v6390 = vpop.f32.mrb[0].mxu0
        %v6391 = vadd.f32 0.0, %v6390
        %v6392 = vpop.f32.mrb[0].mxu0
        %v6393 = vadd.f32 0.0, %v6392
        %6394 = vmatprep.mubr.bf16.mxu0 0
        %6395 = vmatmul.mubr.bf16.gmra.mrb[0].mxu0 %v6211
        %v6396 = vpop.f32.mrb[0].mxu0
        %v6397 = vadd.f32 0.0, %v6396
        %v6398 = vpop.f32.mrb[0].mxu0
        %v6399 = vadd.f32 0.0, %v6398
        %v6400 = vpop.f32.mrb[0].mxu0
        %v6401 = vadd.f32 0.0, %v6400
        %v6402 = vpop.f32.mrb[0].mxu0
        %v6403 = vadd.f32 0.0, %v6402
        %6404 = vdwg.mxu0
        %6405 = vmatprep.subr.bf16.mxu0 %v1205
        %6406 = vmatpush1.bf16.msra.mxu0 %v1204
        %6407 = vmatprep.subr.bf16.mxu0 %v1213
        %6408 = vmatpush1.bf16.msra.mxu0 %v1212
        %6409 = vmatprep.subr.bf16.mxu0 %v1221
        %6410 = vmatpush1.bf16.msra.mxu0 %v1220
        %6411 = vmatprep.subr.bf16.mxu0 %v1229
        %6412 = vmatpush1.bf16.msra.mxu0 %v1228
        %6413 = vmatprep.subr.bf16.mxu0 %v1237
        %6414 = vmatpush1.bf16.msra.mxu0 %v1236
        %6415 = vmatprep.subr.bf16.mxu0 %v1245
        %6416 = vmatpush1.bf16.msra.mxu0 %v1244
        %6417 = vmatprep.subr.bf16.mxu0 %v1253
        %6418 = vmatpush1.bf16.msra.mxu0 %v1252
        %6419 = vmatprep.subr.bf16.mxu0 %v1261
        %6420 = vmatpush1.bf16.msra.mxu0 %v1260
        %6421 = vmatprep.subr.bf16.mxu0 0
        %6422 = vmatpush1.bf16.msra.mxu0 0
        %6423 = vmatprep.subr.bf16.mxu0 0
        %6424 = vmatpush1.bf16.msra.mxu0 0
        %6425 = vmatprep.subr.bf16.mxu0 0
        %6426 = vmatpush1.bf16.msra.mxu0 0
        %6427 = vmatprep.subr.bf16.mxu0 0
        %6428 = vmatpush1.bf16.msra.mxu0 0
        %6429 = vmatprep.subr.bf16.mxu0 0
        %6430 = vmatpush1.bf16.msra.mxu0 0
        %6431 = vmatprep.subr.bf16.mxu0 0
        %6432 = vmatpush1.bf16.msra.mxu0 0
        %6433 = vmatprep.subr.bf16.mxu0 0
        %6434 = vmatpush1.bf16.msra.mxu0 0
        %6435 = vmatprep.subr.bf16.mxu0 0
        %6436 = vmatpush1.bf16.msra.mxu0 0
        %6437 = vmatprep.mubr.bf16.mxu0 0
        %6438 = vmatmul.mubr.bf16.gmra.mrb[0].mxu0 %v6196
        %v6439 = vpop.f32.mrb[0].mxu0
        %v6440 = vadd.f32 0.0, %v6439
        %v6441 = vpop.f32.mrb[0].mxu0
        %v6442 = vadd.f32 0.0, %v6441
        %v6443 = vpop.f32.mrb[0].mxu0
        %v6444 = vadd.f32 0.0, %v6443
        %v6445 = vpop.f32.mrb[0].mxu0
        %v6446 = vadd.f32 0.0, %v6445
        %6447 = vmatprep.mubr.bf16.mxu0 0
        %6448 = vmatmul.mubr.bf16.gmra.mrb[0].mxu0 %v6197
        %v6449 = vpop.f32.mrb[0].mxu0
        %v6450 = vadd.f32 0.0, %v6449
        %v6451 = vpop.f32.mrb[0].mxu0
        %v6452 = vadd.f32 0.0, %v6451
        %v6453 = vpop.f32.mrb[0].mxu0
        %v6454 = vadd.f32 0.0, %v6453
        %v6455 = vpop.f32.mrb[0].mxu0
        %v6456 = vadd.f32 0.0, %v6455
        %6457 = vmatprep.mubr.bf16.mxu0 0
        %6458 = vmatmul.mubr.bf16.gmra.mrb[0].mxu0 %v6198
        %v6459 = vpop.f32.mrb[0].mxu0
        %v6460 = vadd.f32 0.0, %v6459
        %v6461 = vpop.f32.mrb[0].mxu0
        %v6462 = vadd.f32 0.0, %v6461
        %v6463 = vpop.f32.mrb[0].mxu0
        %v6464 = vadd.f32 0.0, %v6463
        %v6465 = vpop.f32.mrb[0].mxu0
        %v6466 = vadd.f32 0.0, %v6465
        %6467 = vmatprep.mubr.bf16.mxu0 0
        %6468 = vmatmul.mubr.bf16.gmra.mrb[0].mxu0 %v6199
        %v6469 = vpop.f32.mrb[0].mxu0
        %v6470 = vadd.f32 0.0, %v6469
        %v6471 = vpop.f32.mrb[0].mxu0
        %v6472 = vadd.f32 0.0, %v6471
        %v6473 = vpop.f32.mrb[0].mxu0
        %v6474 = vadd.f32 0.0, %v6473
        %v6475 = vpop.f32.mrb[0].mxu0
        %v6476 = vadd.f32 0.0, %v6475
        %6477 = vmatprep.mubr.bf16.mxu0 0
        %6478 = vmatmul.mubr.bf16.gmra.mrb[0].mxu0 %v6200
        %v6479 = vpop.f32.mrb[0].mxu0
        %v6480 = vadd.f32 0.0, %v6479
        %v6481 = vpop.f32.mrb[0].mxu0
        %v6482 = vadd.f32 0.0, %v6481
        %v6483 = vpop.f32.mrb[0].mxu0
        %v6484 = vadd.f32 0.0, %v6483
        %v6485 = vpop.f32.mrb[0].mxu0
        %v6486 = vadd.f32 0.0, %v6485
        %6487 = vmatprep.mubr.bf16.mxu0 0
        %6488 = vmatmul.mubr.bf16.gmra.mrb[0].mxu0 %v6201
        %v6489 = vpop.f32.mrb[0].mxu0
        %v6490 = vadd.f32 0.0, %v6489
        %v6491 = vpop.f32.mrb[0].mxu0
        %v6492 = vadd.f32 0.0, %v6491
        %v6493 = vpop.f32.mrb[0].mxu0
        %v6494 = vadd.f32 0.0, %v6493
        %v6495 = vpop.f32.mrb[0].mxu0
        %v6496 = vadd.f32 0.0, %v6495
        %6497 = vmatprep.mubr.bf16.mxu0 0
        %6498 = vmatmul.mubr.bf16.gmra.mrb[0].mxu0 %v6202
        %v6499 = vpop.f32.mrb[0].mxu0
        %v6500 = vadd.f32 0.0, %v6499
        %v6501 = vpop.f32.mrb[0].mxu0
        %v6502 = vadd.f32 0.0, %v6501
        %v6503 = vpop.f32.mrb[0].mxu0
        %v6504 = vadd.f32 0.0, %v6503
        %v6505 = vpop.f32.mrb[0].mxu0
        %v6506 = vadd.f32 0.0, %v6505
        %6507 = vmatprep.mubr.bf16.mxu0 0
        %6508 = vmatmul.mubr.bf16.gmra.mrb[0].mxu0 %v6203
        %v6509 = vpop.f32.mrb[0].mxu0
        %v6510 = vadd.f32 0.0, %v6509
        %v6511 = vpop.f32.mrb[0].mxu0
        %v6512 = vadd.f32 0.0, %v6511
        %v6513 = vpop.f32.mrb[0].mxu0
        %v6514 = vadd.f32 0.0, %v6513
        %v6515 = vpop.f32.mrb[0].mxu0
        %v6516 = vadd.f32 0.0, %v6515
        %6517 = vmatprep.mubr.bf16.mxu0 0
        %6518 = vmatmul.mubr.bf16.gmra.mrb[0].mxu0 %v6204
        %v6519 = vpop.f32.mrb[0].mxu0
        %v6520 = vadd.f32 0.0, %v6519
        %v6521 = vpop.f32.mrb[0].mxu0
        %v6522 = vadd.f32 0.0, %v6521
        %v6523 = vpop.f32.mrb[0].mxu0
        %v6524 = vadd.f32 0.0, %v6523
        %v6525 = vpop.f32.mrb[0].mxu0
        %v6526 = vadd.f32 0.0, %v6525
        %6527 = vmatprep.mubr.bf16.mxu0 0
        %6528 = vmatmul.mubr.bf16.gmra.mrb[0].mxu0 %v6205
        %v6529 = vpop.f32.mrb[0].mxu0
        %v6530 = vadd.f32 0.0, %v6529
        %v6531 = vpop.f32.mrb[0].mxu0
        %v6532 = vadd.f32 0.0, %v6531
        %v6533 = vpop.f32.mrb[0].mxu0
        %v6534 = vadd.f32 0.0, %v6533
        %v6535 = vpop.f32.mrb[0].mxu0
        %v6536 = vadd.f32 0.0, %v6535
        %6537 = vmatprep.mubr.bf16.mxu0 0
        %6538 = vmatmul.mubr.bf16.gmra.mrb[0].mxu0 %v6206
        %v6539 = vpop.f32.mrb[0].mxu0
        %v6540 = vadd.f32 0.0, %v6539
        %v6541 = vpop.f32.mrb[0].mxu0
        %v6542 = vadd.f32 0.0, %v6541
        %v6543 = vpop.f32.mrb[0].mxu0
        %v6544 = vadd.f32 0.0, %v6543
        %v6545 = vpop.f32.mrb[0].mxu0
        %v6546 = vadd.f32 0.0, %v6545
        %6547 = vmatprep.mubr.bf16.mxu0 0
        %6548 = vmatmul.mubr.bf16.gmra.mrb[0].mxu0 %v6207
        %v6549 = vpop.f32.mrb[0].mxu0
        %v6550 = vadd.f32 0.0, %v6549
        %v6551 = vpop.f32.mrb[0].mxu0
        %v6552 = vadd.f32 0.0, %v6551
        %v6553 = vpop.f32.mrb[0].mxu0
        %v6554 = vadd.f32 0.0, %v6553
        %v6555 = vpop.f32.mrb[0].mxu0
        %v6556 = vadd.f32 0.0, %v6555
        %6557 = vmatprep.mubr.bf16.mxu0 0
        %6558 = vmatmul.mubr.bf16.gmra.mrb[0].mxu0 %v6208
        %v6559 = vpop.f32.mrb[0].mxu0
        %v6560 = vadd.f32 0.0, %v6559
        %v6561 = vpop.f32.mrb[0].mxu0
        %v6562 = vadd.f32 0.0, %v6561
        %v6563 = vpop.f32.mrb[0].mxu0
        %v6564 = vadd.f32 0.0, %v6563
        %v6565 = vpop.f32.mrb[0].mxu0
        %v6566 = vadd.f32 0.0, %v6565
        %6567 = vmatprep.mubr.bf16.mxu0 0
        %6568 = vmatmul.mubr.bf16.gmra.mrb[0].mxu0 %v6209
        %v6569 = vpop.f32.mrb[0].mxu0
        %v6570 = vadd.f32 0.0, %v6569
        %v6571 = vpop.f32.mrb[0].mxu0
        %v6572 = vadd.f32 0.0, %v6571
        %v6573 = vpop.f32.mrb[0].mxu0
        %v6574 = vadd.f32 0.0, %v6573
        %v6575 = vpop.f32.mrb[0].mxu0
        %v6576 = vadd.f32 0.0, %v6575
        %6577 = vmatprep.mubr.bf16.mxu0 0
        %6578 = vmatmul.mubr.bf16.gmra.mrb[0].mxu0 %v6210
        %v6579 = vpop.f32.mrb[0].mxu0
        %v6580 = vadd.f32 0.0, %v6579
        %v6581 = vpop.f32.mrb[0].mxu0
        %v6582 = vadd.f32 0.0, %v6581
        %v6583 = vpop.f32.mrb[0].mxu0
        %v6584 = vadd.f32 0.0, %v6583
        %v6585 = vpop.f32.mrb[0].mxu0
        %v6586 = vadd.f32 0.0, %v6585
        %6587 = vmatprep.mubr.bf16.mxu0 0
        %6588 = vmatmul.mubr.bf16.gmra.mrb[0].mxu0 %v6211
        %v6589 = vpop.f32.mrb[0].mxu0
        %v6590 = vadd.f32 0.0, %v6589
        %v6591 = vpop.f32.mrb[0].mxu0
        %v6592 = vadd.f32 0.0, %v6591
        %v6593 = vpop.f32.mrb[0].mxu0
        %v6594 = vadd.f32 0.0, %v6593
        %v6595 = vpop.f32.mrb[0].mxu0
        %v6596 = vadd.f32 0.0, %v6595
        %6597 = vdwg.mxu0
        %6598 = vmatprep.subr.bf16.mxu0 %v1207
        %6599 = vmatpush1.bf16.msra.mxu0 %v1206
        %6600 = vmatprep.subr.bf16.mxu0 %v1215
        %6601 = vmatpush1.bf16.msra.mxu0 %v1214
        %6602 = vmatprep.subr.bf16.mxu0 %v1223
        %6603 = vmatpush1.bf16.msra.mxu0 %v1222
        %6604 = vmatprep.subr.bf16.mxu0 %v1231
        %6605 = vmatpush1.bf16.msra.mxu0 %v1230
        %6606 = vmatprep.subr.bf16.mxu0 %v1239
        %6607 = vmatpush1.bf16.msra.mxu0 %v1238
        %6608 = vmatprep.subr.bf16.mxu0 %v1247
        %6609 = vmatpush1.bf16.msra.mxu0 %v1246
        %6610 = vmatprep.subr.bf16.mxu0 %v1255
        %6611 = vmatpush1.bf16.msra.mxu0 %v1254
        %6612 = vmatprep.subr.bf16.mxu0 %v1263
        %6613 = vmatpush1.bf16.msra.mxu0 %v1262
        %6614 = vmatprep.subr.bf16.mxu0 0
        %6615 = vmatpush1.bf16.msra.mxu0 0
        %6616 = vmatprep.subr.bf16.mxu0 0
        %6617 = vmatpush1.bf16.msra.mxu0 0
        %6618 = vmatprep.subr.bf16.mxu0 0
        %6619 = vmatpush1.bf16.msra.mxu0 0
        %6620 = vmatprep.subr.bf16.mxu0 0
        %6621 = vmatpush1.bf16.msra.mxu0 0
        %6622 = vmatprep.subr.bf16.mxu0 0
        %6623 = vmatpush1.bf16.msra.mxu0 0
        %6624 = vmatprep.subr.bf16.mxu0 0
        %6625 = vmatpush1.bf16.msra.mxu0 0
        %6626 = vmatprep.subr.bf16.mxu0 0
        %6627 = vmatpush1.bf16.msra.mxu0 0
        %6628 = vmatprep.subr.bf16.mxu0 0
        %6629 = vmatpush1.bf16.msra.mxu0 0
        %6630 = vmatprep.mubr.bf16.mxu0 0
        %6631 = vmatmul.mubr.bf16.gmra.mrb[0].mxu0 %v6196
        %v6632 = vpop.f32.mrb[0].mxu0
        %v6633 = vadd.f32 0.0, %v6632
        %v6634 = vpop.f32.mrb[0].mxu0
        %v6635 = vadd.f32 0.0, %v6634
        %v6636 = vpop.f32.mrb[0].mxu0
        %v6637 = vadd.f32 0.0, %v6636
        %v6638 = vpop.f32.mrb[0].mxu0
        %v6639 = vadd.f32 0.0, %v6638
        %6640 = vmatprep.mubr.bf16.mxu0 0
        %6641 = vmatmul.mubr.bf16.gmra.mrb[0].mxu0 %v6197
        %v6642 = vpop.f32.mrb[0].mxu0
        %v6643 = vadd.f32 0.0, %v6642
        %v6644 = vpop.f32.mrb[0].mxu0
        %v6645 = vadd.f32 0.0, %v6644
        %v6646 = vpop.f32.mrb[0].mxu0
        %v6647 = vadd.f32 0.0, %v6646
        %v6648 = vpop.f32.mrb[0].mxu0
        %v6649 = vadd.f32 0.0, %v6648
        %6650 = vmatprep.mubr.bf16.mxu0 0
        %6651 = vmatmul.mubr.bf16.gmra.mrb[0].mxu0 %v6198
        %v6652 = vpop.f32.mrb[0].mxu0
        %v6653 = vadd.f32 0.0, %v6652
        %v6654 = vpop.f32.mrb[0].mxu0
        %v6655 = vadd.f32 0.0, %v6654
        %v6656 = vpop.f32.mrb[0].mxu0
        %v6657 = vadd.f32 0.0, %v6656
        %v6658 = vpop.f32.mrb[0].mxu0
        %v6659 = vadd.f32 0.0, %v6658
        %6660 = vmatprep.mubr.bf16.mxu0 0
        %6661 = vmatmul.mubr.bf16.gmra.mrb[0].mxu0 %v6199
        %v6662 = vpop.f32.mrb[0].mxu0
        %v6663 = vadd.f32 0.0, %v6662
        %v6664 = vpop.f32.mrb[0].mxu0
        %v6665 = vadd.f32 0.0, %v6664
        %v6666 = vpop.f32.mrb[0].mxu0
        %v6667 = vadd.f32 0.0, %v6666
        %v6668 = vpop.f32.mrb[0].mxu0
        %v6669 = vadd.f32 0.0, %v6668
        %6670 = vmatprep.mubr.bf16.mxu0 0
        %6671 = vmatmul.mubr.bf16.gmra.mrb[0].mxu0 %v6200
        %v6672 = vpop.f32.mrb[0].mxu0
        %v6673 = vadd.f32 0.0, %v6672
        %v6674 = vpop.f32.mrb[0].mxu0
        %v6675 = vadd.f32 0.0, %v6674
        %v6676 = vpop.f32.mrb[0].mxu0
        %v6677 = vadd.f32 0.0, %v6676
        %v6678 = vpop.f32.mrb[0].mxu0
        %v6679 = vadd.f32 0.0, %v6678
        %6680 = vmatprep.mubr.bf16.mxu0 0
        %6681 = vmatmul.mubr.bf16.gmra.mrb[0].mxu0 %v6201
        %v6682 = vpop.f32.mrb[0].mxu0
        %v6683 = vadd.f32 0.0, %v6682
        %v6684 = vpop.f32.mrb[0].mxu0
        %v6685 = vadd.f32 0.0, %v6684
        %v6686 = vpop.f32.mrb[0].mxu0
        %v6687 = vadd.f32 0.0, %v6686
        %v6688 = vpop.f32.mrb[0].mxu0
        %v6689 = vadd.f32 0.0, %v6688
        %6690 = vmatprep.mubr.bf16.mxu0 0
        %6691 = vmatmul.mubr.bf16.gmra.mrb[0].mxu0 %v6202
        %v6692 = vpop.f32.mrb[0].mxu0
        %v6693 = vadd.f32 0.0, %v6692
        %v6694 = vpop.f32.mrb[0].mxu0
        %v6695 = vadd.f32 0.0, %v6694
        %v6696 = vpop.f32.mrb[0].mxu0
        %v6697 = vadd.f32 0.0, %v6696
        %v6698 = vpop.f32.mrb[0].mxu0
        %v6699 = vadd.f32 0.0, %v6698
        %6700 = vmatprep.mubr.bf16.mxu0 0
        %6701 = vmatmul.mubr.bf16.gmra.mrb[0].mxu0 %v6203
        %v6702 = vpop.f32.mrb[0].mxu0
        %v6703 = vadd.f32 0.0, %v6702
        %v6704 = vpop.f32.mrb[0].mxu0
        %v6705 = vadd.f32 0.0, %v6704
        %v6706 = vpop.f32.mrb[0].mxu0
        %v6707 = vadd.f32 0.0, %v6706
        %v6708 = vpop.f32.mrb[0].mxu0
        %v6709 = vadd.f32 0.0, %v6708
        %6710 = vmatprep.mubr.bf16.mxu0 0
        %6711 = vmatmul.mubr.bf16.gmra.mrb[0].mxu0 %v6204
        %v6712 = vpop.f32.mrb[0].mxu0
        %v6713 = vadd.f32 0.0, %v6712
        %v6714 = vpop.f32.mrb[0].mxu0
        %v6715 = vadd.f32 0.0, %v6714
        %v6716 = vpop.f32.mrb[0].mxu0
        %v6717 = vadd.f32 0.0, %v6716
        %v6718 = vpop.f32.mrb[0].mxu0
        %v6719 = vadd.f32 0.0, %v6718
        %6720 = vmatprep.mubr.bf16.mxu0 0
        %6721 = vmatmul.mubr.bf16.gmra.mrb[0].mxu0 %v6205
        %v6722 = vpop.f32.mrb[0].mxu0
        %v6723 = vadd.f32 0.0, %v6722
        %v6724 = vpop.f32.mrb[0].mxu0
        %v6725 = vadd.f32 0.0, %v6724
        %v6726 = vpop.f32.mrb[0].mxu0
        %v6727 = vadd.f32 0.0, %v6726
        %v6728 = vpop.f32.mrb[0].mxu0
        %v6729 = vadd.f32 0.0, %v6728
        %6730 = vmatprep.mubr.bf16.mxu0 0
        %6731 = vmatmul.mubr.bf16.gmra.mrb[0].mxu0 %v6206
        %v6732 = vpop.f32.mrb[0].mxu0
        %v6733 = vadd.f32 0.0, %v6732
        %v6734 = vpop.f32.mrb[0].mxu0
        %v6735 = vadd.f32 0.0, %v6734
        %v6736 = vpop.f32.mrb[0].mxu0
        %v6737 = vadd.f32 0.0, %v6736
        %v6738 = vpop.f32.mrb[0].mxu0
        %v6739 = vadd.f32 0.0, %v6738
        %6740 = vmatprep.mubr.bf16.mxu0 0
        %6741 = vmatmul.mubr.bf16.gmra.mrb[0].mxu0 %v6207
        %v6742 = vpop.f32.mrb[0].mxu0
        %v6743 = vadd.f32 0.0, %v6742
        %v6744 = vpop.f32.mrb[0].mxu0
        %v6745 = vadd.f32 0.0, %v6744
        %v6746 = vpop.f32.mrb[0].mxu0
        %v6747 = vadd.f32 0.0, %v6746
        %v6748 = vpop.f32.mrb[0].mxu0
        %v6749 = vadd.f32 0.0, %v6748
        %6750 = vmatprep.mubr.bf16.mxu0 0
        %6751 = vmatmul.mubr.bf16.gmra.mrb[0].mxu0 %v6208
        %v6752 = vpop.f32.mrb[0].mxu0
        %v6753 = vadd.f32 0.0, %v6752
        %v6754 = vpop.f32.mrb[0].mxu0
        %v6755 = vadd.f32 0.0, %v6754
        %v6756 = vpop.f32.mrb[0].mxu0
        %v6757 = vadd.f32 0.0, %v6756
        %v6758 = vpop.f32.mrb[0].mxu0
        %v6759 = vadd.f32 0.0, %v6758
        %6760 = vmatprep.mubr.bf16.mxu0 0
        %6761 = vmatmul.mubr.bf16.gmra.mrb[0].mxu0 %v6209
        %v6762 = vpop.f32.mrb[0].mxu0
        %v6763 = vadd.f32 0.0, %v6762
        %v6764 = vpop.f32.mrb[0].mxu0
        %v6765 = vadd.f32 0.0, %v6764
        %v6766 = vpop.f32.mrb[0].mxu0
        %v6767 = vadd.f32 0.0, %v6766
        %v6768 = vpop.f32.mrb[0].mxu0
        %v6769 = vadd.f32 0.0, %v6768
        %6770 = vmatprep.mubr.bf16.mxu0 0
        %6771 = vmatmul.mubr.bf16.gmra.mrb[0].mxu0 %v6210
        %v6772 = vpop.f32.mrb[0].mxu0
        %v6773 = vadd.f32 0.0, %v6772
        %v6774 = vpop.f32.mrb[0].mxu0
        %v6775 = vadd.f32 0.0, %v6774
        %v6776 = vpop.f32.mrb[0].mxu0
        %v6777 = vadd.f32 0.0, %v6776
        %v6778 = vpop.f32.mrb[0].mxu0
        %v6779 = vadd.f32 0.0, %v6778
        %6780 = vmatprep.mubr.bf16.mxu0 0
        %6781 = vmatmul.mubr.bf16.gmra.mrb[0].mxu0 %v6211
        %v6782 = vpop.f32.mrb[0].mxu0
        %v6783 = vadd.f32 0.0, %v6782
        %v6784 = vpop.f32.mrb[0].mxu0
        %v6785 = vadd.f32 0.0, %v6784
        %v6786 = vpop.f32.mrb[0].mxu0
        %v6787 = vadd.f32 0.0, %v6786
        %v6788 = vpop.f32.mrb[0].mxu0
        %v6789 = vadd.f32 0.0, %v6788
        %6790 = vdwg.mxu0
        %6791 = vmatprep.subr.bf16.mxu0 %v1209
        %6792 = vmatpush1.bf16.msra.mxu0 %v1208
        %6793 = vmatprep.subr.bf16.mxu0 %v1217
        %6794 = vmatpush1.bf16.msra.mxu0 %v1216
        %6795 = vmatprep.subr.bf16.mxu0 %v1225
        %6796 = vmatpush1.bf16.msra.mxu0 %v1224
        %6797 = vmatprep.subr.bf16.mxu0 %v1233
        %6798 = vmatpush1.bf16.msra.mxu0 %v1232
        %6799 = vmatprep.subr.bf16.mxu0 %v1241
        %6800 = vmatpush1.bf16.msra.mxu0 %v1240
        %6801 = vmatprep.subr.bf16.mxu0 %v1249
        %6802 = vmatpush1.bf16.msra.mxu0 %v1248
        %6803 = vmatprep.subr.bf16.mxu0 %v1257
        %6804 = vmatpush1.bf16.msra.mxu0 %v1256
        %6805 = vmatprep.subr.bf16.mxu0 %v1265
        %6806 = vmatpush1.bf16.msra.mxu0 %v1264
        %6807 = vmatprep.subr.bf16.mxu0 0
        %6808 = vmatpush1.bf16.msra.mxu0 0
        %6809 = vmatprep.subr.bf16.mxu0 0
        %6810 = vmatpush1.bf16.msra.mxu0 0
        %6811 = vmatprep.subr.bf16.mxu0 0
        %6812 = vmatpush1.bf16.msra.mxu0 0
        %6813 = vmatprep.subr.bf16.mxu0 0
        %6814 = vmatpush1.bf16.msra.mxu0 0
        %6815 = vmatprep.subr.bf16.mxu0 0
        %6816 = vmatpush1.bf16.msra.mxu0 0
        %6817 = vmatprep.subr.bf16.mxu0 0
        %6818 = vmatpush1.bf16.msra.mxu0 0
        %6819 = vmatprep.subr.bf16.mxu0 0
        %6820 = vmatpush1.bf16.msra.mxu0 0
        %6821 = vmatprep.subr.bf16.mxu0 0
        %6822 = vmatpush1.bf16.msra.mxu0 0
        %6823 = vmatprep.mubr.bf16.mxu0 0
        %6824 = vmatmul.mubr.bf16.gmra.mrb[0].mxu0 %v6196
        %v6825 = vpop.f32.mrb[0].mxu0
        %v6826 = vadd.f32 0.0, %v6825
        %v6827 = vpop.f32.mrb[0].mxu0
        %v6828 = vadd.f32 0.0, %v6827
        %v6829 = vpop.f32.mrb[0].mxu0
        %v6830 = vadd.f32 0.0, %v6829
        %v6831 = vpop.f32.mrb[0].mxu0
        %v6832 = vadd.f32 0.0, %v6831
        %6833 = vmatprep.mubr.bf16.mxu0 0
        %6834 = vmatmul.mubr.bf16.gmra.mrb[0].mxu0 %v6197
        %v6835 = vpop.f32.mrb[0].mxu0
        %v6836 = vadd.f32 0.0, %v6835
        %v6837 = vpop.f32.mrb[0].mxu0
        %v6838 = vadd.f32 0.0, %v6837
        %v6839 = vpop.f32.mrb[0].mxu0
        %v6840 = vadd.f32 0.0, %v6839
        %v6841 = vpop.f32.mrb[0].mxu0
        %v6842 = vadd.f32 0.0, %v6841
        %6843 = vmatprep.mubr.bf16.mxu0 0
        %6844 = vmatmul.mubr.bf16.gmra.mrb[0].mxu0 %v6198
        %v6845 = vpop.f32.mrb[0].mxu0
        %v6846 = vadd.f32 0.0, %v6845
        %v6847 = vpop.f32.mrb[0].mxu0
        %v6848 = vadd.f32 0.0, %v6847
        %v6849 = vpop.f32.mrb[0].mxu0
        %v6850 = vadd.f32 0.0, %v6849
        %v6851 = vpop.f32.mrb[0].mxu0
        %v6852 = vadd.f32 0.0, %v6851
        %6853 = vmatprep.mubr.bf16.mxu0 0
        %6854 = vmatmul.mubr.bf16.gmra.mrb[0].mxu0 %v6199
        %v6855 = vpop.f32.mrb[0].mxu0
        %v6856 = vadd.f32 0.0, %v6855
        %v6857 = vpop.f32.mrb[0].mxu0
        %v6858 = vadd.f32 0.0, %v6857
        %v6859 = vpop.f32.mrb[0].mxu0
        %v6860 = vadd.f32 0.0, %v6859
        %v6861 = vpop.f32.mrb[0].mxu0
        %v6862 = vadd.f32 0.0, %v6861
        %6863 = vmatprep.mubr.bf16.mxu0 0
        %6864 = vmatmul.mubr.bf16.gmra.mrb[0].mxu0 %v6200
        %v6865 = vpop.f32.mrb[0].mxu0
        %v6866 = vadd.f32 0.0, %v6865
        %v6867 = vpop.f32.mrb[0].mxu0
        %v6868 = vadd.f32 0.0, %v6867
        %v6869 = vpop.f32.mrb[0].mxu0
        %v6870 = vadd.f32 0.0, %v6869
        %v6871 = vpop.f32.mrb[0].mxu0
        %v6872 = vadd.f32 0.0, %v6871
        %6873 = vmatprep.mubr.bf16.mxu0 0
        %6874 = vmatmul.mubr.bf16.gmra.mrb[0].mxu0 %v6201
        %v6875 = vpop.f32.mrb[0].mxu0
        %v6876 = vadd.f32 0.0, %v6875
        %v6877 = vpop.f32.mrb[0].mxu0
        %v6878 = vadd.f32 0.0, %v6877
        %v6879 = vpop.f32.mrb[0].mxu0
        %v6880 = vadd.f32 0.0, %v6879
        %v6881 = vpop.f32.mrb[0].mxu0
        %v6882 = vadd.f32 0.0, %v6881
        %6883 = vmatprep.mubr.bf16.mxu0 0
        %6884 = vmatmul.mubr.bf16.gmra.mrb[0].mxu0 %v6202
        %v6885 = vpop.f32.mrb[0].mxu0
        %v6886 = vadd.f32 0.0, %v6885
        %v6887 = vpop.f32.mrb[0].mxu0
        %v6888 = vadd.f32 0.0, %v6887
        %v6889 = vpop.f32.mrb[0].mxu0
        %v6890 = vadd.f32 0.0, %v6889
        %v6891 = vpop.f32.mrb[0].mxu0
        %v6892 = vadd.f32 0.0, %v6891
        %6893 = vmatprep.mubr.bf16.mxu0 0
        %6894 = vmatmul.mubr.bf16.gmra.mrb[0].mxu0 %v6203
        %v6895 = vpop.f32.mrb[0].mxu0
        %v6896 = vadd.f32 0.0, %v6895
        %v6897 = vpop.f32.mrb[0].mxu0
        %v6898 = vadd.f32 0.0, %v6897
        %v6899 = vpop.f32.mrb[0].mxu0
        %v6900 = vadd.f32 0.0, %v6899
        %v6901 = vpop.f32.mrb[0].mxu0
        %v6902 = vadd.f32 0.0, %v6901
        %6903 = vmatprep.mubr.bf16.mxu0 0
        %6904 = vmatmul.mubr.bf16.gmra.mrb[0].mxu0 %v6204
        %v6905 = vpop.f32.mrb[0].mxu0
        %v6906 = vadd.f32 0.0, %v6905
        %v6907 = vpop.f32.mrb[0].mxu0
        %v6908 = vadd.f32 0.0, %v6907
        %v6909 = vpop.f32.mrb[0].mxu0
        %v6910 = vadd.f32 0.0, %v6909
        %v6911 = vpop.f32.mrb[0].mxu0
        %v6912 = vadd.f32 0.0, %v6911
        %6913 = vmatprep.mubr.bf16.mxu0 0
        %6914 = vmatmul.mubr.bf16.gmra.mrb[0].mxu0 %v6205
        %v6915 = vpop.f32.mrb[0].mxu0
        %v6916 = vadd.f32 0.0, %v6915
        %v6917 = vpop.f32.mrb[0].mxu0
        %v6918 = vadd.f32 0.0, %v6917
        %v6919 = vpop.f32.mrb[0].mxu0
        %v6920 = vadd.f32 0.0, %v6919
        %v6921 = vpop.f32.mrb[0].mxu0
        %v6922 = vadd.f32 0.0, %v6921
        %6923 = vmatprep.mubr.bf16.mxu0 0
        %6924 = vmatmul.mubr.bf16.gmra.mrb[0].mxu0 %v6206
        %v6925 = vpop.f32.mrb[0].mxu0
        %v6926 = vadd.f32 0.0, %v6925
        %v6927 = vpop.f32.mrb[0].mxu0
        %v6928 = vadd.f32 0.0, %v6927
        %v6929 = vpop.f32.mrb[0].mxu0
        %v6930 = vadd.f32 0.0, %v6929
        %v6931 = vpop.f32.mrb[0].mxu0
        %v6932 = vadd.f32 0.0, %v6931
        %6933 = vmatprep.mubr.bf16.mxu0 0
        %6934 = vmatmul.mubr.bf16.gmra.mrb[0].mxu0 %v6207
        %v6935 = vpop.f32.mrb[0].mxu0
        %v6936 = vadd.f32 0.0, %v6935
        %v6937 = vpop.f32.mrb[0].mxu0
        %v6938 = vadd.f32 0.0, %v6937
        %v6939 = vpop.f32.mrb[0].mxu0
        %v6940 = vadd.f32 0.0, %v6939
        %v6941 = vpop.f32.mrb[0].mxu0
        %v6942 = vadd.f32 0.0, %v6941
        %6943 = vmatprep.mubr.bf16.mxu0 0
        %6944 = vmatmul.mubr.bf16.gmra.mrb[0].mxu0 %v6208
        %v6945 = vpop.f32.mrb[0].mxu0
        %v6946 = vadd.f32 0.0, %v6945
        %v6947 = vpop.f32.mrb[0].mxu0
        %v6948 = vadd.f32 0.0, %v6947
        %v6949 = vpop.f32.mrb[0].mxu0
        %v6950 = vadd.f32 0.0, %v6949
        %v6951 = vpop.f32.mrb[0].mxu0
        %v6952 = vadd.f32 0.0, %v6951
        %6953 = vmatprep.mubr.bf16.mxu0 0
        %6954 = vmatmul.mubr.bf16.gmra.mrb[0].mxu0 %v6209
        %v6955 = vpop.f32.mrb[0].mxu0
        %v6956 = vadd.f32 0.0, %v6955
        %v6957 = vpop.f32.mrb[0].mxu0
        %v6958 = vadd.f32 0.0, %v6957
        %v6959 = vpop.f32.mrb[0].mxu0
        %v6960 = vadd.f32 0.0, %v6959
        %v6961 = vpop.f32.mrb[0].mxu0
        %v6962 = vadd.f32 0.0, %v6961
        %6963 = vmatprep.mubr.bf16.mxu0 0
        %6964 = vmatmul.mubr.bf16.gmra.mrb[0].mxu0 %v6210
        %v6965 = vpop.f32.mrb[0].mxu0
        %v6966 = vadd.f32 0.0, %v6965
        %v6967 = vpop.f32.mrb[0].mxu0
        %v6968 = vadd.f32 0.0, %v6967
        %v6969 = vpop.f32.mrb[0].mxu0
        %v6970 = vadd.f32 0.0, %v6969
        %v6971 = vpop.f32.mrb[0].mxu0
        %v6972 = vadd.f32 0.0, %v6971
        %6973 = vmatprep.mubr.bf16.mxu0 0
        %6974 = vmatmul.mubr.bf16.gmra.mrb[0].mxu0 %v6211
        %v6975 = vpop.f32.mrb[0].mxu0
        %v6976 = vadd.f32 0.0, %v6975
        %v6977 = vpop.f32.mrb[0].mxu0
        %v6978 = vadd.f32 0.0, %v6977
        %v6979 = vpop.f32.mrb[0].mxu0
        %v6980 = vadd.f32 0.0, %v6979
        %v6981 = vpop.f32.mrb[0].mxu0
        %v6982 = vadd.f32 0.0, %v6981
        %6983 = vdwg.mxu0
        %v6984 = vmax.f32 %v6247, %v6251
        %v6985 = vmax.f32 %v6984, %v6257
        %v6986 = vmax.f32 %v6985, %v6261
        %v6987 = vmax.f32 %v6986, %v6267
        %v6988 = vmax.f32 %v6987, %v6271
        %v6989 = vmax.f32 %v6988, %v6277
        %v6990 = vmax.f32 %v6989, %v6281
        %v6991 = vmax.f32 %v6990, %v6287
        %v6992 = vmax.f32 %v6991, %v6291
        %v6993 = vmax.f32 %v6992, %v6297
        %v6994 = vmax.f32 %v6993, %v6301
        %v6995 = vmax.f32 %v6994, %v6307
        %v6996 = vmax.f32 %v6995, %v6311
        %v6997 = vmax.f32 %v6996, %v6317
        %v6998 = vmax.f32 %v6997, %v6321
        %v6999 = vmax.f32 %v6998, %v6327
        %v7000 = vmax.f32 %v6999, %v6331
        %v7001 = vmax.f32 %v7000, %v6337
        %v7002 = vmax.f32 %v7001, %v6341
        %v7003 = vmax.f32 %v7002, %v6347
        %v7004 = vmax.f32 %v7003, %v6351
        %v7005 = vmax.f32 %v7004, %v6357
        %v7006 = vmax.f32 %v7005, %v6361
        %v7007 = vmax.f32 %v7006, %v6367
        %v7008 = vmax.f32 %v7007, %v6371
        %v7009 = vmax.f32 %v7008, %v6377
        %v7010 = vmax.f32 %v7009, %v6381
        %v7011 = vmax.f32 %v7010, %v6387
        %v7012 = vmax.f32 %v7011, %v6391
        %v7013 = vmax.f32 %v7012, %v6397
        %v7014 = vmax.f32 %v7013, %v6401
        %v7015 = vrot.slane %v7014, 4
        %v7016 = vmax.f32 %v7014, %v7015
        %v7017 = vrot.slane %v7016, 2
        %v7018 = vmax.f32 %v7016, %v7017
        %v7019 = vrot.slane %v7018, 1
        %v7020 = vmax.f32 %v7018, %v7019
        %v7021 = vmax.f32 %v6249, %v6253
        %v7022 = vmax.f32 %v7021, %v6259
        %v7023 = vmax.f32 %v7022, %v6263
        %v7024 = vmax.f32 %v7023, %v6269
        %v7025 = vmax.f32 %v7024, %v6273
        %v7026 = vmax.f32 %v7025, %v6279
        %v7027 = vmax.f32 %v7026, %v6283
        %v7028 = vmax.f32 %v7027, %v6289
        %v7029 = vmax.f32 %v7028, %v6293
        %v7030 = vmax.f32 %v7029, %v6299
        %v7031 = vmax.f32 %v7030, %v6303
        %v7032 = vmax.f32 %v7031, %v6309
        %v7033 = vmax.f32 %v7032, %v6313
        %v7034 = vmax.f32 %v7033, %v6319
        %v7035 = vmax.f32 %v7034, %v6323
        %v7036 = vmax.f32 %v7035, %v6329
        %v7037 = vmax.f32 %v7036, %v6333
        %v7038 = vmax.f32 %v7037, %v6339
        %v7039 = vmax.f32 %v7038, %v6343
        %v7040 = vmax.f32 %v7039, %v6349
        %v7041 = vmax.f32 %v7040, %v6353
        %v7042 = vmax.f32 %v7041, %v6359
        %v7043 = vmax.f32 %v7042, %v6363
        %v7044 = vmax.f32 %v7043, %v6369
        %v7045 = vmax.f32 %v7044, %v6373
        %v7046 = vmax.f32 %v7045, %v6379
        %v7047 = vmax.f32 %v7046, %v6383
        %v7048 = vmax.f32 %v7047, %v6389
        %v7049 = vmax.f32 %v7048, %v6393
        %v7050 = vmax.f32 %v7049, %v6399
        %v7051 = vmax.f32 %v7050, %v6403
        %v7052 = vrot.slane %v7051, 4
        %v7053 = vmax.f32 %v7051, %v7052
        %v7054 = vrot.slane %v7053, 2
        %v7055 = vmax.f32 %v7053, %v7054
        %v7056 = vrot.slane %v7055, 1
        %v7057 = vmax.f32 %v7055, %v7056
        %v7058 = vmax.f32 %v6440, %v6444
        %v7059 = vmax.f32 %v7058, %v6450
        %v7060 = vmax.f32 %v7059, %v6454
        %v7061 = vmax.f32 %v7060, %v6460
        %v7062 = vmax.f32 %v7061, %v6464
        %v7063 = vmax.f32 %v7062, %v6470
        %v7064 = vmax.f32 %v7063, %v6474
        %v7065 = vmax.f32 %v7064, %v6480
        %v7066 = vmax.f32 %v7065, %v6484
        %v7067 = vmax.f32 %v7066, %v6490
        %v7068 = vmax.f32 %v7067, %v6494
        %v7069 = vmax.f32 %v7068, %v6500
        %v7070 = vmax.f32 %v7069, %v6504
        %v7071 = vmax.f32 %v7070, %v6510
        %v7072 = vmax.f32 %v7071, %v6514
        %v7073 = vmax.f32 %v7072, %v6520
        %v7074 = vmax.f32 %v7073, %v6524
        %v7075 = vmax.f32 %v7074, %v6530
        %v7076 = vmax.f32 %v7075, %v6534
        %v7077 = vmax.f32 %v7076, %v6540
        %v7078 = vmax.f32 %v7077, %v6544
        %v7079 = vmax.f32 %v7078, %v6550
        %v7080 = vmax.f32 %v7079, %v6554
        %v7081 = vmax.f32 %v7080, %v6560
        %v7082 = vmax.f32 %v7081, %v6564
        %v7083 = vmax.f32 %v7082, %v6570
        %v7084 = vmax.f32 %v7083, %v6574
        %v7085 = vmax.f32 %v7084, %v6580
        %v7086 = vmax.f32 %v7085, %v6584
        %v7087 = vmax.f32 %v7086, %v6590
        %v7088 = vmax.f32 %v7087, %v6594
        %v7089 = vrot.slane %v7088, 4
        %v7090 = vmax.f32 %v7088, %v7089
        %v7091 = vrot.slane %v7090, 2
        %v7092 = vmax.f32 %v7090, %v7091
        %v7093 = vrot.slane %v7092, 1
        %v7094 = vmax.f32 %v7092, %v7093
        %v7095 = vmax.f32 %v6442, %v6446
        %v7096 = vmax.f32 %v7095, %v6452
        %v7097 = vmax.f32 %v7096, %v6456
        %v7098 = vmax.f32 %v7097, %v6462
        %v7099 = vmax.f32 %v7098, %v6466
        %v7100 = vmax.f32 %v7099, %v6472
        %v7101 = vmax.f32 %v7100, %v6476
        %v7102 = vmax.f32 %v7101, %v6482
        %v7103 = vmax.f32 %v7102, %v6486
        %v7104 = vmax.f32 %v7103, %v6492
        %v7105 = vmax.f32 %v7104, %v6496
        %v7106 = vmax.f32 %v7105, %v6502
        %v7107 = vmax.f32 %v7106, %v6506
        %v7108 = vmax.f32 %v7107, %v6512
        %v7109 = vmax.f32 %v7108, %v6516
        %v7110 = vmax.f32 %v7109, %v6522
        %v7111 = vmax.f32 %v7110, %v6526
        %v7112 = vmax.f32 %v7111, %v6532
        %v7113 = vmax.f32 %v7112, %v6536
        %v7114 = vmax.f32 %v7113, %v6542
        %v7115 = vmax.f32 %v7114, %v6546
        %v7116 = vmax.f32 %v7115, %v6552
        %v7117 = vmax.f32 %v7116, %v6556
        %v7118 = vmax.f32 %v7117, %v6562
        %v7119 = vmax.f32 %v7118, %v6566
        %v7120 = vmax.f32 %v7119, %v6572
        %v7121 = vmax.f32 %v7120, %v6576
        %v7122 = vmax.f32 %v7121, %v6582
        %v7123 = vmax.f32 %v7122, %v6586
        %v7124 = vmax.f32 %v7123, %v6592
        %v7125 = vmax.f32 %v7124, %v6596
        %v7126 = vrot.slane %v7125, 4
        %v7127 = vmax.f32 %v7125, %v7126
        %v7128 = vrot.slane %v7127, 2
        %v7129 = vmax.f32 %v7127, %v7128
        %v7130 = vrot.slane %v7129, 1
        %v7131 = vmax.f32 %v7129, %v7130
        %v7132 = vmax.f32 %v6633, %v6637
        %v7133 = vmax.f32 %v7132, %v6643
        %v7134 = vmax.f32 %v7133, %v6647
        %v7135 = vmax.f32 %v7134, %v6653
        %v7136 = vmax.f32 %v7135, %v6657
        %v7137 = vmax.f32 %v7136, %v6663
        %v7138 = vmax.f32 %v7137, %v6667
        %v7139 = vmax.f32 %v7138, %v6673
        %v7140 = vmax.f32 %v7139, %v6677
        %v7141 = vmax.f32 %v7140, %v6683
        %v7142 = vmax.f32 %v7141, %v6687
        %v7143 = vmax.f32 %v7142, %v6693
        %v7144 = vmax.f32 %v7143, %v6697
        %v7145 = vmax.f32 %v7144, %v6703
        %v7146 = vmax.f32 %v7145, %v6707
        %v7147 = vmax.f32 %v7146, %v6713
        %v7148 = vmax.f32 %v7147, %v6717
        %v7149 = vmax.f32 %v7148, %v6723
        %v7150 = vmax.f32 %v7149, %v6727
        %v7151 = vmax.f32 %v7150, %v6733
        %v7152 = vmax.f32 %v7151, %v6737
        %v7153 = vmax.f32 %v7152, %v6743
        %v7154 = vmax.f32 %v7153, %v6747
        %v7155 = vmax.f32 %v7154, %v6753
        %v7156 = vmax.f32 %v7155, %v6757
        %v7157 = vmax.f32 %v7156, %v6763
        %v7158 = vmax.f32 %v7157, %v6767
        %v7159 = vmax.f32 %v7158, %v6773
        %v7160 = vmax.f32 %v7159, %v6777
        %v7161 = vmax.f32 %v7160, %v6783
        %v7162 = vmax.f32 %v7161, %v6787
        %v7163 = vrot.slane %v7162, 4
        %v7164 = vmax.f32 %v7162, %v7163
        %v7165 = vrot.slane %v7164, 2
        %v7166 = vmax.f32 %v7164, %v7165
        %v7167 = vrot.slane %v7166, 1
        %v7168 = vmax.f32 %v7166, %v7167
        %v7169 = vmax.f32 %v6635, %v6639
        %v7170 = vmax.f32 %v7169, %v6645
        %v7171 = vmax.f32 %v7170, %v6649
        %v7172 = vmax.f32 %v7171, %v6655
        %v7173 = vmax.f32 %v7172, %v6659
        %v7174 = vmax.f32 %v7173, %v6665
        %v7175 = vmax.f32 %v7174, %v6669
        %v7176 = vmax.f32 %v7175, %v6675
        %v7177 = vmax.f32 %v7176, %v6679
        %v7178 = vmax.f32 %v7177, %v6685
        %v7179 = vmax.f32 %v7178, %v6689
        %v7180 = vmax.f32 %v7179, %v6695
        %v7181 = vmax.f32 %v7180, %v6699
        %v7182 = vmax.f32 %v7181, %v6705
        %v7183 = vmax.f32 %v7182, %v6709
        %v7184 = vmax.f32 %v7183, %v6715
        %v7185 = vmax.f32 %v7184, %v6719
        %v7186 = vmax.f32 %v7185, %v6725
        %v7187 = vmax.f32 %v7186, %v6729
        %v7188 = vmax.f32 %v7187, %v6735
        %v7189 = vmax.f32 %v7188, %v6739
        %v7190 = vmax.f32 %v7189, %v6745
        %v7191 = vmax.f32 %v7190, %v6749
        %v7192 = vmax.f32 %v7191, %v6755
        %v7193 = vmax.f32 %v7192, %v6759
        %v7194 = vmax.f32 %v7193, %v6765
        %v7195 = vmax.f32 %v7194, %v6769
        %v7196 = vmax.f32 %v7195, %v6775
        %v7197 = vmax.f32 %v7196, %v6779
        %v7198 = vmax.f32 %v7197, %v6785
        %v7199 = vmax.f32 %v7198, %v6789
        %v7200 = vrot.slane %v7199, 4
        %v7201 = vmax.f32 %v7199, %v7200
        %v7202 = vrot.slane %v7201, 2
        %v7203 = vmax.f32 %v7201, %v7202
        %v7204 = vrot.slane %v7203, 1
        %v7205 = vmax.f32 %v7203, %v7204
        %v7206 = vmax.f32 %v6826, %v6830
        %v7207 = vmax.f32 %v7206, %v6836
        %v7208 = vmax.f32 %v7207, %v6840
        %v7209 = vmax.f32 %v7208, %v6846
        %v7210 = vmax.f32 %v7209, %v6850
        %v7211 = vmax.f32 %v7210, %v6856
        %v7212 = vmax.f32 %v7211, %v6860
        %v7213 = vmax.f32 %v7212, %v6866
        %v7214 = vmax.f32 %v7213, %v6870
        %v7215 = vmax.f32 %v7214, %v6876
        %v7216 = vmax.f32 %v7215, %v6880
        %v7217 = vmax.f32 %v7216, %v6886
        %v7218 = vmax.f32 %v7217, %v6890
        %v7219 = vmax.f32 %v7218, %v6896
        %v7220 = vmax.f32 %v7219, %v6900
        %v7221 = vmax.f32 %v7220, %v6906
        %v7222 = vmax.f32 %v7221, %v6910
        %v7223 = vmax.f32 %v7222, %v6916
        %v7224 = vmax.f32 %v7223, %v6920
        %v7225 = vmax.f32 %v7224, %v6926
        %v7226 = vmax.f32 %v7225, %v6930
        %v7227 = vmax.f32 %v7226, %v6936
        %v7228 = vmax.f32 %v7227, %v6940
        %v7229 = vmax.f32 %v7228, %v6946
        %v7230 = vmax.f32 %v7229, %v6950
        %v7231 = vmax.f32 %v7230, %v6956
        %v7232 = vmax.f32 %v7231, %v6960
        %v7233 = vmax.f32 %v7232, %v6966
        %v7234 = vmax.f32 %v7233, %v6970
        %v7235 = vmax.f32 %v7234, %v6976
        %v7236 = vmax.f32 %v7235, %v6980
        %v7237 = vrot.slane %v7236, 4
        %v7238 = vmax.f32 %v7236, %v7237
        %v7239 = vrot.slane %v7238, 2
        %v7240 = vmax.f32 %v7238, %v7239
        %v7241 = vrot.slane %v7240, 1
        %v7242 = vmax.f32 %v7240, %v7241
        %v7243 = vmax.f32 %v6828, %v6832
        %v7244 = vmax.f32 %v7243, %v6838
        %v7245 = vmax.f32 %v7244, %v6842
        %v7246 = vmax.f32 %v7245, %v6848
        %v7247 = vmax.f32 %v7246, %v6852
        %v7248 = vmax.f32 %v7247, %v6858
        %v7249 = vmax.f32 %v7248, %v6862
        %v7250 = vmax.f32 %v7249, %v6868
        %v7251 = vmax.f32 %v7250, %v6872
        %v7252 = vmax.f32 %v7251, %v6878
        %v7253 = vmax.f32 %v7252, %v6882
        %v7254 = vmax.f32 %v7253, %v6888
        %v7255 = vmax.f32 %v7254, %v6892
        %v7256 = vmax.f32 %v7255, %v6898
        %v7257 = vmax.f32 %v7256, %v6902
        %v7258 = vmax.f32 %v7257, %v6908
        %v7259 = vmax.f32 %v7258, %v6912
        %v7260 = vmax.f32 %v7259, %v6918
        %v7261 = vmax.f32 %v7260, %v6922
        %v7262 = vmax.f32 %v7261, %v6928
        %v7263 = vmax.f32 %v7262, %v6932
        %v7264 = vmax.f32 %v7263, %v6938
        %v7265 = vmax.f32 %v7264, %v6942
        %v7266 = vmax.f32 %v7265, %v6948
        %v7267 = vmax.f32 %v7266, %v6952
        %v7268 = vmax.f32 %v7267, %v6958
        %v7269 = vmax.f32 %v7268, %v6962
        %v7270 = vmax.f32 %v7269, %v6968
        %v7271 = vmax.f32 %v7270, %v6972
        %v7272 = vmax.f32 %v7271, %v6978
        %v7273 = vmax.f32 %v7272, %v6982
        %v7274 = vrot.slane %v7273, 4
        %v7275 = vmax.f32 %v7273, %v7274
        %v7276 = vrot.slane %v7275, 2
        %v7277 = vmax.f32 %v7275, %v7276
        %v7278 = vrot.slane %v7277, 1
        %v7279 = vmax.f32 %v7277, %v7278
        %v7280 = vmax.f32 %v5650, %v7020
        %v7281 = vmax.f32 %v5651, %v7057
        %v7282 = vmax.f32 %v5652, %v7094
        %v7283 = vmax.f32 %v5653, %v7131
        %v7284 = vmax.f32 %v5654, %v7168
        %v7285 = vmax.f32 %v5655, %v7205
        %v7286 = vmax.f32 %v5656, %v7242
        %v7287 = vmax.f32 %v5657, %v7279
        %v7289 = vlaneseq
        %v7290 = vshrl.u32 %v7289, 7
        %v7291 = vsub.s32 0, %v7290
        %v7292 = vrot.slane %v413, %v7291
        %v7293 = vlaneseq
        %v7294 = vshrl.u32 %v7293, 7
        %v7295 = vsub.s32 1, %v7294
        %v7296 = vrot.slane %v413, %v7295
        %v7297 = vlaneseq
        %v7298 = vshrl.u32 %v7297, 7
        %v7299 = vsub.s32 2, %v7298
        %v7300 = vrot.slane %v413, %v7299
        %v7301 = vlaneseq
        %v7302 = vshrl.u32 %v7301, 7
        %v7303 = vsub.s32 3, %v7302
        %v7304 = vrot.slane %v413, %v7303
        %v7305 = vlaneseq
        %v7306 = vshrl.u32 %v7305, 7
        %v7307 = vsub.s32 4, %v7306
        %v7308 = vrot.slane %v413, %v7307
        %v7309 = vlaneseq
        %v7310 = vshrl.u32 %v7309, 7
        %v7311 = vsub.s32 5, %v7310
        %v7312 = vrot.slane %v413, %v7311
        %v7313 = vlaneseq
        %v7314 = vshrl.u32 %v7313, 7
        %v7315 = vsub.s32 6, %v7314
        %v7316 = vrot.slane %v413, %v7315
        %v7317 = vlaneseq
        %v7318 = vshrl.u32 %v7317, 7
        %v7319 = vsub.s32 7, %v7318
        %v7320 = vrot.slane %v413, %v7319
        %v7329 = vadd.f32 %v7280, %v7292
        %v7330 = vadd.f32 %v7281, %v7296
        %v7331 = vadd.f32 %v7282, %v7300
        %v7332 = vadd.f32 %v7283, %v7304
        %v7333 = vadd.f32 %v7284, %v7308
        %v7334 = vadd.f32 %v7285, %v7312
        %v7335 = vadd.f32 %v7286, %v7316
        %v7336 = vadd.f32 %v7287, %v7320
        %v7337 = vmax.f32 %v7329, 0.0
        %v7338 = vmax.f32 %v7330, 0.0
        %v7339 = vmax.f32 %v7331, 0.0
        %v7340 = vmax.f32 %v7332, 0.0
        %v7341 = vmax.f32 %v7333, 0.0
        %v7342 = vmax.f32 %v7334, 0.0
        %v7343 = vmax.f32 %v7335, 0.0
        %v7344 = vmax.f32 %v7336, 0.0
        %v7345 = vpack.c.bf16 %v7337, %v7337
        %v7346 = vpack.c.bf16 %v7338, %v7338
        %v7347 = vpack.c.bf16 %v7339, %v7339
        %v7348 = vpack.c.bf16 %v7340, %v7340
        %v7349 = vpack.c.bf16 %v7341, %v7341
        %v7350 = vpack.c.bf16 %v7342, %v7342
        %v7351 = vpack.c.bf16 %v7343, %v7343
        %v7352 = vpack.c.bf16 %v7344, %v7344
        %v7361 = vcombine.low %v7345, %v7346
        %v7362 = vcombine.low %v7347, %v7348
        %v7363 = vcombine.low %v7349, %v7350
        %v7364 = vcombine.low %v7351, %v7352
        %v7366 = vunpack.c.l.s4 1966171168
        %v7367 = vunpack.c.0.s8 %v7366
        %v7368 = vlaneseq
        %v7369 = vshrl.u32 %v7368, 7
        %v7370 = vsub.s32 %v7367, %v7369
        %v7371 = vrot.slane %v7361, %v7370
        %v7373 = vunpack.c.l.s4 1966171168
        %v7374 = vunpack.c.0.s8 %v7373
        %v7375 = vlaneseq
        %v7376 = vshrl.u32 %v7375, 7
        %v7377 = vsub.s32 %v7374, %v7376
        %v7378 = vrot.slane %v7362, %v7377
        %v7380 = vunpack.c.l.s4 1966171168
        %v7381 = vunpack.c.0.s8 %v7380
        %v7382 = vlaneseq
        %v7383 = vshrl.u32 %v7382, 7
        %v7384 = vsub.s32 %v7381, %v7383
        %v7385 = vrot.slane %v7363, %v7384
        %v7387 = vunpack.c.l.s4 1966171168
        %v7388 = vunpack.c.0.s8 %v7387
        %v7389 = vlaneseq
        %v7390 = vshrl.u32 %v7389, 7
        %v7391 = vsub.s32 %v7388, %v7390
        %v7392 = vrot.slane %v7364, %v7391
        %v7393 = vcombine.low %v7371, %v7378
        %v7394 = vcombine.low %v7385, %v7392
        %v7396 = vunpack.c.l.s4 1966171168
        %v7397 = vunpack.c.0.s8 %v7396
        %v7398 = vlaneseq
        %v7399 = vshrl.u32 %v7398, 7
        %v7400 = vsub.s32 %v7397, %v7399
        %v7401 = vrot.slane %v7393, %v7400
        %v7403 = vunpack.c.l.s4 1966171168
        %v7404 = vunpack.c.0.s8 %v7403
        %v7405 = vlaneseq
        %v7406 = vshrl.u32 %v7405, 7
        %v7407 = vsub.s32 %v7404, %v7406
        %v7408 = vrot.slane %v7394, %v7407
        %v7409 = vcombine.low %v7401, %v7408
        %vm7411 = vcmask 1040384
        %vm7412 = vsmask.f32 256
        %vm7413 = vmand %vm7411, %vm7412
        %vm7414 = vcmask 1041409
        %vm7415 = vsmask.f32 1280
        %vm7416 = vmand %vm7414, %vm7415
        %vm7417 = vmor %vm7416, %vm7413
        %vm7418 = vcmask 1042434
        %vm7419 = vsmask.f32 2304
        %vm7420 = vmand %vm7418, %vm7419
        %vm7421 = vmor %vm7420, %vm7417
        %vm7422 = vcmask 1043459
        %vm7423 = vsmask.f32 3328
        %vm7424 = vmand %vm7422, %vm7423
        %vm7425 = vmor %vm7424, %vm7421
        %vm7426 = vcmask 1044484
        %vm7427 = vsmask.f32 4352
        %vm7428 = vmand %vm7426, %vm7427
        %vm7429 = vmor %vm7428, %vm7425
        %vm7430 = vcmask 1045509
        %vm7431 = vsmask.f32 5376
        %vm7432 = vmand %vm7430, %vm7431
        %vm7433 = vmor %vm7432, %vm7429
        %vm7434 = vcmask 1046534
        %vm7435 = vsmask.f32 6400
        %vm7436 = vmand %vm7434, %vm7435
        %vm7437 = vmor %vm7436, %vm7433
        %vm7438 = vcmask 1047559
        %vm7439 = vsmask.f32 7424
        %vm7440 = vmand %vm7438, %vm7439
        %vm7441 = vmor %vm7440, %vm7437
        %v7442 = vld [vmem:[%s336] sm:$0xff]
        %v7443 = vsel %vm7441, %v7409, %v7442
        %7444 = vst [vmem:[%s336] sm:$0xff] %v7443
        %p7445 = scmp.lt.s32.totalorder %s23, 1
        %s7446 = scalar_select %p7445, %s23, 1
        %s7447 = smul.addr %s7446, 8
        %s7448 = scalar_lea.vmem %s7, %s7447
        // Predicated region
        $region65: #{tpu_custom_call.1} parent=47 // pred_check
          %p7449 = pneg %p193
        $region66: #{tpu_custom_call.1} parent=47 // pred_check_branch
          %7451 = sbr.rel (%p7449) target = $region68
        $region67: #{tpu_custom_call.1} parent=47 // pred_region
          _
        $region68: #{tpu_custom_call.1} parent=47 // pred_fallthru
          _
      $region48: #{tpu_custom_call.1} parent=5 // pred_fallthru
        _
      %p7452 = scmp.le.s32.totalorder 2, %s18
      // Predicated region
      $region69: #{tpu_custom_call.1} parent=5 // pred_check
        %p7453 = pneg %p7452
      $region70: #{tpu_custom_call.1} parent=5 // pred_check_branch
        %7455 = sbr.rel (%p7453) target = $region72
      $region71: #{tpu_custom_call.1} parent=5 // pred_region
        %s7456 = ssub.s32 %s18, 2
        // Predicated region
        $region73: #{tpu_custom_call.1} parent=71 // pred_check
          %p7457 = pneg %p199
        $region74: #{tpu_custom_call.1} parent=71 // pred_check_branch
          %7459 = sbr.rel (%p7457) target = $region76
        $region75: #{tpu_custom_call.1} parent=71 // pred_region
          %p7460 = scmp.lt.s32.totalorder %s24, 1
          %s7461 = scalar_select %p7460, %s24, 1
          %s7462 = smul.addr %s7461, 8
          %s7463 = scalar_lea.vmem %s7, %s7462
        $region76: #{tpu_custom_call.1} parent=71 // pred_fallthru
          _
      $region72: #{tpu_custom_call.1} parent=5 // pred_fallthru
        _
    $region6: #{tpu_custom_call.1} parent=1 // loop_footer
      %s22 = sadd.s32 1, %s18
    $region7: #{tpu_custom_call.1} parent=1 // loop_footer_branch
      %17 = sbr.rel target = $region3
    $region8: #{tpu_custom_call.1} parent=1 // loop_exit
      _
    %7464 = vsyncpa [#allocation3], 1
    %s7465 = scalar_lea.sflag [#allocation3], 1
    %7466 = vsyncpa %s7465, 1
    %7467 = vsyncpa [#allocation5], 1
    %7468 = vsyncpa [#allocation8], 1

</llo_original>
